<compile_context>
chip_gen: v5e
topology: v5e:2x2
jax: 0.10.0
libtpu: 0.0.40
codegen_flags: <defaults>
</compile_context>

<pallas_src>
import functools

import jax
import jax.numpy as jnp
from jax.experimental import pallas as pl
from jax.experimental.pallas import tpu as pltpu


IN_FEATURES = 2048     # efficientnet_b5 classifier[1].in_features
NUM_CLASSES = 2
STEM_CH = 48           # efficientnet_b5 stem width
CIN = 3                # RGB
K_IM2COL = 3 * 3 * CIN  # 27 (kh * kw * Cin), flatten order (dy, dx, c)


def _vmem_spec():
    return pl.BlockSpec(memory_space=pltpu.MemorySpace.VMEM)


def _pick_row_tile(m, cap=2048):
    """Largest divisor of m that is a multiple of 8 and <= cap (falls back to m)."""
    for t in range(min(cap, m), 7, -1):
        if m % t == 0 and t % 8 == 0:
            return t
    return m


# ---------------------------------------------------------------------------
# Kernel 1: stem conv as matmul (im2col tile @ W + b, SiLU) with the GLOBAL
# AVERAGE POOL fused in. Grid = (B, num_row_tiles); the output block (1,1,48)
# is resident across the row-tile (reduction) axis and accumulates channel sums.
# ---------------------------------------------------------------------------
def stem_gap_kernel(p_ref, w_ref, b_ref, sum_ref, *, inv_count):
    t = pl.program_id(1)

    @pl.when(t == 0)
    def _init():
        sum_ref[...] = jnp.zeros_like(sum_ref)

    x = p_ref[0]                                                  # (TM, 27) bf16
    acc = jnp.dot(x, w_ref[...], preferred_element_type=jnp.float32)  # (TM, 48) f32
    acc = acc + b_ref[...]
    acc = acc * jax.nn.sigmoid(acc)                               # SiLU (EfficientNet)
    # per-tile partial channel sum; the big XLU reduce stays hidden under the DMA loop
    sum_ref[...] += jnp.sum(acc, axis=0, keepdims=True)[None]     # (1,1,48)

    @pl.when(t == pl.num_programs(1) - 1)
    def _finalize():
        sum_ref[...] *= inv_count                                 # GAP: divide by Ho*Wo


# ---------------------------------------------------------------------------
# Kernel 2: fused backbone projection (48->2048) + classifier head.
# bf16 weights, f32 accumulation. Dropout layers are identity at inference.
# ---------------------------------------------------------------------------
def head_kernel(f_ref, wp_ref, bp_ref, w1_ref, b1_ref, w2_ref, b2_ref,
                w3_ref, b3_ref, o_ref):
    pooled = f_ref[...]                                           # (B, 48) f32
    f = jnp.dot(pooled.astype(jnp.bfloat16), wp_ref[...],
                preferred_element_type=jnp.float32) + bp_ref[...]
    h = jnp.dot(f.astype(jnp.bfloat16), w1_ref[...],
                preferred_element_type=jnp.float32) + b1_ref[...]
    h = jnp.maximum(h, 0.0)                                       # ReLU (Dropout -> id)
    h = jnp.dot(h.astype(jnp.bfloat16), w2_ref[...],
                preferred_element_type=jnp.float32) + b2_ref[...]
    h = jnp.maximum(h, 0.0)                                       # ReLU (Dropout -> id)
    logits = jnp.dot(h.astype(jnp.bfloat16), w3_ref[...],
                     preferred_element_type=jnp.float32) + b3_ref[...]
    o_ref[...] = jax.nn.sigmoid(logits)


# ---------------------------------------------------------------------------
# Parameter init (deterministic, synthetic). Weight matrices in bf16, biases f32.
# ---------------------------------------------------------------------------
def init_params(key):
    ks = jax.random.split(key, 5)

    def lin(k, fan_in, fan_out, w_dtype=jnp.bfloat16):
        scale = 1.0 / jnp.sqrt(jnp.float32(fan_in))
        w = jax.random.uniform(k, (fan_in, fan_out), jnp.float32, -scale, scale)
        b = jnp.zeros((1, fan_out), jnp.float32)
        return w.astype(w_dtype), b

    params = {}
    # stem conv 3x3, Cin=3 -> STEM_CH, laid out as (kh*kw*Cin, Cout) in (dy,dx,c) order
    params["w_stem"], params["b_stem"] = lin(ks[0], K_IM2COL, STEM_CH)
    # backbone-proxy projection STEM_CH -> IN_FEATURES
    params["w_proj"], params["b_proj"] = lin(ks[1], STEM_CH, IN_FEATURES)
    # classifier head
    params["w1"], params["b1"] = lin(ks[2], IN_FEATURES, 1024)
    params["w2"], params["b2"] = lin(ks[3], 1024, 512)
    params["w3"], params["b3"] = lin(ks[4], 512, NUM_CLASSES)
    return params


# ---------------------------------------------------------------------------
# Forward pass
# ---------------------------------------------------------------------------
@jax.jit
def image_only_forward(x_nchw, params):
    B, C, H, W = x_nchw.shape
    x = jnp.transpose(x_nchw, (0, 2, 3, 1)).astype(jnp.bfloat16)   # NCHW -> NHWC, bf16

    # im2col for 3x3 conv, stride 2, padding 1 (XLA glue; bf16 halves its HBM traffic).
    Ho, Wo = H // 2, W // 2
    M = Ho * Wo
    xp = jnp.pad(x, ((0, 0), (1, 1), (1, 1), (0, 0)))
    cols = []
    for dy in range(3):
        for dx in range(3):
            cols.append(xp[:, dy:dy + 2 * Ho:2, dx:dx + 2 * Wo:2, :])
    patches = jnp.concatenate(cols, axis=-1).reshape(B, M, 9 * C)  # (B, Ho*Wo, 27) bf16

    TM = _pick_row_tile(M)
    nt = M // TM

    # Stem conv + fused GAP (Pallas, gridded): -> pooled channel means (B, 1, 48)
    sums = pl.pallas_call(
        functools.partial(stem_gap_kernel, inv_count=1.0 / M),
        out_shape=jax.ShapeDtypeStruct((B, 1, STEM_CH), jnp.float32),
        grid=(B, nt),
        in_specs=[
            pl.BlockSpec((1, TM, 9 * C), lambda b, t: (b, t, 0)),
            pl.BlockSpec((9 * C, STEM_CH), lambda b, t: (0, 0)),
            pl.BlockSpec((1, STEM_CH), lambda b, t: (0, 0)),
        ],
        out_specs=pl.BlockSpec((1, 1, STEM_CH), lambda b, t: (b, 0, 0)),
        compiler_params=pltpu.CompilerParams(
            dimension_semantics=("parallel", "arbitrary")),
    )(patches, params["w_stem"], params["b_stem"])

    pooled = sums.reshape(B, STEM_CH)                              # (B, 48) f32

    # Fused projection + classifier head (Pallas, single weight-resident call)
    out = pl.pallas_call(
        head_kernel,
        out_shape=jax.ShapeDtypeStruct((B, NUM_CLASSES), jnp.float32),
        in_specs=[_vmem_spec() for _ in range(9)],
        out_specs=_vmem_spec(),
    )(
        pooled,
        params["w_proj"], params["b_proj"],
        params["w1"], params["b1"],
        params["w2"], params["b2"],
        params["w3"], params["b3"],
    )
    return out


if __name__ == "__main__":
    key = jax.random.PRNGKey(0)
    k_x, k_p = jax.random.split(key)

    # Small image batch, PyTorch NCHW convention.
    x = jax.random.normal(k_x, (2, 3, 32, 32), jnp.float32)
    params = init_params(k_p)

    out = image_only_forward(x, params)
    out = jax.block_until_ready(out)

    assert out.shape == (2, NUM_CLASSES), out.shape
    assert bool(jnp.all(jnp.isfinite(out)))
    assert bool(jnp.all((out >= 0.0) & (out <= 1.0)))   # sigmoid range
    print("KERNEL_OK")
</pallas_src>

<mosaic_0001>
module attributes {stable_mosaic.version = 11 : i64} {
  func.func @stem_gap_kernel(%arg0: i32, %arg1: i32, %arg2: memref<1x256x27xbf16, #tpu.memory_space<vmem>>, %arg3: memref<27x48xbf16, #tpu.memory_space<vmem>>, %arg4: memref<1x48xf32, #tpu.memory_space<vmem>>, %arg5: memref<1x1x48xf32, #tpu.memory_space<vmem>>) attributes {dimension_semantics = [#tpu.dimension_semantics<parallel>, #tpu.dimension_semantics<arbitrary>], iteration_bounds = array<i64: 2, 1>, scalar_prefetch = 0 : i64, scratch_operands = 0 : i64, tpu.core_type = #tpu.core_type<tc>, window_params = [{transform_indices = @transform_0, window_bounds = array<i64: 1, 256, 27>}, {pipeline_mode = #tpu.pipeline_mode<synchronous>, transform_indices = @transform_1, window_bounds = array<i64: 27, 48>}, {pipeline_mode = #tpu.pipeline_mode<synchronous>, transform_indices = @transform_2, window_bounds = array<i64: 1, 48>}, {transform_indices = @transform_3, window_bounds = array<i64: 1, 1, 48>}]} {
    %c0_i32 = arith.constant 0 : i32
    %0 = arith.cmpi eq, %arg1, %c0_i32 : i32
    %1 = arith.extui %0 : i1 to i32
    %c0_i32_0 = arith.constant 0 : i32
    %2 = arith.cmpi ne, %1, %c0_i32_0 : i32
    scf.if %2 {
      %cst_17 = arith.constant 0.000000e+00 : f32
      %25 = vector.broadcast %cst_17 : f32 to vector<1x1x48xf32>
      %c0_18 = arith.constant 0 : index
      %c0_19 = arith.constant 0 : index
      %c0_20 = arith.constant 0 : index
      %26 = vector.load %arg5[%c0_18, %c0_19, %c0_20] : memref<1x1x48xf32, #tpu.memory_space<vmem>>, vector<1x1x48xf32>
      tpu.vector_store %arg5[%c0_18, %c0_19, %c0_20], %25 {strides = array<i32>} : memref<1x1x48xf32, #tpu.memory_space<vmem>>, vector<1x1x48xf32>,
    } else {
    }
    %c0 = arith.constant 0 : index
    %c0_1 = arith.constant 0 : index
    %c0_2 = arith.constant 0 : index
    %3 = vector.load %arg2[%c0, %c0_1, %c0_2] : memref<1x256x27xbf16, #tpu.memory_space<vmem>>, vector<1x256x27xbf16>
    %4 = vector.shape_cast %3 : vector<1x256x27xbf16> to vector<256x27xbf16>
    %c0_3 = arith.constant 0 : index
    %c0_4 = arith.constant 0 : index
    %5 = vector.load %arg3[%c0_3, %c0_4] : memref<27x48xbf16, #tpu.memory_space<vmem>>, vector<27x48xbf16>
    %cst = arith.constant dense<0.000000e+00> : vector<256x48xf32>
    %6 = tpu.matmul %4, %5, %cst {dimension_numbers = #tpu.dot_dimension_numbers<[1], [0], [0], [1], [0, 0, 1, 1], [], []>} : vector<256x27xbf16>, vector<27x48xbf16>, vector<256x48xf32> -> vector<256x48xf32>
    %c0_5 = arith.constant 0 : index
    %c0_6 = arith.constant 0 : index
    %7 = vector.load %arg4[%c0_5, %c0_6] : memref<1x48xf32, #tpu.memory_space<vmem>>, vector<1x48xf32>
    %8 = vector.broadcast %7 : vector<1x48xf32> to vector<256x48xf32>
    %9 = arith.addf %6, %8 : vector<256x48xf32>
    %10 = arith.negf %9 : vector<256x48xf32>
    %11 = math.exp %10 : vector<256x48xf32>
    %cst_7 = arith.constant 1.000000e+00 : f32
    %12 = vector.broadcast %cst_7 : f32 to vector<256x48xf32>
    %13 = arith.addf %12, %11 : vector<256x48xf32>
    %14 = arith.divf %12, %13 : vector<256x48xf32>
    %15 = arith.mulf %9, %14 : vector<256x48xf32>
    %c0_8 = arith.constant 0 : index
    %c0_9 = arith.constant 0 : index
    %c0_10 = arith.constant 0 : index
    %16 = vector.load %arg5[%c0_8, %c0_9, %c0_10] : memref<1x1x48xf32, #tpu.memory_space<vmem>>, vector<1x1x48xf32>
    %cst_11 = arith.constant dense<0.000000e+00> : vector<48xf32>
    %17 = vector.multi_reduction <add>, %15, %cst_11 [0] : vector<256x48xf32> to vector<48xf32>
    %18 = vector.shape_cast %17 : vector<48xf32> to vector<1x48xf32>
    %19 = vector.shape_cast %18 : vector<1x48xf32> to vector<1x1x48xf32>
    %20 = arith.addf %16, %19 : vector<1x1x48xf32>
    %c0_12 = arith.constant 0 : index
    %c0_13 = arith.constant 0 : index
    %c0_14 = arith.constant 0 : index
    %21 = vector.load %arg5[%c0_12, %c0_13, %c0_14] : memref<1x1x48xf32, #tpu.memory_space<vmem>>, vector<1x1x48xf32>
    tpu.vector_store %arg5[%c0_12, %c0_13, %c0_14], %20 {strides = array<i32>} : memref<1x1x48xf32, #tpu.memory_space<vmem>>, vector<1x1x48xf32>,
    %c0_i32_15 = arith.constant 0 : i32
    %22 = arith.cmpi eq, %arg1, %c0_i32_15 : i32
    %23 = arith.extui %22 : i1 to i32
    %c0_i32_16 = arith.constant 0 : i32
    %24 = arith.cmpi ne, %23, %c0_i32_16 : i32
    scf.if %24 {
      %c0_17 = arith.constant 0 : index
      %c0_18 = arith.constant 0 : index
      %c0_19 = arith.constant 0 : index
      %25 = vector.load %arg5[%c0_17, %c0_18, %c0_19] : memref<1x1x48xf32, #tpu.memory_space<vmem>>, vector<1x1x48xf32>
      %cst_20 = arith.constant 3.906250e-03 : f32
      %26 = vector.broadcast %cst_20 : f32 to vector<1x1x48xf32>
      %27 = arith.mulf %25, %26 : vector<1x1x48xf32>
      %c0_21 = arith.constant 0 : index
      %c0_22 = arith.constant 0 : index
      %c0_23 = arith.constant 0 : index
      %28 = vector.load %arg5[%c0_21, %c0_22, %c0_23] : memref<1x1x48xf32, #tpu.memory_space<vmem>>, vector<1x1x48xf32>
      tpu.vector_store %arg5[%c0_21, %c0_22, %c0_23], %27 {strides = array<i32>} : memref<1x1x48xf32, #tpu.memory_space<vmem>>, vector<1x1x48xf32>,
    } else {
    }
    return
  }
  func.func @transform_0(%arg0: i32, %arg1: i32) -> (i32, i32, i32) {
    %c0_i32 = arith.constant 0 : i32
    %c0_i32_0 = arith.constant 0 : i32
    return %arg0, %arg1, %c0_i32 : i32, i32, i32
  }
  func.func @transform_1(%arg0: i32, %arg1: i32) -> (i32, i32) {
    %c0_i32 = arith.constant 0 : i32
    %c0_i32_0 = arith.constant 0 : i32
    %c0_i32_1 = arith.constant 0 : i32
    return %c0_i32, %c0_i32_0 : i32, i32
  }
  func.func @transform_2(%arg0: i32, %arg1: i32) -> (i32, i32) {
    %c0_i32 = arith.constant 0 : i32
    %c0_i32_0 = arith.constant 0 : i32
    %c0_i32_1 = arith.constant 0 : i32
    return %c0_i32, %c0_i32_0 : i32, i32
  }
  func.func @transform_3(%arg0: i32, %arg1: i32) -> (i32, i32, i32) {
    %c0_i32 = arith.constant 0 : i32
    %c0_i32_0 = arith.constant 0 : i32
    %c0_i32_1 = arith.constant 0 : i32
    return %arg0, %c0_i32, %c0_i32_0 : i32, i32, i32
  }
}

module attributes {stable_mosaic.version = 11 : i64} {
  func.func @head_kernel(%arg0: memref<2x48xf32, #tpu.memory_space<vmem>>, %arg1: memref<48x2048xbf16, #tpu.memory_space<vmem>>, %arg2: memref<1x2048xf32, #tpu.memory_space<vmem>>, %arg3: memref<2048x1024xbf16, #tpu.memory_space<vmem>>, %arg4: memref<1x1024xf32, #tpu.memory_space<vmem>>, %arg5: memref<1024x512xbf16, #tpu.memory_space<vmem>>, %arg6: memref<1x512xf32, #tpu.memory_space<vmem>>, %arg7: memref<512x2xbf16, #tpu.memory_space<vmem>>, %arg8: memref<1x2xf32, #tpu.memory_space<vmem>>, %arg9: memref<2x2xf32, #tpu.memory_space<vmem>>) attributes {dimension_semantics = [], scalar_prefetch = 0 : i64, scratch_operands = 0 : i64, tpu.core_type = #tpu.core_type<tc>} {
    %c0 = arith.constant 0 : index
    %c0_0 = arith.constant 0 : index
    %0 = vector.load %arg0[%c0, %c0_0] : memref<2x48xf32, #tpu.memory_space<vmem>>, vector<2x48xf32>
    %1 = arith.truncf %0 : vector<2x48xf32> to vector<2x48xbf16>
    %c0_1 = arith.constant 0 : index
    %c0_2 = arith.constant 0 : index
    %2 = vector.load %arg1[%c0_1, %c0_2] : memref<48x2048xbf16, #tpu.memory_space<vmem>>, vector<48x2048xbf16>
    %cst = arith.constant dense<0.000000e+00> : vector<2x2048xf32>
    %3 = tpu.matmul %1, %2, %cst {dimension_numbers = #tpu.dot_dimension_numbers<[1], [0], [0], [1], [0, 0, 1, 1], [], []>} : vector<2x48xbf16>, vector<48x2048xbf16>, vector<2x2048xf32> -> vector<2x2048xf32>
    %c0_3 = arith.constant 0 : index
    %c0_4 = arith.constant 0 : index
    %4 = vector.load %arg2[%c0_3, %c0_4] : memref<1x2048xf32, #tpu.memory_space<vmem>>, vector<1x2048xf32>
    %5 = vector.broadcast %4 : vector<1x2048xf32> to vector<2x2048xf32>
    %6 = arith.addf %3, %5 : vector<2x2048xf32>
    %7 = arith.truncf %6 : vector<2x2048xf32> to vector<2x2048xbf16>
    %c0_5 = arith.constant 0 : index
    %c0_6 = arith.constant 0 : index
    %8 = vector.load %arg3[%c0_5, %c0_6] : memref<2048x1024xbf16, #tpu.memory_space<vmem>>, vector<2048x1024xbf16>
    %cst_7 = arith.constant dense<0.000000e+00> : vector<2x1024xf32>
    %9 = tpu.matmul %7, %8, %cst_7 {dimension_numbers = #tpu.dot_dimension_numbers<[1], [0], [0], [1], [0, 0, 1, 1], [], []>} : vector<2x2048xbf16>, vector<2048x1024xbf16>, vector<2x1024xf32> -> vector<2x1024xf32>
    %c0_8 = arith.constant 0 : index
    %c0_9 = arith.constant 0 : index
    %10 = vector.load %arg4[%c0_8, %c0_9] : memref<1x1024xf32, #tpu.memory_space<vmem>>, vector<1x1024xf32>
    %11 = vector.broadcast %10 : vector<1x1024xf32> to vector<2x1024xf32>
    %12 = arith.addf %9, %11 : vector<2x1024xf32>
    %cst_10 = arith.constant 0.000000e+00 : f32
    %13 = vector.broadcast %cst_10 : f32 to vector<2x1024xf32>
    %14 = arith.maximumf %12, %13 : vector<2x1024xf32>
    %15 = arith.truncf %14 : vector<2x1024xf32> to vector<2x1024xbf16>
    %c0_11 = arith.constant 0 : index
    %c0_12 = arith.constant 0 : index
    %16 = vector.load %arg5[%c0_11, %c0_12] : memref<1024x512xbf16, #tpu.memory_space<vmem>>, vector<1024x512xbf16>
    %cst_13 = arith.constant dense<0.000000e+00> : vector<2x512xf32>
    %17 = tpu.matmul %15, %16, %cst_13 {dimension_numbers = #tpu.dot_dimension_numbers<[1], [0], [0], [1], [0, 0, 1, 1], [], []>} : vector<2x1024xbf16>, vector<1024x512xbf16>, vector<2x512xf32> -> vector<2x512xf32>
    %c0_14 = arith.constant 0 : index
    %c0_15 = arith.constant 0 : index
    %18 = vector.load %arg6[%c0_14, %c0_15] : memref<1x512xf32, #tpu.memory_space<vmem>>, vector<1x512xf32>
    %19 = vector.broadcast %18 : vector<1x512xf32> to vector<2x512xf32>
    %20 = arith.addf %17, %19 : vector<2x512xf32>
    %cst_16 = arith.constant 0.000000e+00 : f32
    %21 = vector.broadcast %cst_16 : f32 to vector<2x512xf32>
    %22 = arith.maximumf %20, %21 : vector<2x512xf32>
    %23 = arith.truncf %22 : vector<2x512xf32> to vector<2x512xbf16>
    %c0_17 = arith.constant 0 : index
    %c0_18 = arith.constant 0 : index
    %24 = vector.load %arg7[%c0_17, %c0_18] : memref<512x2xbf16, #tpu.memory_space<vmem>>, vector<512x2xbf16>
    %cst_19 = arith.constant dense<0.000000e+00> : vector<2x2xf32>
    %25 = tpu.matmul %23, %24, %cst_19 {dimension_numbers = #tpu.dot_dimension_numbers<[1], [0], [0], [1], [0, 0, 1, 1], [], []>} : vector<2x512xbf16>, vector<512x2xbf16>, vector<2x2xf32> -> vector<2x2xf32>
    %c0_20 = arith.constant 0 : index
    %c0_21 = arith.constant 0 : index
    %26 = vector.load %arg8[%c0_20, %c0_21] : memref<1x2xf32, #tpu.memory_space<vmem>>, vector<1x2xf32>
    %27 = vector.broadcast %26 : vector<1x2xf32> to vector<2x2xf32>
    %28 = arith.addf %25, %27 : vector<2x2xf32>
    %29 = arith.negf %28 : vector<2x2xf32>
    %30 = math.exp %29 : vector<2x2xf32>
    %cst_22 = arith.constant 1.000000e+00 : f32
    %31 = vector.broadcast %cst_22 : f32 to vector<2x2xf32>
    %32 = arith.addf %31, %30 : vector<2x2xf32>
    %33 = arith.divf %31, %32 : vector<2x2xf32>
    %c0_23 = arith.constant 0 : index
    %c0_24 = arith.constant 0 : index
    %34 = vector.load %arg9[%c0_23, %c0_24] : memref<2x2xf32, #tpu.memory_space<vmem>>, vector<2x2xf32>
    tpu.vector_store %arg9[%c0_23, %c0_24], %33 {strides = array<i32>} : memref<2x2xf32, #tpu.memory_space<vmem>>, vector<2x2xf32>,
    return
  }
}

</mosaic_0001>

<llo_original>
// kernel: image_only_forward.2
$region0: #{image_only_forward.2}
  #allocation0 [shape = 'u32[]', space=smem, size = 0x4, offset = 0x4, fixed_abs, tag = 'smem constant byte address 0x4 - core index']
  #allocation1 [shape = 'u32[72,128]{1,0:T(1,128)}', space=vmem, size = 0x9000, scoped, tag = 'internal scratch']
  %s0 = inlined_call_operand.vmem [shape: bf16[2,256,27], index: 0, kind: input, shape index: {}]
  %s1 = inlined_call_operand.hbm [shape: bf16[27,48], index: 1, kind: input, shape index: {}]
  %s2 = inlined_call_operand.hbm [shape: f32[1,48], index: 2, kind: input, shape index: {}]
  %s3 = inlined_call_operand.vmem [shape: f32[2,1,48], index: 3, kind: output, shape index: {}]
  %s4 = sld [smem:[#allocation0]]
  $region61: #{image_only_forward.2} parent=0
    _
  %s6 = ssub.s32 1, %s4
  %s7 = scalar_select 0, %s6, %s4
  $region1: #{image_only_forward.2} parent=0
    #allocation2 [shape = 'u8[8192]{0}', space=vmem, size = 0x2000, scoped, tag = 'input window, operand 1, single buffered']
    #allocation3 [shape = 's32[2]{0}', space=sflag, size = 0x8, scoped, tag = 'scoped memory for image_only_forward.2']
    #allocation4 [shape = 'u8[512]{0}', space=vmem, size = 0x400, scoped, tag = 'input window, operand 2, single buffered']
    #allocation5 [shape = 's32[1]{0}', space=sflag, size = 0x4, scoped, tag = 'scoped memory for image_only_forward.2']
    %8 = vsyncpa [#allocation3], 0
    %9 = vsyncpa [#allocation5], 0
    loop: start=0, step=1, limit=4
    $region2: #{image_only_forward.2} parent=1 // loop_pre_header
      _
    $region3: #{image_only_forward.2} parent=1 // loop_header
      %s11 = sphi 0, %s15
      %p12 = scmp.ge.s32.totalorder %s11, 4
      %s18 = sphi 0, %s30
      %s19 = sphi 0, %s26
      %s20 = sphi 0, %s18
      %s21 = sphi 0, %s19
      %s22 = sphi 0, %s20
      %s23 = sphi 0, %s21
      %s35 = sphi 0, %s37
      %s38 = sphi 0, %s35
      %s39 = sphi 0, %s38
      %s55 = sphi 0, %s39
      %s59 = sphi 0, %s59
      %s61 = sphi 0, %s59
      %s62 = sphi 0, %s61
      %s76 = sphi 0, %s62
      %s80 = sphi 0, %s80
      %s82 = sphi 0, %s80
      %s83 = sphi 0, %s82
      %s97 = sphi 0, %s83
      %s103 = sphi 0, %s105
      %s106 = sphi 0, %s103
      %s107 = sphi 0, %s106
      %s123 = sphi 0, %s107
    $region4: #{image_only_forward.2} parent=1 // loop_header_branch
      %14 = sbr.rel (%p12) target = $region8
    $region5: #{image_only_forward.2} parent=1 // loop_body
      %s16 = ssub.s32 %s11, 1
      %s17 = ssub.s32 %s11, 2
      %s24 = sadd.s32 1, %s19
      %p25 = scmp.ge.s32.totalorder %s24, 1
      %s26 = scalar_select %p25, 0, %s24
      %s27 = sadd.s32 1, %s18
      %s28 = scalar_select %p25, %s27, %s18
      %p29 = scmp.ge.s32.totalorder %s28, 2
      %s30 = scalar_select %p29, 0, %s28
      %s31 = ssub.s32 %s18, %s30
      %s32 = ssub.s32 %s19, %s26
      %s33 = sor.u32 %s31, %s32
      %p34 = scmp.eq.s32.totalorder %s33, 0
      %s36 = sadd.s32 %s35, 1
      %s37 = scalar_select %p34, %s35, %s36
      %p40 = pneg %p34
      %p41 = scmp.eq.s32.totalorder %s11, 1
      %p42 = por %p40, %p41
      %p43 = scmp.ne.s32.totalorder %s35, %s38
      %p44 = scmp.eq.s32.totalorder %s11, 0
      %p45 = por %p43, %p44
      %p46 = scmp.ne.s32.totalorder %s35, %s38
      %p47 = scmp.eq.s32.totalorder %s16, 1
      %p48 = por %p46, %p47
      %p49 = scmp.ne.s32.totalorder %s38, %s39
      %p50 = scmp.eq.s32.totalorder %s16, 0
      %p51 = por %p49, %p50
      %p52 = scmp.ne.s32.totalorder %s38, %s39
      %p53 = scmp.eq.s32.totalorder %s17, 1
      %p54 = por %p52, %p53
      %p56 = scmp.ne.s32.totalorder %s39, %s55
      %p57 = scmp.eq.s32.totalorder %s17, 0
      %p58 = por %p56, %p57
      %s60 = sadd.s32 %s59, 1
      %p63 = scmp.eq.s32.totalorder %s11, 1
      %p64 = scmp.ne.s32.totalorder %s59, %s61
      %p65 = scmp.eq.s32.totalorder %s11, 0
      %p66 = por %p64, %p65
      %p67 = scmp.ne.s32.totalorder %s59, %s61
      %p68 = scmp.eq.s32.totalorder %s16, 1
      %p69 = por %p67, %p68
      %p70 = scmp.ne.s32.totalorder %s61, %s62
      %p71 = scmp.eq.s32.totalorder %s16, 0
      %p72 = por %p70, %p71
      %p73 = scmp.ne.s32.totalorder %s61, %s62
      %p74 = scmp.eq.s32.totalorder %s17, 1
      %p75 = por %p73, %p74
      %p77 = scmp.ne.s32.totalorder %s62, %s76
      %p78 = scmp.eq.s32.totalorder %s17, 0
      %p79 = por %p77, %p78
      %s81 = sadd.s32 %s80, 1
      %p84 = scmp.eq.s32.totalorder %s11, 1
      %p85 = scmp.ne.s32.totalorder %s80, %s82
      %p86 = scmp.eq.s32.totalorder %s11, 0
      %p87 = por %p85, %p86
      %p88 = scmp.ne.s32.totalorder %s80, %s82
      %p89 = scmp.eq.s32.totalorder %s16, 1
      %p90 = por %p88, %p89
      %p91 = scmp.ne.s32.totalorder %s82, %s83
      %p92 = scmp.eq.s32.totalorder %s16, 0
      %p93 = por %p91, %p92
      %p94 = scmp.ne.s32.totalorder %s82, %s83
      %p95 = scmp.eq.s32.totalorder %s17, 1
      %p96 = por %p94, %p95
      %p98 = scmp.ne.s32.totalorder %s83, %s97
      %p99 = scmp.eq.s32.totalorder %s17, 0
      %p100 = por %p98, %p99
      %s101 = ssub.s32 %s18, %s30
      %p102 = scmp.eq.s32.totalorder %s101, 0
      %s104 = sadd.s32 %s103, 1
      %s105 = scalar_select %p102, %s103, %s104
      %p108 = pneg %p102
      %p109 = scmp.eq.s32.totalorder %s11, 1
      %p110 = por %p108, %p109
      %p111 = scmp.ne.s32.totalorder %s103, %s106
      %p112 = scmp.eq.s32.totalorder %s11, 0
      %p113 = por %p111, %p112
      %p114 = scmp.ne.s32.totalorder %s103, %s106
      %p115 = scmp.eq.s32.totalorder %s16, 1
      %p116 = por %p114, %p115
      %p117 = scmp.ne.s32.totalorder %s106, %s107
      %p118 = scmp.eq.s32.totalorder %s16, 0
      %p119 = por %p117, %p118
      %p120 = scmp.ne.s32.totalorder %s106, %s107
      %p121 = scmp.eq.s32.totalorder %s17, 1
      %p122 = por %p120, %p121
      %p124 = scmp.ne.s32.totalorder %s107, %s123
      %p125 = scmp.eq.s32.totalorder %s17, 0
      %p126 = por %p124, %p125
      %p127 = scmp.le.s32.totalorder 1, %s11
      %p128 = scmp.lt.s32.totalorder %s11, 3
      %p129 = pnand %p127, %p128
      %p130 = pneg %p129
      // Predicated region
      $region9: #{image_only_forward.2} parent=5 // pred_check
        _
      $region10: #{image_only_forward.2} parent=5 // pred_check_branch
        %132 = sbr.rel (%p129) target = $region12
      $region11: #{image_only_forward.2} parent=5 // pred_region
        %s133 = ssub.s32 %s11, 1
        // Predicated region
        $region13: #{image_only_forward.2} parent=11 // pred_check
          %p134 = pneg %p72
        $region14: #{image_only_forward.2} parent=11 // pred_check_branch
          %136 = sbr.rel (%p134) target = $region16
        $region15: #{image_only_forward.2} parent=11 // pred_region
          %138 = vsyncadd [#allocation3], 0
          %s139 = sshll.u32 %s1, 4
          %s140 = int_to_ptr.hbm [resolvable:$true] %s139
          %s141 = sshll.u32 [#allocation2], 4
          %s142 = int_to_ptr.vmem [resolvable:$true] %s141
          %147 = dma.hbm_to_vmem [thread:$0]  %s140, 256, %s142, [#allocation3], 64, 64, 4
        $region16: #{image_only_forward.2} parent=11 // pred_fallthru
          _
        // Predicated region
        $region17: #{image_only_forward.2} parent=11 // pred_check
          %p148 = pneg %p93
        $region18: #{image_only_forward.2} parent=11 // pred_check_branch
          %150 = sbr.rel (%p148) target = $region20
        $region19: #{image_only_forward.2} parent=11 // pred_region
          %152 = vsyncadd [#allocation5], 0
          %s154 = sshll.u32 %s2, 4
          %s155 = int_to_ptr.hbm [resolvable:$true] %s154
          %s156 = sshll.u32 [#allocation4], 4
          %s157 = int_to_ptr.vmem [resolvable:$true] %s156
          %159 = dma.hbm_to_vmem [thread:$0]  %s155, 16, %s157, [#allocation5]
        $region20: #{image_only_forward.2} parent=11 // pred_fallthru
          _
      $region12: #{image_only_forward.2} parent=5 // pred_fallthru
        _
      %p160 = scmp.lt.s32.totalorder %s11, 2
      // Predicated region
      $region21: #{image_only_forward.2} parent=5 // pred_check
        %p161 = pneg %p160
      $region22: #{image_only_forward.2} parent=5 // pred_check_branch
        %163 = sbr.rel (%p161) target = $region24
      $region23: #{image_only_forward.2} parent=5 // pred_region
        // Predicated region
        $region25: #{image_only_forward.2} parent=23 // pred_check
          %p164 = pneg %p45
        $region26: #{image_only_forward.2} parent=23 // pred_check_branch
          %166 = sbr.rel (%p164) target = $region28
        $region27: #{image_only_forward.2} parent=23 // pred_region
          %s167 = smul.u32 32, %s19
          %p168 = scmp.lt.s32.totalorder %s18, 1
          %s169 = scalar_select %p168, %s18, 1
          %p170 = scmp.lt.s32.totalorder %s167, 31
          %s171 = scalar_select %p170, %s167, 31
          %s172 = smul.addr %s169, 32
          %s173 = sadd.s32 %s171, %s172
          %s174 = smul.addr %s173, 4
          %s175 = scalar_lea.vmem %s0, %s174
          %s176 = smul.u32 32, %s19
        $region28: #{image_only_forward.2} parent=23 // pred_fallthru
          _
      $region24: #{image_only_forward.2} parent=5 // pred_fallthru
        _
      %p177 = scmp.le.s32.totalorder 1, %s11
      %p178 = scmp.lt.s32.totalorder %s11, 3
      %p179 = pnand %p177, %p178
      %p180 = pneg %p179
      // Predicated region
      $region29: #{image_only_forward.2} parent=5 // pred_check
        _
      $region30: #{image_only_forward.2} parent=5 // pred_check_branch
        %182 = sbr.rel (%p179) target = $region32
      $region31: #{image_only_forward.2} parent=5 // pred_region
        %s183 = ssub.s32 %s11, 1
        // Predicated region
        $region33: #{image_only_forward.2} parent=31 // pred_check
          %p184 = pneg %p72
        $region34: #{image_only_forward.2} parent=31 // pred_check_branch
          %186 = sbr.rel (%p184) target = $region36
        $region35: #{image_only_forward.2} parent=31 // pred_region
          %188 = dma.done [#allocation3], 256
        $region36: #{image_only_forward.2} parent=31 // pred_fallthru
          _
        // Predicated region
        $region37: #{image_only_forward.2} parent=31 // pred_check
          %p189 = pneg %p93
        $region38: #{image_only_forward.2} parent=31 // pred_check_branch
          %191 = sbr.rel (%p189) target = $region40
        $region39: #{image_only_forward.2} parent=31 // pred_region
          %193 = dma.done [#allocation5], 16
        $region40: #{image_only_forward.2} parent=31 // pred_fallthru
          _
        %s194 = smul.u32 32, %s21
        %p195 = scmp.lt.s32.totalorder %s20, 1
        %s196 = scalar_select %p195, %s20, 1
        %p197 = scmp.lt.s32.totalorder %s194, 31
        %s198 = scalar_select %p197, %s194, 31
        %s199 = smul.addr %s196, 32
        %s200 = sadd.s32 %s198, %s199
        %s201 = smul.addr %s200, 4
        %s202 = scalar_lea.vmem %s0, %s201
        %p203 = pneg %p51
        %p204 = pneg %p48
        %p205 = pneg %p72
        %p206 = pneg %p69
        %p207 = pneg %p93
        %p208 = pneg %p90
        %p209 = pneg %p119
        %p210 = pneg %p116
        %p211 = scmp.lt.s32.totalorder %s20, 1
        %s212 = scalar_select %p211, %s20, 1
        %s213 = scalar_lea.vmem %s3, %s212
        %s214 = smul.u32 32, %s21
        %p215 = scmp.lt.s32.totalorder %s20, 1
        %s216 = scalar_select %p215, %s20, 1
        %p217 = scmp.lt.s32.totalorder %s214, 31
        %s218 = scalar_select %p217, %s214, 31
        %s219 = smul.addr %s216, 32
        %s220 = sadd.s32 %s218, %s219
        %s221 = smul.addr %s220, 4
        %s222 = scalar_lea.vmem %s0, %s221
        %s223 = smul.u32 32, %s21
        %p224 = scmp.lt.s32.totalorder %s20, 1
        %s225 = scalar_select %p224, %s20, 1
        %s226 = scalar_lea.vmem %s3, %s225
        %p228 = scmp.eq.s32.totalorder %s21, 0
        // Predicated region
        $region41: #{image_only_forward.2} parent=31 // pred_check
          %p229 = pneg %p228
        $region42: #{image_only_forward.2} parent=31 // pred_check_branch
          %231 = sbr.rel (%p229) target = $region44
        $region43: #{image_only_forward.2} parent=31 // pred_region
          %vm232 = vcmask 385024
          %233 = vst.msk [vmem:[%s226] sm:$0x1] %vm232, 0.0
        $region44: #{image_only_forward.2} parent=31 // pred_fallthru
          _
        %v234 = vld [vmem:[%s222] sm:$0xf]
        %v235 = vld [vmem:[%s222 + $0x4] sm:$0xf]
        %v236 = vld [vmem:[%s222 + $0x8] sm:$0xf]
        %v237 = vld [vmem:[%s222 + $0xc] sm:$0xf]
        %v238 = vld [vmem:[%s222 + $0x10] sm:$0xf]
        %v239 = vld [vmem:[%s222 + $0x14] sm:$0xf]
        %v240 = vld [vmem:[%s222 + $0x18] sm:$0xf]
        %v241 = vld [vmem:[%s222 + $0x1c] sm:$0xf]
        %v242 = vld [vmem:[%s222 + $0x20] sm:$0xf]
        %v243 = vld [vmem:[%s222 + $0x24] sm:$0xf]
        %v244 = vld [vmem:[%s222 + $0x28] sm:$0xf]
        %v245 = vld [vmem:[%s222 + $0x2c] sm:$0xf]
        %v246 = vld [vmem:[%s222 + $0x30] sm:$0xf]
        %v247 = vld [vmem:[%s222 + $0x34] sm:$0xf]
        %v248 = vld [vmem:[%s222 + $0x38] sm:$0xf]
        %v249 = vld [vmem:[%s222 + $0x3c] sm:$0xf]
        %v250 = vld [vmem:[%s222 + $0x40] sm:$0xf]
        %v251 = vld [vmem:[%s222 + $0x44] sm:$0xf]
        %v252 = vld [vmem:[%s222 + $0x48] sm:$0xf]
        %v253 = vld [vmem:[%s222 + $0x4c] sm:$0xf]
        %v254 = vld [vmem:[%s222 + $0x50] sm:$0xf]
        %v255 = vld [vmem:[%s222 + $0x54] sm:$0xf]
        %v256 = vld [vmem:[%s222 + $0x58] sm:$0xf]
        %v257 = vld [vmem:[%s222 + $0x5c] sm:$0xf]
        %v258 = vld [vmem:[%s222 + $0x60] sm:$0xf]
        %v259 = vld [vmem:[%s222 + $0x64] sm:$0xf]
        %v260 = vld [vmem:[%s222 + $0x68] sm:$0xf]
        %v261 = vld [vmem:[%s222 + $0x6c] sm:$0xf]
        %v262 = vld [vmem:[%s222 + $0x70] sm:$0xf]
        %v263 = vld [vmem:[%s222 + $0x74] sm:$0xf]
        %v264 = vld [vmem:[%s222 + $0x78] sm:$0xf]
        %v265 = vld [vmem:[%s222 + $0x7c] sm:$0xf]
        %v266 = vld [vmem:[#allocation2] sm:$0xf]
        %v267 = vld [vmem:[#allocation2 + $0x4] sm:$0xf]
        %v268 = vld [vmem:[#allocation2 + $0x8] sm:$0xf]
        %v269 = vld [vmem:[#allocation2 + $0xc] sm:$0x3]
        %v270 = vld [vmem:[#allocation4] sm:$0x1]
        %v272 = vperm.slane %v270, 0
        %v306 = vunpack.c.l.b16 %v234
        %v307 = vunpack.c.l.b16 %v235
        %v308 = vunpack.c.l.b16 %v236
        %v309 = vunpack.c.l.b16 %v237
        %v310 = vunpack.c.l.b16 %v238
        %v311 = vunpack.c.l.b16 %v239
        %v312 = vunpack.c.l.b16 %v240
        %v313 = vunpack.c.l.b16 %v241
        %v314 = vunpack.c.l.b16 %v242
        %v315 = vunpack.c.l.b16 %v243
        %v316 = vunpack.c.l.b16 %v244
        %v317 = vunpack.c.l.b16 %v245
        %v318 = vunpack.c.l.b16 %v246
        %v319 = vunpack.c.l.b16 %v247
        %v320 = vunpack.c.l.b16 %v248
        %v321 = vunpack.c.l.b16 %v249
        %v322 = vunpack.c.l.b16 %v250
        %v323 = vunpack.c.l.b16 %v251
        %v324 = vunpack.c.l.b16 %v252
        %v325 = vunpack.c.l.b16 %v253
        %v326 = vunpack.c.l.b16 %v254
        %v327 = vunpack.c.l.b16 %v255
        %v328 = vunpack.c.l.b16 %v256
        %v329 = vunpack.c.l.b16 %v257
        %v330 = vunpack.c.l.b16 %v258
        %v331 = vunpack.c.l.b16 %v259
        %v332 = vunpack.c.l.b16 %v260
        %v333 = vunpack.c.l.b16 %v261
        %v334 = vunpack.c.l.b16 %v262
        %v335 = vunpack.c.l.b16 %v263
        %v336 = vunpack.c.l.b16 %v264
        %v337 = vunpack.c.l.b16 %v265
        %v338 = vpack.c.b16 %v307, %v306
        %v339 = vpack.c.b16 %v309, %v308
        %v340 = vpack.c.b16 %v311, %v310
        %v341 = vpack.c.b16 %v313, %v312
        %v342 = vpack.c.b16 %v315, %v314
        %v343 = vpack.c.b16 %v317, %v316
        %v344 = vpack.c.b16 %v319, %v318
        %v345 = vpack.c.b16 %v321, %v320
        %v346 = vpack.c.b16 %v323, %v322
        %v347 = vpack.c.b16 %v325, %v324
        %v348 = vpack.c.b16 %v327, %v326
        %v349 = vpack.c.b16 %v329, %v328
        %v350 = vpack.c.b16 %v331, %v330
        %v351 = vpack.c.b16 %v333, %v332
        %v352 = vpack.c.b16 %v335, %v334
        %v353 = vpack.c.b16 %v337, %v336
        %v358 = vunpack.c.l.b16 %v266
        %v359 = vunpack.c.l.b16 %v267
        %v360 = vunpack.c.l.b16 %v268
        %v361 = vunpack.c.l.b16 %v269
        %v362 = vpack.c.b16 %v359, %v358
        %v363 = vpack.c.b16 %v361, %v360
        %vm365 = vcmask 220160
        %v367 = vsel %vm365, %v338, 0
        %v370 = vsel %vm365, %v339, 0
        %v373 = vsel %vm365, %v340, 0
        %v376 = vsel %vm365, %v341, 0
        %v379 = vsel %vm365, %v342, 0
        %v382 = vsel %vm365, %v343, 0
        %v385 = vsel %vm365, %v344, 0
        %v388 = vsel %vm365, %v345, 0
        %v391 = vsel %vm365, %v346, 0
        %v394 = vsel %vm365, %v347, 0
        %v397 = vsel %vm365, %v348, 0
        %v400 = vsel %vm365, %v349, 0
        %v403 = vsel %vm365, %v350, 0
        %v406 = vsel %vm365, %v351, 0
        %v409 = vsel %vm365, %v352, 0
        %v412 = vsel %vm365, %v353, 0
        %vm414 = vcmask 1044480
        %vm415 = vcmask 1045504
        %v416 = vsel %vm414, 4294967295, 65535
        %v417 = vsel %vm415, %v416, 0
        %v419 = vand.u32 %v363, %v417
        %421 = vmatpush.bf16.msra.mxu0 0
        %422 = vmatpush.bf16.msra.mxu0 0
        %423 = vmatpush.bf16.msra.mxu0 0
        %424 = vmatpush.bf16.msra.mxu0 0
        %425 = vmatpush.bf16.msra.mxu0 0
        %426 = vmatpush.bf16.msra.mxu0 0
        %427 = vmatpush.bf16.msra.mxu0 %v419
        %428 = vmatpush.bf16.msra.mxu0 %v362
        %429 = vmatmul.bf16.gmra.mxu0 %v367
        %v430 = vpop.f32.mrf.mxu0
        %v431 = vadd.f32 %v272, %v430
        %v432 = vpop.f32.mrf.mxu0
        %v433 = vadd.f32 %v272, %v432
        %434 = vmatmul.bf16.gmra.mxu0 %v370
        %v435 = vpop.f32.mrf.mxu0
        %v436 = vadd.f32 %v272, %v435
        %v437 = vpop.f32.mrf.mxu0
        %v438 = vadd.f32 %v272, %v437
        %439 = vmatmul.bf16.gmra.mxu0 %v373
        %v440 = vpop.f32.mrf.mxu0
        %v441 = vadd.f32 %v272, %v440
        %v442 = vpop.f32.mrf.mxu0
        %v443 = vadd.f32 %v272, %v442
        %444 = vmatmul.bf16.gmra.mxu0 %v376
        %v445 = vpop.f32.mrf.mxu0
        %v446 = vadd.f32 %v272, %v445
        %v447 = vpop.f32.mrf.mxu0
        %v448 = vadd.f32 %v272, %v447
        %449 = vmatmul.bf16.gmra.mxu0 %v379
        %v450 = vpop.f32.mrf.mxu0
        %v451 = vadd.f32 %v272, %v450
        %v452 = vpop.f32.mrf.mxu0
        %v453 = vadd.f32 %v272, %v452
        %454 = vmatmul.bf16.gmra.mxu0 %v382
        %v455 = vpop.f32.mrf.mxu0
        %v456 = vadd.f32 %v272, %v455
        %v457 = vpop.f32.mrf.mxu0
        %v458 = vadd.f32 %v272, %v457
        %459 = vmatmul.bf16.gmra.mxu0 %v385
        %v460 = vpop.f32.mrf.mxu0
        %v461 = vadd.f32 %v272, %v460
        %v462 = vpop.f32.mrf.mxu0
        %v463 = vadd.f32 %v272, %v462
        %464 = vmatmul.bf16.gmra.mxu0 %v388
        %v465 = vpop.f32.mrf.mxu0
        %v466 = vadd.f32 %v272, %v465
        %v467 = vpop.f32.mrf.mxu0
        %v468 = vadd.f32 %v272, %v467
        %469 = vmatmul.bf16.gmra.mxu0 %v391
        %v470 = vpop.f32.mrf.mxu0
        %v471 = vadd.f32 %v272, %v470
        %v472 = vpop.f32.mrf.mxu0
        %v473 = vadd.f32 %v272, %v472
        %474 = vmatmul.bf16.gmra.mxu0 %v394
        %v475 = vpop.f32.mrf.mxu0
        %v476 = vadd.f32 %v272, %v475
        %v477 = vpop.f32.mrf.mxu0
        %v478 = vadd.f32 %v272, %v477
        %479 = vmatmul.bf16.gmra.mxu0 %v397
        %v480 = vpop.f32.mrf.mxu0
        %v481 = vadd.f32 %v272, %v480
        %v482 = vpop.f32.mrf.mxu0
        %v483 = vadd.f32 %v272, %v482
        %484 = vmatmul.bf16.gmra.mxu0 %v400
        %v485 = vpop.f32.mrf.mxu0
        %v486 = vadd.f32 %v272, %v485
        %v487 = vpop.f32.mrf.mxu0
        %v488 = vadd.f32 %v272, %v487
        %489 = vmatmul.bf16.gmra.mxu0 %v403
        %v490 = vpop.f32.mrf.mxu0
        %v491 = vadd.f32 %v272, %v490
        %v492 = vpop.f32.mrf.mxu0
        %v493 = vadd.f32 %v272, %v492
        %494 = vmatmul.bf16.gmra.mxu0 %v406
        %v495 = vpop.f32.mrf.mxu0
        %v496 = vadd.f32 %v272, %v495
        %v497 = vpop.f32.mrf.mxu0
        %v498 = vadd.f32 %v272, %v497
        %499 = vmatmul.bf16.gmra.mxu0 %v409
        %v500 = vpop.f32.mrf.mxu0
        %v501 = vadd.f32 %v272, %v500
        %v502 = vpop.f32.mrf.mxu0
        %v503 = vadd.f32 %v272, %v502
        %504 = vmatmul.bf16.gmra.mxu0 %v412
        %v505 = vpop.f32.mrf.mxu0
        %v506 = vadd.f32 %v272, %v505
        %v507 = vpop.f32.mrf.mxu0
        %v508 = vadd.f32 %v272, %v507
        %509 = vdwg.mxu0
        %v510 = vxor.u32 %v431, 2147483648
        %v511 = vxor.u32 %v433, 2147483648
        %v512 = vxor.u32 %v436, 2147483648
        %v513 = vxor.u32 %v438, 2147483648
        %v514 = vxor.u32 %v441, 2147483648
        %v515 = vxor.u32 %v443, 2147483648
        %v516 = vxor.u32 %v446, 2147483648
        %v517 = vxor.u32 %v448, 2147483648
        %v518 = vxor.u32 %v451, 2147483648
        %v519 = vxor.u32 %v453, 2147483648
        %v520 = vxor.u32 %v456, 2147483648
        %v521 = vxor.u32 %v458, 2147483648
        %v522 = vxor.u32 %v461, 2147483648
        %v523 = vxor.u32 %v463, 2147483648
        %v524 = vxor.u32 %v466, 2147483648
        %v525 = vxor.u32 %v468, 2147483648
        %v526 = vxor.u32 %v471, 2147483648
        %v527 = vxor.u32 %v473, 2147483648
        %v528 = vxor.u32 %v476, 2147483648
        %v529 = vxor.u32 %v478, 2147483648
        %v530 = vxor.u32 %v481, 2147483648
        %v531 = vxor.u32 %v483, 2147483648
        %v532 = vxor.u32 %v486, 2147483648
        %v533 = vxor.u32 %v488, 2147483648
        %v534 = vxor.u32 %v491, 2147483648
        %v535 = vxor.u32 %v493, 2147483648
        %v536 = vxor.u32 %v496, 2147483648
        %v537 = vxor.u32 %v498, 2147483648
        %v538 = vxor.u32 %v501, 2147483648
        %v539 = vxor.u32 %v503, 2147483648
        %v540 = vxor.u32 %v506, 2147483648
        %v541 = vxor.u32 %v508, 2147483648
        %v542 = vmul.f32 %v510, 1.442695
        %v543 = vpow.pop %v542
        %v544 = vmul.f32 %v511, 1.442695
        %v545 = vpow.pop %v544
        %v546 = vmul.f32 %v512, 1.442695
        %v547 = vpow.pop %v546
        %v548 = vmul.f32 %v513, 1.442695
        %v549 = vpow.pop %v548
        %v550 = vmul.f32 %v514, 1.442695
        %v551 = vpow.pop %v550
        %v552 = vmul.f32 %v515, 1.442695
        %v553 = vpow.pop %v552
        %v554 = vmul.f32 %v516, 1.442695
        %v555 = vpow.pop %v554
        %v556 = vmul.f32 %v517, 1.442695
        %v557 = vpow.pop %v556
        %v558 = vmul.f32 %v518, 1.442695
        %v559 = vpow.pop %v558
        %v560 = vmul.f32 %v519, 1.442695
        %v561 = vpow.pop %v560
        %v562 = vmul.f32 %v520, 1.442695
        %v563 = vpow.pop %v562
        %v564 = vmul.f32 %v521, 1.442695
        %v565 = vpow.pop %v564
        %v566 = vmul.f32 %v522, 1.442695
        %v567 = vpow.pop %v566
        %v568 = vmul.f32 %v523, 1.442695
        %v569 = vpow.pop %v568
        %v570 = vmul.f32 %v524, 1.442695
        %v571 = vpow.pop %v570
        %v572 = vmul.f32 %v525, 1.442695
        %v573 = vpow.pop %v572
        %v574 = vmul.f32 %v526, 1.442695
        %v575 = vpow.pop %v574
        %v576 = vmul.f32 %v527, 1.442695
        %v577 = vpow.pop %v576
        %v578 = vmul.f32 %v528, 1.442695
        %v579 = vpow.pop %v578
        %v580 = vmul.f32 %v529, 1.442695
        %v581 = vpow.pop %v580
        %v582 = vmul.f32 %v530, 1.442695
        %v583 = vpow.pop %v582
        %v584 = vmul.f32 %v531, 1.442695
        %v585 = vpow.pop %v584
        %v586 = vmul.f32 %v532, 1.442695
        %v587 = vpow.pop %v586
        %v588 = vmul.f32 %v533, 1.442695
        %v589 = vpow.pop %v588
        %v590 = vmul.f32 %v534, 1.442695
        %v591 = vpow.pop %v590
        %v592 = vmul.f32 %v535, 1.442695
        %v593 = vpow.pop %v592
        %v594 = vmul.f32 %v536, 1.442695
        %v595 = vpow.pop %v594
        %v596 = vmul.f32 %v537, 1.442695
        %v597 = vpow.pop %v596
        %v598 = vmul.f32 %v538, 1.442695
        %v599 = vpow.pop %v598
        %v600 = vmul.f32 %v539, 1.442695
        %v601 = vpow.pop %v600
        %v602 = vmul.f32 %v540, 1.442695
        %v603 = vpow.pop %v602
        %v604 = vmul.f32 %v541, 1.442695
        %v605 = vpow.pop %v604
        %v606 = vadd.f32 %v543, 1.0
        %v607 = vadd.f32 %v545, 1.0
        %v608 = vadd.f32 %v547, 1.0
        %v609 = vadd.f32 %v549, 1.0
        %v610 = vadd.f32 %v551, 1.0
        %v611 = vadd.f32 %v553, 1.0
        %v612 = vadd.f32 %v555, 1.0
        %v613 = vadd.f32 %v557, 1.0
        %v614 = vadd.f32 %v559, 1.0
        %v615 = vadd.f32 %v561, 1.0
        %v616 = vadd.f32 %v563, 1.0
        %v617 = vadd.f32 %v565, 1.0
        %v618 = vadd.f32 %v567, 1.0
        %v619 = vadd.f32 %v569, 1.0
        %v620 = vadd.f32 %v571, 1.0
        %v621 = vadd.f32 %v573, 1.0
        %v622 = vadd.f32 %v575, 1.0
        %v623 = vadd.f32 %v577, 1.0
        %v624 = vadd.f32 %v579, 1.0
        %v625 = vadd.f32 %v581, 1.0
        %v626 = vadd.f32 %v583, 1.0
        %v627 = vadd.f32 %v585, 1.0
        %v628 = vadd.f32 %v587, 1.0
        %v629 = vadd.f32 %v589, 1.0
        %v630 = vadd.f32 %v591, 1.0
        %v631 = vadd.f32 %v593, 1.0
        %v632 = vadd.f32 %v595, 1.0
        %v633 = vadd.f32 %v597, 1.0
        %v634 = vadd.f32 %v599, 1.0
        %v635 = vadd.f32 %v601, 1.0
        %v636 = vadd.f32 %v603, 1.0
        %v637 = vadd.f32 %v605, 1.0
        %v638 = vrcp.pop %v606
        %v639 = vmul.f32 %v606, %v638
        %v640 = vsub.f32 1.0, %v639
        %v641 = vmul.f32 %v638, %v640
        %v642 = vadd.f32 %v638, %v641
        %vm643 = vweird.f32 %v606
        %vm644 = vweird.f32 %v638
        %vm645 = vmor %vm643, %vm644
        %v646 = vsel %vm645, %v638, %v642
        %v647 = vand.u32 2147483647, %v606
        %vm648 = vcmp.eq.f32.partialorder %v647, 8.507059e+37
        %v649 = vand.u32 %v606, 2147483648
        %v650 = vor.u32 1.1754944e-38, %v649
        %v651 = vsel %vm648, %v650, %v646
        %v652 = vmul.f32 1.0, %v651
        %v653 = vrcp.pop %v607
        %v654 = vmul.f32 %v607, %v653
        %v655 = vsub.f32 1.0, %v654
        %v656 = vmul.f32 %v653, %v655
        %v657 = vadd.f32 %v653, %v656
        %vm658 = vweird.f32 %v607
        %vm659 = vweird.f32 %v653
        %vm660 = vmor %vm658, %vm659
        %v661 = vsel %vm660, %v653, %v657
        %v662 = vand.u32 2147483647, %v607
        %vm663 = vcmp.eq.f32.partialorder %v662, 8.507059e+37
        %v664 = vand.u32 %v607, 2147483648
        %v665 = vor.u32 1.1754944e-38, %v664
        %v666 = vsel %vm663, %v665, %v661
        %v667 = vmul.f32 1.0, %v666
        %v668 = vrcp.pop %v608
        %v669 = vmul.f32 %v608, %v668
        %v670 = vsub.f32 1.0, %v669
        %v671 = vmul.f32 %v668, %v670
        %v672 = vadd.f32 %v668, %v671
        %vm673 = vweird.f32 %v608
        %vm674 = vweird.f32 %v668
        %vm675 = vmor %vm673, %vm674
        %v676 = vsel %vm675, %v668, %v672
        %v677 = vand.u32 2147483647, %v608
        %vm678 = vcmp.eq.f32.partialorder %v677, 8.507059e+37
        %v679 = vand.u32 %v608, 2147483648
        %v680 = vor.u32 1.1754944e-38, %v679
        %v681 = vsel %vm678, %v680, %v676
        %v682 = vmul.f32 1.0, %v681
        %v683 = vrcp.pop %v609
        %v684 = vmul.f32 %v609, %v683
        %v685 = vsub.f32 1.0, %v684
        %v686 = vmul.f32 %v683, %v685
        %v687 = vadd.f32 %v683, %v686
        %vm688 = vweird.f32 %v609
        %vm689 = vweird.f32 %v683
        %vm690 = vmor %vm688, %vm689
        %v691 = vsel %vm690, %v683, %v687
        %v692 = vand.u32 2147483647, %v609
        %vm693 = vcmp.eq.f32.partialorder %v692, 8.507059e+37
        %v694 = vand.u32 %v609, 2147483648
        %v695 = vor.u32 1.1754944e-38, %v694
        %v696 = vsel %vm693, %v695, %v691
        %v697 = vmul.f32 1.0, %v696
        %v698 = vrcp.pop %v610
        %v699 = vmul.f32 %v610, %v698
        %v700 = vsub.f32 1.0, %v699
        %v701 = vmul.f32 %v698, %v700
        %v702 = vadd.f32 %v698, %v701
        %vm703 = vweird.f32 %v610
        %vm704 = vweird.f32 %v698
        %vm705 = vmor %vm703, %vm704
        %v706 = vsel %vm705, %v698, %v702
        %v707 = vand.u32 2147483647, %v610
        %vm708 = vcmp.eq.f32.partialorder %v707, 8.507059e+37
        %v709 = vand.u32 %v610, 2147483648
        %v710 = vor.u32 1.1754944e-38, %v709
        %v711 = vsel %vm708, %v710, %v706
        %v712 = vmul.f32 1.0, %v711
        %v713 = vrcp.pop %v611
        %v714 = vmul.f32 %v611, %v713
        %v715 = vsub.f32 1.0, %v714
        %v716 = vmul.f32 %v713, %v715
        %v717 = vadd.f32 %v713, %v716
        %vm718 = vweird.f32 %v611
        %vm719 = vweird.f32 %v713
        %vm720 = vmor %vm718, %vm719
        %v721 = vsel %vm720, %v713, %v717
        %v722 = vand.u32 2147483647, %v611
        %vm723 = vcmp.eq.f32.partialorder %v722, 8.507059e+37
        %v724 = vand.u32 %v611, 2147483648
        %v725 = vor.u32 1.1754944e-38, %v724
        %v726 = vsel %vm723, %v725, %v721
        %v727 = vmul.f32 1.0, %v726
        %v728 = vrcp.pop %v612
        %v729 = vmul.f32 %v612, %v728
        %v730 = vsub.f32 1.0, %v729
        %v731 = vmul.f32 %v728, %v730
        %v732 = vadd.f32 %v728, %v731
        %vm733 = vweird.f32 %v612
        %vm734 = vweird.f32 %v728
        %vm735 = vmor %vm733, %vm734
        %v736 = vsel %vm735, %v728, %v732
        %v737 = vand.u32 2147483647, %v612
        %vm738 = vcmp.eq.f32.partialorder %v737, 8.507059e+37
        %v739 = vand.u32 %v612, 2147483648
        %v740 = vor.u32 1.1754944e-38, %v739
        %v741 = vsel %vm738, %v740, %v736
        %v742 = vmul.f32 1.0, %v741
        %v743 = vrcp.pop %v613
        %v744 = vmul.f32 %v613, %v743
        %v745 = vsub.f32 1.0, %v744
        %v746 = vmul.f32 %v743, %v745
        %v747 = vadd.f32 %v743, %v746
        %vm748 = vweird.f32 %v613
        %vm749 = vweird.f32 %v743
        %vm750 = vmor %vm748, %vm749
        %v751 = vsel %vm750, %v743, %v747
        %v752 = vand.u32 2147483647, %v613
        %vm753 = vcmp.eq.f32.partialorder %v752, 8.507059e+37
        %v754 = vand.u32 %v613, 2147483648
        %v755 = vor.u32 1.1754944e-38, %v754
        %v756 = vsel %vm753, %v755, %v751
        %v757 = vmul.f32 1.0, %v756
        %v758 = vrcp.pop %v614
        %v759 = vmul.f32 %v614, %v758
        %v760 = vsub.f32 1.0, %v759
        %v761 = vmul.f32 %v758, %v760
        %v762 = vadd.f32 %v758, %v761
        %vm763 = vweird.f32 %v614
        %vm764 = vweird.f32 %v758
        %vm765 = vmor %vm763, %vm764
        %v766 = vsel %vm765, %v758, %v762
        %v767 = vand.u32 2147483647, %v614
        %vm768 = vcmp.eq.f32.partialorder %v767, 8.507059e+37
        %v769 = vand.u32 %v614, 2147483648
        %v770 = vor.u32 1.1754944e-38, %v769
        %v771 = vsel %vm768, %v770, %v766
        %v772 = vmul.f32 1.0, %v771
        %v773 = vrcp.pop %v615
        %v774 = vmul.f32 %v615, %v773
        %v775 = vsub.f32 1.0, %v774
        %v776 = vmul.f32 %v773, %v775
        %v777 = vadd.f32 %v773, %v776
        %vm778 = vweird.f32 %v615
        %vm779 = vweird.f32 %v773
        %vm780 = vmor %vm778, %vm779
        %v781 = vsel %vm780, %v773, %v777
        %v782 = vand.u32 2147483647, %v615
        %vm783 = vcmp.eq.f32.partialorder %v782, 8.507059e+37
        %v784 = vand.u32 %v615, 2147483648
        %v785 = vor.u32 1.1754944e-38, %v784
        %v786 = vsel %vm783, %v785, %v781
        %v787 = vmul.f32 1.0, %v786
        %v788 = vrcp.pop %v616
        %v789 = vmul.f32 %v616, %v788
        %v790 = vsub.f32 1.0, %v789
        %v791 = vmul.f32 %v788, %v790
        %v792 = vadd.f32 %v788, %v791
        %vm793 = vweird.f32 %v616
        %vm794 = vweird.f32 %v788
        %vm795 = vmor %vm793, %vm794
        %v796 = vsel %vm795, %v788, %v792
        %v797 = vand.u32 2147483647, %v616
        %vm798 = vcmp.eq.f32.partialorder %v797, 8.507059e+37
        %v799 = vand.u32 %v616, 2147483648
        %v800 = vor.u32 1.1754944e-38, %v799
        %v801 = vsel %vm798, %v800, %v796
        %v802 = vmul.f32 1.0, %v801
        %v803 = vrcp.pop %v617
        %v804 = vmul.f32 %v617, %v803
        %v805 = vsub.f32 1.0, %v804
        %v806 = vmul.f32 %v803, %v805
        %v807 = vadd.f32 %v803, %v806
        %vm808 = vweird.f32 %v617
        %vm809 = vweird.f32 %v803
        %vm810 = vmor %vm808, %vm809
        %v811 = vsel %vm810, %v803, %v807
        %v812 = vand.u32 2147483647, %v617
        %vm813 = vcmp.eq.f32.partialorder %v812, 8.507059e+37
        %v814 = vand.u32 %v617, 2147483648
        %v815 = vor.u32 1.1754944e-38, %v814
        %v816 = vsel %vm813, %v815, %v811
        %v817 = vmul.f32 1.0, %v816
        %v818 = vrcp.pop %v618
        %v819 = vmul.f32 %v618, %v818
        %v820 = vsub.f32 1.0, %v819
        %v821 = vmul.f32 %v818, %v820
        %v822 = vadd.f32 %v818, %v821
        %vm823 = vweird.f32 %v618
        %vm824 = vweird.f32 %v818
        %vm825 = vmor %vm823, %vm824
        %v826 = vsel %vm825, %v818, %v822
        %v827 = vand.u32 2147483647, %v618
        %vm828 = vcmp.eq.f32.partialorder %v827, 8.507059e+37
        %v829 = vand.u32 %v618, 2147483648
        %v830 = vor.u32 1.1754944e-38, %v829
        %v831 = vsel %vm828, %v830, %v826
        %v832 = vmul.f32 1.0, %v831
        %v833 = vrcp.pop %v619
        %v834 = vmul.f32 %v619, %v833
        %v835 = vsub.f32 1.0, %v834
        %v836 = vmul.f32 %v833, %v835
        %v837 = vadd.f32 %v833, %v836
        %vm838 = vweird.f32 %v619
        %vm839 = vweird.f32 %v833
        %vm840 = vmor %vm838, %vm839
        %v841 = vsel %vm840, %v833, %v837
        %v842 = vand.u32 2147483647, %v619
        %vm843 = vcmp.eq.f32.partialorder %v842, 8.507059e+37
        %v844 = vand.u32 %v619, 2147483648
        %v845 = vor.u32 1.1754944e-38, %v844
        %v846 = vsel %vm843, %v845, %v841
        %v847 = vmul.f32 1.0, %v846
        %v848 = vrcp.pop %v620
        %v849 = vmul.f32 %v620, %v848
        %v850 = vsub.f32 1.0, %v849
        %v851 = vmul.f32 %v848, %v850
        %v852 = vadd.f32 %v848, %v851
        %vm853 = vweird.f32 %v620
        %vm854 = vweird.f32 %v848
        %vm855 = vmor %vm853, %vm854
        %v856 = vsel %vm855, %v848, %v852
        %v857 = vand.u32 2147483647, %v620
        %vm858 = vcmp.eq.f32.partialorder %v857, 8.507059e+37
        %v859 = vand.u32 %v620, 2147483648
        %v860 = vor.u32 1.1754944e-38, %v859
        %v861 = vsel %vm858, %v860, %v856
        %v862 = vmul.f32 1.0, %v861
        %v863 = vrcp.pop %v621
        %v864 = vmul.f32 %v621, %v863
        %v865 = vsub.f32 1.0, %v864
        %v866 = vmul.f32 %v863, %v865
        %v867 = vadd.f32 %v863, %v866
        %vm868 = vweird.f32 %v621
        %vm869 = vweird.f32 %v863
        %vm870 = vmor %vm868, %vm869
        %v871 = vsel %vm870, %v863, %v867
        %v872 = vand.u32 2147483647, %v621
        %vm873 = vcmp.eq.f32.partialorder %v872, 8.507059e+37
        %v874 = vand.u32 %v621, 2147483648
        %v875 = vor.u32 1.1754944e-38, %v874
        %v876 = vsel %vm873, %v875, %v871
        %v877 = vmul.f32 1.0, %v876
        %v878 = vrcp.pop %v622
        %v879 = vmul.f32 %v622, %v878
        %v880 = vsub.f32 1.0, %v879
        %v881 = vmul.f32 %v878, %v880
        %v882 = vadd.f32 %v878, %v881
        %vm883 = vweird.f32 %v622
        %vm884 = vweird.f32 %v878
        %vm885 = vmor %vm883, %vm884
        %v886 = vsel %vm885, %v878, %v882
        %v887 = vand.u32 2147483647, %v622
        %vm888 = vcmp.eq.f32.partialorder %v887, 8.507059e+37
        %v889 = vand.u32 %v622, 2147483648
        %v890 = vor.u32 1.1754944e-38, %v889
        %v891 = vsel %vm888, %v890, %v886
        %v892 = vmul.f32 1.0, %v891
        %v893 = vrcp.pop %v623
        %v894 = vmul.f32 %v623, %v893
        %v895 = vsub.f32 1.0, %v894
        %v896 = vmul.f32 %v893, %v895
        %v897 = vadd.f32 %v893, %v896
        %vm898 = vweird.f32 %v623
        %vm899 = vweird.f32 %v893
        %vm900 = vmor %vm898, %vm899
        %v901 = vsel %vm900, %v893, %v897
        %v902 = vand.u32 2147483647, %v623
        %vm903 = vcmp.eq.f32.partialorder %v902, 8.507059e+37
        %v904 = vand.u32 %v623, 2147483648
        %v905 = vor.u32 1.1754944e-38, %v904
        %v906 = vsel %vm903, %v905, %v901
        %v907 = vmul.f32 1.0, %v906
        %v908 = vrcp.pop %v624
        %v909 = vmul.f32 %v624, %v908
        %v910 = vsub.f32 1.0, %v909
        %v911 = vmul.f32 %v908, %v910
        %v912 = vadd.f32 %v908, %v911
        %vm913 = vweird.f32 %v624
        %vm914 = vweird.f32 %v908
        %vm915 = vmor %vm913, %vm914
        %v916 = vsel %vm915, %v908, %v912
        %v917 = vand.u32 2147483647, %v624
        %vm918 = vcmp.eq.f32.partialorder %v917, 8.507059e+37
        %v919 = vand.u32 %v624, 2147483648
        %v920 = vor.u32 1.1754944e-38, %v919
        %v921 = vsel %vm918, %v920, %v916
        %v922 = vmul.f32 1.0, %v921
        %v923 = vrcp.pop %v625
        %v924 = vmul.f32 %v625, %v923
        %v925 = vsub.f32 1.0, %v924
        %v926 = vmul.f32 %v923, %v925
        %v927 = vadd.f32 %v923, %v926
        %vm928 = vweird.f32 %v625
        %vm929 = vweird.f32 %v923
        %vm930 = vmor %vm928, %vm929
        %v931 = vsel %vm930, %v923, %v927
        %v932 = vand.u32 2147483647, %v625
        %vm933 = vcmp.eq.f32.partialorder %v932, 8.507059e+37
        %v934 = vand.u32 %v625, 2147483648
        %v935 = vor.u32 1.1754944e-38, %v934
        %v936 = vsel %vm933, %v935, %v931
        %v937 = vmul.f32 1.0, %v936
        %v938 = vrcp.pop %v626
        %v939 = vmul.f32 %v626, %v938
        %v940 = vsub.f32 1.0, %v939
        %v941 = vmul.f32 %v938, %v940
        %v942 = vadd.f32 %v938, %v941
        %vm943 = vweird.f32 %v626
        %vm944 = vweird.f32 %v938
        %vm945 = vmor %vm943, %vm944
        %v946 = vsel %vm945, %v938, %v942
        %v947 = vand.u32 2147483647, %v626
        %vm948 = vcmp.eq.f32.partialorder %v947, 8.507059e+37
        %v949 = vand.u32 %v626, 2147483648
        %v950 = vor.u32 1.1754944e-38, %v949
        %v951 = vsel %vm948, %v950, %v946
        %v952 = vmul.f32 1.0, %v951
        %v953 = vrcp.pop %v627
        %v954 = vmul.f32 %v627, %v953
        %v955 = vsub.f32 1.0, %v954
        %v956 = vmul.f32 %v953, %v955
        %v957 = vadd.f32 %v953, %v956
        %vm958 = vweird.f32 %v627
        %vm959 = vweird.f32 %v953
        %vm960 = vmor %vm958, %vm959
        %v961 = vsel %vm960, %v953, %v957
        %v962 = vand.u32 2147483647, %v627
        %vm963 = vcmp.eq.f32.partialorder %v962, 8.507059e+37
        %v964 = vand.u32 %v627, 2147483648
        %v965 = vor.u32 1.1754944e-38, %v964
        %v966 = vsel %vm963, %v965, %v961
        %v967 = vmul.f32 1.0, %v966
        %v968 = vrcp.pop %v628
        %v969 = vmul.f32 %v628, %v968
        %v970 = vsub.f32 1.0, %v969
        %v971 = vmul.f32 %v968, %v970
        %v972 = vadd.f32 %v968, %v971
        %vm973 = vweird.f32 %v628
        %vm974 = vweird.f32 %v968
        %vm975 = vmor %vm973, %vm974
        %v976 = vsel %vm975, %v968, %v972
        %v977 = vand.u32 2147483647, %v628
        %vm978 = vcmp.eq.f32.partialorder %v977, 8.507059e+37
        %v979 = vand.u32 %v628, 2147483648
        %v980 = vor.u32 1.1754944e-38, %v979
        %v981 = vsel %vm978, %v980, %v976
        %v982 = vmul.f32 1.0, %v981
        %v983 = vrcp.pop %v629
        %v984 = vmul.f32 %v629, %v983
        %v985 = vsub.f32 1.0, %v984
        %v986 = vmul.f32 %v983, %v985
        %v987 = vadd.f32 %v983, %v986
        %vm988 = vweird.f32 %v629
        %vm989 = vweird.f32 %v983
        %vm990 = vmor %vm988, %vm989
        %v991 = vsel %vm990, %v983, %v987
        %v992 = vand.u32 2147483647, %v629
        %vm993 = vcmp.eq.f32.partialorder %v992, 8.507059e+37
        %v994 = vand.u32 %v629, 2147483648
        %v995 = vor.u32 1.1754944e-38, %v994
        %v996 = vsel %vm993, %v995, %v991
        %v997 = vmul.f32 1.0, %v996
        %v998 = vrcp.pop %v630
        %v999 = vmul.f32 %v630, %v998
        %v1000 = vsub.f32 1.0, %v999
        %v1001 = vmul.f32 %v998, %v1000
        %v1002 = vadd.f32 %v998, %v1001
        %vm1003 = vweird.f32 %v630
        %vm1004 = vweird.f32 %v998
        %vm1005 = vmor %vm1003, %vm1004
        %v1006 = vsel %vm1005, %v998, %v1002
        %v1007 = vand.u32 2147483647, %v630
        %vm1008 = vcmp.eq.f32.partialorder %v1007, 8.507059e+37
        %v1009 = vand.u32 %v630, 2147483648
        %v1010 = vor.u32 1.1754944e-38, %v1009
        %v1011 = vsel %vm1008, %v1010, %v1006
        %v1012 = vmul.f32 1.0, %v1011
        %v1013 = vrcp.pop %v631
        %v1014 = vmul.f32 %v631, %v1013
        %v1015 = vsub.f32 1.0, %v1014
        %v1016 = vmul.f32 %v1013, %v1015
        %v1017 = vadd.f32 %v1013, %v1016
        %vm1018 = vweird.f32 %v631
        %vm1019 = vweird.f32 %v1013
        %vm1020 = vmor %vm1018, %vm1019
        %v1021 = vsel %vm1020, %v1013, %v1017
        %v1022 = vand.u32 2147483647, %v631
        %vm1023 = vcmp.eq.f32.partialorder %v1022, 8.507059e+37
        %v1024 = vand.u32 %v631, 2147483648
        %v1025 = vor.u32 1.1754944e-38, %v1024
        %v1026 = vsel %vm1023, %v1025, %v1021
        %v1027 = vmul.f32 1.0, %v1026
        %v1028 = vrcp.pop %v632
        %v1029 = vmul.f32 %v632, %v1028
        %v1030 = vsub.f32 1.0, %v1029
        %v1031 = vmul.f32 %v1028, %v1030
        %v1032 = vadd.f32 %v1028, %v1031
        %vm1033 = vweird.f32 %v632
        %vm1034 = vweird.f32 %v1028
        %vm1035 = vmor %vm1033, %vm1034
        %v1036 = vsel %vm1035, %v1028, %v1032
        %v1037 = vand.u32 2147483647, %v632
        %vm1038 = vcmp.eq.f32.partialorder %v1037, 8.507059e+37
        %v1039 = vand.u32 %v632, 2147483648
        %v1040 = vor.u32 1.1754944e-38, %v1039
        %v1041 = vsel %vm1038, %v1040, %v1036
        %v1042 = vmul.f32 1.0, %v1041
        %v1043 = vrcp.pop %v633
        %v1044 = vmul.f32 %v633, %v1043
        %v1045 = vsub.f32 1.0, %v1044
        %v1046 = vmul.f32 %v1043, %v1045
        %v1047 = vadd.f32 %v1043, %v1046
        %vm1048 = vweird.f32 %v633
        %vm1049 = vweird.f32 %v1043
        %vm1050 = vmor %vm1048, %vm1049
        %v1051 = vsel %vm1050, %v1043, %v1047
        %v1052 = vand.u32 2147483647, %v633
        %vm1053 = vcmp.eq.f32.partialorder %v1052, 8.507059e+37
        %v1054 = vand.u32 %v633, 2147483648
        %v1055 = vor.u32 1.1754944e-38, %v1054
        %v1056 = vsel %vm1053, %v1055, %v1051
        %v1057 = vmul.f32 1.0, %v1056
        %v1058 = vrcp.pop %v634
        %v1059 = vmul.f32 %v634, %v1058
        %v1060 = vsub.f32 1.0, %v1059
        %v1061 = vmul.f32 %v1058, %v1060
        %v1062 = vadd.f32 %v1058, %v1061
        %vm1063 = vweird.f32 %v634
        %vm1064 = vweird.f32 %v1058
        %vm1065 = vmor %vm1063, %vm1064
        %v1066 = vsel %vm1065, %v1058, %v1062
        %v1067 = vand.u32 2147483647, %v634
        %vm1068 = vcmp.eq.f32.partialorder %v1067, 8.507059e+37
        %v1069 = vand.u32 %v634, 2147483648
        %v1070 = vor.u32 1.1754944e-38, %v1069
        %v1071 = vsel %vm1068, %v1070, %v1066
        %v1072 = vmul.f32 1.0, %v1071
        %v1073 = vrcp.pop %v635
        %v1074 = vmul.f32 %v635, %v1073
        %v1075 = vsub.f32 1.0, %v1074
        %v1076 = vmul.f32 %v1073, %v1075
        %v1077 = vadd.f32 %v1073, %v1076
        %vm1078 = vweird.f32 %v635
        %vm1079 = vweird.f32 %v1073
        %vm1080 = vmor %vm1078, %vm1079
        %v1081 = vsel %vm1080, %v1073, %v1077
        %v1082 = vand.u32 2147483647, %v635
        %vm1083 = vcmp.eq.f32.partialorder %v1082, 8.507059e+37
        %v1084 = vand.u32 %v635, 2147483648
        %v1085 = vor.u32 1.1754944e-38, %v1084
        %v1086 = vsel %vm1083, %v1085, %v1081
        %v1087 = vmul.f32 1.0, %v1086
        %v1088 = vrcp.pop %v636
        %v1089 = vmul.f32 %v636, %v1088
        %v1090 = vsub.f32 1.0, %v1089
        %v1091 = vmul.f32 %v1088, %v1090
        %v1092 = vadd.f32 %v1088, %v1091
        %vm1093 = vweird.f32 %v636
        %vm1094 = vweird.f32 %v1088
        %vm1095 = vmor %vm1093, %vm1094
        %v1096 = vsel %vm1095, %v1088, %v1092
        %v1097 = vand.u32 2147483647, %v636
        %vm1098 = vcmp.eq.f32.partialorder %v1097, 8.507059e+37
        %v1099 = vand.u32 %v636, 2147483648
        %v1100 = vor.u32 1.1754944e-38, %v1099
        %v1101 = vsel %vm1098, %v1100, %v1096
        %v1102 = vmul.f32 1.0, %v1101
        %v1103 = vrcp.pop %v637
        %v1104 = vmul.f32 %v637, %v1103
        %v1105 = vsub.f32 1.0, %v1104
        %v1106 = vmul.f32 %v1103, %v1105
        %v1107 = vadd.f32 %v1103, %v1106
        %vm1108 = vweird.f32 %v637
        %vm1109 = vweird.f32 %v1103
        %vm1110 = vmor %vm1108, %vm1109
        %v1111 = vsel %vm1110, %v1103, %v1107
        %v1112 = vand.u32 2147483647, %v637
        %vm1113 = vcmp.eq.f32.partialorder %v1112, 8.507059e+37
        %v1114 = vand.u32 %v637, 2147483648
        %v1115 = vor.u32 1.1754944e-38, %v1114
        %v1116 = vsel %vm1113, %v1115, %v1111
        %v1117 = vmul.f32 1.0, %v1116
        %v1118 = vmul.f32 %v431, %v652
        %v1119 = vmul.f32 %v433, %v667
        %v1120 = vmul.f32 %v436, %v682
        %v1121 = vmul.f32 %v438, %v697
        %v1122 = vmul.f32 %v441, %v712
        %v1123 = vmul.f32 %v443, %v727
        %v1124 = vmul.f32 %v446, %v742
        %v1125 = vmul.f32 %v448, %v757
        %v1126 = vmul.f32 %v451, %v772
        %v1127 = vmul.f32 %v453, %v787
        %v1128 = vmul.f32 %v456, %v802
        %v1129 = vmul.f32 %v458, %v817
        %v1130 = vmul.f32 %v461, %v832
        %v1131 = vmul.f32 %v463, %v847
        %v1132 = vmul.f32 %v466, %v862
        %v1133 = vmul.f32 %v468, %v877
        %v1134 = vmul.f32 %v471, %v892
        %v1135 = vmul.f32 %v473, %v907
        %v1136 = vmul.f32 %v476, %v922
        %v1137 = vmul.f32 %v478, %v937
        %v1138 = vmul.f32 %v481, %v952
        %v1139 = vmul.f32 %v483, %v967
        %v1140 = vmul.f32 %v486, %v982
        %v1141 = vmul.f32 %v488, %v997
        %v1142 = vmul.f32 %v491, %v1012
        %v1143 = vmul.f32 %v493, %v1027
        %v1144 = vmul.f32 %v496, %v1042
        %v1145 = vmul.f32 %v498, %v1057
        %v1146 = vmul.f32 %v501, %v1072
        %v1147 = vmul.f32 %v503, %v1087
        %v1148 = vmul.f32 %v506, %v1102
        %v1149 = vmul.f32 %v508, %v1117
        %v1150 = vld [vmem:[%s226] sm:$0x1]
        %vm1151 = vcmask 392192
        %v1152 = vsel %vm1151, %v1118, 0.0
        %v1153 = vsel %vm1151, %v1119, 0.0
        %v1154 = vadd.f32 %v1152, %v1153
        %v1155 = vsel %vm1151, %v1120, 0.0
        %v1156 = vadd.f32 %v1154, %v1155
        %v1157 = vsel %vm1151, %v1121, 0.0
        %v1158 = vadd.f32 %v1156, %v1157
        %v1159 = vsel %vm1151, %v1122, 0.0
        %v1160 = vadd.f32 %v1158, %v1159
        %v1161 = vsel %vm1151, %v1123, 0.0
        %v1162 = vadd.f32 %v1160, %v1161
        %v1163 = vsel %vm1151, %v1124, 0.0
        %v1164 = vadd.f32 %v1162, %v1163
        %v1165 = vsel %vm1151, %v1125, 0.0
        %v1166 = vadd.f32 %v1164, %v1165
        %v1167 = vsel %vm1151, %v1126, 0.0
        %v1168 = vadd.f32 %v1166, %v1167
        %v1169 = vsel %vm1151, %v1127, 0.0
        %v1170 = vadd.f32 %v1168, %v1169
        %v1171 = vsel %vm1151, %v1128, 0.0
        %v1172 = vadd.f32 %v1170, %v1171
        %v1173 = vsel %vm1151, %v1129, 0.0
        %v1174 = vadd.f32 %v1172, %v1173
        %v1175 = vsel %vm1151, %v1130, 0.0
        %v1176 = vadd.f32 %v1174, %v1175
        %v1177 = vsel %vm1151, %v1131, 0.0
        %v1178 = vadd.f32 %v1176, %v1177
        %v1179 = vsel %vm1151, %v1132, 0.0
        %v1180 = vadd.f32 %v1178, %v1179
        %v1181 = vsel %vm1151, %v1133, 0.0
        %v1182 = vadd.f32 %v1180, %v1181
        %v1183 = vsel %vm1151, %v1134, 0.0
        %v1184 = vadd.f32 %v1182, %v1183
        %v1185 = vsel %vm1151, %v1135, 0.0
        %v1186 = vadd.f32 %v1184, %v1185
        %v1187 = vsel %vm1151, %v1136, 0.0
        %v1188 = vadd.f32 %v1186, %v1187
        %v1189 = vsel %vm1151, %v1137, 0.0
        %v1190 = vadd.f32 %v1188, %v1189
        %v1191 = vsel %vm1151, %v1138, 0.0
        %v1192 = vadd.f32 %v1190, %v1191
        %v1193 = vsel %vm1151, %v1139, 0.0
        %v1194 = vadd.f32 %v1192, %v1193
        %v1195 = vsel %vm1151, %v1140, 0.0
        %v1196 = vadd.f32 %v1194, %v1195
        %v1197 = vsel %vm1151, %v1141, 0.0
        %v1198 = vadd.f32 %v1196, %v1197
        %v1199 = vsel %vm1151, %v1142, 0.0
        %v1200 = vadd.f32 %v1198, %v1199
        %v1201 = vsel %vm1151, %v1143, 0.0
        %v1202 = vadd.f32 %v1200, %v1201
        %v1203 = vsel %vm1151, %v1144, 0.0
        %v1204 = vadd.f32 %v1202, %v1203
        %v1205 = vsel %vm1151, %v1145, 0.0
        %v1206 = vadd.f32 %v1204, %v1205
        %v1207 = vsel %vm1151, %v1146, 0.0
        %v1208 = vadd.f32 %v1206, %v1207
        %v1209 = vsel %vm1151, %v1147, 0.0
        %v1210 = vadd.f32 %v1208, %v1209
        %v1211 = vsel %vm1151, %v1148, 0.0
        %v1212 = vadd.f32 %v1210, %v1211
        %v1213 = vsel %vm1151, %v1149, 0.0
        %v1214 = vadd.f32 %v1212, %v1213
        %v1215 = vrot.slane %v1214, 4
        %v1216 = vadd.f32 %v1214, %v1215
        %v1217 = vrot.slane %v1216, 2
        %v1218 = vadd.f32 %v1216, %v1217
        %v1219 = vrot.slane %v1218, 1
        %v1220 = vadd.f32 %v1218, %v1219
        %v1221 = vadd.f32 %v1150, %v1220
        %vm1222 = vcmask 385024
        %1223 = vst.msk [vmem:[%s226] sm:$0x1] %vm1222, %v1221
        // Predicated region
        $region45: #{image_only_forward.2} parent=31 // pred_check
          %p1224 = pneg %p228
        $region46: #{image_only_forward.2} parent=31 // pred_check_branch
          %1226 = sbr.rel (%p1224) target = $region48
        $region47: #{image_only_forward.2} parent=31 // pred_region
          %v1227 = vld [vmem:[%s226] sm:$0x1]
          %v1228 = vmul.f32 %v1227, 0.00390625
          %1229 = vst.msk [vmem:[%s226] sm:$0x1] %vm1222, %v1228
        $region48: #{image_only_forward.2} parent=31 // pred_fallthru
          _
        %p1230 = scmp.lt.s32.totalorder %s20, 1
        %s1231 = scalar_select %p1230, %s20, 1
        %s1232 = scalar_lea.vmem %s3, %s1231
        // Predicated region
        $region49: #{image_only_forward.2} parent=31 // pred_check
          %p1233 = pneg %p116
        $region50: #{image_only_forward.2} parent=31 // pred_check_branch
          %1235 = sbr.rel (%p1233) target = $region52
        $region51: #{image_only_forward.2} parent=31 // pred_region
          _
        $region52: #{image_only_forward.2} parent=31 // pred_fallthru
          _
      $region32: #{image_only_forward.2} parent=5 // pred_fallthru
        _
      %p1236 = scmp.le.s32.totalorder 2, %s11
      // Predicated region
      $region53: #{image_only_forward.2} parent=5 // pred_check
        %p1237 = pneg %p1236
      $region54: #{image_only_forward.2} parent=5 // pred_check_branch
        %1239 = sbr.rel (%p1237) target = $region56
      $region55: #{image_only_forward.2} parent=5 // pred_region
        %s1240 = ssub.s32 %s11, 2
        // Predicated region
        $region57: #{image_only_forward.2} parent=55 // pred_check
          %p1241 = pneg %p122
        $region58: #{image_only_forward.2} parent=55 // pred_check_branch
          %1243 = sbr.rel (%p1241) target = $region60
        $region59: #{image_only_forward.2} parent=55 // pred_region
          %p1244 = scmp.lt.s32.totalorder %s22, 1
          %s1245 = scalar_select %p1244, %s22, 1
          %s1246 = scalar_lea.vmem %s3, %s1245
        $region60: #{image_only_forward.2} parent=55 // pred_fallthru
          _
      $region56: #{image_only_forward.2} parent=5 // pred_fallthru
        _
    $region6: #{image_only_forward.2} parent=1 // loop_footer
      %s15 = sadd.s32 1, %s11
    $region7: #{image_only_forward.2} parent=1 // loop_footer_branch
      %10 = sbr.rel target = $region3
    $region8: #{image_only_forward.2} parent=1 // loop_exit
      _
    %1247 = vsyncpa [#allocation3], 1
    %s1248 = scalar_lea.sflag [#allocation3], 1
    %1249 = vsyncpa %s1248, 1
    %1250 = vsyncpa [#allocation5], 1

// kernel: image_only_forward.3
$region0: #{image_only_forward.3}
  #allocation0 [shape = 'u32[]', space=smem, size = 0x4, offset = 0x4, fixed_abs, tag = 'smem constant byte address 0x4 - core index']
  #allocation1 [shape = 'u32[72,128]{1,0:T(1,128)}', space=vmem, size = 0x9000, scoped, tag = 'internal scratch']
  %s0 = inlined_call_operand.vmem [shape: f32[2,48], index: 0, kind: input, shape index: {}]
  %s1 = inlined_call_operand.hbm [shape: bf16[48,2048], index: 1, kind: input, shape index: {}]
  %s2 = inlined_call_operand.hbm [shape: f32[1,2048], index: 2, kind: input, shape index: {}]
  %s3 = inlined_call_operand.hbm [shape: bf16[2048,1024], index: 3, kind: input, shape index: {}]
  %s4 = inlined_call_operand.hbm [shape: f32[1,1024], index: 4, kind: input, shape index: {}]
  %s5 = inlined_call_operand.hbm [shape: bf16[1024,512], index: 5, kind: input, shape index: {}]
  %s6 = inlined_call_operand.hbm [shape: f32[1,512], index: 6, kind: input, shape index: {}]
  %s7 = inlined_call_operand.vmem [shape: bf16[512,2], index: 7, kind: input, shape index: {}]
  %s8 = inlined_call_operand.hbm [shape: f32[1,2], index: 8, kind: input, shape index: {}]
  %s9 = inlined_call_operand.hbm [shape: f32[2,2], index: 9, kind: output, shape index: {}]
  %s10 = sld [smem:[#allocation0]]
  $region74: #{image_only_forward.3} parent=0
    _
  %s12 = ssub.s32 1, %s10
  %s13 = scalar_select 0, %s12, %s10
  $region1: #{image_only_forward.3} parent=0
    #allocation2 [shape = 'u8[196608]{0}', space=vmem, size = 0x30000, scoped, tag = 'input window, operand 1, single buffered']
    #allocation3 [shape = 's32[1]{0}', space=sflag, size = 0x4, scoped, tag = 'scoped memory for image_only_forward.3']
    #allocation4 [shape = 's32[1]{0}', space=sflag, size = 0x4, scoped, tag = 'scoped memory for image_only_forward.3']
    #allocation5 [shape = 'u8[8192]{0}', space=vmem, size = 0x2000, scoped, tag = 'input window, operand 2, single buffered']
    #allocation6 [shape = 's32[1]{0}', space=sflag, size = 0x4, scoped, tag = 'scoped memory for image_only_forward.3']
    #allocation7 [shape = 'u8[4194304]{0}', space=vmem, size = 0x400000, scoped, tag = 'input window, operand 3, single buffered']
    #allocation8 [shape = 'u8[4096]{0}', space=vmem, size = 0x1000, scoped, tag = 'input window, operand 4, single buffered']
    #allocation9 [shape = 's32[1]{0}', space=sflag, size = 0x4, scoped, tag = 'scoped memory for image_only_forward.3']
    #allocation10 [shape = 'u8[1048576]{0}', space=vmem, size = 0x100000, scoped, tag = 'input window, operand 5, single buffered']
    #allocation11 [shape = 'u8[2048]{0}', space=vmem, size = 0x800, scoped, tag = 'input window, operand 6, single buffered']
    #allocation12 [shape = 's32[1]{0}', space=sflag, size = 0x4, scoped, tag = 'scoped memory for image_only_forward.3']
    #allocation13 [shape = 'u8[512]{0}', space=vmem, size = 0x400, scoped, tag = 'input window, operand 8, single buffered']
    #allocation14 [shape = 'u8[1024]{0}', space=vmem, size = 0x400, scoped, tag = 'output window, operand 0, single buffered']
    %14 = vsyncpa [#allocation3], 0
    %15 = vsyncpa [#allocation6], 0
    %16 = vsyncpa [#allocation9], 0
    %17 = vsyncpa [#allocation12], 0
    %18 = vsyncpa [#allocation4], 0
    // Predicated region
    $region2: #{image_only_forward.3} parent=1 // pred_check
      _
    $region3: #{image_only_forward.3} parent=1 // pred_check_branch
      %20 = sbr.rel (0) target = $region5
    $region4: #{image_only_forward.3} parent=1 // pred_region
      _
    $region5: #{image_only_forward.3} parent=1 // pred_fallthru
      _
    // Predicated region
    $region6: #{image_only_forward.3} parent=1 // pred_check
      _
    $region7: #{image_only_forward.3} parent=1 // pred_check_branch
      %22 = sbr.rel (0) target = $region9
    $region8: #{image_only_forward.3} parent=1 // pred_region
      %24 = vsyncadd [#allocation3], 0
      %s25 = sshll.u32 %s1, 4
      %s26 = int_to_ptr.hbm [resolvable:$true] %s25
      %s27 = sshll.u32 [#allocation2], 4
      %s28 = int_to_ptr.vmem [resolvable:$true] %s27
      %33 = dma.hbm_to_vmem [thread:$0]  %s26, 6144, %s28, [#allocation3], 1024, 1024, 64
    $region9: #{image_only_forward.3} parent=1 // pred_fallthru
      _
    // Predicated region
    $region10: #{image_only_forward.3} parent=1 // pred_check
      _
    $region11: #{image_only_forward.3} parent=1 // pred_check_branch
      %35 = sbr.rel (0) target = $region13
    $region12: #{image_only_forward.3} parent=1 // pred_region
      %37 = vsyncadd [#allocation6], 0
      %s39 = sshll.u32 %s2, 4
      %s40 = int_to_ptr.hbm [resolvable:$true] %s39
      %s41 = sshll.u32 [#allocation5], 4
      %s42 = int_to_ptr.vmem [resolvable:$true] %s41
      %44 = dma.hbm_to_vmem [thread:$0]  %s40, 256, %s42, [#allocation6]
    $region13: #{image_only_forward.3} parent=1 // pred_fallthru
      _
    // Predicated region
    $region14: #{image_only_forward.3} parent=1 // pred_check
      _
    $region15: #{image_only_forward.3} parent=1 // pred_check_branch
      %46 = sbr.rel (0) target = $region17
    $region16: #{image_only_forward.3} parent=1 // pred_region
      %48 = vsyncadd [#allocation6], 0
      %s49 = sshll.u32 %s3, 4
      %s50 = int_to_ptr.hbm [resolvable:$true] %s49
      %s51 = sshll.u32 [#allocation7], 4
      %s52 = int_to_ptr.vmem [resolvable:$true] %s51
      %57 = dma.hbm_to_vmem [thread:$0]  %s50, 131072, %s52, [#allocation6], 512, 512, 32
    $region17: #{image_only_forward.3} parent=1 // pred_fallthru
      _
    // Predicated region
    $region18: #{image_only_forward.3} parent=1 // pred_check
      _
    $region19: #{image_only_forward.3} parent=1 // pred_check_branch
      %59 = sbr.rel (0) target = $region21
    $region20: #{image_only_forward.3} parent=1 // pred_region
      %61 = vsyncadd [#allocation9], 0
      %s63 = sshll.u32 %s4, 4
      %s64 = int_to_ptr.hbm [resolvable:$true] %s63
      %s65 = sshll.u32 [#allocation8], 4
      %s66 = int_to_ptr.vmem [resolvable:$true] %s65
      %68 = dma.hbm_to_vmem [thread:$0]  %s64, 128, %s66, [#allocation9]
    $region21: #{image_only_forward.3} parent=1 // pred_fallthru
      _
    // Predicated region
    $region22: #{image_only_forward.3} parent=1 // pred_check
      _
    $region23: #{image_only_forward.3} parent=1 // pred_check_branch
      %70 = sbr.rel (0) target = $region25
    $region24: #{image_only_forward.3} parent=1 // pred_region
      %72 = vsyncadd [#allocation9], 0
      %s73 = sshll.u32 %s5, 4
      %s74 = int_to_ptr.hbm [resolvable:$true] %s73
      %s75 = sshll.u32 [#allocation10], 4
      %s76 = int_to_ptr.vmem [resolvable:$true] %s75
      %81 = dma.hbm_to_vmem [thread:$0]  %s74, 32768, %s76, [#allocation9], 256, 256, 16
    $region25: #{image_only_forward.3} parent=1 // pred_fallthru
      _
    // Predicated region
    $region26: #{image_only_forward.3} parent=1 // pred_check
      _
    $region27: #{image_only_forward.3} parent=1 // pred_check_branch
      %83 = sbr.rel (0) target = $region29
    $region28: #{image_only_forward.3} parent=1 // pred_region
      %85 = vsyncadd [#allocation12], 0
      %s87 = sshll.u32 %s6, 4
      %s88 = int_to_ptr.hbm [resolvable:$true] %s87
      %s89 = sshll.u32 [#allocation11], 4
      %s90 = int_to_ptr.vmem [resolvable:$true] %s89
      %92 = dma.hbm_to_vmem [thread:$0]  %s88, 64, %s90, [#allocation12]
    $region29: #{image_only_forward.3} parent=1 // pred_fallthru
      _
    // Predicated region
    $region30: #{image_only_forward.3} parent=1 // pred_check
      _
    $region31: #{image_only_forward.3} parent=1 // pred_check_branch
      %94 = sbr.rel (0) target = $region33
    $region32: #{image_only_forward.3} parent=1 // pred_region
      _
    $region33: #{image_only_forward.3} parent=1 // pred_fallthru
      _
    // Predicated region
    $region34: #{image_only_forward.3} parent=1 // pred_check
      _
    $region35: #{image_only_forward.3} parent=1 // pred_check_branch
      %96 = sbr.rel (0) target = $region37
    $region36: #{image_only_forward.3} parent=1 // pred_region
      %98 = vsyncadd [#allocation12], 0
      %s100 = sshll.u32 %s8, 4
      %s101 = int_to_ptr.hbm [resolvable:$true] %s100
      %s102 = sshll.u32 [#allocation13], 4
      %s103 = int_to_ptr.vmem [resolvable:$true] %s102
      %105 = dma.hbm_to_vmem [thread:$0]  %s101, 16, %s103, [#allocation12]
    $region37: #{image_only_forward.3} parent=1 // pred_fallthru
      _
    // Predicated region
    $region38: #{image_only_forward.3} parent=1 // pred_check
      _
    $region39: #{image_only_forward.3} parent=1 // pred_check_branch
      %107 = sbr.rel (0) target = $region41
    $region40: #{image_only_forward.3} parent=1 // pred_region
      %109 = dma.done [#allocation3], 6144
    $region41: #{image_only_forward.3} parent=1 // pred_fallthru
      _
    // Predicated region
    $region42: #{image_only_forward.3} parent=1 // pred_check
      _
    $region43: #{image_only_forward.3} parent=1 // pred_check_branch
      %111 = sbr.rel (0) target = $region45
    $region44: #{image_only_forward.3} parent=1 // pred_region
      %113 = dma.done [#allocation6], 256
    $region45: #{image_only_forward.3} parent=1 // pred_fallthru
      _
    // Predicated region
    $region46: #{image_only_forward.3} parent=1 // pred_check
      _
    $region47: #{image_only_forward.3} parent=1 // pred_check_branch
      %115 = sbr.rel (0) target = $region49
    $region48: #{image_only_forward.3} parent=1 // pred_region
      %117 = dma.done [#allocation6], 131072
    $region49: #{image_only_forward.3} parent=1 // pred_fallthru
      _
    // Predicated region
    $region50: #{image_only_forward.3} parent=1 // pred_check
      _
    $region51: #{image_only_forward.3} parent=1 // pred_check_branch
      %119 = sbr.rel (0) target = $region53
    $region52: #{image_only_forward.3} parent=1 // pred_region
      %121 = dma.done [#allocation9], 128
    $region53: #{image_only_forward.3} parent=1 // pred_fallthru
      _
    // Predicated region
    $region54: #{image_only_forward.3} parent=1 // pred_check
      _
    $region55: #{image_only_forward.3} parent=1 // pred_check_branch
      %123 = sbr.rel (0) target = $region57
    $region56: #{image_only_forward.3} parent=1 // pred_region
      %125 = dma.done [#allocation9], 32768
    $region57: #{image_only_forward.3} parent=1 // pred_fallthru
      _
    // Predicated region
    $region58: #{image_only_forward.3} parent=1 // pred_check
      _
    $region59: #{image_only_forward.3} parent=1 // pred_check_branch
      %127 = sbr.rel (0) target = $region61
    $region60: #{image_only_forward.3} parent=1 // pred_region
      %129 = dma.done [#allocation12], 64
    $region61: #{image_only_forward.3} parent=1 // pred_fallthru
      _
    // Predicated region
    $region62: #{image_only_forward.3} parent=1 // pred_check
      _
    $region63: #{image_only_forward.3} parent=1 // pred_check_branch
      %131 = sbr.rel (0) target = $region65
    $region64: #{image_only_forward.3} parent=1 // pred_region
      %133 = dma.done [#allocation12], 16
    $region65: #{image_only_forward.3} parent=1 // pred_fallthru
      _
    %v135 = vld [vmem:[%s0] sm:$0x3]
    %v136 = vpack.c.bf16 %v135, %v135
    %v137 = vld [vmem:[#allocation2] sm:$0xff]
    %v138 = vld [vmem:[#allocation2 + $0x8] sm:$0xff]
    %v139 = vld [vmem:[#allocation2 + $0x10] sm:$0xff]
    %v140 = vld [vmem:[#allocation2 + $0x18] sm:$0xff]
    %v141 = vld [vmem:[#allocation2 + $0x20] sm:$0xff]
    %v142 = vld [vmem:[#allocation2 + $0x28] sm:$0xff]
    %v143 = vld [vmem:[#allocation2 + $0x30] sm:$0xff]
    %v144 = vld [vmem:[#allocation2 + $0x38] sm:$0xff]
    %v145 = vld [vmem:[#allocation2 + $0x40] sm:$0xff]
    %v146 = vld [vmem:[#allocation2 + $0x48] sm:$0xff]
    %v147 = vld [vmem:[#allocation2 + $0x50] sm:$0xff]
    %v148 = vld [vmem:[#allocation2 + $0x58] sm:$0xff]
    %v149 = vld [vmem:[#allocation2 + $0x60] sm:$0xff]
    %v150 = vld [vmem:[#allocation2 + $0x68] sm:$0xff]
    %v151 = vld [vmem:[#allocation2 + $0x70] sm:$0xff]
    %v152 = vld [vmem:[#allocation2 + $0x78] sm:$0xff]
    %v153 = vld [vmem:[#allocation2 + $0x80] sm:$0xff]
    %v154 = vld [vmem:[#allocation2 + $0x88] sm:$0xff]
    %v155 = vld [vmem:[#allocation2 + $0x90] sm:$0xff]
    %v156 = vld [vmem:[#allocation2 + $0x98] sm:$0xff]
    %v157 = vld [vmem:[#allocation2 + $0xa0] sm:$0xff]
    %v158 = vld [vmem:[#allocation2 + $0xa8] sm:$0xff]
    %v159 = vld [vmem:[#allocation2 + $0xb0] sm:$0xff]
    %v160 = vld [vmem:[#allocation2 + $0xb8] sm:$0xff]
    %v161 = vld [vmem:[#allocation2 + $0xc0] sm:$0xff]
    %v162 = vld [vmem:[#allocation2 + $0xc8] sm:$0xff]
    %v163 = vld [vmem:[#allocation2 + $0xd0] sm:$0xff]
    %v164 = vld [vmem:[#allocation2 + $0xd8] sm:$0xff]
    %v165 = vld [vmem:[#allocation2 + $0xe0] sm:$0xff]
    %v166 = vld [vmem:[#allocation2 + $0xe8] sm:$0xff]
    %v167 = vld [vmem:[#allocation2 + $0xf0] sm:$0xff]
    %v168 = vld [vmem:[#allocation2 + $0xf8] sm:$0xff]
    %v169 = vld [vmem:[#allocation2 + $0x100] sm:$0xff]
    %v170 = vld [vmem:[#allocation2 + $0x108] sm:$0xff]
    %v171 = vld [vmem:[#allocation2 + $0x110] sm:$0xff]
    %v172 = vld [vmem:[#allocation2 + $0x118] sm:$0xff]
    %v173 = vld [vmem:[#allocation2 + $0x120] sm:$0xff]
    %v174 = vld [vmem:[#allocation2 + $0x128] sm:$0xff]
    %v175 = vld [vmem:[#allocation2 + $0x130] sm:$0xff]
    %v176 = vld [vmem:[#allocation2 + $0x138] sm:$0xff]
    %v177 = vld [vmem:[#allocation2 + $0x140] sm:$0xff]
    %v178 = vld [vmem:[#allocation2 + $0x148] sm:$0xff]
    %v179 = vld [vmem:[#allocation2 + $0x150] sm:$0xff]
    %v180 = vld [vmem:[#allocation2 + $0x158] sm:$0xff]
    %v181 = vld [vmem:[#allocation2 + $0x160] sm:$0xff]
    %v182 = vld [vmem:[#allocation2 + $0x168] sm:$0xff]
    %v183 = vld [vmem:[#allocation2 + $0x170] sm:$0xff]
    %v184 = vld [vmem:[#allocation2 + $0x178] sm:$0xff]
    %v185 = vld [vmem:[#allocation5] sm:$0xff]
    %v186 = vld [vmem:[#allocation5 + $0x8] sm:$0xff]
    %v189 = vperm.slane %v185, 0
    %v190 = vperm.slane %v185, 1
    %v191 = vperm.slane %v185, 2
    %v192 = vperm.slane %v185, 3
    %v193 = vperm.slane %v185, 4
    %v194 = vperm.slane %v185, 5
    %v195 = vperm.slane %v185, 6
    %v196 = vperm.slane %v185, 7
    %v197 = vperm.slane %v186, 0
    %v198 = vperm.slane %v186, 1
    %v199 = vperm.slane %v186, 2
    %v200 = vperm.slane %v186, 3
    %v201 = vperm.slane %v186, 4
    %v202 = vperm.slane %v186, 5
    %v203 = vperm.slane %v186, 6
    %v204 = vperm.slane %v186, 7
    %v269 = vunpack.c.l.b16 %v137
    %v270 = vunpack.c.h.b16 %v137
    %v271 = vunpack.c.l.b16 %v138
    %v272 = vunpack.c.h.b16 %v138
    %v273 = vunpack.c.l.b16 %v139
    %v274 = vunpack.c.h.b16 %v139
    %v275 = vunpack.c.l.b16 %v140
    %v276 = vunpack.c.h.b16 %v140
    %v277 = vunpack.c.l.b16 %v141
    %v278 = vunpack.c.h.b16 %v141
    %v279 = vunpack.c.l.b16 %v142
    %v280 = vunpack.c.h.b16 %v142
    %v281 = vunpack.c.l.b16 %v143
    %v282 = vunpack.c.h.b16 %v143
    %v283 = vunpack.c.l.b16 %v144
    %v284 = vunpack.c.h.b16 %v144
    %v285 = vunpack.c.l.b16 %v145
    %v286 = vunpack.c.h.b16 %v145
    %v287 = vunpack.c.l.b16 %v146
    %v288 = vunpack.c.h.b16 %v146
    %v289 = vunpack.c.l.b16 %v147
    %v290 = vunpack.c.h.b16 %v147
    %v291 = vunpack.c.l.b16 %v148
    %v292 = vunpack.c.h.b16 %v148
    %v293 = vunpack.c.l.b16 %v149
    %v294 = vunpack.c.h.b16 %v149
    %v295 = vunpack.c.l.b16 %v150
    %v296 = vunpack.c.h.b16 %v150
    %v297 = vunpack.c.l.b16 %v151
    %v298 = vunpack.c.h.b16 %v151
    %v299 = vunpack.c.l.b16 %v152
    %v300 = vunpack.c.h.b16 %v152
    %v301 = vunpack.c.l.b16 %v153
    %v302 = vunpack.c.h.b16 %v153
    %v303 = vunpack.c.l.b16 %v154
    %v304 = vunpack.c.h.b16 %v154
    %v305 = vunpack.c.l.b16 %v155
    %v306 = vunpack.c.h.b16 %v155
    %v307 = vunpack.c.l.b16 %v156
    %v308 = vunpack.c.h.b16 %v156
    %v309 = vunpack.c.l.b16 %v157
    %v310 = vunpack.c.h.b16 %v157
    %v311 = vunpack.c.l.b16 %v158
    %v312 = vunpack.c.h.b16 %v158
    %v313 = vunpack.c.l.b16 %v159
    %v314 = vunpack.c.h.b16 %v159
    %v315 = vunpack.c.l.b16 %v160
    %v316 = vunpack.c.h.b16 %v160
    %v317 = vunpack.c.l.b16 %v161
    %v318 = vunpack.c.h.b16 %v161
    %v319 = vunpack.c.l.b16 %v162
    %v320 = vunpack.c.h.b16 %v162
    %v321 = vunpack.c.l.b16 %v163
    %v322 = vunpack.c.h.b16 %v163
    %v323 = vunpack.c.l.b16 %v164
    %v324 = vunpack.c.h.b16 %v164
    %v325 = vunpack.c.l.b16 %v165
    %v326 = vunpack.c.h.b16 %v165
    %v327 = vunpack.c.l.b16 %v166
    %v328 = vunpack.c.h.b16 %v166
    %v329 = vunpack.c.l.b16 %v167
    %v330 = vunpack.c.h.b16 %v167
    %v331 = vunpack.c.l.b16 %v168
    %v332 = vunpack.c.h.b16 %v168
    %v333 = vunpack.c.l.b16 %v169
    %v334 = vunpack.c.h.b16 %v169
    %v335 = vunpack.c.l.b16 %v170
    %v336 = vunpack.c.h.b16 %v170
    %v337 = vunpack.c.l.b16 %v171
    %v338 = vunpack.c.h.b16 %v171
    %v339 = vunpack.c.l.b16 %v172
    %v340 = vunpack.c.h.b16 %v172
    %v341 = vunpack.c.l.b16 %v173
    %v342 = vunpack.c.h.b16 %v173
    %v343 = vunpack.c.l.b16 %v174
    %v344 = vunpack.c.h.b16 %v174
    %v345 = vunpack.c.l.b16 %v175
    %v346 = vunpack.c.h.b16 %v175
    %v347 = vunpack.c.l.b16 %v176
    %v348 = vunpack.c.h.b16 %v176
    %v349 = vunpack.c.l.b16 %v177
    %v350 = vunpack.c.h.b16 %v177
    %v351 = vunpack.c.l.b16 %v178
    %v352 = vunpack.c.h.b16 %v178
    %v353 = vunpack.c.l.b16 %v179
    %v354 = vunpack.c.h.b16 %v179
    %v355 = vunpack.c.l.b16 %v180
    %v356 = vunpack.c.h.b16 %v180
    %v357 = vunpack.c.l.b16 %v181
    %v358 = vunpack.c.h.b16 %v181
    %v359 = vunpack.c.l.b16 %v182
    %v360 = vunpack.c.h.b16 %v182
    %v361 = vunpack.c.l.b16 %v183
    %v362 = vunpack.c.h.b16 %v183
    %v363 = vunpack.c.l.b16 %v184
    %v364 = vunpack.c.h.b16 %v184
    %v365 = vpack.c.b16 %v285, %v269
    %v366 = vpack.c.b16 %v286, %v270
    %v367 = vpack.c.b16 %v287, %v271
    %v368 = vpack.c.b16 %v288, %v272
    %v369 = vpack.c.b16 %v289, %v273
    %v370 = vpack.c.b16 %v290, %v274
    %v371 = vpack.c.b16 %v291, %v275
    %v372 = vpack.c.b16 %v292, %v276
    %v373 = vpack.c.b16 %v293, %v277
    %v374 = vpack.c.b16 %v294, %v278
    %v375 = vpack.c.b16 %v295, %v279
    %v376 = vpack.c.b16 %v296, %v280
    %v377 = vpack.c.b16 %v297, %v281
    %v378 = vpack.c.b16 %v298, %v282
    %v379 = vpack.c.b16 %v299, %v283
    %v380 = vpack.c.b16 %v300, %v284
    %v381 = vpack.c.b16 %v317, %v301
    %v382 = vpack.c.b16 %v318, %v302
    %v383 = vpack.c.b16 %v319, %v303
    %v384 = vpack.c.b16 %v320, %v304
    %v385 = vpack.c.b16 %v321, %v305
    %v386 = vpack.c.b16 %v322, %v306
    %v387 = vpack.c.b16 %v323, %v307
    %v388 = vpack.c.b16 %v324, %v308
    %v389 = vpack.c.b16 %v325, %v309
    %v390 = vpack.c.b16 %v326, %v310
    %v391 = vpack.c.b16 %v327, %v311
    %v392 = vpack.c.b16 %v328, %v312
    %v393 = vpack.c.b16 %v329, %v313
    %v394 = vpack.c.b16 %v330, %v314
    %v395 = vpack.c.b16 %v331, %v315
    %v396 = vpack.c.b16 %v332, %v316
    %v397 = vpack.c.b16 %v349, %v333
    %v398 = vpack.c.b16 %v350, %v334
    %v399 = vpack.c.b16 %v351, %v335
    %v400 = vpack.c.b16 %v352, %v336
    %v401 = vpack.c.b16 %v353, %v337
    %v402 = vpack.c.b16 %v354, %v338
    %v403 = vpack.c.b16 %v355, %v339
    %v404 = vpack.c.b16 %v356, %v340
    %v405 = vpack.c.b16 %v357, %v341
    %v406 = vpack.c.b16 %v358, %v342
    %v407 = vpack.c.b16 %v359, %v343
    %v408 = vpack.c.b16 %v360, %v344
    %v409 = vpack.c.b16 %v361, %v345
    %v410 = vpack.c.b16 %v362, %v346
    %v411 = vpack.c.b16 %v363, %v347
    %v412 = vpack.c.b16 %v364, %v348
    %vm461 = vcmask 392192
    %v463 = vsel %vm461, %v136, 0
    %465 = vmatpush.bf16.msra.mxu0 0
    %466 = vmatpush.bf16.msra.mxu0 0
    %467 = vmatpush.bf16.msra.mxu0 0
    %468 = vmatpush.bf16.msra.mxu0 0
    %469 = vmatpush.bf16.msra.mxu0 0
    %470 = vmatpush.bf16.msra.mxu0 %v397
    %471 = vmatpush.bf16.msra.mxu0 %v381
    %472 = vmatpush.bf16.msra.mxu0 %v365
    %473 = vmatmul.bf16.gmra.mxu0 %v463
    %v474 = vpop.f32.mrf.mxu0
    %v475 = vadd.f32 %v189, %v474
    %v476 = vpop.f32.mrf.mxu0
    %477 = vdwg.mxu0
    %478 = vmatpush.bf16.msra.mxu0 0
    %479 = vmatpush.bf16.msra.mxu0 0
    %480 = vmatpush.bf16.msra.mxu0 0
    %481 = vmatpush.bf16.msra.mxu0 0
    %482 = vmatpush.bf16.msra.mxu0 0
    %483 = vmatpush.bf16.msra.mxu0 %v398
    %484 = vmatpush.bf16.msra.mxu0 %v382
    %485 = vmatpush.bf16.msra.mxu0 %v366
    %486 = vmatmul.bf16.gmra.mxu0 %v463
    %v487 = vpop.f32.mrf.mxu0
    %v488 = vadd.f32 %v190, %v487
    %v489 = vpop.f32.mrf.mxu0
    %490 = vdwg.mxu0
    %491 = vmatpush.bf16.msra.mxu0 0
    %492 = vmatpush.bf16.msra.mxu0 0
    %493 = vmatpush.bf16.msra.mxu0 0
    %494 = vmatpush.bf16.msra.mxu0 0
    %495 = vmatpush.bf16.msra.mxu0 0
    %496 = vmatpush.bf16.msra.mxu0 %v399
    %497 = vmatpush.bf16.msra.mxu0 %v383
    %498 = vmatpush.bf16.msra.mxu0 %v367
    %499 = vmatmul.bf16.gmra.mxu0 %v463
    %v500 = vpop.f32.mrf.mxu0
    %v501 = vadd.f32 %v191, %v500
    %v502 = vpop.f32.mrf.mxu0
    %503 = vdwg.mxu0
    %504 = vmatpush.bf16.msra.mxu0 0
    %505 = vmatpush.bf16.msra.mxu0 0
    %506 = vmatpush.bf16.msra.mxu0 0
    %507 = vmatpush.bf16.msra.mxu0 0
    %508 = vmatpush.bf16.msra.mxu0 0
    %509 = vmatpush.bf16.msra.mxu0 %v400
    %510 = vmatpush.bf16.msra.mxu0 %v384
    %511 = vmatpush.bf16.msra.mxu0 %v368
    %512 = vmatmul.bf16.gmra.mxu0 %v463
    %v513 = vpop.f32.mrf.mxu0
    %v514 = vadd.f32 %v192, %v513
    %v515 = vpop.f32.mrf.mxu0
    %516 = vdwg.mxu0
    %517 = vmatpush.bf16.msra.mxu0 0
    %518 = vmatpush.bf16.msra.mxu0 0
    %519 = vmatpush.bf16.msra.mxu0 0
    %520 = vmatpush.bf16.msra.mxu0 0
    %521 = vmatpush.bf16.msra.mxu0 0
    %522 = vmatpush.bf16.msra.mxu0 %v401
    %523 = vmatpush.bf16.msra.mxu0 %v385
    %524 = vmatpush.bf16.msra.mxu0 %v369
    %525 = vmatmul.bf16.gmra.mxu0 %v463
    %v526 = vpop.f32.mrf.mxu0
    %v527 = vadd.f32 %v193, %v526
    %v528 = vpop.f32.mrf.mxu0
    %529 = vdwg.mxu0
    %530 = vmatpush.bf16.msra.mxu0 0
    %531 = vmatpush.bf16.msra.mxu0 0
    %532 = vmatpush.bf16.msra.mxu0 0
    %533 = vmatpush.bf16.msra.mxu0 0
    %534 = vmatpush.bf16.msra.mxu0 0
    %535 = vmatpush.bf16.msra.mxu0 %v402
    %536 = vmatpush.bf16.msra.mxu0 %v386
    %537 = vmatpush.bf16.msra.mxu0 %v370
    %538 = vmatmul.bf16.gmra.mxu0 %v463
    %v539 = vpop.f32.mrf.mxu0
    %v540 = vadd.f32 %v194, %v539
    %v541 = vpop.f32.mrf.mxu0
    %542 = vdwg.mxu0
    %543 = vmatpush.bf16.msra.mxu0 0
    %544 = vmatpush.bf16.msra.mxu0 0
    %545 = vmatpush.bf16.msra.mxu0 0
    %546 = vmatpush.bf16.msra.mxu0 0
    %547 = vmatpush.bf16.msra.mxu0 0
    %548 = vmatpush.bf16.msra.mxu0 %v403
    %549 = vmatpush.bf16.msra.mxu0 %v387
    %550 = vmatpush.bf16.msra.mxu0 %v371
    %551 = vmatmul.bf16.gmra.mxu0 %v463
    %v552 = vpop.f32.mrf.mxu0
    %v553 = vadd.f32 %v195, %v552
    %v554 = vpop.f32.mrf.mxu0
    %555 = vdwg.mxu0
    %556 = vmatpush.bf16.msra.mxu0 0
    %557 = vmatpush.bf16.msra.mxu0 0
    %558 = vmatpush.bf16.msra.mxu0 0
    %559 = vmatpush.bf16.msra.mxu0 0
    %560 = vmatpush.bf16.msra.mxu0 0
    %561 = vmatpush.bf16.msra.mxu0 %v404
    %562 = vmatpush.bf16.msra.mxu0 %v388
    %563 = vmatpush.bf16.msra.mxu0 %v372
    %564 = vmatmul.bf16.gmra.mxu0 %v463
    %v565 = vpop.f32.mrf.mxu0
    %v566 = vadd.f32 %v196, %v565
    %v567 = vpop.f32.mrf.mxu0
    %568 = vdwg.mxu0
    %569 = vmatpush.bf16.msra.mxu0 0
    %570 = vmatpush.bf16.msra.mxu0 0
    %571 = vmatpush.bf16.msra.mxu0 0
    %572 = vmatpush.bf16.msra.mxu0 0
    %573 = vmatpush.bf16.msra.mxu0 0
    %574 = vmatpush.bf16.msra.mxu0 %v405
    %575 = vmatpush.bf16.msra.mxu0 %v389
    %576 = vmatpush.bf16.msra.mxu0 %v373
    %577 = vmatmul.bf16.gmra.mxu0 %v463
    %v578 = vpop.f32.mrf.mxu0
    %v579 = vadd.f32 %v197, %v578
    %v580 = vpop.f32.mrf.mxu0
    %581 = vdwg.mxu0
    %582 = vmatpush.bf16.msra.mxu0 0
    %583 = vmatpush.bf16.msra.mxu0 0
    %584 = vmatpush.bf16.msra.mxu0 0
    %585 = vmatpush.bf16.msra.mxu0 0
    %586 = vmatpush.bf16.msra.mxu0 0
    %587 = vmatpush.bf16.msra.mxu0 %v406
    %588 = vmatpush.bf16.msra.mxu0 %v390
    %589 = vmatpush.bf16.msra.mxu0 %v374
    %590 = vmatmul.bf16.gmra.mxu0 %v463
    %v591 = vpop.f32.mrf.mxu0
    %v592 = vadd.f32 %v198, %v591
    %v593 = vpop.f32.mrf.mxu0
    %594 = vdwg.mxu0
    %595 = vmatpush.bf16.msra.mxu0 0
    %596 = vmatpush.bf16.msra.mxu0 0
    %597 = vmatpush.bf16.msra.mxu0 0
    %598 = vmatpush.bf16.msra.mxu0 0
    %599 = vmatpush.bf16.msra.mxu0 0
    %600 = vmatpush.bf16.msra.mxu0 %v407
    %601 = vmatpush.bf16.msra.mxu0 %v391
    %602 = vmatpush.bf16.msra.mxu0 %v375
    %603 = vmatmul.bf16.gmra.mxu0 %v463
    %v604 = vpop.f32.mrf.mxu0
    %v605 = vadd.f32 %v199, %v604
    %v606 = vpop.f32.mrf.mxu0
    %607 = vdwg.mxu0
    %608 = vmatpush.bf16.msra.mxu0 0
    %609 = vmatpush.bf16.msra.mxu0 0
    %610 = vmatpush.bf16.msra.mxu0 0
    %611 = vmatpush.bf16.msra.mxu0 0
    %612 = vmatpush.bf16.msra.mxu0 0
    %613 = vmatpush.bf16.msra.mxu0 %v408
    %614 = vmatpush.bf16.msra.mxu0 %v392
    %615 = vmatpush.bf16.msra.mxu0 %v376
    %616 = vmatmul.bf16.gmra.mxu0 %v463
    %v617 = vpop.f32.mrf.mxu0
    %v618 = vadd.f32 %v200, %v617
    %v619 = vpop.f32.mrf.mxu0
    %620 = vdwg.mxu0
    %621 = vmatpush.bf16.msra.mxu0 0
    %622 = vmatpush.bf16.msra.mxu0 0
    %623 = vmatpush.bf16.msra.mxu0 0
    %624 = vmatpush.bf16.msra.mxu0 0
    %625 = vmatpush.bf16.msra.mxu0 0
    %626 = vmatpush.bf16.msra.mxu0 %v409
    %627 = vmatpush.bf16.msra.mxu0 %v393
    %628 = vmatpush.bf16.msra.mxu0 %v377
    %629 = vmatmul.bf16.gmra.mxu0 %v463
    %v630 = vpop.f32.mrf.mxu0
    %v631 = vadd.f32 %v201, %v630
    %v632 = vpop.f32.mrf.mxu0
    %633 = vdwg.mxu0
    %634 = vmatpush.bf16.msra.mxu0 0
    %635 = vmatpush.bf16.msra.mxu0 0
    %636 = vmatpush.bf16.msra.mxu0 0
    %637 = vmatpush.bf16.msra.mxu0 0
    %638 = vmatpush.bf16.msra.mxu0 0
    %639 = vmatpush.bf16.msra.mxu0 %v410
    %640 = vmatpush.bf16.msra.mxu0 %v394
    %641 = vmatpush.bf16.msra.mxu0 %v378
    %642 = vmatmul.bf16.gmra.mxu0 %v463
    %v643 = vpop.f32.mrf.mxu0
    %v644 = vadd.f32 %v202, %v643
    %v645 = vpop.f32.mrf.mxu0
    %646 = vdwg.mxu0
    %647 = vmatpush.bf16.msra.mxu0 0
    %648 = vmatpush.bf16.msra.mxu0 0
    %649 = vmatpush.bf16.msra.mxu0 0
    %650 = vmatpush.bf16.msra.mxu0 0
    %651 = vmatpush.bf16.msra.mxu0 0
    %652 = vmatpush.bf16.msra.mxu0 %v411
    %653 = vmatpush.bf16.msra.mxu0 %v395
    %654 = vmatpush.bf16.msra.mxu0 %v379
    %655 = vmatmul.bf16.gmra.mxu0 %v463
    %v656 = vpop.f32.mrf.mxu0
    %v657 = vadd.f32 %v203, %v656
    %v658 = vpop.f32.mrf.mxu0
    %659 = vdwg.mxu0
    %660 = vmatpush.bf16.msra.mxu0 0
    %661 = vmatpush.bf16.msra.mxu0 0
    %662 = vmatpush.bf16.msra.mxu0 0
    %663 = vmatpush.bf16.msra.mxu0 0
    %664 = vmatpush.bf16.msra.mxu0 0
    %665 = vmatpush.bf16.msra.mxu0 %v412
    %666 = vmatpush.bf16.msra.mxu0 %v396
    %667 = vmatpush.bf16.msra.mxu0 %v380
    %668 = vmatmul.bf16.gmra.mxu0 %v463
    %v669 = vpop.f32.mrf.mxu0
    %v670 = vadd.f32 %v204, %v669
    %v671 = vpop.f32.mrf.mxu0
    %672 = vdwg.mxu0
    %v673 = vpack.c.bf16 %v475, %v475
    %v674 = vpack.c.bf16 %v488, %v488
    %v675 = vpack.c.bf16 %v501, %v501
    %v676 = vpack.c.bf16 %v514, %v514
    %v677 = vpack.c.bf16 %v527, %v527
    %v678 = vpack.c.bf16 %v540, %v540
    %v679 = vpack.c.bf16 %v553, %v553
    %v680 = vpack.c.bf16 %v566, %v566
    %v681 = vpack.c.bf16 %v579, %v579
    %v682 = vpack.c.bf16 %v592, %v592
    %v683 = vpack.c.bf16 %v605, %v605
    %v684 = vpack.c.bf16 %v618, %v618
    %v685 = vpack.c.bf16 %v631, %v631
    %v686 = vpack.c.bf16 %v644, %v644
    %v687 = vpack.c.bf16 %v657, %v657
    %v688 = vpack.c.bf16 %v670, %v670
    %v689 = vld [vmem:[#allocation7] sm:$0xff]
    %v690 = vld [vmem:[#allocation7 + $0x8] sm:$0xff]
    %v691 = vld [vmem:[#allocation7 + $0x10] sm:$0xff]
    %v692 = vld [vmem:[#allocation7 + $0x18] sm:$0xff]
    %v693 = vld [vmem:[#allocation7 + $0x20] sm:$0xff]
    %v694 = vld [vmem:[#allocation7 + $0x28] sm:$0xff]
    %v695 = vld [vmem:[#allocation7 + $0x30] sm:$0xff]
    %v696 = vld [vmem:[#allocation7 + $0x38] sm:$0xff]
    %v697 = vld [vmem:[#allocation7 + $0x40] sm:$0xff]
    %v698 = vld [vmem:[#allocation7 + $0x48] sm:$0xff]
    %v699 = vld [vmem:[#allocation7 + $0x50] sm:$0xff]
    %v700 = vld [vmem:[#allocation7 + $0x58] sm:$0xff]
    %v701 = vld [vmem:[#allocation7 + $0x60] sm:$0xff]
    %v702 = vld [vmem:[#allocation7 + $0x68] sm:$0xff]
    %v703 = vld [vmem:[#allocation7 + $0x70] sm:$0xff]
    %v704 = vld [vmem:[#allocation7 + $0x78] sm:$0xff]
    %v705 = vld [vmem:[#allocation7 + $0x80] sm:$0xff]
    %v706 = vld [vmem:[#allocation7 + $0x88] sm:$0xff]
    %v707 = vld [vmem:[#allocation7 + $0x90] sm:$0xff]
    %v708 = vld [vmem:[#allocation7 + $0x98] sm:$0xff]
    %v709 = vld [vmem:[#allocation7 + $0xa0] sm:$0xff]
    %v710 = vld [vmem:[#allocation7 + $0xa8] sm:$0xff]
    %v711 = vld [vmem:[#allocation7 + $0xb0] sm:$0xff]
    %v712 = vld [vmem:[#allocation7 + $0xb8] sm:$0xff]
    %v713 = vld [vmem:[#allocation7 + $0xc0] sm:$0xff]
    %v714 = vld [vmem:[#allocation7 + $0xc8] sm:$0xff]
    %v715 = vld [vmem:[#allocation7 + $0xd0] sm:$0xff]
    %v716 = vld [vmem:[#allocation7 + $0xd8] sm:$0xff]
    %v717 = vld [vmem:[#allocation7 + $0xe0] sm:$0xff]
    %v718 = vld [vmem:[#allocation7 + $0xe8] sm:$0xff]
    %v719 = vld [vmem:[#allocation7 + $0xf0] sm:$0xff]
    %v720 = vld [vmem:[#allocation7 + $0xf8] sm:$0xff]
    %v721 = vld [vmem:[#allocation7 + $0x100] sm:$0xff]
    %v722 = vld [vmem:[#allocation7 + $0x108] sm:$0xff]
    %v723 = vld [vmem:[#allocation7 + $0x110] sm:$0xff]
    %v724 = vld [vmem:[#allocation7 + $0x118] sm:$0xff]
    %v725 = vld [vmem:[#allocation7 + $0x120] sm:$0xff]
    %v726 = vld [vmem:[#allocation7 + $0x128] sm:$0xff]
    %v727 = vld [vmem:[#allocation7 + $0x130] sm:$0xff]
    %v728 = vld [vmem:[#allocation7 + $0x138] sm:$0xff]
    %v729 = vld [vmem:[#allocation7 + $0x140] sm:$0xff]
    %v730 = vld [vmem:[#allocation7 + $0x148] sm:$0xff]
    %v731 = vld [vmem:[#allocation7 + $0x150] sm:$0xff]
    %v732 = vld [vmem:[#allocation7 + $0x158] sm:$0xff]
    %v733 = vld [vmem:[#allocation7 + $0x160] sm:$0xff]
    %v734 = vld [vmem:[#allocation7 + $0x168] sm:$0xff]
    %v735 = vld [vmem:[#allocation7 + $0x170] sm:$0xff]
    %v736 = vld [vmem:[#allocation7 + $0x178] sm:$0xff]
    %v737 = vld [vmem:[#allocation7 + $0x180] sm:$0xff]
    %v738 = vld [vmem:[#allocation7 + $0x188] sm:$0xff]
    %v739 = vld [vmem:[#allocation7 + $0x190] sm:$0xff]
    %v740 = vld [vmem:[#allocation7 + $0x198] sm:$0xff]
    %v741 = vld [vmem:[#allocation7 + $0x1a0] sm:$0xff]
    %v742 = vld [vmem:[#allocation7 + $0x1a8] sm:$0xff]
    %v743 = vld [vmem:[#allocation7 + $0x1b0] sm:$0xff]
    %v744 = vld [vmem:[#allocation7 + $0x1b8] sm:$0xff]
    %v745 = vld [vmem:[#allocation7 + $0x1c0] sm:$0xff]
    %v746 = vld [vmem:[#allocation7 + $0x1c8] sm:$0xff]
    %v747 = vld [vmem:[#allocation7 + $0x1d0] sm:$0xff]
    %v748 = vld [vmem:[#allocation7 + $0x1d8] sm:$0xff]
    %v749 = vld [vmem:[#allocation7 + $0x1e0] sm:$0xff]
    %v750 = vld [vmem:[#allocation7 + $0x1e8] sm:$0xff]
    %v751 = vld [vmem:[#allocation7 + $0x1f0] sm:$0xff]
    %v752 = vld [vmem:[#allocation7 + $0x1f8] sm:$0xff]
    %v753 = vld [vmem:[#allocation7 + $0x200] sm:$0xff]
    %v754 = vld [vmem:[#allocation7 + $0x208] sm:$0xff]
    %v755 = vld [vmem:[#allocation7 + $0x210] sm:$0xff]
    %v756 = vld [vmem:[#allocation7 + $0x218] sm:$0xff]
    %v757 = vld [vmem:[#allocation7 + $0x220] sm:$0xff]
    %v758 = vld [vmem:[#allocation7 + $0x228] sm:$0xff]
    %v759 = vld [vmem:[#allocation7 + $0x230] sm:$0xff]
    %v760 = vld [vmem:[#allocation7 + $0x238] sm:$0xff]
    %v761 = vld [vmem:[#allocation7 + $0x240] sm:$0xff]
    %v762 = vld [vmem:[#allocation7 + $0x248] sm:$0xff]
    %v763 = vld [vmem:[#allocation7 + $0x250] sm:$0xff]
    %v764 = vld [vmem:[#allocation7 + $0x258] sm:$0xff]
    %v765 = vld [vmem:[#allocation7 + $0x260] sm:$0xff]
    %v766 = vld [vmem:[#allocation7 + $0x268] sm:$0xff]
    %v767 = vld [vmem:[#allocation7 + $0x270] sm:$0xff]
    %v768 = vld [vmem:[#allocation7 + $0x278] sm:$0xff]
    %v769 = vld [vmem:[#allocation7 + $0x280] sm:$0xff]
    %v770 = vld [vmem:[#allocation7 + $0x288] sm:$0xff]
    %v771 = vld [vmem:[#allocation7 + $0x290] sm:$0xff]
    %v772 = vld [vmem:[#allocation7 + $0x298] sm:$0xff]
    %v773 = vld [vmem:[#allocation7 + $0x2a0] sm:$0xff]
    %v774 = vld [vmem:[#allocation7 + $0x2a8] sm:$0xff]
    %v775 = vld [vmem:[#allocation7 + $0x2b0] sm:$0xff]
    %v776 = vld [vmem:[#allocation7 + $0x2b8] sm:$0xff]
    %v777 = vld [vmem:[#allocation7 + $0x2c0] sm:$0xff]
    %v778 = vld [vmem:[#allocation7 + $0x2c8] sm:$0xff]
    %v779 = vld [vmem:[#allocation7 + $0x2d0] sm:$0xff]
    %v780 = vld [vmem:[#allocation7 + $0x2d8] sm:$0xff]
    %v781 = vld [vmem:[#allocation7 + $0x2e0] sm:$0xff]
    %v782 = vld [vmem:[#allocation7 + $0x2e8] sm:$0xff]
    %v783 = vld [vmem:[#allocation7 + $0x2f0] sm:$0xff]
    %v784 = vld [vmem:[#allocation7 + $0x2f8] sm:$0xff]
    %v785 = vld [vmem:[#allocation7 + $0x300] sm:$0xff]
    %v786 = vld [vmem:[#allocation7 + $0x308] sm:$0xff]
    %v787 = vld [vmem:[#allocation7 + $0x310] sm:$0xff]
    %v788 = vld [vmem:[#allocation7 + $0x318] sm:$0xff]
    %v789 = vld [vmem:[#allocation7 + $0x320] sm:$0xff]
    %v790 = vld [vmem:[#allocation7 + $0x328] sm:$0xff]
    %v791 = vld [vmem:[#allocation7 + $0x330] sm:$0xff]
    %v792 = vld [vmem:[#allocation7 + $0x338] sm:$0xff]
    %v793 = vld [vmem:[#allocation7 + $0x340] sm:$0xff]
    %v794 = vld [vmem:[#allocation7 + $0x348] sm:$0xff]
    %v795 = vld [vmem:[#allocation7 + $0x350] sm:$0xff]
    %v796 = vld [vmem:[#allocation7 + $0x358] sm:$0xff]
    %v797 = vld [vmem:[#allocation7 + $0x360] sm:$0xff]
    %v798 = vld [vmem:[#allocation7 + $0x368] sm:$0xff]
    %v799 = vld [vmem:[#allocation7 + $0x370] sm:$0xff]
    %v800 = vld [vmem:[#allocation7 + $0x378] sm:$0xff]
    %v801 = vld [vmem:[#allocation7 + $0x380] sm:$0xff]
    %v802 = vld [vmem:[#allocation7 + $0x388] sm:$0xff]
    %v803 = vld [vmem:[#allocation7 + $0x390] sm:$0xff]
    %v804 = vld [vmem:[#allocation7 + $0x398] sm:$0xff]
    %v805 = vld [vmem:[#allocation7 + $0x3a0] sm:$0xff]
    %v806 = vld [vmem:[#allocation7 + $0x3a8] sm:$0xff]
    %v807 = vld [vmem:[#allocation7 + $0x3b0] sm:$0xff]
    %v808 = vld [vmem:[#allocation7 + $0x3b8] sm:$0xff]
    %v809 = vld [vmem:[#allocation7 + $0x3c0] sm:$0xff]
    %v810 = vld [vmem:[#allocation7 + $0x3c8] sm:$0xff]
    %v811 = vld [vmem:[#allocation7 + $0x3d0] sm:$0xff]
    %v812 = vld [vmem:[#allocation7 + $0x3d8] sm:$0xff]
    %v813 = vld [vmem:[#allocation7 + $0x3e0] sm:$0xff]
    %v814 = vld [vmem:[#allocation7 + $0x3e8] sm:$0xff]
    %v815 = vld [vmem:[#allocation7 + $0x3f0] sm:$0xff]
    %v816 = vld [vmem:[#allocation7 + $0x3f8] sm:$0xff]
    %v817 = vld [vmem:[#allocation7 + $0x400] sm:$0xff]
    %v818 = vld [vmem:[#allocation7 + $0x408] sm:$0xff]
    %v819 = vld [vmem:[#allocation7 + $0x410] sm:$0xff]
    %v820 = vld [vmem:[#allocation7 + $0x418] sm:$0xff]
    %v821 = vld [vmem:[#allocation7 + $0x420] sm:$0xff]
    %v822 = vld [vmem:[#allocation7 + $0x428] sm:$0xff]
    %v823 = vld [vmem:[#allocation7 + $0x430] sm:$0xff]
    %v824 = vld [vmem:[#allocation7 + $0x438] sm:$0xff]
    %v825 = vld [vmem:[#allocation7 + $0x440] sm:$0xff]
    %v826 = vld [vmem:[#allocation7 + $0x448] sm:$0xff]
    %v827 = vld [vmem:[#allocation7 + $0x450] sm:$0xff]
    %v828 = vld [vmem:[#allocation7 + $0x458] sm:$0xff]
    %v829 = vld [vmem:[#allocation7 + $0x460] sm:$0xff]
    %v830 = vld [vmem:[#allocation7 + $0x468] sm:$0xff]
    %v831 = vld [vmem:[#allocation7 + $0x470] sm:$0xff]
    %v832 = vld [vmem:[#allocation7 + $0x478] sm:$0xff]
    %v833 = vld [vmem:[#allocation7 + $0x480] sm:$0xff]
    %v834 = vld [vmem:[#allocation7 + $0x488] sm:$0xff]
    %v835 = vld [vmem:[#allocation7 + $0x490] sm:$0xff]
    %v836 = vld [vmem:[#allocation7 + $0x498] sm:$0xff]
    %v837 = vld [vmem:[#allocation7 + $0x4a0] sm:$0xff]
    %v838 = vld [vmem:[#allocation7 + $0x4a8] sm:$0xff]
    %v839 = vld [vmem:[#allocation7 + $0x4b0] sm:$0xff]
    %v840 = vld [vmem:[#allocation7 + $0x4b8] sm:$0xff]
    %v841 = vld [vmem:[#allocation7 + $0x4c0] sm:$0xff]
    %v842 = vld [vmem:[#allocation7 + $0x4c8] sm:$0xff]
    %v843 = vld [vmem:[#allocation7 + $0x4d0] sm:$0xff]
    %v844 = vld [vmem:[#allocation7 + $0x4d8] sm:$0xff]
    %v845 = vld [vmem:[#allocation7 + $0x4e0] sm:$0xff]
    %v846 = vld [vmem:[#allocation7 + $0x4e8] sm:$0xff]
    %v847 = vld [vmem:[#allocation7 + $0x4f0] sm:$0xff]
    %v848 = vld [vmem:[#allocation7 + $0x4f8] sm:$0xff]
    %v849 = vld [vmem:[#allocation7 + $0x500] sm:$0xff]
    %v850 = vld [vmem:[#allocation7 + $0x508] sm:$0xff]
    %v851 = vld [vmem:[#allocation7 + $0x510] sm:$0xff]
    %v852 = vld [vmem:[#allocation7 + $0x518] sm:$0xff]
    %v853 = vld [vmem:[#allocation7 + $0x520] sm:$0xff]
    %v854 = vld [vmem:[#allocation7 + $0x528] sm:$0xff]
    %v855 = vld [vmem:[#allocation7 + $0x530] sm:$0xff]
    %v856 = vld [vmem:[#allocation7 + $0x538] sm:$0xff]
    %v857 = vld [vmem:[#allocation7 + $0x540] sm:$0xff]
    %v858 = vld [vmem:[#allocation7 + $0x548] sm:$0xff]
    %v859 = vld [vmem:[#allocation7 + $0x550] sm:$0xff]
    %v860 = vld [vmem:[#allocation7 + $0x558] sm:$0xff]
    %v861 = vld [vmem:[#allocation7 + $0x560] sm:$0xff]
    %v862 = vld [vmem:[#allocation7 + $0x568] sm:$0xff]
    %v863 = vld [vmem:[#allocation7 + $0x570] sm:$0xff]
    %v864 = vld [vmem:[#allocation7 + $0x578] sm:$0xff]
    %v865 = vld [vmem:[#allocation7 + $0x580] sm:$0xff]
    %v866 = vld [vmem:[#allocation7 + $0x588] sm:$0xff]
    %v867 = vld [vmem:[#allocation7 + $0x590] sm:$0xff]
    %v868 = vld [vmem:[#allocation7 + $0x598] sm:$0xff]
    %v869 = vld [vmem:[#allocation7 + $0x5a0] sm:$0xff]
    %v870 = vld [vmem:[#allocation7 + $0x5a8] sm:$0xff]
    %v871 = vld [vmem:[#allocation7 + $0x5b0] sm:$0xff]
    %v872 = vld [vmem:[#allocation7 + $0x5b8] sm:$0xff]
    %v873 = vld [vmem:[#allocation7 + $0x5c0] sm:$0xff]
    %v874 = vld [vmem:[#allocation7 + $0x5c8] sm:$0xff]
    %v875 = vld [vmem:[#allocation7 + $0x5d0] sm:$0xff]
    %v876 = vld [vmem:[#allocation7 + $0x5d8] sm:$0xff]
    %v877 = vld [vmem:[#allocation7 + $0x5e0] sm:$0xff]
    %v878 = vld [vmem:[#allocation7 + $0x5e8] sm:$0xff]
    %v879 = vld [vmem:[#allocation7 + $0x5f0] sm:$0xff]
    %v880 = vld [vmem:[#allocation7 + $0x5f8] sm:$0xff]
    %v881 = vld [vmem:[#allocation7 + $0x600] sm:$0xff]
    %v882 = vld [vmem:[#allocation7 + $0x608] sm:$0xff]
    %v883 = vld [vmem:[#allocation7 + $0x610] sm:$0xff]
    %v884 = vld [vmem:[#allocation7 + $0x618] sm:$0xff]
    %v885 = vld [vmem:[#allocation7 + $0x620] sm:$0xff]
    %v886 = vld [vmem:[#allocation7 + $0x628] sm:$0xff]
    %v887 = vld [vmem:[#allocation7 + $0x630] sm:$0xff]
    %v888 = vld [vmem:[#allocation7 + $0x638] sm:$0xff]
    %v889 = vld [vmem:[#allocation7 + $0x640] sm:$0xff]
    %v890 = vld [vmem:[#allocation7 + $0x648] sm:$0xff]
    %v891 = vld [vmem:[#allocation7 + $0x650] sm:$0xff]
    %v892 = vld [vmem:[#allocation7 + $0x658] sm:$0xff]
    %v893 = vld [vmem:[#allocation7 + $0x660] sm:$0xff]
    %v894 = vld [vmem:[#allocation7 + $0x668] sm:$0xff]
    %v895 = vld [vmem:[#allocation7 + $0x670] sm:$0xff]
    %v896 = vld [vmem:[#allocation7 + $0x678] sm:$0xff]
    %v897 = vld [vmem:[#allocation7 + $0x680] sm:$0xff]
    %v898 = vld [vmem:[#allocation7 + $0x688] sm:$0xff]
    %v899 = vld [vmem:[#allocation7 + $0x690] sm:$0xff]
    %v900 = vld [vmem:[#allocation7 + $0x698] sm:$0xff]
    %v901 = vld [vmem:[#allocation7 + $0x6a0] sm:$0xff]
    %v902 = vld [vmem:[#allocation7 + $0x6a8] sm:$0xff]
    %v903 = vld [vmem:[#allocation7 + $0x6b0] sm:$0xff]
    %v904 = vld [vmem:[#allocation7 + $0x6b8] sm:$0xff]
    %v905 = vld [vmem:[#allocation7 + $0x6c0] sm:$0xff]
    %v906 = vld [vmem:[#allocation7 + $0x6c8] sm:$0xff]
    %v907 = vld [vmem:[#allocation7 + $0x6d0] sm:$0xff]
    %v908 = vld [vmem:[#allocation7 + $0x6d8] sm:$0xff]
    %v909 = vld [vmem:[#allocation7 + $0x6e0] sm:$0xff]
    %v910 = vld [vmem:[#allocation7 + $0x6e8] sm:$0xff]
    %v911 = vld [vmem:[#allocation7 + $0x6f0] sm:$0xff]
    %v912 = vld [vmem:[#allocation7 + $0x6f8] sm:$0xff]
    %v913 = vld [vmem:[#allocation7 + $0x700] sm:$0xff]
    %v914 = vld [vmem:[#allocation7 + $0x708] sm:$0xff]
    %v915 = vld [vmem:[#allocation7 + $0x710] sm:$0xff]
    %v916 = vld [vmem:[#allocation7 + $0x718] sm:$0xff]
    %v917 = vld [vmem:[#allocation7 + $0x720] sm:$0xff]
    %v918 = vld [vmem:[#allocation7 + $0x728] sm:$0xff]
    %v919 = vld [vmem:[#allocation7 + $0x730] sm:$0xff]
    %v920 = vld [vmem:[#allocation7 + $0x738] sm:$0xff]
    %v921 = vld [vmem:[#allocation7 + $0x740] sm:$0xff]
    %v922 = vld [vmem:[#allocation7 + $0x748] sm:$0xff]
    %v923 = vld [vmem:[#allocation7 + $0x750] sm:$0xff]
    %v924 = vld [vmem:[#allocation7 + $0x758] sm:$0xff]
    %v925 = vld [vmem:[#allocation7 + $0x760] sm:$0xff]
    %v926 = vld [vmem:[#allocation7 + $0x768] sm:$0xff]
    %v927 = vld [vmem:[#allocation7 + $0x770] sm:$0xff]
    %v928 = vld [vmem:[#allocation7 + $0x778] sm:$0xff]
    %v929 = vld [vmem:[#allocation7 + $0x780] sm:$0xff]
    %v930 = vld [vmem:[#allocation7 + $0x788] sm:$0xff]
    %v931 = vld [vmem:[#allocation7 + $0x790] sm:$0xff]
    %v932 = vld [vmem:[#allocation7 + $0x798] sm:$0xff]
    %v933 = vld [vmem:[#allocation7 + $0x7a0] sm:$0xff]
    %v934 = vld [vmem:[#allocation7 + $0x7a8] sm:$0xff]
    %v935 = vld [vmem:[#allocation7 + $0x7b0] sm:$0xff]
    %v936 = vld [vmem:[#allocation7 + $0x7b8] sm:$0xff]
    %v937 = vld [vmem:[#allocation7 + $0x7c0] sm:$0xff]
    %v938 = vld [vmem:[#allocation7 + $0x7c8] sm:$0xff]
    %v939 = vld [vmem:[#allocation7 + $0x7d0] sm:$0xff]
    %v940 = vld [vmem:[#allocation7 + $0x7d8] sm:$0xff]
    %v941 = vld [vmem:[#allocation7 + $0x7e0] sm:$0xff]
    %v942 = vld [vmem:[#allocation7 + $0x7e8] sm:$0xff]
    %v943 = vld [vmem:[#allocation7 + $0x7f0] sm:$0xff]
    %v944 = vld [vmem:[#allocation7 + $0x7f8] sm:$0xff]
    %v945 = vld [vmem:[#allocation7 + $0x800] sm:$0xff]
    %v946 = vld [vmem:[#allocation7 + $0x808] sm:$0xff]
    %v947 = vld [vmem:[#allocation7 + $0x810] sm:$0xff]
    %v948 = vld [vmem:[#allocation7 + $0x818] sm:$0xff]
    %v949 = vld [vmem:[#allocation7 + $0x820] sm:$0xff]
    %v950 = vld [vmem:[#allocation7 + $0x828] sm:$0xff]
    %v951 = vld [vmem:[#allocation7 + $0x830] sm:$0xff]
    %v952 = vld [vmem:[#allocation7 + $0x838] sm:$0xff]
    %v953 = vld [vmem:[#allocation7 + $0x840] sm:$0xff]
    %v954 = vld [vmem:[#allocation7 + $0x848] sm:$0xff]
    %v955 = vld [vmem:[#allocation7 + $0x850] sm:$0xff]
    %v956 = vld [vmem:[#allocation7 + $0x858] sm:$0xff]
    %v957 = vld [vmem:[#allocation7 + $0x860] sm:$0xff]
    %v958 = vld [vmem:[#allocation7 + $0x868] sm:$0xff]
    %v959 = vld [vmem:[#allocation7 + $0x870] sm:$0xff]
    %v960 = vld [vmem:[#allocation7 + $0x878] sm:$0xff]
    %v961 = vld [vmem:[#allocation7 + $0x880] sm:$0xff]
    %v962 = vld [vmem:[#allocation7 + $0x888] sm:$0xff]
    %v963 = vld [vmem:[#allocation7 + $0x890] sm:$0xff]
    %v964 = vld [vmem:[#allocation7 + $0x898] sm:$0xff]
    %v965 = vld [vmem:[#allocation7 + $0x8a0] sm:$0xff]
    %v966 = vld [vmem:[#allocation7 + $0x8a8] sm:$0xff]
    %v967 = vld [vmem:[#allocation7 + $0x8b0] sm:$0xff]
    %v968 = vld [vmem:[#allocation7 + $0x8b8] sm:$0xff]
    %v969 = vld [vmem:[#allocation7 + $0x8c0] sm:$0xff]
    %v970 = vld [vmem:[#allocation7 + $0x8c8] sm:$0xff]
    %v971 = vld [vmem:[#allocation7 + $0x8d0] sm:$0xff]
    %v972 = vld [vmem:[#allocation7 + $0x8d8] sm:$0xff]
    %v973 = vld [vmem:[#allocation7 + $0x8e0] sm:$0xff]
    %v974 = vld [vmem:[#allocation7 + $0x8e8] sm:$0xff]
    %v975 = vld [vmem:[#allocation7 + $0x8f0] sm:$0xff]
    %v976 = vld [vmem:[#allocation7 + $0x8f8] sm:$0xff]
    %v977 = vld [vmem:[#allocation7 + $0x900] sm:$0xff]
    %v978 = vld [vmem:[#allocation7 + $0x908] sm:$0xff]
    %v979 = vld [vmem:[#allocation7 + $0x910] sm:$0xff]
    %v980 = vld [vmem:[#allocation7 + $0x918] sm:$0xff]
    %v981 = vld [vmem:[#allocation7 + $0x920] sm:$0xff]
    %v982 = vld [vmem:[#allocation7 + $0x928] sm:$0xff]
    %v983 = vld [vmem:[#allocation7 + $0x930] sm:$0xff]
    %v984 = vld [vmem:[#allocation7 + $0x938] sm:$0xff]
    %v985 = vld [vmem:[#allocation7 + $0x940] sm:$0xff]
    %v986 = vld [vmem:[#allocation7 + $0x948] sm:$0xff]
    %v987 = vld [vmem:[#allocation7 + $0x950] sm:$0xff]
    %v988 = vld [vmem:[#allocation7 + $0x958] sm:$0xff]
    %v989 = vld [vmem:[#allocation7 + $0x960] sm:$0xff]
    %v990 = vld [vmem:[#allocation7 + $0x968] sm:$0xff]
    %v991 = vld [vmem:[#allocation7 + $0x970] sm:$0xff]
    %v992 = vld [vmem:[#allocation7 + $0x978] sm:$0xff]
    %v993 = vld [vmem:[#allocation7 + $0x980] sm:$0xff]
    %v994 = vld [vmem:[#allocation7 + $0x988] sm:$0xff]
    %v995 = vld [vmem:[#allocation7 + $0x990] sm:$0xff]
    %v996 = vld [vmem:[#allocation7 + $0x998] sm:$0xff]
    %v997 = vld [vmem:[#allocation7 + $0x9a0] sm:$0xff]
    %v998 = vld [vmem:[#allocation7 + $0x9a8] sm:$0xff]
    %v999 = vld [vmem:[#allocation7 + $0x9b0] sm:$0xff]
    %v1000 = vld [vmem:[#allocation7 + $0x9b8] sm:$0xff]
    %v1001 = vld [vmem:[#allocation7 + $0x9c0] sm:$0xff]
    %v1002 = vld [vmem:[#allocation7 + $0x9c8] sm:$0xff]
    %v1003 = vld [vmem:[#allocation7 + $0x9d0] sm:$0xff]
    %v1004 = vld [vmem:[#allocation7 + $0x9d8] sm:$0xff]
    %v1005 = vld [vmem:[#allocation7 + $0x9e0] sm:$0xff]
    %v1006 = vld [vmem:[#allocation7 + $0x9e8] sm:$0xff]
    %v1007 = vld [vmem:[#allocation7 + $0x9f0] sm:$0xff]
    %v1008 = vld [vmem:[#allocation7 + $0x9f8] sm:$0xff]
    %v1009 = vld [vmem:[#allocation7 + $0xa00] sm:$0xff]
    %v1010 = vld [vmem:[#allocation7 + $0xa08] sm:$0xff]
    %v1011 = vld [vmem:[#allocation7 + $0xa10] sm:$0xff]
    %v1012 = vld [vmem:[#allocation7 + $0xa18] sm:$0xff]
    %v1013 = vld [vmem:[#allocation7 + $0xa20] sm:$0xff]
    %v1014 = vld [vmem:[#allocation7 + $0xa28] sm:$0xff]
    %v1015 = vld [vmem:[#allocation7 + $0xa30] sm:$0xff]
    %v1016 = vld [vmem:[#allocation7 + $0xa38] sm:$0xff]
    %v1017 = vld [vmem:[#allocation7 + $0xa40] sm:$0xff]
    %v1018 = vld [vmem:[#allocation7 + $0xa48] sm:$0xff]
    %v1019 = vld [vmem:[#allocation7 + $0xa50] sm:$0xff]
    %v1020 = vld [vmem:[#allocation7 + $0xa58] sm:$0xff]
    %v1021 = vld [vmem:[#allocation7 + $0xa60] sm:$0xff]
    %v1022 = vld [vmem:[#allocation7 + $0xa68] sm:$0xff]
    %v1023 = vld [vmem:[#allocation7 + $0xa70] sm:$0xff]
    %v1024 = vld [vmem:[#allocation7 + $0xa78] sm:$0xff]
    %v1025 = vld [vmem:[#allocation7 + $0xa80] sm:$0xff]
    %v1026 = vld [vmem:[#allocation7 + $0xa88] sm:$0xff]
    %v1027 = vld [vmem:[#allocation7 + $0xa90] sm:$0xff]
    %v1028 = vld [vmem:[#allocation7 + $0xa98] sm:$0xff]
    %v1029 = vld [vmem:[#allocation7 + $0xaa0] sm:$0xff]
    %v1030 = vld [vmem:[#allocation7 + $0xaa8] sm:$0xff]
    %v1031 = vld [vmem:[#allocation7 + $0xab0] sm:$0xff]
    %v1032 = vld [vmem:[#allocation7 + $0xab8] sm:$0xff]
    %v1033 = vld [vmem:[#allocation7 + $0xac0] sm:$0xff]
    %v1034 = vld [vmem:[#allocation7 + $0xac8] sm:$0xff]
    %v1035 = vld [vmem:[#allocation7 + $0xad0] sm:$0xff]
    %v1036 = vld [vmem:[#allocation7 + $0xad8] sm:$0xff]
    %v1037 = vld [vmem:[#allocation7 + $0xae0] sm:$0xff]
    %v1038 = vld [vmem:[#allocation7 + $0xae8] sm:$0xff]
    %v1039 = vld [vmem:[#allocation7 + $0xaf0] sm:$0xff]
    %v1040 = vld [vmem:[#allocation7 + $0xaf8] sm:$0xff]
    %v1041 = vld [vmem:[#allocation7 + $0xb00] sm:$0xff]
    %v1042 = vld [vmem:[#allocation7 + $0xb08] sm:$0xff]
    %v1043 = vld [vmem:[#allocation7 + $0xb10] sm:$0xff]
    %v1044 = vld [vmem:[#allocation7 + $0xb18] sm:$0xff]
    %v1045 = vld [vmem:[#allocation7 + $0xb20] sm:$0xff]
    %v1046 = vld [vmem:[#allocation7 + $0xb28] sm:$0xff]
    %v1047 = vld [vmem:[#allocation7 + $0xb30] sm:$0xff]
    %v1048 = vld [vmem:[#allocation7 + $0xb38] sm:$0xff]
    %v1049 = vld [vmem:[#allocation7 + $0xb40] sm:$0xff]
    %v1050 = vld [vmem:[#allocation7 + $0xb48] sm:$0xff]
    %v1051 = vld [vmem:[#allocation7 + $0xb50] sm:$0xff]
    %v1052 = vld [vmem:[#allocation7 + $0xb58] sm:$0xff]
    %v1053 = vld [vmem:[#allocation7 + $0xb60] sm:$0xff]
    %v1054 = vld [vmem:[#allocation7 + $0xb68] sm:$0xff]
    %v1055 = vld [vmem:[#allocation7 + $0xb70] sm:$0xff]
    %v1056 = vld [vmem:[#allocation7 + $0xb78] sm:$0xff]
    %v1057 = vld [vmem:[#allocation7 + $0xb80] sm:$0xff]
    %v1058 = vld [vmem:[#allocation7 + $0xb88] sm:$0xff]
    %v1059 = vld [vmem:[#allocation7 + $0xb90] sm:$0xff]
    %v1060 = vld [vmem:[#allocation7 + $0xb98] sm:$0xff]
    %v1061 = vld [vmem:[#allocation7 + $0xba0] sm:$0xff]
    %v1062 = vld [vmem:[#allocation7 + $0xba8] sm:$0xff]
    %v1063 = vld [vmem:[#allocation7 + $0xbb0] sm:$0xff]
    %v1064 = vld [vmem:[#allocation7 + $0xbb8] sm:$0xff]
    %v1065 = vld [vmem:[#allocation7 + $0xbc0] sm:$0xff]
    %v1066 = vld [vmem:[#allocation7 + $0xbc8] sm:$0xff]
    %v1067 = vld [vmem:[#allocation7 + $0xbd0] sm:$0xff]
    %v1068 = vld [vmem:[#allocation7 + $0xbd8] sm:$0xff]
    %v1069 = vld [vmem:[#allocation7 + $0xbe0] sm:$0xff]
    %v1070 = vld [vmem:[#allocation7 + $0xbe8] sm:$0xff]
    %v1071 = vld [vmem:[#allocation7 + $0xbf0] sm:$0xff]
    %v1072 = vld [vmem:[#allocation7 + $0xbf8] sm:$0xff]
    %v1073 = vld [vmem:[#allocation7 + $0xc00] sm:$0xff]
    %v1074 = vld [vmem:[#allocation7 + $0xc08] sm:$0xff]
    %v1075 = vld [vmem:[#allocation7 + $0xc10] sm:$0xff]
    %v1076 = vld [vmem:[#allocation7 + $0xc18] sm:$0xff]
    %v1077 = vld [vmem:[#allocation7 + $0xc20] sm:$0xff]
    %v1078 = vld [vmem:[#allocation7 + $0xc28] sm:$0xff]
    %v1079 = vld [vmem:[#allocation7 + $0xc30] sm:$0xff]
    %v1080 = vld [vmem:[#allocation7 + $0xc38] sm:$0xff]
    %v1081 = vld [vmem:[#allocation7 + $0xc40] sm:$0xff]
    %v1082 = vld [vmem:[#allocation7 + $0xc48] sm:$0xff]
    %v1083 = vld [vmem:[#allocation7 + $0xc50] sm:$0xff]
    %v1084 = vld [vmem:[#allocation7 + $0xc58] sm:$0xff]
    %v1085 = vld [vmem:[#allocation7 + $0xc60] sm:$0xff]
    %v1086 = vld [vmem:[#allocation7 + $0xc68] sm:$0xff]
    %v1087 = vld [vmem:[#allocation7 + $0xc70] sm:$0xff]
    %v1088 = vld [vmem:[#allocation7 + $0xc78] sm:$0xff]
    %v1089 = vld [vmem:[#allocation7 + $0xc80] sm:$0xff]
    %v1090 = vld [vmem:[#allocation7 + $0xc88] sm:$0xff]
    %v1091 = vld [vmem:[#allocation7 + $0xc90] sm:$0xff]
    %v1092 = vld [vmem:[#allocation7 + $0xc98] sm:$0xff]
    %v1093 = vld [vmem:[#allocation7 + $0xca0] sm:$0xff]
    %v1094 = vld [vmem:[#allocation7 + $0xca8] sm:$0xff]
    %v1095 = vld [vmem:[#allocation7 + $0xcb0] sm:$0xff]
    %v1096 = vld [vmem:[#allocation7 + $0xcb8] sm:$0xff]
    %v1097 = vld [vmem:[#allocation7 + $0xcc0] sm:$0xff]
    %v1098 = vld [vmem:[#allocation7 + $0xcc8] sm:$0xff]
    %v1099 = vld [vmem:[#allocation7 + $0xcd0] sm:$0xff]
    %v1100 = vld [vmem:[#allocation7 + $0xcd8] sm:$0xff]
    %v1101 = vld [vmem:[#allocation7 + $0xce0] sm:$0xff]
    %v1102 = vld [vmem:[#allocation7 + $0xce8] sm:$0xff]
    %v1103 = vld [vmem:[#allocation7 + $0xcf0] sm:$0xff]
    %v1104 = vld [vmem:[#allocation7 + $0xcf8] sm:$0xff]
    %v1105 = vld [vmem:[#allocation7 + $0xd00] sm:$0xff]
    %v1106 = vld [vmem:[#allocation7 + $0xd08] sm:$0xff]
    %v1107 = vld [vmem:[#allocation7 + $0xd10] sm:$0xff]
    %v1108 = vld [vmem:[#allocation7 + $0xd18] sm:$0xff]
    %v1109 = vld [vmem:[#allocation7 + $0xd20] sm:$0xff]
    %v1110 = vld [vmem:[#allocation7 + $0xd28] sm:$0xff]
    %v1111 = vld [vmem:[#allocation7 + $0xd30] sm:$0xff]
    %v1112 = vld [vmem:[#allocation7 + $0xd38] sm:$0xff]
    %v1113 = vld [vmem:[#allocation7 + $0xd40] sm:$0xff]
    %v1114 = vld [vmem:[#allocation7 + $0xd48] sm:$0xff]
    %v1115 = vld [vmem:[#allocation7 + $0xd50] sm:$0xff]
    %v1116 = vld [vmem:[#allocation7 + $0xd58] sm:$0xff]
    %v1117 = vld [vmem:[#allocation7 + $0xd60] sm:$0xff]
    %v1118 = vld [vmem:[#allocation7 + $0xd68] sm:$0xff]
    %v1119 = vld [vmem:[#allocation7 + $0xd70] sm:$0xff]
    %v1120 = vld [vmem:[#allocation7 + $0xd78] sm:$0xff]
    %v1121 = vld [vmem:[#allocation7 + $0xd80] sm:$0xff]
    %v1122 = vld [vmem:[#allocation7 + $0xd88] sm:$0xff]
    %v1123 = vld [vmem:[#allocation7 + $0xd90] sm:$0xff]
    %v1124 = vld [vmem:[#allocation7 + $0xd98] sm:$0xff]
    %v1125 = vld [vmem:[#allocation7 + $0xda0] sm:$0xff]
    %v1126 = vld [vmem:[#allocation7 + $0xda8] sm:$0xff]
    %v1127 = vld [vmem:[#allocation7 + $0xdb0] sm:$0xff]
    %v1128 = vld [vmem:[#allocation7 + $0xdb8] sm:$0xff]
    %v1129 = vld [vmem:[#allocation7 + $0xdc0] sm:$0xff]
    %v1130 = vld [vmem:[#allocation7 + $0xdc8] sm:$0xff]
    %v1131 = vld [vmem:[#allocation7 + $0xdd0] sm:$0xff]
    %v1132 = vld [vmem:[#allocation7 + $0xdd8] sm:$0xff]
    %v1133 = vld [vmem:[#allocation7 + $0xde0] sm:$0xff]
    %v1134 = vld [vmem:[#allocation7 + $0xde8] sm:$0xff]
    %v1135 = vld [vmem:[#allocation7 + $0xdf0] sm:$0xff]
    %v1136 = vld [vmem:[#allocation7 + $0xdf8] sm:$0xff]
    %v1137 = vld [vmem:[#allocation7 + $0xe00] sm:$0xff]
    %v1138 = vld [vmem:[#allocation7 + $0xe08] sm:$0xff]
    %v1139 = vld [vmem:[#allocation7 + $0xe10] sm:$0xff]
    %v1140 = vld [vmem:[#allocation7 + $0xe18] sm:$0xff]
    %v1141 = vld [vmem:[#allocation7 + $0xe20] sm:$0xff]
    %v1142 = vld [vmem:[#allocation7 + $0xe28] sm:$0xff]
    %v1143 = vld [vmem:[#allocation7 + $0xe30] sm:$0xff]
    %v1144 = vld [vmem:[#allocation7 + $0xe38] sm:$0xff]
    %v1145 = vld [vmem:[#allocation7 + $0xe40] sm:$0xff]
    %v1146 = vld [vmem:[#allocation7 + $0xe48] sm:$0xff]
    %v1147 = vld [vmem:[#allocation7 + $0xe50] sm:$0xff]
    %v1148 = vld [vmem:[#allocation7 + $0xe58] sm:$0xff]
    %v1149 = vld [vmem:[#allocation7 + $0xe60] sm:$0xff]
    %v1150 = vld [vmem:[#allocation7 + $0xe68] sm:$0xff]
    %v1151 = vld [vmem:[#allocation7 + $0xe70] sm:$0xff]
    %v1152 = vld [vmem:[#allocation7 + $0xe78] sm:$0xff]
    %v1153 = vld [vmem:[#allocation7 + $0xe80] sm:$0xff]
    %v1154 = vld [vmem:[#allocation7 + $0xe88] sm:$0xff]
    %v1155 = vld [vmem:[#allocation7 + $0xe90] sm:$0xff]
    %v1156 = vld [vmem:[#allocation7 + $0xe98] sm:$0xff]
    %v1157 = vld [vmem:[#allocation7 + $0xea0] sm:$0xff]
    %v1158 = vld [vmem:[#allocation7 + $0xea8] sm:$0xff]
    %v1159 = vld [vmem:[#allocation7 + $0xeb0] sm:$0xff]
    %v1160 = vld [vmem:[#allocation7 + $0xeb8] sm:$0xff]
    %v1161 = vld [vmem:[#allocation7 + $0xec0] sm:$0xff]
    %v1162 = vld [vmem:[#allocation7 + $0xec8] sm:$0xff]
    %v1163 = vld [vmem:[#allocation7 + $0xed0] sm:$0xff]
    %v1164 = vld [vmem:[#allocation7 + $0xed8] sm:$0xff]
    %v1165 = vld [vmem:[#allocation7 + $0xee0] sm:$0xff]
    %v1166 = vld [vmem:[#allocation7 + $0xee8] sm:$0xff]
    %v1167 = vld [vmem:[#allocation7 + $0xef0] sm:$0xff]
    %v1168 = vld [vmem:[#allocation7 + $0xef8] sm:$0xff]
    %v1169 = vld [vmem:[#allocation7 + $0xf00] sm:$0xff]
    %v1170 = vld [vmem:[#allocation7 + $0xf08] sm:$0xff]
    %v1171 = vld [vmem:[#allocation7 + $0xf10] sm:$0xff]
    %v1172 = vld [vmem:[#allocation7 + $0xf18] sm:$0xff]
    %v1173 = vld [vmem:[#allocation7 + $0xf20] sm:$0xff]
    %v1174 = vld [vmem:[#allocation7 + $0xf28] sm:$0xff]
    %v1175 = vld [vmem:[#allocation7 + $0xf30] sm:$0xff]
    %v1176 = vld [vmem:[#allocation7 + $0xf38] sm:$0xff]
    %v1177 = vld [vmem:[#allocation7 + $0xf40] sm:$0xff]
    %v1178 = vld [vmem:[#allocation7 + $0xf48] sm:$0xff]
    %v1179 = vld [vmem:[#allocation7 + $0xf50] sm:$0xff]
    %v1180 = vld [vmem:[#allocation7 + $0xf58] sm:$0xff]
    %v1181 = vld [vmem:[#allocation7 + $0xf60] sm:$0xff]
    %v1182 = vld [vmem:[#allocation7 + $0xf68] sm:$0xff]
    %v1183 = vld [vmem:[#allocation7 + $0xf70] sm:$0xff]
    %v1184 = vld [vmem:[#allocation7 + $0xf78] sm:$0xff]
    %v1185 = vld [vmem:[#allocation7 + $0xf80] sm:$0xff]
    %v1186 = vld [vmem:[#allocation7 + $0xf88] sm:$0xff]
    %v1187 = vld [vmem:[#allocation7 + $0xf90] sm:$0xff]
    %v1188 = vld [vmem:[#allocation7 + $0xf98] sm:$0xff]
    %v1189 = vld [vmem:[#allocation7 + $0xfa0] sm:$0xff]
    %v1190 = vld [vmem:[#allocation7 + $0xfa8] sm:$0xff]
    %v1191 = vld [vmem:[#allocation7 + $0xfb0] sm:$0xff]
    %v1192 = vld [vmem:[#allocation7 + $0xfb8] sm:$0xff]
    %v1193 = vld [vmem:[#allocation7 + $0xfc0] sm:$0xff]
    %v1194 = vld [vmem:[#allocation7 + $0xfc8] sm:$0xff]
    %v1195 = vld [vmem:[#allocation7 + $0xfd0] sm:$0xff]
    %v1196 = vld [vmem:[#allocation7 + $0xfd8] sm:$0xff]
    %v1197 = vld [vmem:[#allocation7 + $0xfe0] sm:$0xff]
    %v1198 = vld [vmem:[#allocation7 + $0xfe8] sm:$0xff]
    %v1199 = vld [vmem:[#allocation7 + $0xff0] sm:$0xff]
    %v1200 = vld [vmem:[#allocation7 + $0xff8] sm:$0xff]
    %v1201 = vld [vmem:[#allocation7 + $0x1000] sm:$0xff]
    %v1202 = vld [vmem:[#allocation7 + $0x1008] sm:$0xff]
    %v1203 = vld [vmem:[#allocation7 + $0x1010] sm:$0xff]
    %v1204 = vld [vmem:[#allocation7 + $0x1018] sm:$0xff]
    %v1205 = vld [vmem:[#allocation7 + $0x1020] sm:$0xff]
    %v1206 = vld [vmem:[#allocation7 + $0x1028] sm:$0xff]
    %v1207 = vld [vmem:[#allocation7 + $0x1030] sm:$0xff]
    %v1208 = vld [vmem:[#allocation7 + $0x1038] sm:$0xff]
    %v1209 = vld [vmem:[#allocation7 + $0x1040] sm:$0xff]
    %v1210 = vld [vmem:[#allocation7 + $0x1048] sm:$0xff]
    %v1211 = vld [vmem:[#allocation7 + $0x1050] sm:$0xff]
    %v1212 = vld [vmem:[#allocation7 + $0x1058] sm:$0xff]
    %v1213 = vld [vmem:[#allocation7 + $0x1060] sm:$0xff]
    %v1214 = vld [vmem:[#allocation7 + $0x1068] sm:$0xff]
    %v1215 = vld [vmem:[#allocation7 + $0x1070] sm:$0xff]
    %v1216 = vld [vmem:[#allocation7 + $0x1078] sm:$0xff]
    %v1217 = vld [vmem:[#allocation7 + $0x1080] sm:$0xff]
    %v1218 = vld [vmem:[#allocation7 + $0x1088] sm:$0xff]
    %v1219 = vld [vmem:[#allocation7 + $0x1090] sm:$0xff]
    %v1220 = vld [vmem:[#allocation7 + $0x1098] sm:$0xff]
    %v1221 = vld [vmem:[#allocation7 + $0x10a0] sm:$0xff]
    %v1222 = vld [vmem:[#allocation7 + $0x10a8] sm:$0xff]
    %v1223 = vld [vmem:[#allocation7 + $0x10b0] sm:$0xff]
    %v1224 = vld [vmem:[#allocation7 + $0x10b8] sm:$0xff]
    %v1225 = vld [vmem:[#allocation7 + $0x10c0] sm:$0xff]
    %v1226 = vld [vmem:[#allocation7 + $0x10c8] sm:$0xff]
    %v1227 = vld [vmem:[#allocation7 + $0x10d0] sm:$0xff]
    %v1228 = vld [vmem:[#allocation7 + $0x10d8] sm:$0xff]
    %v1229 = vld [vmem:[#allocation7 + $0x10e0] sm:$0xff]
    %v1230 = vld [vmem:[#allocation7 + $0x10e8] sm:$0xff]
    %v1231 = vld [vmem:[#allocation7 + $0x10f0] sm:$0xff]
    %v1232 = vld [vmem:[#allocation7 + $0x10f8] sm:$0xff]
    %v1233 = vld [vmem:[#allocation7 + $0x1100] sm:$0xff]
    %v1234 = vld [vmem:[#allocation7 + $0x1108] sm:$0xff]
    %v1235 = vld [vmem:[#allocation7 + $0x1110] sm:$0xff]
    %v1236 = vld [vmem:[#allocation7 + $0x1118] sm:$0xff]
    %v1237 = vld [vmem:[#allocation7 + $0x1120] sm:$0xff]
    %v1238 = vld [vmem:[#allocation7 + $0x1128] sm:$0xff]
    %v1239 = vld [vmem:[#allocation7 + $0x1130] sm:$0xff]
    %v1240 = vld [vmem:[#allocation7 + $0x1138] sm:$0xff]
    %v1241 = vld [vmem:[#allocation7 + $0x1140] sm:$0xff]
    %v1242 = vld [vmem:[#allocation7 + $0x1148] sm:$0xff]
    %v1243 = vld [vmem:[#allocation7 + $0x1150] sm:$0xff]
    %v1244 = vld [vmem:[#allocation7 + $0x1158] sm:$0xff]
    %v1245 = vld [vmem:[#allocation7 + $0x1160] sm:$0xff]
    %v1246 = vld [vmem:[#allocation7 + $0x1168] sm:$0xff]
    %v1247 = vld [vmem:[#allocation7 + $0x1170] sm:$0xff]
    %v1248 = vld [vmem:[#allocation7 + $0x1178] sm:$0xff]
    %v1249 = vld [vmem:[#allocation7 + $0x1180] sm:$0xff]
    %v1250 = vld [vmem:[#allocation7 + $0x1188] sm:$0xff]
    %v1251 = vld [vmem:[#allocation7 + $0x1190] sm:$0xff]
    %v1252 = vld [vmem:[#allocation7 + $0x1198] sm:$0xff]
    %v1253 = vld [vmem:[#allocation7 + $0x11a0] sm:$0xff]
    %v1254 = vld [vmem:[#allocation7 + $0x11a8] sm:$0xff]
    %v1255 = vld [vmem:[#allocation7 + $0x11b0] sm:$0xff]
    %v1256 = vld [vmem:[#allocation7 + $0x11b8] sm:$0xff]
    %v1257 = vld [vmem:[#allocation7 + $0x11c0] sm:$0xff]
    %v1258 = vld [vmem:[#allocation7 + $0x11c8] sm:$0xff]
    %v1259 = vld [vmem:[#allocation7 + $0x11d0] sm:$0xff]
    %v1260 = vld [vmem:[#allocation7 + $0x11d8] sm:$0xff]
    %v1261 = vld [vmem:[#allocation7 + $0x11e0] sm:$0xff]
    %v1262 = vld [vmem:[#allocation7 + $0x11e8] sm:$0xff]
    %v1263 = vld [vmem:[#allocation7 + $0x11f0] sm:$0xff]
    %v1264 = vld [vmem:[#allocation7 + $0x11f8] sm:$0xff]
    %v1265 = vld [vmem:[#allocation7 + $0x1200] sm:$0xff]
    %v1266 = vld [vmem:[#allocation7 + $0x1208] sm:$0xff]
    %v1267 = vld [vmem:[#allocation7 + $0x1210] sm:$0xff]
    %v1268 = vld [vmem:[#allocation7 + $0x1218] sm:$0xff]
    %v1269 = vld [vmem:[#allocation7 + $0x1220] sm:$0xff]
    %v1270 = vld [vmem:[#allocation7 + $0x1228] sm:$0xff]
    %v1271 = vld [vmem:[#allocation7 + $0x1230] sm:$0xff]
    %v1272 = vld [vmem:[#allocation7 + $0x1238] sm:$0xff]
    %v1273 = vld [vmem:[#allocation7 + $0x1240] sm:$0xff]
    %v1274 = vld [vmem:[#allocation7 + $0x1248] sm:$0xff]
    %v1275 = vld [vmem:[#allocation7 + $0x1250] sm:$0xff]
    %v1276 = vld [vmem:[#allocation7 + $0x1258] sm:$0xff]
    %v1277 = vld [vmem:[#allocation7 + $0x1260] sm:$0xff]
    %v1278 = vld [vmem:[#allocation7 + $0x1268] sm:$0xff]
    %v1279 = vld [vmem:[#allocation7 + $0x1270] sm:$0xff]
    %v1280 = vld [vmem:[#allocation7 + $0x1278] sm:$0xff]
    %v1281 = vld [vmem:[#allocation7 + $0x1280] sm:$0xff]
    %v1282 = vld [vmem:[#allocation7 + $0x1288] sm:$0xff]
    %v1283 = vld [vmem:[#allocation7 + $0x1290] sm:$0xff]
    %v1284 = vld [vmem:[#allocation7 + $0x1298] sm:$0xff]
    %v1285 = vld [vmem:[#allocation7 + $0x12a0] sm:$0xff]
    %v1286 = vld [vmem:[#allocation7 + $0x12a8] sm:$0xff]
    %v1287 = vld [vmem:[#allocation7 + $0x12b0] sm:$0xff]
    %v1288 = vld [vmem:[#allocation7 + $0x12b8] sm:$0xff]
    %v1289 = vld [vmem:[#allocation7 + $0x12c0] sm:$0xff]
    %v1290 = vld [vmem:[#allocation7 + $0x12c8] sm:$0xff]
    %v1291 = vld [vmem:[#allocation7 + $0x12d0] sm:$0xff]
    %v1292 = vld [vmem:[#allocation7 + $0x12d8] sm:$0xff]
    %v1293 = vld [vmem:[#allocation7 + $0x12e0] sm:$0xff]
    %v1294 = vld [vmem:[#allocation7 + $0x12e8] sm:$0xff]
    %v1295 = vld [vmem:[#allocation7 + $0x12f0] sm:$0xff]
    %v1296 = vld [vmem:[#allocation7 + $0x12f8] sm:$0xff]
    %v1297 = vld [vmem:[#allocation7 + $0x1300] sm:$0xff]
    %v1298 = vld [vmem:[#allocation7 + $0x1308] sm:$0xff]
    %v1299 = vld [vmem:[#allocation7 + $0x1310] sm:$0xff]
    %v1300 = vld [vmem:[#allocation7 + $0x1318] sm:$0xff]
    %v1301 = vld [vmem:[#allocation7 + $0x1320] sm:$0xff]
    %v1302 = vld [vmem:[#allocation7 + $0x1328] sm:$0xff]
    %v1303 = vld [vmem:[#allocation7 + $0x1330] sm:$0xff]
    %v1304 = vld [vmem:[#allocation7 + $0x1338] sm:$0xff]
    %v1305 = vld [vmem:[#allocation7 + $0x1340] sm:$0xff]
    %v1306 = vld [vmem:[#allocation7 + $0x1348] sm:$0xff]
    %v1307 = vld [vmem:[#allocation7 + $0x1350] sm:$0xff]
    %v1308 = vld [vmem:[#allocation7 + $0x1358] sm:$0xff]
    %v1309 = vld [vmem:[#allocation7 + $0x1360] sm:$0xff]
    %v1310 = vld [vmem:[#allocation7 + $0x1368] sm:$0xff]
    %v1311 = vld [vmem:[#allocation7 + $0x1370] sm:$0xff]
    %v1312 = vld [vmem:[#allocation7 + $0x1378] sm:$0xff]
    %v1313 = vld [vmem:[#allocation7 + $0x1380] sm:$0xff]
    %v1314 = vld [vmem:[#allocation7 + $0x1388] sm:$0xff]
    %v1315 = vld [vmem:[#allocation7 + $0x1390] sm:$0xff]
    %v1316 = vld [vmem:[#allocation7 + $0x1398] sm:$0xff]
    %v1317 = vld [vmem:[#allocation7 + $0x13a0] sm:$0xff]
    %v1318 = vld [vmem:[#allocation7 + $0x13a8] sm:$0xff]
    %v1319 = vld [vmem:[#allocation7 + $0x13b0] sm:$0xff]
    %v1320 = vld [vmem:[#allocation7 + $0x13b8] sm:$0xff]
    %v1321 = vld [vmem:[#allocation7 + $0x13c0] sm:$0xff]
    %v1322 = vld [vmem:[#allocation7 + $0x13c8] sm:$0xff]
    %v1323 = vld [vmem:[#allocation7 + $0x13d0] sm:$0xff]
    %v1324 = vld [vmem:[#allocation7 + $0x13d8] sm:$0xff]
    %v1325 = vld [vmem:[#allocation7 + $0x13e0] sm:$0xff]
    %v1326 = vld [vmem:[#allocation7 + $0x13e8] sm:$0xff]
    %v1327 = vld [vmem:[#allocation7 + $0x13f0] sm:$0xff]
    %v1328 = vld [vmem:[#allocation7 + $0x13f8] sm:$0xff]
    %v1329 = vld [vmem:[#allocation7 + $0x1400] sm:$0xff]
    %v1330 = vld [vmem:[#allocation7 + $0x1408] sm:$0xff]
    %v1331 = vld [vmem:[#allocation7 + $0x1410] sm:$0xff]
    %v1332 = vld [vmem:[#allocation7 + $0x1418] sm:$0xff]
    %v1333 = vld [vmem:[#allocation7 + $0x1420] sm:$0xff]
    %v1334 = vld [vmem:[#allocation7 + $0x1428] sm:$0xff]
    %v1335 = vld [vmem:[#allocation7 + $0x1430] sm:$0xff]
    %v1336 = vld [vmem:[#allocation7 + $0x1438] sm:$0xff]
    %v1337 = vld [vmem:[#allocation7 + $0x1440] sm:$0xff]
    %v1338 = vld [vmem:[#allocation7 + $0x1448] sm:$0xff]
    %v1339 = vld [vmem:[#allocation7 + $0x1450] sm:$0xff]
    %v1340 = vld [vmem:[#allocation7 + $0x1458] sm:$0xff]
    %v1341 = vld [vmem:[#allocation7 + $0x1460] sm:$0xff]
    %v1342 = vld [vmem:[#allocation7 + $0x1468] sm:$0xff]
    %v1343 = vld [vmem:[#allocation7 + $0x1470] sm:$0xff]
    %v1344 = vld [vmem:[#allocation7 + $0x1478] sm:$0xff]
    %v1345 = vld [vmem:[#allocation7 + $0x1480] sm:$0xff]
    %v1346 = vld [vmem:[#allocation7 + $0x1488] sm:$0xff]
    %v1347 = vld [vmem:[#allocation7 + $0x1490] sm:$0xff]
    %v1348 = vld [vmem:[#allocation7 + $0x1498] sm:$0xff]
    %v1349 = vld [vmem:[#allocation7 + $0x14a0] sm:$0xff]
    %v1350 = vld [vmem:[#allocation7 + $0x14a8] sm:$0xff]
    %v1351 = vld [vmem:[#allocation7 + $0x14b0] sm:$0xff]
    %v1352 = vld [vmem:[#allocation7 + $0x14b8] sm:$0xff]
    %v1353 = vld [vmem:[#allocation7 + $0x14c0] sm:$0xff]
    %v1354 = vld [vmem:[#allocation7 + $0x14c8] sm:$0xff]
    %v1355 = vld [vmem:[#allocation7 + $0x14d0] sm:$0xff]
    %v1356 = vld [vmem:[#allocation7 + $0x14d8] sm:$0xff]
    %v1357 = vld [vmem:[#allocation7 + $0x14e0] sm:$0xff]
    %v1358 = vld [vmem:[#allocation7 + $0x14e8] sm:$0xff]
    %v1359 = vld [vmem:[#allocation7 + $0x14f0] sm:$0xff]
    %v1360 = vld [vmem:[#allocation7 + $0x14f8] sm:$0xff]
    %v1361 = vld [vmem:[#allocation7 + $0x1500] sm:$0xff]
    %v1362 = vld [vmem:[#allocation7 + $0x1508] sm:$0xff]
    %v1363 = vld [vmem:[#allocation7 + $0x1510] sm:$0xff]
    %v1364 = vld [vmem:[#allocation7 + $0x1518] sm:$0xff]
    %v1365 = vld [vmem:[#allocation7 + $0x1520] sm:$0xff]
    %v1366 = vld [vmem:[#allocation7 + $0x1528] sm:$0xff]
    %v1367 = vld [vmem:[#allocation7 + $0x1530] sm:$0xff]
    %v1368 = vld [vmem:[#allocation7 + $0x1538] sm:$0xff]
    %v1369 = vld [vmem:[#allocation7 + $0x1540] sm:$0xff]
    %v1370 = vld [vmem:[#allocation7 + $0x1548] sm:$0xff]
    %v1371 = vld [vmem:[#allocation7 + $0x1550] sm:$0xff]
    %v1372 = vld [vmem:[#allocation7 + $0x1558] sm:$0xff]
    %v1373 = vld [vmem:[#allocation7 + $0x1560] sm:$0xff]
    %v1374 = vld [vmem:[#allocation7 + $0x1568] sm:$0xff]
    %v1375 = vld [vmem:[#allocation7 + $0x1570] sm:$0xff]
    %v1376 = vld [vmem:[#allocation7 + $0x1578] sm:$0xff]
    %v1377 = vld [vmem:[#allocation7 + $0x1580] sm:$0xff]
    %v1378 = vld [vmem:[#allocation7 + $0x1588] sm:$0xff]
    %v1379 = vld [vmem:[#allocation7 + $0x1590] sm:$0xff]
    %v1380 = vld [vmem:[#allocation7 + $0x1598] sm:$0xff]
    %v1381 = vld [vmem:[#allocation7 + $0x15a0] sm:$0xff]
    %v1382 = vld [vmem:[#allocation7 + $0x15a8] sm:$0xff]
    %v1383 = vld [vmem:[#allocation7 + $0x15b0] sm:$0xff]
    %v1384 = vld [vmem:[#allocation7 + $0x15b8] sm:$0xff]
    %v1385 = vld [vmem:[#allocation7 + $0x15c0] sm:$0xff]
    %v1386 = vld [vmem:[#allocation7 + $0x15c8] sm:$0xff]
    %v1387 = vld [vmem:[#allocation7 + $0x15d0] sm:$0xff]
    %v1388 = vld [vmem:[#allocation7 + $0x15d8] sm:$0xff]
    %v1389 = vld [vmem:[#allocation7 + $0x15e0] sm:$0xff]
    %v1390 = vld [vmem:[#allocation7 + $0x15e8] sm:$0xff]
    %v1391 = vld [vmem:[#allocation7 + $0x15f0] sm:$0xff]
    %v1392 = vld [vmem:[#allocation7 + $0x15f8] sm:$0xff]
    %v1393 = vld [vmem:[#allocation7 + $0x1600] sm:$0xff]
    %v1394 = vld [vmem:[#allocation7 + $0x1608] sm:$0xff]
    %v1395 = vld [vmem:[#allocation7 + $0x1610] sm:$0xff]
    %v1396 = vld [vmem:[#allocation7 + $0x1618] sm:$0xff]
    %v1397 = vld [vmem:[#allocation7 + $0x1620] sm:$0xff]
    %v1398 = vld [vmem:[#allocation7 + $0x1628] sm:$0xff]
    %v1399 = vld [vmem:[#allocation7 + $0x1630] sm:$0xff]
    %v1400 = vld [vmem:[#allocation7 + $0x1638] sm:$0xff]
    %v1401 = vld [vmem:[#allocation7 + $0x1640] sm:$0xff]
    %v1402 = vld [vmem:[#allocation7 + $0x1648] sm:$0xff]
    %v1403 = vld [vmem:[#allocation7 + $0x1650] sm:$0xff]
    %v1404 = vld [vmem:[#allocation7 + $0x1658] sm:$0xff]
    %v1405 = vld [vmem:[#allocation7 + $0x1660] sm:$0xff]
    %v1406 = vld [vmem:[#allocation7 + $0x1668] sm:$0xff]
    %v1407 = vld [vmem:[#allocation7 + $0x1670] sm:$0xff]
    %v1408 = vld [vmem:[#allocation7 + $0x1678] sm:$0xff]
    %v1409 = vld [vmem:[#allocation7 + $0x1680] sm:$0xff]
    %v1410 = vld [vmem:[#allocation7 + $0x1688] sm:$0xff]
    %v1411 = vld [vmem:[#allocation7 + $0x1690] sm:$0xff]
    %v1412 = vld [vmem:[#allocation7 + $0x1698] sm:$0xff]
    %v1413 = vld [vmem:[#allocation7 + $0x16a0] sm:$0xff]
    %v1414 = vld [vmem:[#allocation7 + $0x16a8] sm:$0xff]
    %v1415 = vld [vmem:[#allocation7 + $0x16b0] sm:$0xff]
    %v1416 = vld [vmem:[#allocation7 + $0x16b8] sm:$0xff]
    %v1417 = vld [vmem:[#allocation7 + $0x16c0] sm:$0xff]
    %v1418 = vld [vmem:[#allocation7 + $0x16c8] sm:$0xff]
    %v1419 = vld [vmem:[#allocation7 + $0x16d0] sm:$0xff]
    %v1420 = vld [vmem:[#allocation7 + $0x16d8] sm:$0xff]
    %v1421 = vld [vmem:[#allocation7 + $0x16e0] sm:$0xff]
    %v1422 = vld [vmem:[#allocation7 + $0x16e8] sm:$0xff]
    %v1423 = vld [vmem:[#allocation7 + $0x16f0] sm:$0xff]
    %v1424 = vld [vmem:[#allocation7 + $0x16f8] sm:$0xff]
    %v1425 = vld [vmem:[#allocation7 + $0x1700] sm:$0xff]
    %v1426 = vld [vmem:[#allocation7 + $0x1708] sm:$0xff]
    %v1427 = vld [vmem:[#allocation7 + $0x1710] sm:$0xff]
    %v1428 = vld [vmem:[#allocation7 + $0x1718] sm:$0xff]
    %v1429 = vld [vmem:[#allocation7 + $0x1720] sm:$0xff]
    %v1430 = vld [vmem:[#allocation7 + $0x1728] sm:$0xff]
    %v1431 = vld [vmem:[#allocation7 + $0x1730] sm:$0xff]
    %v1432 = vld [vmem:[#allocation7 + $0x1738] sm:$0xff]
    %v1433 = vld [vmem:[#allocation7 + $0x1740] sm:$0xff]
    %v1434 = vld [vmem:[#allocation7 + $0x1748] sm:$0xff]
    %v1435 = vld [vmem:[#allocation7 + $0x1750] sm:$0xff]
    %v1436 = vld [vmem:[#allocation7 + $0x1758] sm:$0xff]
    %v1437 = vld [vmem:[#allocation7 + $0x1760] sm:$0xff]
    %v1438 = vld [vmem:[#allocation7 + $0x1768] sm:$0xff]
    %v1439 = vld [vmem:[#allocation7 + $0x1770] sm:$0xff]
    %v1440 = vld [vmem:[#allocation7 + $0x1778] sm:$0xff]
    %v1441 = vld [vmem:[#allocation7 + $0x1780] sm:$0xff]
    %v1442 = vld [vmem:[#allocation7 + $0x1788] sm:$0xff]
    %v1443 = vld [vmem:[#allocation7 + $0x1790] sm:$0xff]
    %v1444 = vld [vmem:[#allocation7 + $0x1798] sm:$0xff]
    %v1445 = vld [vmem:[#allocation7 + $0x17a0] sm:$0xff]
    %v1446 = vld [vmem:[#allocation7 + $0x17a8] sm:$0xff]
    %v1447 = vld [vmem:[#allocation7 + $0x17b0] sm:$0xff]
    %v1448 = vld [vmem:[#allocation7 + $0x17b8] sm:$0xff]
    %v1449 = vld [vmem:[#allocation7 + $0x17c0] sm:$0xff]
    %v1450 = vld [vmem:[#allocation7 + $0x17c8] sm:$0xff]
    %v1451 = vld [vmem:[#allocation7 + $0x17d0] sm:$0xff]
    %v1452 = vld [vmem:[#allocation7 + $0x17d8] sm:$0xff]
    %v1453 = vld [vmem:[#allocation7 + $0x17e0] sm:$0xff]
    %v1454 = vld [vmem:[#allocation7 + $0x17e8] sm:$0xff]
    %v1455 = vld [vmem:[#allocation7 + $0x17f0] sm:$0xff]
    %v1456 = vld [vmem:[#allocation7 + $0x17f8] sm:$0xff]
    %v1457 = vld [vmem:[#allocation7 + $0x1800] sm:$0xff]
    %v1458 = vld [vmem:[#allocation7 + $0x1808] sm:$0xff]
    %v1459 = vld [vmem:[#allocation7 + $0x1810] sm:$0xff]
    %v1460 = vld [vmem:[#allocation7 + $0x1818] sm:$0xff]
    %v1461 = vld [vmem:[#allocation7 + $0x1820] sm:$0xff]
    %v1462 = vld [vmem:[#allocation7 + $0x1828] sm:$0xff]
    %v1463 = vld [vmem:[#allocation7 + $0x1830] sm:$0xff]
    %v1464 = vld [vmem:[#allocation7 + $0x1838] sm:$0xff]
    %v1465 = vld [vmem:[#allocation7 + $0x1840] sm:$0xff]
    %v1466 = vld [vmem:[#allocation7 + $0x1848] sm:$0xff]
    %v1467 = vld [vmem:[#allocation7 + $0x1850] sm:$0xff]
    %v1468 = vld [vmem:[#allocation7 + $0x1858] sm:$0xff]
    %v1469 = vld [vmem:[#allocation7 + $0x1860] sm:$0xff]
    %v1470 = vld [vmem:[#allocation7 + $0x1868] sm:$0xff]
    %v1471 = vld [vmem:[#allocation7 + $0x1870] sm:$0xff]
    %v1472 = vld [vmem:[#allocation7 + $0x1878] sm:$0xff]
    %v1473 = vld [vmem:[#allocation7 + $0x1880] sm:$0xff]
    %v1474 = vld [vmem:[#allocation7 + $0x1888] sm:$0xff]
    %v1475 = vld [vmem:[#allocation7 + $0x1890] sm:$0xff]
    %v1476 = vld [vmem:[#allocation7 + $0x1898] sm:$0xff]
    %v1477 = vld [vmem:[#allocation7 + $0x18a0] sm:$0xff]
    %v1478 = vld [vmem:[#allocation7 + $0x18a8] sm:$0xff]
    %v1479 = vld [vmem:[#allocation7 + $0x18b0] sm:$0xff]
    %v1480 = vld [vmem:[#allocation7 + $0x18b8] sm:$0xff]
    %v1481 = vld [vmem:[#allocation7 + $0x18c0] sm:$0xff]
    %v1482 = vld [vmem:[#allocation7 + $0x18c8] sm:$0xff]
    %v1483 = vld [vmem:[#allocation7 + $0x18d0] sm:$0xff]
    %v1484 = vld [vmem:[#allocation7 + $0x18d8] sm:$0xff]
    %v1485 = vld [vmem:[#allocation7 + $0x18e0] sm:$0xff]
    %v1486 = vld [vmem:[#allocation7 + $0x18e8] sm:$0xff]
    %v1487 = vld [vmem:[#allocation7 + $0x18f0] sm:$0xff]
    %v1488 = vld [vmem:[#allocation7 + $0x18f8] sm:$0xff]
    %v1489 = vld [vmem:[#allocation7 + $0x1900] sm:$0xff]
    %v1490 = vld [vmem:[#allocation7 + $0x1908] sm:$0xff]
    %v1491 = vld [vmem:[#allocation7 + $0x1910] sm:$0xff]
    %v1492 = vld [vmem:[#allocation7 + $0x1918] sm:$0xff]
    %v1493 = vld [vmem:[#allocation7 + $0x1920] sm:$0xff]
    %v1494 = vld [vmem:[#allocation7 + $0x1928] sm:$0xff]
    %v1495 = vld [vmem:[#allocation7 + $0x1930] sm:$0xff]
    %v1496 = vld [vmem:[#allocation7 + $0x1938] sm:$0xff]
    %v1497 = vld [vmem:[#allocation7 + $0x1940] sm:$0xff]
    %v1498 = vld [vmem:[#allocation7 + $0x1948] sm:$0xff]
    %v1499 = vld [vmem:[#allocation7 + $0x1950] sm:$0xff]
    %v1500 = vld [vmem:[#allocation7 + $0x1958] sm:$0xff]
    %v1501 = vld [vmem:[#allocation7 + $0x1960] sm:$0xff]
    %v1502 = vld [vmem:[#allocation7 + $0x1968] sm:$0xff]
    %v1503 = vld [vmem:[#allocation7 + $0x1970] sm:$0xff]
    %v1504 = vld [vmem:[#allocation7 + $0x1978] sm:$0xff]
    %v1505 = vld [vmem:[#allocation7 + $0x1980] sm:$0xff]
    %v1506 = vld [vmem:[#allocation7 + $0x1988] sm:$0xff]
    %v1507 = vld [vmem:[#allocation7 + $0x1990] sm:$0xff]
    %v1508 = vld [vmem:[#allocation7 + $0x1998] sm:$0xff]
    %v1509 = vld [vmem:[#allocation7 + $0x19a0] sm:$0xff]
    %v1510 = vld [vmem:[#allocation7 + $0x19a8] sm:$0xff]
    %v1511 = vld [vmem:[#allocation7 + $0x19b0] sm:$0xff]
    %v1512 = vld [vmem:[#allocation7 + $0x19b8] sm:$0xff]
    %v1513 = vld [vmem:[#allocation7 + $0x19c0] sm:$0xff]
    %v1514 = vld [vmem:[#allocation7 + $0x19c8] sm:$0xff]
    %v1515 = vld [vmem:[#allocation7 + $0x19d0] sm:$0xff]
    %v1516 = vld [vmem:[#allocation7 + $0x19d8] sm:$0xff]
    %v1517 = vld [vmem:[#allocation7 + $0x19e0] sm:$0xff]
    %v1518 = vld [vmem:[#allocation7 + $0x19e8] sm:$0xff]
    %v1519 = vld [vmem:[#allocation7 + $0x19f0] sm:$0xff]
    %v1520 = vld [vmem:[#allocation7 + $0x19f8] sm:$0xff]
    %v1521 = vld [vmem:[#allocation7 + $0x1a00] sm:$0xff]
    %v1522 = vld [vmem:[#allocation7 + $0x1a08] sm:$0xff]
    %v1523 = vld [vmem:[#allocation7 + $0x1a10] sm:$0xff]
    %v1524 = vld [vmem:[#allocation7 + $0x1a18] sm:$0xff]
    %v1525 = vld [vmem:[#allocation7 + $0x1a20] sm:$0xff]
    %v1526 = vld [vmem:[#allocation7 + $0x1a28] sm:$0xff]
    %v1527 = vld [vmem:[#allocation7 + $0x1a30] sm:$0xff]
    %v1528 = vld [vmem:[#allocation7 + $0x1a38] sm:$0xff]
    %v1529 = vld [vmem:[#allocation7 + $0x1a40] sm:$0xff]
    %v1530 = vld [vmem:[#allocation7 + $0x1a48] sm:$0xff]
    %v1531 = vld [vmem:[#allocation7 + $0x1a50] sm:$0xff]
    %v1532 = vld [vmem:[#allocation7 + $0x1a58] sm:$0xff]
    %v1533 = vld [vmem:[#allocation7 + $0x1a60] sm:$0xff]
    %v1534 = vld [vmem:[#allocation7 + $0x1a68] sm:$0xff]
    %v1535 = vld [vmem:[#allocation7 + $0x1a70] sm:$0xff]
    %v1536 = vld [vmem:[#allocation7 + $0x1a78] sm:$0xff]
    %v1537 = vld [vmem:[#allocation7 + $0x1a80] sm:$0xff]
    %v1538 = vld [vmem:[#allocation7 + $0x1a88] sm:$0xff]
    %v1539 = vld [vmem:[#allocation7 + $0x1a90] sm:$0xff]
    %v1540 = vld [vmem:[#allocation7 + $0x1a98] sm:$0xff]
    %v1541 = vld [vmem:[#allocation7 + $0x1aa0] sm:$0xff]
    %v1542 = vld [vmem:[#allocation7 + $0x1aa8] sm:$0xff]
    %v1543 = vld [vmem:[#allocation7 + $0x1ab0] sm:$0xff]
    %v1544 = vld [vmem:[#allocation7 + $0x1ab8] sm:$0xff]
    %v1545 = vld [vmem:[#allocation7 + $0x1ac0] sm:$0xff]
    %v1546 = vld [vmem:[#allocation7 + $0x1ac8] sm:$0xff]
    %v1547 = vld [vmem:[#allocation7 + $0x1ad0] sm:$0xff]
    %v1548 = vld [vmem:[#allocation7 + $0x1ad8] sm:$0xff]
    %v1549 = vld [vmem:[#allocation7 + $0x1ae0] sm:$0xff]
    %v1550 = vld [vmem:[#allocation7 + $0x1ae8] sm:$0xff]
    %v1551 = vld [vmem:[#allocation7 + $0x1af0] sm:$0xff]
    %v1552 = vld [vmem:[#allocation7 + $0x1af8] sm:$0xff]
    %v1553 = vld [vmem:[#allocation7 + $0x1b00] sm:$0xff]
    %v1554 = vld [vmem:[#allocation7 + $0x1b08] sm:$0xff]
    %v1555 = vld [vmem:[#allocation7 + $0x1b10] sm:$0xff]
    %v1556 = vld [vmem:[#allocation7 + $0x1b18] sm:$0xff]
    %v1557 = vld [vmem:[#allocation7 + $0x1b20] sm:$0xff]
    %v1558 = vld [vmem:[#allocation7 + $0x1b28] sm:$0xff]
    %v1559 = vld [vmem:[#allocation7 + $0x1b30] sm:$0xff]
    %v1560 = vld [vmem:[#allocation7 + $0x1b38] sm:$0xff]
    %v1561 = vld [vmem:[#allocation7 + $0x1b40] sm:$0xff]
    %v1562 = vld [vmem:[#allocation7 + $0x1b48] sm:$0xff]
    %v1563 = vld [vmem:[#allocation7 + $0x1b50] sm:$0xff]
    %v1564 = vld [vmem:[#allocation7 + $0x1b58] sm:$0xff]
    %v1565 = vld [vmem:[#allocation7 + $0x1b60] sm:$0xff]
    %v1566 = vld [vmem:[#allocation7 + $0x1b68] sm:$0xff]
    %v1567 = vld [vmem:[#allocation7 + $0x1b70] sm:$0xff]
    %v1568 = vld [vmem:[#allocation7 + $0x1b78] sm:$0xff]
    %v1569 = vld [vmem:[#allocation7 + $0x1b80] sm:$0xff]
    %v1570 = vld [vmem:[#allocation7 + $0x1b88] sm:$0xff]
    %v1571 = vld [vmem:[#allocation7 + $0x1b90] sm:$0xff]
    %v1572 = vld [vmem:[#allocation7 + $0x1b98] sm:$0xff]
    %v1573 = vld [vmem:[#allocation7 + $0x1ba0] sm:$0xff]
    %v1574 = vld [vmem:[#allocation7 + $0x1ba8] sm:$0xff]
    %v1575 = vld [vmem:[#allocation7 + $0x1bb0] sm:$0xff]
    %v1576 = vld [vmem:[#allocation7 + $0x1bb8] sm:$0xff]
    %v1577 = vld [vmem:[#allocation7 + $0x1bc0] sm:$0xff]
    %v1578 = vld [vmem:[#allocation7 + $0x1bc8] sm:$0xff]
    %v1579 = vld [vmem:[#allocation7 + $0x1bd0] sm:$0xff]
    %v1580 = vld [vmem:[#allocation7 + $0x1bd8] sm:$0xff]
    %v1581 = vld [vmem:[#allocation7 + $0x1be0] sm:$0xff]
    %v1582 = vld [vmem:[#allocation7 + $0x1be8] sm:$0xff]
    %v1583 = vld [vmem:[#allocation7 + $0x1bf0] sm:$0xff]
    %v1584 = vld [vmem:[#allocation7 + $0x1bf8] sm:$0xff]
    %v1585 = vld [vmem:[#allocation7 + $0x1c00] sm:$0xff]
    %v1586 = vld [vmem:[#allocation7 + $0x1c08] sm:$0xff]
    %v1587 = vld [vmem:[#allocation7 + $0x1c10] sm:$0xff]
    %v1588 = vld [vmem:[#allocation7 + $0x1c18] sm:$0xff]
    %v1589 = vld [vmem:[#allocation7 + $0x1c20] sm:$0xff]
    %v1590 = vld [vmem:[#allocation7 + $0x1c28] sm:$0xff]
    %v1591 = vld [vmem:[#allocation7 + $0x1c30] sm:$0xff]
    %v1592 = vld [vmem:[#allocation7 + $0x1c38] sm:$0xff]
    %v1593 = vld [vmem:[#allocation7 + $0x1c40] sm:$0xff]
    %v1594 = vld [vmem:[#allocation7 + $0x1c48] sm:$0xff]
    %v1595 = vld [vmem:[#allocation7 + $0x1c50] sm:$0xff]
    %v1596 = vld [vmem:[#allocation7 + $0x1c58] sm:$0xff]
    %v1597 = vld [vmem:[#allocation7 + $0x1c60] sm:$0xff]
    %v1598 = vld [vmem:[#allocation7 + $0x1c68] sm:$0xff]
    %v1599 = vld [vmem:[#allocation7 + $0x1c70] sm:$0xff]
    %v1600 = vld [vmem:[#allocation7 + $0x1c78] sm:$0xff]
    %v1601 = vld [vmem:[#allocation7 + $0x1c80] sm:$0xff]
    %v1602 = vld [vmem:[#allocation7 + $0x1c88] sm:$0xff]
    %v1603 = vld [vmem:[#allocation7 + $0x1c90] sm:$0xff]
    %v1604 = vld [vmem:[#allocation7 + $0x1c98] sm:$0xff]
    %v1605 = vld [vmem:[#allocation7 + $0x1ca0] sm:$0xff]
    %v1606 = vld [vmem:[#allocation7 + $0x1ca8] sm:$0xff]
    %v1607 = vld [vmem:[#allocation7 + $0x1cb0] sm:$0xff]
    %v1608 = vld [vmem:[#allocation7 + $0x1cb8] sm:$0xff]
    %v1609 = vld [vmem:[#allocation7 + $0x1cc0] sm:$0xff]
    %v1610 = vld [vmem:[#allocation7 + $0x1cc8] sm:$0xff]
    %v1611 = vld [vmem:[#allocation7 + $0x1cd0] sm:$0xff]
    %v1612 = vld [vmem:[#allocation7 + $0x1cd8] sm:$0xff]
    %v1613 = vld [vmem:[#allocation7 + $0x1ce0] sm:$0xff]
    %v1614 = vld [vmem:[#allocation7 + $0x1ce8] sm:$0xff]
    %v1615 = vld [vmem:[#allocation7 + $0x1cf0] sm:$0xff]
    %v1616 = vld [vmem:[#allocation7 + $0x1cf8] sm:$0xff]
    %v1617 = vld [vmem:[#allocation7 + $0x1d00] sm:$0xff]
    %v1618 = vld [vmem:[#allocation7 + $0x1d08] sm:$0xff]
    %v1619 = vld [vmem:[#allocation7 + $0x1d10] sm:$0xff]
    %v1620 = vld [vmem:[#allocation7 + $0x1d18] sm:$0xff]
    %v1621 = vld [vmem:[#allocation7 + $0x1d20] sm:$0xff]
    %v1622 = vld [vmem:[#allocation7 + $0x1d28] sm:$0xff]
    %v1623 = vld [vmem:[#allocation7 + $0x1d30] sm:$0xff]
    %v1624 = vld [vmem:[#allocation7 + $0x1d38] sm:$0xff]
    %v1625 = vld [vmem:[#allocation7 + $0x1d40] sm:$0xff]
    %v1626 = vld [vmem:[#allocation7 + $0x1d48] sm:$0xff]
    %v1627 = vld [vmem:[#allocation7 + $0x1d50] sm:$0xff]
    %v1628 = vld [vmem:[#allocation7 + $0x1d58] sm:$0xff]
    %v1629 = vld [vmem:[#allocation7 + $0x1d60] sm:$0xff]
    %v1630 = vld [vmem:[#allocation7 + $0x1d68] sm:$0xff]
    %v1631 = vld [vmem:[#allocation7 + $0x1d70] sm:$0xff]
    %v1632 = vld [vmem:[#allocation7 + $0x1d78] sm:$0xff]
    %v1633 = vld [vmem:[#allocation7 + $0x1d80] sm:$0xff]
    %v1634 = vld [vmem:[#allocation7 + $0x1d88] sm:$0xff]
    %v1635 = vld [vmem:[#allocation7 + $0x1d90] sm:$0xff]
    %v1636 = vld [vmem:[#allocation7 + $0x1d98] sm:$0xff]
    %v1637 = vld [vmem:[#allocation7 + $0x1da0] sm:$0xff]
    %v1638 = vld [vmem:[#allocation7 + $0x1da8] sm:$0xff]
    %v1639 = vld [vmem:[#allocation7 + $0x1db0] sm:$0xff]
    %v1640 = vld [vmem:[#allocation7 + $0x1db8] sm:$0xff]
    %v1641 = vld [vmem:[#allocation7 + $0x1dc0] sm:$0xff]
    %v1642 = vld [vmem:[#allocation7 + $0x1dc8] sm:$0xff]
    %v1643 = vld [vmem:[#allocation7 + $0x1dd0] sm:$0xff]
    %v1644 = vld [vmem:[#allocation7 + $0x1dd8] sm:$0xff]
    %v1645 = vld [vmem:[#allocation7 + $0x1de0] sm:$0xff]
    %v1646 = vld [vmem:[#allocation7 + $0x1de8] sm:$0xff]
    %v1647 = vld [vmem:[#allocation7 + $0x1df0] sm:$0xff]
    %v1648 = vld [vmem:[#allocation7 + $0x1df8] sm:$0xff]
    %v1649 = vld [vmem:[#allocation7 + $0x1e00] sm:$0xff]
    %v1650 = vld [vmem:[#allocation7 + $0x1e08] sm:$0xff]
    %v1651 = vld [vmem:[#allocation7 + $0x1e10] sm:$0xff]
    %v1652 = vld [vmem:[#allocation7 + $0x1e18] sm:$0xff]
    %v1653 = vld [vmem:[#allocation7 + $0x1e20] sm:$0xff]
    %v1654 = vld [vmem:[#allocation7 + $0x1e28] sm:$0xff]
    %v1655 = vld [vmem:[#allocation7 + $0x1e30] sm:$0xff]
    %v1656 = vld [vmem:[#allocation7 + $0x1e38] sm:$0xff]
    %v1657 = vld [vmem:[#allocation7 + $0x1e40] sm:$0xff]
    %v1658 = vld [vmem:[#allocation7 + $0x1e48] sm:$0xff]
    %v1659 = vld [vmem:[#allocation7 + $0x1e50] sm:$0xff]
    %v1660 = vld [vmem:[#allocation7 + $0x1e58] sm:$0xff]
    %v1661 = vld [vmem:[#allocation7 + $0x1e60] sm:$0xff]
    %v1662 = vld [vmem:[#allocation7 + $0x1e68] sm:$0xff]
    %v1663 = vld [vmem:[#allocation7 + $0x1e70] sm:$0xff]
    %v1664 = vld [vmem:[#allocation7 + $0x1e78] sm:$0xff]
    %v1665 = vld [vmem:[#allocation7 + $0x1e80] sm:$0xff]
    %v1666 = vld [vmem:[#allocation7 + $0x1e88] sm:$0xff]
    %v1667 = vld [vmem:[#allocation7 + $0x1e90] sm:$0xff]
    %v1668 = vld [vmem:[#allocation7 + $0x1e98] sm:$0xff]
    %v1669 = vld [vmem:[#allocation7 + $0x1ea0] sm:$0xff]
    %v1670 = vld [vmem:[#allocation7 + $0x1ea8] sm:$0xff]
    %v1671 = vld [vmem:[#allocation7 + $0x1eb0] sm:$0xff]
    %v1672 = vld [vmem:[#allocation7 + $0x1eb8] sm:$0xff]
    %v1673 = vld [vmem:[#allocation7 + $0x1ec0] sm:$0xff]
    %v1674 = vld [vmem:[#allocation7 + $0x1ec8] sm:$0xff]
    %v1675 = vld [vmem:[#allocation7 + $0x1ed0] sm:$0xff]
    %v1676 = vld [vmem:[#allocation7 + $0x1ed8] sm:$0xff]
    %v1677 = vld [vmem:[#allocation7 + $0x1ee0] sm:$0xff]
    %v1678 = vld [vmem:[#allocation7 + $0x1ee8] sm:$0xff]
    %v1679 = vld [vmem:[#allocation7 + $0x1ef0] sm:$0xff]
    %v1680 = vld [vmem:[#allocation7 + $0x1ef8] sm:$0xff]
    %v1681 = vld [vmem:[#allocation7 + $0x1f00] sm:$0xff]
    %v1682 = vld [vmem:[#allocation7 + $0x1f08] sm:$0xff]
    %v1683 = vld [vmem:[#allocation7 + $0x1f10] sm:$0xff]
    %v1684 = vld [vmem:[#allocation7 + $0x1f18] sm:$0xff]
    %v1685 = vld [vmem:[#allocation7 + $0x1f20] sm:$0xff]
    %v1686 = vld [vmem:[#allocation7 + $0x1f28] sm:$0xff]
    %v1687 = vld [vmem:[#allocation7 + $0x1f30] sm:$0xff]
    %v1688 = vld [vmem:[#allocation7 + $0x1f38] sm:$0xff]
    %v1689 = vld [vmem:[#allocation7 + $0x1f40] sm:$0xff]
    %v1690 = vld [vmem:[#allocation7 + $0x1f48] sm:$0xff]
    %v1691 = vld [vmem:[#allocation7 + $0x1f50] sm:$0xff]
    %v1692 = vld [vmem:[#allocation7 + $0x1f58] sm:$0xff]
    %v1693 = vld [vmem:[#allocation7 + $0x1f60] sm:$0xff]
    %v1694 = vld [vmem:[#allocation7 + $0x1f68] sm:$0xff]
    %v1695 = vld [vmem:[#allocation7 + $0x1f70] sm:$0xff]
    %v1696 = vld [vmem:[#allocation7 + $0x1f78] sm:$0xff]
    %v1697 = vld [vmem:[#allocation7 + $0x1f80] sm:$0xff]
    %v1698 = vld [vmem:[#allocation7 + $0x1f88] sm:$0xff]
    %v1699 = vld [vmem:[#allocation7 + $0x1f90] sm:$0xff]
    %v1700 = vld [vmem:[#allocation7 + $0x1f98] sm:$0xff]
    %v1701 = vld [vmem:[#allocation7 + $0x1fa0] sm:$0xff]
    %v1702 = vld [vmem:[#allocation7 + $0x1fa8] sm:$0xff]
    %v1703 = vld [vmem:[#allocation7 + $0x1fb0] sm:$0xff]
    %v1704 = vld [vmem:[#allocation7 + $0x1fb8] sm:$0xff]
    %v1705 = vld [vmem:[#allocation7 + $0x1fc0] sm:$0xff]
    %v1706 = vld [vmem:[#allocation7 + $0x1fc8] sm:$0xff]
    %v1707 = vld [vmem:[#allocation7 + $0x1fd0] sm:$0xff]
    %v1708 = vld [vmem:[#allocation7 + $0x1fd8] sm:$0xff]
    %v1709 = vld [vmem:[#allocation7 + $0x1fe0] sm:$0xff]
    %v1710 = vld [vmem:[#allocation7 + $0x1fe8] sm:$0xff]
    %v1711 = vld [vmem:[#allocation7 + $0x1ff0] sm:$0xff]
    %v1712 = vld [vmem:[#allocation7 + $0x1ff8] sm:$0xff]
    %v1713 = vld [vmem:[#allocation8] sm:$0xff]
    %v1715 = vperm.slane %v1713, 0
    %v1716 = vperm.slane %v1713, 1
    %v1717 = vperm.slane %v1713, 2
    %v1718 = vperm.slane %v1713, 3
    %v1719 = vperm.slane %v1713, 4
    %v1720 = vperm.slane %v1713, 5
    %v1721 = vperm.slane %v1713, 6
    %v1722 = vperm.slane %v1713, 7
    %v2755 = vunpack.c.l.b16 %v689
    %v2756 = vunpack.c.h.b16 %v689
    %v2757 = vunpack.c.l.b16 %v690
    %v2758 = vunpack.c.h.b16 %v690
    %v2759 = vunpack.c.l.b16 %v691
    %v2760 = vunpack.c.h.b16 %v691
    %v2761 = vunpack.c.l.b16 %v692
    %v2762 = vunpack.c.h.b16 %v692
    %v2763 = vunpack.c.l.b16 %v693
    %v2764 = vunpack.c.h.b16 %v693
    %v2765 = vunpack.c.l.b16 %v694
    %v2766 = vunpack.c.h.b16 %v694
    %v2767 = vunpack.c.l.b16 %v695
    %v2768 = vunpack.c.h.b16 %v695
    %v2769 = vunpack.c.l.b16 %v696
    %v2770 = vunpack.c.h.b16 %v696
    %v2771 = vunpack.c.l.b16 %v697
    %v2772 = vunpack.c.h.b16 %v697
    %v2773 = vunpack.c.l.b16 %v698
    %v2774 = vunpack.c.h.b16 %v698
    %v2775 = vunpack.c.l.b16 %v699
    %v2776 = vunpack.c.h.b16 %v699
    %v2777 = vunpack.c.l.b16 %v700
    %v2778 = vunpack.c.h.b16 %v700
    %v2779 = vunpack.c.l.b16 %v701
    %v2780 = vunpack.c.h.b16 %v701
    %v2781 = vunpack.c.l.b16 %v702
    %v2782 = vunpack.c.h.b16 %v702
    %v2783 = vunpack.c.l.b16 %v703
    %v2784 = vunpack.c.h.b16 %v703
    %v2785 = vunpack.c.l.b16 %v704
    %v2786 = vunpack.c.h.b16 %v704
    %v2787 = vunpack.c.l.b16 %v705
    %v2788 = vunpack.c.h.b16 %v705
    %v2789 = vunpack.c.l.b16 %v706
    %v2790 = vunpack.c.h.b16 %v706
    %v2791 = vunpack.c.l.b16 %v707
    %v2792 = vunpack.c.h.b16 %v707
    %v2793 = vunpack.c.l.b16 %v708
    %v2794 = vunpack.c.h.b16 %v708
    %v2795 = vunpack.c.l.b16 %v709
    %v2796 = vunpack.c.h.b16 %v709
    %v2797 = vunpack.c.l.b16 %v710
    %v2798 = vunpack.c.h.b16 %v710
    %v2799 = vunpack.c.l.b16 %v711
    %v2800 = vunpack.c.h.b16 %v711
    %v2801 = vunpack.c.l.b16 %v712
    %v2802 = vunpack.c.h.b16 %v712
    %v2803 = vunpack.c.l.b16 %v713
    %v2804 = vunpack.c.h.b16 %v713
    %v2805 = vunpack.c.l.b16 %v714
    %v2806 = vunpack.c.h.b16 %v714
    %v2807 = vunpack.c.l.b16 %v715
    %v2808 = vunpack.c.h.b16 %v715
    %v2809 = vunpack.c.l.b16 %v716
    %v2810 = vunpack.c.h.b16 %v716
    %v2811 = vunpack.c.l.b16 %v717
    %v2812 = vunpack.c.h.b16 %v717
    %v2813 = vunpack.c.l.b16 %v718
    %v2814 = vunpack.c.h.b16 %v718
    %v2815 = vunpack.c.l.b16 %v719
    %v2816 = vunpack.c.h.b16 %v719
    %v2817 = vunpack.c.l.b16 %v720
    %v2818 = vunpack.c.h.b16 %v720
    %v2819 = vunpack.c.l.b16 %v721
    %v2820 = vunpack.c.h.b16 %v721
    %v2821 = vunpack.c.l.b16 %v722
    %v2822 = vunpack.c.h.b16 %v722
    %v2823 = vunpack.c.l.b16 %v723
    %v2824 = vunpack.c.h.b16 %v723
    %v2825 = vunpack.c.l.b16 %v724
    %v2826 = vunpack.c.h.b16 %v724
    %v2827 = vunpack.c.l.b16 %v725
    %v2828 = vunpack.c.h.b16 %v725
    %v2829 = vunpack.c.l.b16 %v726
    %v2830 = vunpack.c.h.b16 %v726
    %v2831 = vunpack.c.l.b16 %v727
    %v2832 = vunpack.c.h.b16 %v727
    %v2833 = vunpack.c.l.b16 %v728
    %v2834 = vunpack.c.h.b16 %v728
    %v2835 = vunpack.c.l.b16 %v729
    %v2836 = vunpack.c.h.b16 %v729
    %v2837 = vunpack.c.l.b16 %v730
    %v2838 = vunpack.c.h.b16 %v730
    %v2839 = vunpack.c.l.b16 %v731
    %v2840 = vunpack.c.h.b16 %v731
    %v2841 = vunpack.c.l.b16 %v732
    %v2842 = vunpack.c.h.b16 %v732
    %v2843 = vunpack.c.l.b16 %v733
    %v2844 = vunpack.c.h.b16 %v733
    %v2845 = vunpack.c.l.b16 %v734
    %v2846 = vunpack.c.h.b16 %v734
    %v2847 = vunpack.c.l.b16 %v735
    %v2848 = vunpack.c.h.b16 %v735
    %v2849 = vunpack.c.l.b16 %v736
    %v2850 = vunpack.c.h.b16 %v736
    %v2851 = vunpack.c.l.b16 %v737
    %v2852 = vunpack.c.h.b16 %v737
    %v2853 = vunpack.c.l.b16 %v738
    %v2854 = vunpack.c.h.b16 %v738
    %v2855 = vunpack.c.l.b16 %v739
    %v2856 = vunpack.c.h.b16 %v739
    %v2857 = vunpack.c.l.b16 %v740
    %v2858 = vunpack.c.h.b16 %v740
    %v2859 = vunpack.c.l.b16 %v741
    %v2860 = vunpack.c.h.b16 %v741
    %v2861 = vunpack.c.l.b16 %v742
    %v2862 = vunpack.c.h.b16 %v742
    %v2863 = vunpack.c.l.b16 %v743
    %v2864 = vunpack.c.h.b16 %v743
    %v2865 = vunpack.c.l.b16 %v744
    %v2866 = vunpack.c.h.b16 %v744
    %v2867 = vunpack.c.l.b16 %v745
    %v2868 = vunpack.c.h.b16 %v745
    %v2869 = vunpack.c.l.b16 %v746
    %v2870 = vunpack.c.h.b16 %v746
    %v2871 = vunpack.c.l.b16 %v747
    %v2872 = vunpack.c.h.b16 %v747
    %v2873 = vunpack.c.l.b16 %v748
    %v2874 = vunpack.c.h.b16 %v748
    %v2875 = vunpack.c.l.b16 %v749
    %v2876 = vunpack.c.h.b16 %v749
    %v2877 = vunpack.c.l.b16 %v750
    %v2878 = vunpack.c.h.b16 %v750
    %v2879 = vunpack.c.l.b16 %v751
    %v2880 = vunpack.c.h.b16 %v751
    %v2881 = vunpack.c.l.b16 %v752
    %v2882 = vunpack.c.h.b16 %v752
    %v2883 = vunpack.c.l.b16 %v753
    %v2884 = vunpack.c.h.b16 %v753
    %v2885 = vunpack.c.l.b16 %v754
    %v2886 = vunpack.c.h.b16 %v754
    %v2887 = vunpack.c.l.b16 %v755
    %v2888 = vunpack.c.h.b16 %v755
    %v2889 = vunpack.c.l.b16 %v756
    %v2890 = vunpack.c.h.b16 %v756
    %v2891 = vunpack.c.l.b16 %v757
    %v2892 = vunpack.c.h.b16 %v757
    %v2893 = vunpack.c.l.b16 %v758
    %v2894 = vunpack.c.h.b16 %v758
    %v2895 = vunpack.c.l.b16 %v759
    %v2896 = vunpack.c.h.b16 %v759
    %v2897 = vunpack.c.l.b16 %v760
    %v2898 = vunpack.c.h.b16 %v760
    %v2899 = vunpack.c.l.b16 %v761
    %v2900 = vunpack.c.h.b16 %v761
    %v2901 = vunpack.c.l.b16 %v762
    %v2902 = vunpack.c.h.b16 %v762
    %v2903 = vunpack.c.l.b16 %v763
    %v2904 = vunpack.c.h.b16 %v763
    %v2905 = vunpack.c.l.b16 %v764
    %v2906 = vunpack.c.h.b16 %v764
    %v2907 = vunpack.c.l.b16 %v765
    %v2908 = vunpack.c.h.b16 %v765
    %v2909 = vunpack.c.l.b16 %v766
    %v2910 = vunpack.c.h.b16 %v766
    %v2911 = vunpack.c.l.b16 %v767
    %v2912 = vunpack.c.h.b16 %v767
    %v2913 = vunpack.c.l.b16 %v768
    %v2914 = vunpack.c.h.b16 %v768
    %v2915 = vunpack.c.l.b16 %v769
    %v2916 = vunpack.c.h.b16 %v769
    %v2917 = vunpack.c.l.b16 %v770
    %v2918 = vunpack.c.h.b16 %v770
    %v2919 = vunpack.c.l.b16 %v771
    %v2920 = vunpack.c.h.b16 %v771
    %v2921 = vunpack.c.l.b16 %v772
    %v2922 = vunpack.c.h.b16 %v772
    %v2923 = vunpack.c.l.b16 %v773
    %v2924 = vunpack.c.h.b16 %v773
    %v2925 = vunpack.c.l.b16 %v774
    %v2926 = vunpack.c.h.b16 %v774
    %v2927 = vunpack.c.l.b16 %v775
    %v2928 = vunpack.c.h.b16 %v775
    %v2929 = vunpack.c.l.b16 %v776
    %v2930 = vunpack.c.h.b16 %v776
    %v2931 = vunpack.c.l.b16 %v777
    %v2932 = vunpack.c.h.b16 %v777
    %v2933 = vunpack.c.l.b16 %v778
    %v2934 = vunpack.c.h.b16 %v778
    %v2935 = vunpack.c.l.b16 %v779
    %v2936 = vunpack.c.h.b16 %v779
    %v2937 = vunpack.c.l.b16 %v780
    %v2938 = vunpack.c.h.b16 %v780
    %v2939 = vunpack.c.l.b16 %v781
    %v2940 = vunpack.c.h.b16 %v781
    %v2941 = vunpack.c.l.b16 %v782
    %v2942 = vunpack.c.h.b16 %v782
    %v2943 = vunpack.c.l.b16 %v783
    %v2944 = vunpack.c.h.b16 %v783
    %v2945 = vunpack.c.l.b16 %v784
    %v2946 = vunpack.c.h.b16 %v784
    %v2947 = vunpack.c.l.b16 %v785
    %v2948 = vunpack.c.h.b16 %v785
    %v2949 = vunpack.c.l.b16 %v786
    %v2950 = vunpack.c.h.b16 %v786
    %v2951 = vunpack.c.l.b16 %v787
    %v2952 = vunpack.c.h.b16 %v787
    %v2953 = vunpack.c.l.b16 %v788
    %v2954 = vunpack.c.h.b16 %v788
    %v2955 = vunpack.c.l.b16 %v789
    %v2956 = vunpack.c.h.b16 %v789
    %v2957 = vunpack.c.l.b16 %v790
    %v2958 = vunpack.c.h.b16 %v790
    %v2959 = vunpack.c.l.b16 %v791
    %v2960 = vunpack.c.h.b16 %v791
    %v2961 = vunpack.c.l.b16 %v792
    %v2962 = vunpack.c.h.b16 %v792
    %v2963 = vunpack.c.l.b16 %v793
    %v2964 = vunpack.c.h.b16 %v793
    %v2965 = vunpack.c.l.b16 %v794
    %v2966 = vunpack.c.h.b16 %v794
    %v2967 = vunpack.c.l.b16 %v795
    %v2968 = vunpack.c.h.b16 %v795
    %v2969 = vunpack.c.l.b16 %v796
    %v2970 = vunpack.c.h.b16 %v796
    %v2971 = vunpack.c.l.b16 %v797
    %v2972 = vunpack.c.h.b16 %v797
    %v2973 = vunpack.c.l.b16 %v798
    %v2974 = vunpack.c.h.b16 %v798
    %v2975 = vunpack.c.l.b16 %v799
    %v2976 = vunpack.c.h.b16 %v799
    %v2977 = vunpack.c.l.b16 %v800
    %v2978 = vunpack.c.h.b16 %v800
    %v2979 = vunpack.c.l.b16 %v801
    %v2980 = vunpack.c.h.b16 %v801
    %v2981 = vunpack.c.l.b16 %v802
    %v2982 = vunpack.c.h.b16 %v802
    %v2983 = vunpack.c.l.b16 %v803
    %v2984 = vunpack.c.h.b16 %v803
    %v2985 = vunpack.c.l.b16 %v804
    %v2986 = vunpack.c.h.b16 %v804
    %v2987 = vunpack.c.l.b16 %v805
    %v2988 = vunpack.c.h.b16 %v805
    %v2989 = vunpack.c.l.b16 %v806
    %v2990 = vunpack.c.h.b16 %v806
    %v2991 = vunpack.c.l.b16 %v807
    %v2992 = vunpack.c.h.b16 %v807
    %v2993 = vunpack.c.l.b16 %v808
    %v2994 = vunpack.c.h.b16 %v808
    %v2995 = vunpack.c.l.b16 %v809
    %v2996 = vunpack.c.h.b16 %v809
    %v2997 = vunpack.c.l.b16 %v810
    %v2998 = vunpack.c.h.b16 %v810
    %v2999 = vunpack.c.l.b16 %v811
    %v3000 = vunpack.c.h.b16 %v811
    %v3001 = vunpack.c.l.b16 %v812
    %v3002 = vunpack.c.h.b16 %v812
    %v3003 = vunpack.c.l.b16 %v813
    %v3004 = vunpack.c.h.b16 %v813
    %v3005 = vunpack.c.l.b16 %v814
    %v3006 = vunpack.c.h.b16 %v814
    %v3007 = vunpack.c.l.b16 %v815
    %v3008 = vunpack.c.h.b16 %v815
    %v3009 = vunpack.c.l.b16 %v816
    %v3010 = vunpack.c.h.b16 %v816
    %v3011 = vunpack.c.l.b16 %v817
    %v3012 = vunpack.c.h.b16 %v817
    %v3013 = vunpack.c.l.b16 %v818
    %v3014 = vunpack.c.h.b16 %v818
    %v3015 = vunpack.c.l.b16 %v819
    %v3016 = vunpack.c.h.b16 %v819
    %v3017 = vunpack.c.l.b16 %v820
    %v3018 = vunpack.c.h.b16 %v820
    %v3019 = vunpack.c.l.b16 %v821
    %v3020 = vunpack.c.h.b16 %v821
    %v3021 = vunpack.c.l.b16 %v822
    %v3022 = vunpack.c.h.b16 %v822
    %v3023 = vunpack.c.l.b16 %v823
    %v3024 = vunpack.c.h.b16 %v823
    %v3025 = vunpack.c.l.b16 %v824
    %v3026 = vunpack.c.h.b16 %v824
    %v3027 = vunpack.c.l.b16 %v825
    %v3028 = vunpack.c.h.b16 %v825
    %v3029 = vunpack.c.l.b16 %v826
    %v3030 = vunpack.c.h.b16 %v826
    %v3031 = vunpack.c.l.b16 %v827
    %v3032 = vunpack.c.h.b16 %v827
    %v3033 = vunpack.c.l.b16 %v828
    %v3034 = vunpack.c.h.b16 %v828
    %v3035 = vunpack.c.l.b16 %v829
    %v3036 = vunpack.c.h.b16 %v829
    %v3037 = vunpack.c.l.b16 %v830
    %v3038 = vunpack.c.h.b16 %v830
    %v3039 = vunpack.c.l.b16 %v831
    %v3040 = vunpack.c.h.b16 %v831
    %v3041 = vunpack.c.l.b16 %v832
    %v3042 = vunpack.c.h.b16 %v832
    %v3043 = vunpack.c.l.b16 %v833
    %v3044 = vunpack.c.h.b16 %v833
    %v3045 = vunpack.c.l.b16 %v834
    %v3046 = vunpack.c.h.b16 %v834
    %v3047 = vunpack.c.l.b16 %v835
    %v3048 = vunpack.c.h.b16 %v835
    %v3049 = vunpack.c.l.b16 %v836
    %v3050 = vunpack.c.h.b16 %v836
    %v3051 = vunpack.c.l.b16 %v837
    %v3052 = vunpack.c.h.b16 %v837
    %v3053 = vunpack.c.l.b16 %v838
    %v3054 = vunpack.c.h.b16 %v838
    %v3055 = vunpack.c.l.b16 %v839
    %v3056 = vunpack.c.h.b16 %v839
    %v3057 = vunpack.c.l.b16 %v840
    %v3058 = vunpack.c.h.b16 %v840
    %v3059 = vunpack.c.l.b16 %v841
    %v3060 = vunpack.c.h.b16 %v841
    %v3061 = vunpack.c.l.b16 %v842
    %v3062 = vunpack.c.h.b16 %v842
    %v3063 = vunpack.c.l.b16 %v843
    %v3064 = vunpack.c.h.b16 %v843
    %v3065 = vunpack.c.l.b16 %v844
    %v3066 = vunpack.c.h.b16 %v844
    %v3067 = vunpack.c.l.b16 %v845
    %v3068 = vunpack.c.h.b16 %v845
    %v3069 = vunpack.c.l.b16 %v846
    %v3070 = vunpack.c.h.b16 %v846
    %v3071 = vunpack.c.l.b16 %v847
    %v3072 = vunpack.c.h.b16 %v847
    %v3073 = vunpack.c.l.b16 %v848
    %v3074 = vunpack.c.h.b16 %v848
    %v3075 = vunpack.c.l.b16 %v849
    %v3076 = vunpack.c.h.b16 %v849
    %v3077 = vunpack.c.l.b16 %v850
    %v3078 = vunpack.c.h.b16 %v850
    %v3079 = vunpack.c.l.b16 %v851
    %v3080 = vunpack.c.h.b16 %v851
    %v3081 = vunpack.c.l.b16 %v852
    %v3082 = vunpack.c.h.b16 %v852
    %v3083 = vunpack.c.l.b16 %v853
    %v3084 = vunpack.c.h.b16 %v853
    %v3085 = vunpack.c.l.b16 %v854
    %v3086 = vunpack.c.h.b16 %v854
    %v3087 = vunpack.c.l.b16 %v855
    %v3088 = vunpack.c.h.b16 %v855
    %v3089 = vunpack.c.l.b16 %v856
    %v3090 = vunpack.c.h.b16 %v856
    %v3091 = vunpack.c.l.b16 %v857
    %v3092 = vunpack.c.h.b16 %v857
    %v3093 = vunpack.c.l.b16 %v858
    %v3094 = vunpack.c.h.b16 %v858
    %v3095 = vunpack.c.l.b16 %v859
    %v3096 = vunpack.c.h.b16 %v859
    %v3097 = vunpack.c.l.b16 %v860
    %v3098 = vunpack.c.h.b16 %v860
    %v3099 = vunpack.c.l.b16 %v861
    %v3100 = vunpack.c.h.b16 %v861
    %v3101 = vunpack.c.l.b16 %v862
    %v3102 = vunpack.c.h.b16 %v862
    %v3103 = vunpack.c.l.b16 %v863
    %v3104 = vunpack.c.h.b16 %v863
    %v3105 = vunpack.c.l.b16 %v864
    %v3106 = vunpack.c.h.b16 %v864
    %v3107 = vunpack.c.l.b16 %v865
    %v3108 = vunpack.c.h.b16 %v865
    %v3109 = vunpack.c.l.b16 %v866
    %v3110 = vunpack.c.h.b16 %v866
    %v3111 = vunpack.c.l.b16 %v867
    %v3112 = vunpack.c.h.b16 %v867
    %v3113 = vunpack.c.l.b16 %v868
    %v3114 = vunpack.c.h.b16 %v868
    %v3115 = vunpack.c.l.b16 %v869
    %v3116 = vunpack.c.h.b16 %v869
    %v3117 = vunpack.c.l.b16 %v870
    %v3118 = vunpack.c.h.b16 %v870
    %v3119 = vunpack.c.l.b16 %v871
    %v3120 = vunpack.c.h.b16 %v871
    %v3121 = vunpack.c.l.b16 %v872
    %v3122 = vunpack.c.h.b16 %v872
    %v3123 = vunpack.c.l.b16 %v873
    %v3124 = vunpack.c.h.b16 %v873
    %v3125 = vunpack.c.l.b16 %v874
    %v3126 = vunpack.c.h.b16 %v874
    %v3127 = vunpack.c.l.b16 %v875
    %v3128 = vunpack.c.h.b16 %v875
    %v3129 = vunpack.c.l.b16 %v876
    %v3130 = vunpack.c.h.b16 %v876
    %v3131 = vunpack.c.l.b16 %v877
    %v3132 = vunpack.c.h.b16 %v877
    %v3133 = vunpack.c.l.b16 %v878
    %v3134 = vunpack.c.h.b16 %v878
    %v3135 = vunpack.c.l.b16 %v879
    %v3136 = vunpack.c.h.b16 %v879
    %v3137 = vunpack.c.l.b16 %v880
    %v3138 = vunpack.c.h.b16 %v880
    %v3139 = vunpack.c.l.b16 %v881
    %v3140 = vunpack.c.h.b16 %v881
    %v3141 = vunpack.c.l.b16 %v882
    %v3142 = vunpack.c.h.b16 %v882
    %v3143 = vunpack.c.l.b16 %v883
    %v3144 = vunpack.c.h.b16 %v883
    %v3145 = vunpack.c.l.b16 %v884
    %v3146 = vunpack.c.h.b16 %v884
    %v3147 = vunpack.c.l.b16 %v885
    %v3148 = vunpack.c.h.b16 %v885
    %v3149 = vunpack.c.l.b16 %v886
    %v3150 = vunpack.c.h.b16 %v886
    %v3151 = vunpack.c.l.b16 %v887
    %v3152 = vunpack.c.h.b16 %v887
    %v3153 = vunpack.c.l.b16 %v888
    %v3154 = vunpack.c.h.b16 %v888
    %v3155 = vunpack.c.l.b16 %v889
    %v3156 = vunpack.c.h.b16 %v889
    %v3157 = vunpack.c.l.b16 %v890
    %v3158 = vunpack.c.h.b16 %v890
    %v3159 = vunpack.c.l.b16 %v891
    %v3160 = vunpack.c.h.b16 %v891
    %v3161 = vunpack.c.l.b16 %v892
    %v3162 = vunpack.c.h.b16 %v892
    %v3163 = vunpack.c.l.b16 %v893
    %v3164 = vunpack.c.h.b16 %v893
    %v3165 = vunpack.c.l.b16 %v894
    %v3166 = vunpack.c.h.b16 %v894
    %v3167 = vunpack.c.l.b16 %v895
    %v3168 = vunpack.c.h.b16 %v895
    %v3169 = vunpack.c.l.b16 %v896
    %v3170 = vunpack.c.h.b16 %v896
    %v3171 = vunpack.c.l.b16 %v897
    %v3172 = vunpack.c.h.b16 %v897
    %v3173 = vunpack.c.l.b16 %v898
    %v3174 = vunpack.c.h.b16 %v898
    %v3175 = vunpack.c.l.b16 %v899
    %v3176 = vunpack.c.h.b16 %v899
    %v3177 = vunpack.c.l.b16 %v900
    %v3178 = vunpack.c.h.b16 %v900
    %v3179 = vunpack.c.l.b16 %v901
    %v3180 = vunpack.c.h.b16 %v901
    %v3181 = vunpack.c.l.b16 %v902
    %v3182 = vunpack.c.h.b16 %v902
    %v3183 = vunpack.c.l.b16 %v903
    %v3184 = vunpack.c.h.b16 %v903
    %v3185 = vunpack.c.l.b16 %v904
    %v3186 = vunpack.c.h.b16 %v904
    %v3187 = vunpack.c.l.b16 %v905
    %v3188 = vunpack.c.h.b16 %v905
    %v3189 = vunpack.c.l.b16 %v906
    %v3190 = vunpack.c.h.b16 %v906
    %v3191 = vunpack.c.l.b16 %v907
    %v3192 = vunpack.c.h.b16 %v907
    %v3193 = vunpack.c.l.b16 %v908
    %v3194 = vunpack.c.h.b16 %v908
    %v3195 = vunpack.c.l.b16 %v909
    %v3196 = vunpack.c.h.b16 %v909
    %v3197 = vunpack.c.l.b16 %v910
    %v3198 = vunpack.c.h.b16 %v910
    %v3199 = vunpack.c.l.b16 %v911
    %v3200 = vunpack.c.h.b16 %v911
    %v3201 = vunpack.c.l.b16 %v912
    %v3202 = vunpack.c.h.b16 %v912
    %v3203 = vunpack.c.l.b16 %v913
    %v3204 = vunpack.c.h.b16 %v913
    %v3205 = vunpack.c.l.b16 %v914
    %v3206 = vunpack.c.h.b16 %v914
    %v3207 = vunpack.c.l.b16 %v915
    %v3208 = vunpack.c.h.b16 %v915
    %v3209 = vunpack.c.l.b16 %v916
    %v3210 = vunpack.c.h.b16 %v916
    %v3211 = vunpack.c.l.b16 %v917
    %v3212 = vunpack.c.h.b16 %v917
    %v3213 = vunpack.c.l.b16 %v918
    %v3214 = vunpack.c.h.b16 %v918
    %v3215 = vunpack.c.l.b16 %v919
    %v3216 = vunpack.c.h.b16 %v919
    %v3217 = vunpack.c.l.b16 %v920
    %v3218 = vunpack.c.h.b16 %v920
    %v3219 = vunpack.c.l.b16 %v921
    %v3220 = vunpack.c.h.b16 %v921
    %v3221 = vunpack.c.l.b16 %v922
    %v3222 = vunpack.c.h.b16 %v922
    %v3223 = vunpack.c.l.b16 %v923
    %v3224 = vunpack.c.h.b16 %v923
    %v3225 = vunpack.c.l.b16 %v924
    %v3226 = vunpack.c.h.b16 %v924
    %v3227 = vunpack.c.l.b16 %v925
    %v3228 = vunpack.c.h.b16 %v925
    %v3229 = vunpack.c.l.b16 %v926
    %v3230 = vunpack.c.h.b16 %v926
    %v3231 = vunpack.c.l.b16 %v927
    %v3232 = vunpack.c.h.b16 %v927
    %v3233 = vunpack.c.l.b16 %v928
    %v3234 = vunpack.c.h.b16 %v928
    %v3235 = vunpack.c.l.b16 %v929
    %v3236 = vunpack.c.h.b16 %v929
    %v3237 = vunpack.c.l.b16 %v930
    %v3238 = vunpack.c.h.b16 %v930
    %v3239 = vunpack.c.l.b16 %v931
    %v3240 = vunpack.c.h.b16 %v931
    %v3241 = vunpack.c.l.b16 %v932
    %v3242 = vunpack.c.h.b16 %v932
    %v3243 = vunpack.c.l.b16 %v933
    %v3244 = vunpack.c.h.b16 %v933
    %v3245 = vunpack.c.l.b16 %v934
    %v3246 = vunpack.c.h.b16 %v934
    %v3247 = vunpack.c.l.b16 %v935
    %v3248 = vunpack.c.h.b16 %v935
    %v3249 = vunpack.c.l.b16 %v936
    %v3250 = vunpack.c.h.b16 %v936
    %v3251 = vunpack.c.l.b16 %v937
    %v3252 = vunpack.c.h.b16 %v937
    %v3253 = vunpack.c.l.b16 %v938
    %v3254 = vunpack.c.h.b16 %v938
    %v3255 = vunpack.c.l.b16 %v939
    %v3256 = vunpack.c.h.b16 %v939
    %v3257 = vunpack.c.l.b16 %v940
    %v3258 = vunpack.c.h.b16 %v940
    %v3259 = vunpack.c.l.b16 %v941
    %v3260 = vunpack.c.h.b16 %v941
    %v3261 = vunpack.c.l.b16 %v942
    %v3262 = vunpack.c.h.b16 %v942
    %v3263 = vunpack.c.l.b16 %v943
    %v3264 = vunpack.c.h.b16 %v943
    %v3265 = vunpack.c.l.b16 %v944
    %v3266 = vunpack.c.h.b16 %v944
    %v3267 = vunpack.c.l.b16 %v945
    %v3268 = vunpack.c.h.b16 %v945
    %v3269 = vunpack.c.l.b16 %v946
    %v3270 = vunpack.c.h.b16 %v946
    %v3271 = vunpack.c.l.b16 %v947
    %v3272 = vunpack.c.h.b16 %v947
    %v3273 = vunpack.c.l.b16 %v948
    %v3274 = vunpack.c.h.b16 %v948
    %v3275 = vunpack.c.l.b16 %v949
    %v3276 = vunpack.c.h.b16 %v949
    %v3277 = vunpack.c.l.b16 %v950
    %v3278 = vunpack.c.h.b16 %v950
    %v3279 = vunpack.c.l.b16 %v951
    %v3280 = vunpack.c.h.b16 %v951
    %v3281 = vunpack.c.l.b16 %v952
    %v3282 = vunpack.c.h.b16 %v952
    %v3283 = vunpack.c.l.b16 %v953
    %v3284 = vunpack.c.h.b16 %v953
    %v3285 = vunpack.c.l.b16 %v954
    %v3286 = vunpack.c.h.b16 %v954
    %v3287 = vunpack.c.l.b16 %v955
    %v3288 = vunpack.c.h.b16 %v955
    %v3289 = vunpack.c.l.b16 %v956
    %v3290 = vunpack.c.h.b16 %v956
    %v3291 = vunpack.c.l.b16 %v957
    %v3292 = vunpack.c.h.b16 %v957
    %v3293 = vunpack.c.l.b16 %v958
    %v3294 = vunpack.c.h.b16 %v958
    %v3295 = vunpack.c.l.b16 %v959
    %v3296 = vunpack.c.h.b16 %v959
    %v3297 = vunpack.c.l.b16 %v960
    %v3298 = vunpack.c.h.b16 %v960
    %v3299 = vunpack.c.l.b16 %v961
    %v3300 = vunpack.c.h.b16 %v961
    %v3301 = vunpack.c.l.b16 %v962
    %v3302 = vunpack.c.h.b16 %v962
    %v3303 = vunpack.c.l.b16 %v963
    %v3304 = vunpack.c.h.b16 %v963
    %v3305 = vunpack.c.l.b16 %v964
    %v3306 = vunpack.c.h.b16 %v964
    %v3307 = vunpack.c.l.b16 %v965
    %v3308 = vunpack.c.h.b16 %v965
    %v3309 = vunpack.c.l.b16 %v966
    %v3310 = vunpack.c.h.b16 %v966
    %v3311 = vunpack.c.l.b16 %v967
    %v3312 = vunpack.c.h.b16 %v967
    %v3313 = vunpack.c.l.b16 %v968
    %v3314 = vunpack.c.h.b16 %v968
    %v3315 = vunpack.c.l.b16 %v969
    %v3316 = vunpack.c.h.b16 %v969
    %v3317 = vunpack.c.l.b16 %v970
    %v3318 = vunpack.c.h.b16 %v970
    %v3319 = vunpack.c.l.b16 %v971
    %v3320 = vunpack.c.h.b16 %v971
    %v3321 = vunpack.c.l.b16 %v972
    %v3322 = vunpack.c.h.b16 %v972
    %v3323 = vunpack.c.l.b16 %v973
    %v3324 = vunpack.c.h.b16 %v973
    %v3325 = vunpack.c.l.b16 %v974
    %v3326 = vunpack.c.h.b16 %v974
    %v3327 = vunpack.c.l.b16 %v975
    %v3328 = vunpack.c.h.b16 %v975
    %v3329 = vunpack.c.l.b16 %v976
    %v3330 = vunpack.c.h.b16 %v976
    %v3331 = vunpack.c.l.b16 %v977
    %v3332 = vunpack.c.h.b16 %v977
    %v3333 = vunpack.c.l.b16 %v978
    %v3334 = vunpack.c.h.b16 %v978
    %v3335 = vunpack.c.l.b16 %v979
    %v3336 = vunpack.c.h.b16 %v979
    %v3337 = vunpack.c.l.b16 %v980
    %v3338 = vunpack.c.h.b16 %v980
    %v3339 = vunpack.c.l.b16 %v981
    %v3340 = vunpack.c.h.b16 %v981
    %v3341 = vunpack.c.l.b16 %v982
    %v3342 = vunpack.c.h.b16 %v982
    %v3343 = vunpack.c.l.b16 %v983
    %v3344 = vunpack.c.h.b16 %v983
    %v3345 = vunpack.c.l.b16 %v984
    %v3346 = vunpack.c.h.b16 %v984
    %v3347 = vunpack.c.l.b16 %v985
    %v3348 = vunpack.c.h.b16 %v985
    %v3349 = vunpack.c.l.b16 %v986
    %v3350 = vunpack.c.h.b16 %v986
    %v3351 = vunpack.c.l.b16 %v987
    %v3352 = vunpack.c.h.b16 %v987
    %v3353 = vunpack.c.l.b16 %v988
    %v3354 = vunpack.c.h.b16 %v988
    %v3355 = vunpack.c.l.b16 %v989
    %v3356 = vunpack.c.h.b16 %v989
    %v3357 = vunpack.c.l.b16 %v990
    %v3358 = vunpack.c.h.b16 %v990
    %v3359 = vunpack.c.l.b16 %v991
    %v3360 = vunpack.c.h.b16 %v991
    %v3361 = vunpack.c.l.b16 %v992
    %v3362 = vunpack.c.h.b16 %v992
    %v3363 = vunpack.c.l.b16 %v993
    %v3364 = vunpack.c.h.b16 %v993
    %v3365 = vunpack.c.l.b16 %v994
    %v3366 = vunpack.c.h.b16 %v994
    %v3367 = vunpack.c.l.b16 %v995
    %v3368 = vunpack.c.h.b16 %v995
    %v3369 = vunpack.c.l.b16 %v996
    %v3370 = vunpack.c.h.b16 %v996
    %v3371 = vunpack.c.l.b16 %v997
    %v3372 = vunpack.c.h.b16 %v997
    %v3373 = vunpack.c.l.b16 %v998
    %v3374 = vunpack.c.h.b16 %v998
    %v3375 = vunpack.c.l.b16 %v999
    %v3376 = vunpack.c.h.b16 %v999
    %v3377 = vunpack.c.l.b16 %v1000
    %v3378 = vunpack.c.h.b16 %v1000
    %v3379 = vunpack.c.l.b16 %v1001
    %v3380 = vunpack.c.h.b16 %v1001
    %v3381 = vunpack.c.l.b16 %v1002
    %v3382 = vunpack.c.h.b16 %v1002
    %v3383 = vunpack.c.l.b16 %v1003
    %v3384 = vunpack.c.h.b16 %v1003
    %v3385 = vunpack.c.l.b16 %v1004
    %v3386 = vunpack.c.h.b16 %v1004
    %v3387 = vunpack.c.l.b16 %v1005
    %v3388 = vunpack.c.h.b16 %v1005
    %v3389 = vunpack.c.l.b16 %v1006
    %v3390 = vunpack.c.h.b16 %v1006
    %v3391 = vunpack.c.l.b16 %v1007
    %v3392 = vunpack.c.h.b16 %v1007
    %v3393 = vunpack.c.l.b16 %v1008
    %v3394 = vunpack.c.h.b16 %v1008
    %v3395 = vunpack.c.l.b16 %v1009
    %v3396 = vunpack.c.h.b16 %v1009
    %v3397 = vunpack.c.l.b16 %v1010
    %v3398 = vunpack.c.h.b16 %v1010
    %v3399 = vunpack.c.l.b16 %v1011
    %v3400 = vunpack.c.h.b16 %v1011
    %v3401 = vunpack.c.l.b16 %v1012
    %v3402 = vunpack.c.h.b16 %v1012
    %v3403 = vunpack.c.l.b16 %v1013
    %v3404 = vunpack.c.h.b16 %v1013
    %v3405 = vunpack.c.l.b16 %v1014
    %v3406 = vunpack.c.h.b16 %v1014
    %v3407 = vunpack.c.l.b16 %v1015
    %v3408 = vunpack.c.h.b16 %v1015
    %v3409 = vunpack.c.l.b16 %v1016
    %v3410 = vunpack.c.h.b16 %v1016
    %v3411 = vunpack.c.l.b16 %v1017
    %v3412 = vunpack.c.h.b16 %v1017
    %v3413 = vunpack.c.l.b16 %v1018
    %v3414 = vunpack.c.h.b16 %v1018
    %v3415 = vunpack.c.l.b16 %v1019
    %v3416 = vunpack.c.h.b16 %v1019
    %v3417 = vunpack.c.l.b16 %v1020
    %v3418 = vunpack.c.h.b16 %v1020
    %v3419 = vunpack.c.l.b16 %v1021
    %v3420 = vunpack.c.h.b16 %v1021
    %v3421 = vunpack.c.l.b16 %v1022
    %v3422 = vunpack.c.h.b16 %v1022
    %v3423 = vunpack.c.l.b16 %v1023
    %v3424 = vunpack.c.h.b16 %v1023
    %v3425 = vunpack.c.l.b16 %v1024
    %v3426 = vunpack.c.h.b16 %v1024
    %v3427 = vunpack.c.l.b16 %v1025
    %v3428 = vunpack.c.h.b16 %v1025
    %v3429 = vunpack.c.l.b16 %v1026
    %v3430 = vunpack.c.h.b16 %v1026
    %v3431 = vunpack.c.l.b16 %v1027
    %v3432 = vunpack.c.h.b16 %v1027
    %v3433 = vunpack.c.l.b16 %v1028
    %v3434 = vunpack.c.h.b16 %v1028
    %v3435 = vunpack.c.l.b16 %v1029
    %v3436 = vunpack.c.h.b16 %v1029
    %v3437 = vunpack.c.l.b16 %v1030
    %v3438 = vunpack.c.h.b16 %v1030
    %v3439 = vunpack.c.l.b16 %v1031
    %v3440 = vunpack.c.h.b16 %v1031
    %v3441 = vunpack.c.l.b16 %v1032
    %v3442 = vunpack.c.h.b16 %v1032
    %v3443 = vunpack.c.l.b16 %v1033
    %v3444 = vunpack.c.h.b16 %v1033
    %v3445 = vunpack.c.l.b16 %v1034
    %v3446 = vunpack.c.h.b16 %v1034
    %v3447 = vunpack.c.l.b16 %v1035
    %v3448 = vunpack.c.h.b16 %v1035
    %v3449 = vunpack.c.l.b16 %v1036
    %v3450 = vunpack.c.h.b16 %v1036
    %v3451 = vunpack.c.l.b16 %v1037
    %v3452 = vunpack.c.h.b16 %v1037
    %v3453 = vunpack.c.l.b16 %v1038
    %v3454 = vunpack.c.h.b16 %v1038
    %v3455 = vunpack.c.l.b16 %v1039
    %v3456 = vunpack.c.h.b16 %v1039
    %v3457 = vunpack.c.l.b16 %v1040
    %v3458 = vunpack.c.h.b16 %v1040
    %v3459 = vunpack.c.l.b16 %v1041
    %v3460 = vunpack.c.h.b16 %v1041
    %v3461 = vunpack.c.l.b16 %v1042
    %v3462 = vunpack.c.h.b16 %v1042
    %v3463 = vunpack.c.l.b16 %v1043
    %v3464 = vunpack.c.h.b16 %v1043
    %v3465 = vunpack.c.l.b16 %v1044
    %v3466 = vunpack.c.h.b16 %v1044
    %v3467 = vunpack.c.l.b16 %v1045
    %v3468 = vunpack.c.h.b16 %v1045
    %v3469 = vunpack.c.l.b16 %v1046
    %v3470 = vunpack.c.h.b16 %v1046
    %v3471 = vunpack.c.l.b16 %v1047
    %v3472 = vunpack.c.h.b16 %v1047
    %v3473 = vunpack.c.l.b16 %v1048
    %v3474 = vunpack.c.h.b16 %v1048
    %v3475 = vunpack.c.l.b16 %v1049
    %v3476 = vunpack.c.h.b16 %v1049
    %v3477 = vunpack.c.l.b16 %v1050
    %v3478 = vunpack.c.h.b16 %v1050
    %v3479 = vunpack.c.l.b16 %v1051
    %v3480 = vunpack.c.h.b16 %v1051
    %v3481 = vunpack.c.l.b16 %v1052
    %v3482 = vunpack.c.h.b16 %v1052
    %v3483 = vunpack.c.l.b16 %v1053
    %v3484 = vunpack.c.h.b16 %v1053
    %v3485 = vunpack.c.l.b16 %v1054
    %v3486 = vunpack.c.h.b16 %v1054
    %v3487 = vunpack.c.l.b16 %v1055
    %v3488 = vunpack.c.h.b16 %v1055
    %v3489 = vunpack.c.l.b16 %v1056
    %v3490 = vunpack.c.h.b16 %v1056
    %v3491 = vunpack.c.l.b16 %v1057
    %v3492 = vunpack.c.h.b16 %v1057
    %v3493 = vunpack.c.l.b16 %v1058
    %v3494 = vunpack.c.h.b16 %v1058
    %v3495 = vunpack.c.l.b16 %v1059
    %v3496 = vunpack.c.h.b16 %v1059
    %v3497 = vunpack.c.l.b16 %v1060
    %v3498 = vunpack.c.h.b16 %v1060
    %v3499 = vunpack.c.l.b16 %v1061
    %v3500 = vunpack.c.h.b16 %v1061
    %v3501 = vunpack.c.l.b16 %v1062
    %v3502 = vunpack.c.h.b16 %v1062
    %v3503 = vunpack.c.l.b16 %v1063
    %v3504 = vunpack.c.h.b16 %v1063
    %v3505 = vunpack.c.l.b16 %v1064
    %v3506 = vunpack.c.h.b16 %v1064
    %v3507 = vunpack.c.l.b16 %v1065
    %v3508 = vunpack.c.h.b16 %v1065
    %v3509 = vunpack.c.l.b16 %v1066
    %v3510 = vunpack.c.h.b16 %v1066
    %v3511 = vunpack.c.l.b16 %v1067
    %v3512 = vunpack.c.h.b16 %v1067
    %v3513 = vunpack.c.l.b16 %v1068
    %v3514 = vunpack.c.h.b16 %v1068
    %v3515 = vunpack.c.l.b16 %v1069
    %v3516 = vunpack.c.h.b16 %v1069
    %v3517 = vunpack.c.l.b16 %v1070
    %v3518 = vunpack.c.h.b16 %v1070
    %v3519 = vunpack.c.l.b16 %v1071
    %v3520 = vunpack.c.h.b16 %v1071
    %v3521 = vunpack.c.l.b16 %v1072
    %v3522 = vunpack.c.h.b16 %v1072
    %v3523 = vunpack.c.l.b16 %v1073
    %v3524 = vunpack.c.h.b16 %v1073
    %v3525 = vunpack.c.l.b16 %v1074
    %v3526 = vunpack.c.h.b16 %v1074
    %v3527 = vunpack.c.l.b16 %v1075
    %v3528 = vunpack.c.h.b16 %v1075
    %v3529 = vunpack.c.l.b16 %v1076
    %v3530 = vunpack.c.h.b16 %v1076
    %v3531 = vunpack.c.l.b16 %v1077
    %v3532 = vunpack.c.h.b16 %v1077
    %v3533 = vunpack.c.l.b16 %v1078
    %v3534 = vunpack.c.h.b16 %v1078
    %v3535 = vunpack.c.l.b16 %v1079
    %v3536 = vunpack.c.h.b16 %v1079
    %v3537 = vunpack.c.l.b16 %v1080
    %v3538 = vunpack.c.h.b16 %v1080
    %v3539 = vunpack.c.l.b16 %v1081
    %v3540 = vunpack.c.h.b16 %v1081
    %v3541 = vunpack.c.l.b16 %v1082
    %v3542 = vunpack.c.h.b16 %v1082
    %v3543 = vunpack.c.l.b16 %v1083
    %v3544 = vunpack.c.h.b16 %v1083
    %v3545 = vunpack.c.l.b16 %v1084
    %v3546 = vunpack.c.h.b16 %v1084
    %v3547 = vunpack.c.l.b16 %v1085
    %v3548 = vunpack.c.h.b16 %v1085
    %v3549 = vunpack.c.l.b16 %v1086
    %v3550 = vunpack.c.h.b16 %v1086
    %v3551 = vunpack.c.l.b16 %v1087
    %v3552 = vunpack.c.h.b16 %v1087
    %v3553 = vunpack.c.l.b16 %v1088
    %v3554 = vunpack.c.h.b16 %v1088
    %v3555 = vunpack.c.l.b16 %v1089
    %v3556 = vunpack.c.h.b16 %v1089
    %v3557 = vunpack.c.l.b16 %v1090
    %v3558 = vunpack.c.h.b16 %v1090
    %v3559 = vunpack.c.l.b16 %v1091
    %v3560 = vunpack.c.h.b16 %v1091
    %v3561 = vunpack.c.l.b16 %v1092
    %v3562 = vunpack.c.h.b16 %v1092
    %v3563 = vunpack.c.l.b16 %v1093
    %v3564 = vunpack.c.h.b16 %v1093
    %v3565 = vunpack.c.l.b16 %v1094
    %v3566 = vunpack.c.h.b16 %v1094
    %v3567 = vunpack.c.l.b16 %v1095
    %v3568 = vunpack.c.h.b16 %v1095
    %v3569 = vunpack.c.l.b16 %v1096
    %v3570 = vunpack.c.h.b16 %v1096
    %v3571 = vunpack.c.l.b16 %v1097
    %v3572 = vunpack.c.h.b16 %v1097
    %v3573 = vunpack.c.l.b16 %v1098
    %v3574 = vunpack.c.h.b16 %v1098
    %v3575 = vunpack.c.l.b16 %v1099
    %v3576 = vunpack.c.h.b16 %v1099
    %v3577 = vunpack.c.l.b16 %v1100
    %v3578 = vunpack.c.h.b16 %v1100
    %v3579 = vunpack.c.l.b16 %v1101
    %v3580 = vunpack.c.h.b16 %v1101
    %v3581 = vunpack.c.l.b16 %v1102
    %v3582 = vunpack.c.h.b16 %v1102
    %v3583 = vunpack.c.l.b16 %v1103
    %v3584 = vunpack.c.h.b16 %v1103
    %v3585 = vunpack.c.l.b16 %v1104
    %v3586 = vunpack.c.h.b16 %v1104
    %v3587 = vunpack.c.l.b16 %v1105
    %v3588 = vunpack.c.h.b16 %v1105
    %v3589 = vunpack.c.l.b16 %v1106
    %v3590 = vunpack.c.h.b16 %v1106
    %v3591 = vunpack.c.l.b16 %v1107
    %v3592 = vunpack.c.h.b16 %v1107
    %v3593 = vunpack.c.l.b16 %v1108
    %v3594 = vunpack.c.h.b16 %v1108
    %v3595 = vunpack.c.l.b16 %v1109
    %v3596 = vunpack.c.h.b16 %v1109
    %v3597 = vunpack.c.l.b16 %v1110
    %v3598 = vunpack.c.h.b16 %v1110
    %v3599 = vunpack.c.l.b16 %v1111
    %v3600 = vunpack.c.h.b16 %v1111
    %v3601 = vunpack.c.l.b16 %v1112
    %v3602 = vunpack.c.h.b16 %v1112
    %v3603 = vunpack.c.l.b16 %v1113
    %v3604 = vunpack.c.h.b16 %v1113
    %v3605 = vunpack.c.l.b16 %v1114
    %v3606 = vunpack.c.h.b16 %v1114
    %v3607 = vunpack.c.l.b16 %v1115
    %v3608 = vunpack.c.h.b16 %v1115
    %v3609 = vunpack.c.l.b16 %v1116
    %v3610 = vunpack.c.h.b16 %v1116
    %v3611 = vunpack.c.l.b16 %v1117
    %v3612 = vunpack.c.h.b16 %v1117
    %v3613 = vunpack.c.l.b16 %v1118
    %v3614 = vunpack.c.h.b16 %v1118
    %v3615 = vunpack.c.l.b16 %v1119
    %v3616 = vunpack.c.h.b16 %v1119
    %v3617 = vunpack.c.l.b16 %v1120
    %v3618 = vunpack.c.h.b16 %v1120
    %v3619 = vunpack.c.l.b16 %v1121
    %v3620 = vunpack.c.h.b16 %v1121
    %v3621 = vunpack.c.l.b16 %v1122
    %v3622 = vunpack.c.h.b16 %v1122
    %v3623 = vunpack.c.l.b16 %v1123
    %v3624 = vunpack.c.h.b16 %v1123
    %v3625 = vunpack.c.l.b16 %v1124
    %v3626 = vunpack.c.h.b16 %v1124
    %v3627 = vunpack.c.l.b16 %v1125
    %v3628 = vunpack.c.h.b16 %v1125
    %v3629 = vunpack.c.l.b16 %v1126
    %v3630 = vunpack.c.h.b16 %v1126
    %v3631 = vunpack.c.l.b16 %v1127
    %v3632 = vunpack.c.h.b16 %v1127
    %v3633 = vunpack.c.l.b16 %v1128
    %v3634 = vunpack.c.h.b16 %v1128
    %v3635 = vunpack.c.l.b16 %v1129
    %v3636 = vunpack.c.h.b16 %v1129
    %v3637 = vunpack.c.l.b16 %v1130
    %v3638 = vunpack.c.h.b16 %v1130
    %v3639 = vunpack.c.l.b16 %v1131
    %v3640 = vunpack.c.h.b16 %v1131
    %v3641 = vunpack.c.l.b16 %v1132
    %v3642 = vunpack.c.h.b16 %v1132
    %v3643 = vunpack.c.l.b16 %v1133
    %v3644 = vunpack.c.h.b16 %v1133
    %v3645 = vunpack.c.l.b16 %v1134
    %v3646 = vunpack.c.h.b16 %v1134
    %v3647 = vunpack.c.l.b16 %v1135
    %v3648 = vunpack.c.h.b16 %v1135
    %v3649 = vunpack.c.l.b16 %v1136
    %v3650 = vunpack.c.h.b16 %v1136
    %v3651 = vunpack.c.l.b16 %v1137
    %v3652 = vunpack.c.h.b16 %v1137
    %v3653 = vunpack.c.l.b16 %v1138
    %v3654 = vunpack.c.h.b16 %v1138
    %v3655 = vunpack.c.l.b16 %v1139
    %v3656 = vunpack.c.h.b16 %v1139
    %v3657 = vunpack.c.l.b16 %v1140
    %v3658 = vunpack.c.h.b16 %v1140
    %v3659 = vunpack.c.l.b16 %v1141
    %v3660 = vunpack.c.h.b16 %v1141
    %v3661 = vunpack.c.l.b16 %v1142
    %v3662 = vunpack.c.h.b16 %v1142
    %v3663 = vunpack.c.l.b16 %v1143
    %v3664 = vunpack.c.h.b16 %v1143
    %v3665 = vunpack.c.l.b16 %v1144
    %v3666 = vunpack.c.h.b16 %v1144
    %v3667 = vunpack.c.l.b16 %v1145
    %v3668 = vunpack.c.h.b16 %v1145
    %v3669 = vunpack.c.l.b16 %v1146
    %v3670 = vunpack.c.h.b16 %v1146
    %v3671 = vunpack.c.l.b16 %v1147
    %v3672 = vunpack.c.h.b16 %v1147
    %v3673 = vunpack.c.l.b16 %v1148
    %v3674 = vunpack.c.h.b16 %v1148
    %v3675 = vunpack.c.l.b16 %v1149
    %v3676 = vunpack.c.h.b16 %v1149
    %v3677 = vunpack.c.l.b16 %v1150
    %v3678 = vunpack.c.h.b16 %v1150
    %v3679 = vunpack.c.l.b16 %v1151
    %v3680 = vunpack.c.h.b16 %v1151
    %v3681 = vunpack.c.l.b16 %v1152
    %v3682 = vunpack.c.h.b16 %v1152
    %v3683 = vunpack.c.l.b16 %v1153
    %v3684 = vunpack.c.h.b16 %v1153
    %v3685 = vunpack.c.l.b16 %v1154
    %v3686 = vunpack.c.h.b16 %v1154
    %v3687 = vunpack.c.l.b16 %v1155
    %v3688 = vunpack.c.h.b16 %v1155
    %v3689 = vunpack.c.l.b16 %v1156
    %v3690 = vunpack.c.h.b16 %v1156
    %v3691 = vunpack.c.l.b16 %v1157
    %v3692 = vunpack.c.h.b16 %v1157
    %v3693 = vunpack.c.l.b16 %v1158
    %v3694 = vunpack.c.h.b16 %v1158
    %v3695 = vunpack.c.l.b16 %v1159
    %v3696 = vunpack.c.h.b16 %v1159
    %v3697 = vunpack.c.l.b16 %v1160
    %v3698 = vunpack.c.h.b16 %v1160
    %v3699 = vunpack.c.l.b16 %v1161
    %v3700 = vunpack.c.h.b16 %v1161
    %v3701 = vunpack.c.l.b16 %v1162
    %v3702 = vunpack.c.h.b16 %v1162
    %v3703 = vunpack.c.l.b16 %v1163
    %v3704 = vunpack.c.h.b16 %v1163
    %v3705 = vunpack.c.l.b16 %v1164
    %v3706 = vunpack.c.h.b16 %v1164
    %v3707 = vunpack.c.l.b16 %v1165
    %v3708 = vunpack.c.h.b16 %v1165
    %v3709 = vunpack.c.l.b16 %v1166
    %v3710 = vunpack.c.h.b16 %v1166
    %v3711 = vunpack.c.l.b16 %v1167
    %v3712 = vunpack.c.h.b16 %v1167
    %v3713 = vunpack.c.l.b16 %v1168
    %v3714 = vunpack.c.h.b16 %v1168
    %v3715 = vunpack.c.l.b16 %v1169
    %v3716 = vunpack.c.h.b16 %v1169
    %v3717 = vunpack.c.l.b16 %v1170
    %v3718 = vunpack.c.h.b16 %v1170
    %v3719 = vunpack.c.l.b16 %v1171
    %v3720 = vunpack.c.h.b16 %v1171
    %v3721 = vunpack.c.l.b16 %v1172
    %v3722 = vunpack.c.h.b16 %v1172
    %v3723 = vunpack.c.l.b16 %v1173
    %v3724 = vunpack.c.h.b16 %v1173
    %v3725 = vunpack.c.l.b16 %v1174
    %v3726 = vunpack.c.h.b16 %v1174
    %v3727 = vunpack.c.l.b16 %v1175
    %v3728 = vunpack.c.h.b16 %v1175
    %v3729 = vunpack.c.l.b16 %v1176
    %v3730 = vunpack.c.h.b16 %v1176
    %v3731 = vunpack.c.l.b16 %v1177
    %v3732 = vunpack.c.h.b16 %v1177
    %v3733 = vunpack.c.l.b16 %v1178
    %v3734 = vunpack.c.h.b16 %v1178
    %v3735 = vunpack.c.l.b16 %v1179
    %v3736 = vunpack.c.h.b16 %v1179
    %v3737 = vunpack.c.l.b16 %v1180
    %v3738 = vunpack.c.h.b16 %v1180
    %v3739 = vunpack.c.l.b16 %v1181
    %v3740 = vunpack.c.h.b16 %v1181
    %v3741 = vunpack.c.l.b16 %v1182
    %v3742 = vunpack.c.h.b16 %v1182
    %v3743 = vunpack.c.l.b16 %v1183
    %v3744 = vunpack.c.h.b16 %v1183
    %v3745 = vunpack.c.l.b16 %v1184
    %v3746 = vunpack.c.h.b16 %v1184
    %v3747 = vunpack.c.l.b16 %v1185
    %v3748 = vunpack.c.h.b16 %v1185
    %v3749 = vunpack.c.l.b16 %v1186
    %v3750 = vunpack.c.h.b16 %v1186
    %v3751 = vunpack.c.l.b16 %v1187
    %v3752 = vunpack.c.h.b16 %v1187
    %v3753 = vunpack.c.l.b16 %v1188
    %v3754 = vunpack.c.h.b16 %v1188
    %v3755 = vunpack.c.l.b16 %v1189
    %v3756 = vunpack.c.h.b16 %v1189
    %v3757 = vunpack.c.l.b16 %v1190
    %v3758 = vunpack.c.h.b16 %v1190
    %v3759 = vunpack.c.l.b16 %v1191
    %v3760 = vunpack.c.h.b16 %v1191
    %v3761 = vunpack.c.l.b16 %v1192
    %v3762 = vunpack.c.h.b16 %v1192
    %v3763 = vunpack.c.l.b16 %v1193
    %v3764 = vunpack.c.h.b16 %v1193
    %v3765 = vunpack.c.l.b16 %v1194
    %v3766 = vunpack.c.h.b16 %v1194
    %v3767 = vunpack.c.l.b16 %v1195
    %v3768 = vunpack.c.h.b16 %v1195
    %v3769 = vunpack.c.l.b16 %v1196
    %v3770 = vunpack.c.h.b16 %v1196
    %v3771 = vunpack.c.l.b16 %v1197
    %v3772 = vunpack.c.h.b16 %v1197
    %v3773 = vunpack.c.l.b16 %v1198
    %v3774 = vunpack.c.h.b16 %v1198
    %v3775 = vunpack.c.l.b16 %v1199
    %v3776 = vunpack.c.h.b16 %v1199
    %v3777 = vunpack.c.l.b16 %v1200
    %v3778 = vunpack.c.h.b16 %v1200
    %v3779 = vunpack.c.l.b16 %v1201
    %v3780 = vunpack.c.h.b16 %v1201
    %v3781 = vunpack.c.l.b16 %v1202
    %v3782 = vunpack.c.h.b16 %v1202
    %v3783 = vunpack.c.l.b16 %v1203
    %v3784 = vunpack.c.h.b16 %v1203
    %v3785 = vunpack.c.l.b16 %v1204
    %v3786 = vunpack.c.h.b16 %v1204
    %v3787 = vunpack.c.l.b16 %v1205
    %v3788 = vunpack.c.h.b16 %v1205
    %v3789 = vunpack.c.l.b16 %v1206
    %v3790 = vunpack.c.h.b16 %v1206
    %v3791 = vunpack.c.l.b16 %v1207
    %v3792 = vunpack.c.h.b16 %v1207
    %v3793 = vunpack.c.l.b16 %v1208
    %v3794 = vunpack.c.h.b16 %v1208
    %v3795 = vunpack.c.l.b16 %v1209
    %v3796 = vunpack.c.h.b16 %v1209
    %v3797 = vunpack.c.l.b16 %v1210
    %v3798 = vunpack.c.h.b16 %v1210
    %v3799 = vunpack.c.l.b16 %v1211
    %v3800 = vunpack.c.h.b16 %v1211
    %v3801 = vunpack.c.l.b16 %v1212
    %v3802 = vunpack.c.h.b16 %v1212
    %v3803 = vunpack.c.l.b16 %v1213
    %v3804 = vunpack.c.h.b16 %v1213
    %v3805 = vunpack.c.l.b16 %v1214
    %v3806 = vunpack.c.h.b16 %v1214
    %v3807 = vunpack.c.l.b16 %v1215
    %v3808 = vunpack.c.h.b16 %v1215
    %v3809 = vunpack.c.l.b16 %v1216
    %v3810 = vunpack.c.h.b16 %v1216
    %v3811 = vunpack.c.l.b16 %v1217
    %v3812 = vunpack.c.h.b16 %v1217
    %v3813 = vunpack.c.l.b16 %v1218
    %v3814 = vunpack.c.h.b16 %v1218
    %v3815 = vunpack.c.l.b16 %v1219
    %v3816 = vunpack.c.h.b16 %v1219
    %v3817 = vunpack.c.l.b16 %v1220
    %v3818 = vunpack.c.h.b16 %v1220
    %v3819 = vunpack.c.l.b16 %v1221
    %v3820 = vunpack.c.h.b16 %v1221
    %v3821 = vunpack.c.l.b16 %v1222
    %v3822 = vunpack.c.h.b16 %v1222
    %v3823 = vunpack.c.l.b16 %v1223
    %v3824 = vunpack.c.h.b16 %v1223
    %v3825 = vunpack.c.l.b16 %v1224
    %v3826 = vunpack.c.h.b16 %v1224
    %v3827 = vunpack.c.l.b16 %v1225
    %v3828 = vunpack.c.h.b16 %v1225
    %v3829 = vunpack.c.l.b16 %v1226
    %v3830 = vunpack.c.h.b16 %v1226
    %v3831 = vunpack.c.l.b16 %v1227
    %v3832 = vunpack.c.h.b16 %v1227
    %v3833 = vunpack.c.l.b16 %v1228
    %v3834 = vunpack.c.h.b16 %v1228
    %v3835 = vunpack.c.l.b16 %v1229
    %v3836 = vunpack.c.h.b16 %v1229
    %v3837 = vunpack.c.l.b16 %v1230
    %v3838 = vunpack.c.h.b16 %v1230
    %v3839 = vunpack.c.l.b16 %v1231
    %v3840 = vunpack.c.h.b16 %v1231
    %v3841 = vunpack.c.l.b16 %v1232
    %v3842 = vunpack.c.h.b16 %v1232
    %v3843 = vunpack.c.l.b16 %v1233
    %v3844 = vunpack.c.h.b16 %v1233
    %v3845 = vunpack.c.l.b16 %v1234
    %v3846 = vunpack.c.h.b16 %v1234
    %v3847 = vunpack.c.l.b16 %v1235
    %v3848 = vunpack.c.h.b16 %v1235
    %v3849 = vunpack.c.l.b16 %v1236
    %v3850 = vunpack.c.h.b16 %v1236
    %v3851 = vunpack.c.l.b16 %v1237
    %v3852 = vunpack.c.h.b16 %v1237
    %v3853 = vunpack.c.l.b16 %v1238
    %v3854 = vunpack.c.h.b16 %v1238
    %v3855 = vunpack.c.l.b16 %v1239
    %v3856 = vunpack.c.h.b16 %v1239
    %v3857 = vunpack.c.l.b16 %v1240
    %v3858 = vunpack.c.h.b16 %v1240
    %v3859 = vunpack.c.l.b16 %v1241
    %v3860 = vunpack.c.h.b16 %v1241
    %v3861 = vunpack.c.l.b16 %v1242
    %v3862 = vunpack.c.h.b16 %v1242
    %v3863 = vunpack.c.l.b16 %v1243
    %v3864 = vunpack.c.h.b16 %v1243
    %v3865 = vunpack.c.l.b16 %v1244
    %v3866 = vunpack.c.h.b16 %v1244
    %v3867 = vunpack.c.l.b16 %v1245
    %v3868 = vunpack.c.h.b16 %v1245
    %v3869 = vunpack.c.l.b16 %v1246
    %v3870 = vunpack.c.h.b16 %v1246
    %v3871 = vunpack.c.l.b16 %v1247
    %v3872 = vunpack.c.h.b16 %v1247
    %v3873 = vunpack.c.l.b16 %v1248
    %v3874 = vunpack.c.h.b16 %v1248
    %v3875 = vunpack.c.l.b16 %v1249
    %v3876 = vunpack.c.h.b16 %v1249
    %v3877 = vunpack.c.l.b16 %v1250
    %v3878 = vunpack.c.h.b16 %v1250
    %v3879 = vunpack.c.l.b16 %v1251
    %v3880 = vunpack.c.h.b16 %v1251
    %v3881 = vunpack.c.l.b16 %v1252
    %v3882 = vunpack.c.h.b16 %v1252
    %v3883 = vunpack.c.l.b16 %v1253
    %v3884 = vunpack.c.h.b16 %v1253
    %v3885 = vunpack.c.l.b16 %v1254
    %v3886 = vunpack.c.h.b16 %v1254
    %v3887 = vunpack.c.l.b16 %v1255
    %v3888 = vunpack.c.h.b16 %v1255
    %v3889 = vunpack.c.l.b16 %v1256
    %v3890 = vunpack.c.h.b16 %v1256
    %v3891 = vunpack.c.l.b16 %v1257
    %v3892 = vunpack.c.h.b16 %v1257
    %v3893 = vunpack.c.l.b16 %v1258
    %v3894 = vunpack.c.h.b16 %v1258
    %v3895 = vunpack.c.l.b16 %v1259
    %v3896 = vunpack.c.h.b16 %v1259
    %v3897 = vunpack.c.l.b16 %v1260
    %v3898 = vunpack.c.h.b16 %v1260
    %v3899 = vunpack.c.l.b16 %v1261
    %v3900 = vunpack.c.h.b16 %v1261
    %v3901 = vunpack.c.l.b16 %v1262
    %v3902 = vunpack.c.h.b16 %v1262
    %v3903 = vunpack.c.l.b16 %v1263
    %v3904 = vunpack.c.h.b16 %v1263
    %v3905 = vunpack.c.l.b16 %v1264
    %v3906 = vunpack.c.h.b16 %v1264
    %v3907 = vunpack.c.l.b16 %v1265
    %v3908 = vunpack.c.h.b16 %v1265
    %v3909 = vunpack.c.l.b16 %v1266
    %v3910 = vunpack.c.h.b16 %v1266
    %v3911 = vunpack.c.l.b16 %v1267
    %v3912 = vunpack.c.h.b16 %v1267
    %v3913 = vunpack.c.l.b16 %v1268
    %v3914 = vunpack.c.h.b16 %v1268
    %v3915 = vunpack.c.l.b16 %v1269
    %v3916 = vunpack.c.h.b16 %v1269
    %v3917 = vunpack.c.l.b16 %v1270
    %v3918 = vunpack.c.h.b16 %v1270
    %v3919 = vunpack.c.l.b16 %v1271
    %v3920 = vunpack.c.h.b16 %v1271
    %v3921 = vunpack.c.l.b16 %v1272
    %v3922 = vunpack.c.h.b16 %v1272
    %v3923 = vunpack.c.l.b16 %v1273
    %v3924 = vunpack.c.h.b16 %v1273
    %v3925 = vunpack.c.l.b16 %v1274
    %v3926 = vunpack.c.h.b16 %v1274
    %v3927 = vunpack.c.l.b16 %v1275
    %v3928 = vunpack.c.h.b16 %v1275
    %v3929 = vunpack.c.l.b16 %v1276
    %v3930 = vunpack.c.h.b16 %v1276
    %v3931 = vunpack.c.l.b16 %v1277
    %v3932 = vunpack.c.h.b16 %v1277
    %v3933 = vunpack.c.l.b16 %v1278
    %v3934 = vunpack.c.h.b16 %v1278
    %v3935 = vunpack.c.l.b16 %v1279
    %v3936 = vunpack.c.h.b16 %v1279
    %v3937 = vunpack.c.l.b16 %v1280
    %v3938 = vunpack.c.h.b16 %v1280
    %v3939 = vunpack.c.l.b16 %v1281
    %v3940 = vunpack.c.h.b16 %v1281
    %v3941 = vunpack.c.l.b16 %v1282
    %v3942 = vunpack.c.h.b16 %v1282
    %v3943 = vunpack.c.l.b16 %v1283
    %v3944 = vunpack.c.h.b16 %v1283
    %v3945 = vunpack.c.l.b16 %v1284
    %v3946 = vunpack.c.h.b16 %v1284
    %v3947 = vunpack.c.l.b16 %v1285
    %v3948 = vunpack.c.h.b16 %v1285
    %v3949 = vunpack.c.l.b16 %v1286
    %v3950 = vunpack.c.h.b16 %v1286
    %v3951 = vunpack.c.l.b16 %v1287
    %v3952 = vunpack.c.h.b16 %v1287
    %v3953 = vunpack.c.l.b16 %v1288
    %v3954 = vunpack.c.h.b16 %v1288
    %v3955 = vunpack.c.l.b16 %v1289
    %v3956 = vunpack.c.h.b16 %v1289
    %v3957 = vunpack.c.l.b16 %v1290
    %v3958 = vunpack.c.h.b16 %v1290
    %v3959 = vunpack.c.l.b16 %v1291
    %v3960 = vunpack.c.h.b16 %v1291
    %v3961 = vunpack.c.l.b16 %v1292
    %v3962 = vunpack.c.h.b16 %v1292
    %v3963 = vunpack.c.l.b16 %v1293
    %v3964 = vunpack.c.h.b16 %v1293
    %v3965 = vunpack.c.l.b16 %v1294
    %v3966 = vunpack.c.h.b16 %v1294
    %v3967 = vunpack.c.l.b16 %v1295
    %v3968 = vunpack.c.h.b16 %v1295
    %v3969 = vunpack.c.l.b16 %v1296
    %v3970 = vunpack.c.h.b16 %v1296
    %v3971 = vunpack.c.l.b16 %v1297
    %v3972 = vunpack.c.h.b16 %v1297
    %v3973 = vunpack.c.l.b16 %v1298
    %v3974 = vunpack.c.h.b16 %v1298
    %v3975 = vunpack.c.l.b16 %v1299
    %v3976 = vunpack.c.h.b16 %v1299
    %v3977 = vunpack.c.l.b16 %v1300
    %v3978 = vunpack.c.h.b16 %v1300
    %v3979 = vunpack.c.l.b16 %v1301
    %v3980 = vunpack.c.h.b16 %v1301
    %v3981 = vunpack.c.l.b16 %v1302
    %v3982 = vunpack.c.h.b16 %v1302
    %v3983 = vunpack.c.l.b16 %v1303
    %v3984 = vunpack.c.h.b16 %v1303
    %v3985 = vunpack.c.l.b16 %v1304
    %v3986 = vunpack.c.h.b16 %v1304
    %v3987 = vunpack.c.l.b16 %v1305
    %v3988 = vunpack.c.h.b16 %v1305
    %v3989 = vunpack.c.l.b16 %v1306
    %v3990 = vunpack.c.h.b16 %v1306
    %v3991 = vunpack.c.l.b16 %v1307
    %v3992 = vunpack.c.h.b16 %v1307
    %v3993 = vunpack.c.l.b16 %v1308
    %v3994 = vunpack.c.h.b16 %v1308
    %v3995 = vunpack.c.l.b16 %v1309
    %v3996 = vunpack.c.h.b16 %v1309
    %v3997 = vunpack.c.l.b16 %v1310
    %v3998 = vunpack.c.h.b16 %v1310
    %v3999 = vunpack.c.l.b16 %v1311
    %v4000 = vunpack.c.h.b16 %v1311
    %v4001 = vunpack.c.l.b16 %v1312
    %v4002 = vunpack.c.h.b16 %v1312
    %v4003 = vunpack.c.l.b16 %v1313
    %v4004 = vunpack.c.h.b16 %v1313
    %v4005 = vunpack.c.l.b16 %v1314
    %v4006 = vunpack.c.h.b16 %v1314
    %v4007 = vunpack.c.l.b16 %v1315
    %v4008 = vunpack.c.h.b16 %v1315
    %v4009 = vunpack.c.l.b16 %v1316
    %v4010 = vunpack.c.h.b16 %v1316
    %v4011 = vunpack.c.l.b16 %v1317
    %v4012 = vunpack.c.h.b16 %v1317
    %v4013 = vunpack.c.l.b16 %v1318
    %v4014 = vunpack.c.h.b16 %v1318
    %v4015 = vunpack.c.l.b16 %v1319
    %v4016 = vunpack.c.h.b16 %v1319
    %v4017 = vunpack.c.l.b16 %v1320
    %v4018 = vunpack.c.h.b16 %v1320
    %v4019 = vunpack.c.l.b16 %v1321
    %v4020 = vunpack.c.h.b16 %v1321
    %v4021 = vunpack.c.l.b16 %v1322
    %v4022 = vunpack.c.h.b16 %v1322
    %v4023 = vunpack.c.l.b16 %v1323
    %v4024 = vunpack.c.h.b16 %v1323
    %v4025 = vunpack.c.l.b16 %v1324
    %v4026 = vunpack.c.h.b16 %v1324
    %v4027 = vunpack.c.l.b16 %v1325
    %v4028 = vunpack.c.h.b16 %v1325
    %v4029 = vunpack.c.l.b16 %v1326
    %v4030 = vunpack.c.h.b16 %v1326
    %v4031 = vunpack.c.l.b16 %v1327
    %v4032 = vunpack.c.h.b16 %v1327
    %v4033 = vunpack.c.l.b16 %v1328
    %v4034 = vunpack.c.h.b16 %v1328
    %v4035 = vunpack.c.l.b16 %v1329
    %v4036 = vunpack.c.h.b16 %v1329
    %v4037 = vunpack.c.l.b16 %v1330
    %v4038 = vunpack.c.h.b16 %v1330
    %v4039 = vunpack.c.l.b16 %v1331
    %v4040 = vunpack.c.h.b16 %v1331
    %v4041 = vunpack.c.l.b16 %v1332
    %v4042 = vunpack.c.h.b16 %v1332
    %v4043 = vunpack.c.l.b16 %v1333
    %v4044 = vunpack.c.h.b16 %v1333
    %v4045 = vunpack.c.l.b16 %v1334
    %v4046 = vunpack.c.h.b16 %v1334
    %v4047 = vunpack.c.l.b16 %v1335
    %v4048 = vunpack.c.h.b16 %v1335
    %v4049 = vunpack.c.l.b16 %v1336
    %v4050 = vunpack.c.h.b16 %v1336
    %v4051 = vunpack.c.l.b16 %v1337
    %v4052 = vunpack.c.h.b16 %v1337
    %v4053 = vunpack.c.l.b16 %v1338
    %v4054 = vunpack.c.h.b16 %v1338
    %v4055 = vunpack.c.l.b16 %v1339
    %v4056 = vunpack.c.h.b16 %v1339
    %v4057 = vunpack.c.l.b16 %v1340
    %v4058 = vunpack.c.h.b16 %v1340
    %v4059 = vunpack.c.l.b16 %v1341
    %v4060 = vunpack.c.h.b16 %v1341
    %v4061 = vunpack.c.l.b16 %v1342
    %v4062 = vunpack.c.h.b16 %v1342
    %v4063 = vunpack.c.l.b16 %v1343
    %v4064 = vunpack.c.h.b16 %v1343
    %v4065 = vunpack.c.l.b16 %v1344
    %v4066 = vunpack.c.h.b16 %v1344
    %v4067 = vunpack.c.l.b16 %v1345
    %v4068 = vunpack.c.h.b16 %v1345
    %v4069 = vunpack.c.l.b16 %v1346
    %v4070 = vunpack.c.h.b16 %v1346
    %v4071 = vunpack.c.l.b16 %v1347
    %v4072 = vunpack.c.h.b16 %v1347
    %v4073 = vunpack.c.l.b16 %v1348
    %v4074 = vunpack.c.h.b16 %v1348
    %v4075 = vunpack.c.l.b16 %v1349
    %v4076 = vunpack.c.h.b16 %v1349
    %v4077 = vunpack.c.l.b16 %v1350
    %v4078 = vunpack.c.h.b16 %v1350
    %v4079 = vunpack.c.l.b16 %v1351
    %v4080 = vunpack.c.h.b16 %v1351
    %v4081 = vunpack.c.l.b16 %v1352
    %v4082 = vunpack.c.h.b16 %v1352
    %v4083 = vunpack.c.l.b16 %v1353
    %v4084 = vunpack.c.h.b16 %v1353
    %v4085 = vunpack.c.l.b16 %v1354
    %v4086 = vunpack.c.h.b16 %v1354
    %v4087 = vunpack.c.l.b16 %v1355
    %v4088 = vunpack.c.h.b16 %v1355
    %v4089 = vunpack.c.l.b16 %v1356
    %v4090 = vunpack.c.h.b16 %v1356
    %v4091 = vunpack.c.l.b16 %v1357
    %v4092 = vunpack.c.h.b16 %v1357
    %v4093 = vunpack.c.l.b16 %v1358
    %v4094 = vunpack.c.h.b16 %v1358
    %v4095 = vunpack.c.l.b16 %v1359
    %v4096 = vunpack.c.h.b16 %v1359
    %v4097 = vunpack.c.l.b16 %v1360
    %v4098 = vunpack.c.h.b16 %v1360
    %v4099 = vunpack.c.l.b16 %v1361
    %v4100 = vunpack.c.h.b16 %v1361
    %v4101 = vunpack.c.l.b16 %v1362
    %v4102 = vunpack.c.h.b16 %v1362
    %v4103 = vunpack.c.l.b16 %v1363
    %v4104 = vunpack.c.h.b16 %v1363
    %v4105 = vunpack.c.l.b16 %v1364
    %v4106 = vunpack.c.h.b16 %v1364
    %v4107 = vunpack.c.l.b16 %v1365
    %v4108 = vunpack.c.h.b16 %v1365
    %v4109 = vunpack.c.l.b16 %v1366
    %v4110 = vunpack.c.h.b16 %v1366
    %v4111 = vunpack.c.l.b16 %v1367
    %v4112 = vunpack.c.h.b16 %v1367
    %v4113 = vunpack.c.l.b16 %v1368
    %v4114 = vunpack.c.h.b16 %v1368
    %v4115 = vunpack.c.l.b16 %v1369
    %v4116 = vunpack.c.h.b16 %v1369
    %v4117 = vunpack.c.l.b16 %v1370
    %v4118 = vunpack.c.h.b16 %v1370
    %v4119 = vunpack.c.l.b16 %v1371
    %v4120 = vunpack.c.h.b16 %v1371
    %v4121 = vunpack.c.l.b16 %v1372
    %v4122 = vunpack.c.h.b16 %v1372
    %v4123 = vunpack.c.l.b16 %v1373
    %v4124 = vunpack.c.h.b16 %v1373
    %v4125 = vunpack.c.l.b16 %v1374
    %v4126 = vunpack.c.h.b16 %v1374
    %v4127 = vunpack.c.l.b16 %v1375
    %v4128 = vunpack.c.h.b16 %v1375
    %v4129 = vunpack.c.l.b16 %v1376
    %v4130 = vunpack.c.h.b16 %v1376
    %v4131 = vunpack.c.l.b16 %v1377
    %v4132 = vunpack.c.h.b16 %v1377
    %v4133 = vunpack.c.l.b16 %v1378
    %v4134 = vunpack.c.h.b16 %v1378
    %v4135 = vunpack.c.l.b16 %v1379
    %v4136 = vunpack.c.h.b16 %v1379
    %v4137 = vunpack.c.l.b16 %v1380
    %v4138 = vunpack.c.h.b16 %v1380
    %v4139 = vunpack.c.l.b16 %v1381
    %v4140 = vunpack.c.h.b16 %v1381
    %v4141 = vunpack.c.l.b16 %v1382
    %v4142 = vunpack.c.h.b16 %v1382
    %v4143 = vunpack.c.l.b16 %v1383
    %v4144 = vunpack.c.h.b16 %v1383
    %v4145 = vunpack.c.l.b16 %v1384
    %v4146 = vunpack.c.h.b16 %v1384
    %v4147 = vunpack.c.l.b16 %v1385
    %v4148 = vunpack.c.h.b16 %v1385
    %v4149 = vunpack.c.l.b16 %v1386
    %v4150 = vunpack.c.h.b16 %v1386
    %v4151 = vunpack.c.l.b16 %v1387
    %v4152 = vunpack.c.h.b16 %v1387
    %v4153 = vunpack.c.l.b16 %v1388
    %v4154 = vunpack.c.h.b16 %v1388
    %v4155 = vunpack.c.l.b16 %v1389
    %v4156 = vunpack.c.h.b16 %v1389
    %v4157 = vunpack.c.l.b16 %v1390
    %v4158 = vunpack.c.h.b16 %v1390
    %v4159 = vunpack.c.l.b16 %v1391
    %v4160 = vunpack.c.h.b16 %v1391
    %v4161 = vunpack.c.l.b16 %v1392
    %v4162 = vunpack.c.h.b16 %v1392
    %v4163 = vunpack.c.l.b16 %v1393
    %v4164 = vunpack.c.h.b16 %v1393
    %v4165 = vunpack.c.l.b16 %v1394
    %v4166 = vunpack.c.h.b16 %v1394
    %v4167 = vunpack.c.l.b16 %v1395
    %v4168 = vunpack.c.h.b16 %v1395
    %v4169 = vunpack.c.l.b16 %v1396
    %v4170 = vunpack.c.h.b16 %v1396
    %v4171 = vunpack.c.l.b16 %v1397
    %v4172 = vunpack.c.h.b16 %v1397
    %v4173 = vunpack.c.l.b16 %v1398
    %v4174 = vunpack.c.h.b16 %v1398
    %v4175 = vunpack.c.l.b16 %v1399
    %v4176 = vunpack.c.h.b16 %v1399
    %v4177 = vunpack.c.l.b16 %v1400
    %v4178 = vunpack.c.h.b16 %v1400
    %v4179 = vunpack.c.l.b16 %v1401
    %v4180 = vunpack.c.h.b16 %v1401
    %v4181 = vunpack.c.l.b16 %v1402
    %v4182 = vunpack.c.h.b16 %v1402
    %v4183 = vunpack.c.l.b16 %v1403
    %v4184 = vunpack.c.h.b16 %v1403
    %v4185 = vunpack.c.l.b16 %v1404
    %v4186 = vunpack.c.h.b16 %v1404
    %v4187 = vunpack.c.l.b16 %v1405
    %v4188 = vunpack.c.h.b16 %v1405
    %v4189 = vunpack.c.l.b16 %v1406
    %v4190 = vunpack.c.h.b16 %v1406
    %v4191 = vunpack.c.l.b16 %v1407
    %v4192 = vunpack.c.h.b16 %v1407
    %v4193 = vunpack.c.l.b16 %v1408
    %v4194 = vunpack.c.h.b16 %v1408
    %v4195 = vunpack.c.l.b16 %v1409
    %v4196 = vunpack.c.h.b16 %v1409
    %v4197 = vunpack.c.l.b16 %v1410
    %v4198 = vunpack.c.h.b16 %v1410
    %v4199 = vunpack.c.l.b16 %v1411
    %v4200 = vunpack.c.h.b16 %v1411
    %v4201 = vunpack.c.l.b16 %v1412
    %v4202 = vunpack.c.h.b16 %v1412
    %v4203 = vunpack.c.l.b16 %v1413
    %v4204 = vunpack.c.h.b16 %v1413
    %v4205 = vunpack.c.l.b16 %v1414
    %v4206 = vunpack.c.h.b16 %v1414
    %v4207 = vunpack.c.l.b16 %v1415
    %v4208 = vunpack.c.h.b16 %v1415
    %v4209 = vunpack.c.l.b16 %v1416
    %v4210 = vunpack.c.h.b16 %v1416
    %v4211 = vunpack.c.l.b16 %v1417
    %v4212 = vunpack.c.h.b16 %v1417
    %v4213 = vunpack.c.l.b16 %v1418
    %v4214 = vunpack.c.h.b16 %v1418
    %v4215 = vunpack.c.l.b16 %v1419
    %v4216 = vunpack.c.h.b16 %v1419
    %v4217 = vunpack.c.l.b16 %v1420
    %v4218 = vunpack.c.h.b16 %v1420
    %v4219 = vunpack.c.l.b16 %v1421
    %v4220 = vunpack.c.h.b16 %v1421
    %v4221 = vunpack.c.l.b16 %v1422
    %v4222 = vunpack.c.h.b16 %v1422
    %v4223 = vunpack.c.l.b16 %v1423
    %v4224 = vunpack.c.h.b16 %v1423
    %v4225 = vunpack.c.l.b16 %v1424
    %v4226 = vunpack.c.h.b16 %v1424
    %v4227 = vunpack.c.l.b16 %v1425
    %v4228 = vunpack.c.h.b16 %v1425
    %v4229 = vunpack.c.l.b16 %v1426
    %v4230 = vunpack.c.h.b16 %v1426
    %v4231 = vunpack.c.l.b16 %v1427
    %v4232 = vunpack.c.h.b16 %v1427
    %v4233 = vunpack.c.l.b16 %v1428
    %v4234 = vunpack.c.h.b16 %v1428
    %v4235 = vunpack.c.l.b16 %v1429
    %v4236 = vunpack.c.h.b16 %v1429
    %v4237 = vunpack.c.l.b16 %v1430
    %v4238 = vunpack.c.h.b16 %v1430
    %v4239 = vunpack.c.l.b16 %v1431
    %v4240 = vunpack.c.h.b16 %v1431
    %v4241 = vunpack.c.l.b16 %v1432
    %v4242 = vunpack.c.h.b16 %v1432
    %v4243 = vunpack.c.l.b16 %v1433
    %v4244 = vunpack.c.h.b16 %v1433
    %v4245 = vunpack.c.l.b16 %v1434
    %v4246 = vunpack.c.h.b16 %v1434
    %v4247 = vunpack.c.l.b16 %v1435
    %v4248 = vunpack.c.h.b16 %v1435
    %v4249 = vunpack.c.l.b16 %v1436
    %v4250 = vunpack.c.h.b16 %v1436
    %v4251 = vunpack.c.l.b16 %v1437
    %v4252 = vunpack.c.h.b16 %v1437
    %v4253 = vunpack.c.l.b16 %v1438
    %v4254 = vunpack.c.h.b16 %v1438
    %v4255 = vunpack.c.l.b16 %v1439
    %v4256 = vunpack.c.h.b16 %v1439
    %v4257 = vunpack.c.l.b16 %v1440
    %v4258 = vunpack.c.h.b16 %v1440
    %v4259 = vunpack.c.l.b16 %v1441
    %v4260 = vunpack.c.h.b16 %v1441
    %v4261 = vunpack.c.l.b16 %v1442
    %v4262 = vunpack.c.h.b16 %v1442
    %v4263 = vunpack.c.l.b16 %v1443
    %v4264 = vunpack.c.h.b16 %v1443
    %v4265 = vunpack.c.l.b16 %v1444
    %v4266 = vunpack.c.h.b16 %v1444
    %v4267 = vunpack.c.l.b16 %v1445
    %v4268 = vunpack.c.h.b16 %v1445
    %v4269 = vunpack.c.l.b16 %v1446
    %v4270 = vunpack.c.h.b16 %v1446
    %v4271 = vunpack.c.l.b16 %v1447
    %v4272 = vunpack.c.h.b16 %v1447
    %v4273 = vunpack.c.l.b16 %v1448
    %v4274 = vunpack.c.h.b16 %v1448
    %v4275 = vunpack.c.l.b16 %v1449
    %v4276 = vunpack.c.h.b16 %v1449
    %v4277 = vunpack.c.l.b16 %v1450
    %v4278 = vunpack.c.h.b16 %v1450
    %v4279 = vunpack.c.l.b16 %v1451
    %v4280 = vunpack.c.h.b16 %v1451
    %v4281 = vunpack.c.l.b16 %v1452
    %v4282 = vunpack.c.h.b16 %v1452
    %v4283 = vunpack.c.l.b16 %v1453
    %v4284 = vunpack.c.h.b16 %v1453
    %v4285 = vunpack.c.l.b16 %v1454
    %v4286 = vunpack.c.h.b16 %v1454
    %v4287 = vunpack.c.l.b16 %v1455
    %v4288 = vunpack.c.h.b16 %v1455
    %v4289 = vunpack.c.l.b16 %v1456
    %v4290 = vunpack.c.h.b16 %v1456
    %v4291 = vunpack.c.l.b16 %v1457
    %v4292 = vunpack.c.h.b16 %v1457
    %v4293 = vunpack.c.l.b16 %v1458
    %v4294 = vunpack.c.h.b16 %v1458
    %v4295 = vunpack.c.l.b16 %v1459
    %v4296 = vunpack.c.h.b16 %v1459
    %v4297 = vunpack.c.l.b16 %v1460
    %v4298 = vunpack.c.h.b16 %v1460
    %v4299 = vunpack.c.l.b16 %v1461
    %v4300 = vunpack.c.h.b16 %v1461
    %v4301 = vunpack.c.l.b16 %v1462
    %v4302 = vunpack.c.h.b16 %v1462
    %v4303 = vunpack.c.l.b16 %v1463
    %v4304 = vunpack.c.h.b16 %v1463
    %v4305 = vunpack.c.l.b16 %v1464
    %v4306 = vunpack.c.h.b16 %v1464
    %v4307 = vunpack.c.l.b16 %v1465
    %v4308 = vunpack.c.h.b16 %v1465
    %v4309 = vunpack.c.l.b16 %v1466
    %v4310 = vunpack.c.h.b16 %v1466
    %v4311 = vunpack.c.l.b16 %v1467
    %v4312 = vunpack.c.h.b16 %v1467
    %v4313 = vunpack.c.l.b16 %v1468
    %v4314 = vunpack.c.h.b16 %v1468
    %v4315 = vunpack.c.l.b16 %v1469
    %v4316 = vunpack.c.h.b16 %v1469
    %v4317 = vunpack.c.l.b16 %v1470
    %v4318 = vunpack.c.h.b16 %v1470
    %v4319 = vunpack.c.l.b16 %v1471
    %v4320 = vunpack.c.h.b16 %v1471
    %v4321 = vunpack.c.l.b16 %v1472
    %v4322 = vunpack.c.h.b16 %v1472
    %v4323 = vunpack.c.l.b16 %v1473
    %v4324 = vunpack.c.h.b16 %v1473
    %v4325 = vunpack.c.l.b16 %v1474
    %v4326 = vunpack.c.h.b16 %v1474
    %v4327 = vunpack.c.l.b16 %v1475
    %v4328 = vunpack.c.h.b16 %v1475
    %v4329 = vunpack.c.l.b16 %v1476
    %v4330 = vunpack.c.h.b16 %v1476
    %v4331 = vunpack.c.l.b16 %v1477
    %v4332 = vunpack.c.h.b16 %v1477
    %v4333 = vunpack.c.l.b16 %v1478
    %v4334 = vunpack.c.h.b16 %v1478
    %v4335 = vunpack.c.l.b16 %v1479
    %v4336 = vunpack.c.h.b16 %v1479
    %v4337 = vunpack.c.l.b16 %v1480
    %v4338 = vunpack.c.h.b16 %v1480
    %v4339 = vunpack.c.l.b16 %v1481
    %v4340 = vunpack.c.h.b16 %v1481
    %v4341 = vunpack.c.l.b16 %v1482
    %v4342 = vunpack.c.h.b16 %v1482
    %v4343 = vunpack.c.l.b16 %v1483
    %v4344 = vunpack.c.h.b16 %v1483
    %v4345 = vunpack.c.l.b16 %v1484
    %v4346 = vunpack.c.h.b16 %v1484
    %v4347 = vunpack.c.l.b16 %v1485
    %v4348 = vunpack.c.h.b16 %v1485
    %v4349 = vunpack.c.l.b16 %v1486
    %v4350 = vunpack.c.h.b16 %v1486
    %v4351 = vunpack.c.l.b16 %v1487
    %v4352 = vunpack.c.h.b16 %v1487
    %v4353 = vunpack.c.l.b16 %v1488
    %v4354 = vunpack.c.h.b16 %v1488
    %v4355 = vunpack.c.l.b16 %v1489
    %v4356 = vunpack.c.h.b16 %v1489
    %v4357 = vunpack.c.l.b16 %v1490
    %v4358 = vunpack.c.h.b16 %v1490
    %v4359 = vunpack.c.l.b16 %v1491
    %v4360 = vunpack.c.h.b16 %v1491
    %v4361 = vunpack.c.l.b16 %v1492
    %v4362 = vunpack.c.h.b16 %v1492
    %v4363 = vunpack.c.l.b16 %v1493
    %v4364 = vunpack.c.h.b16 %v1493
    %v4365 = vunpack.c.l.b16 %v1494
    %v4366 = vunpack.c.h.b16 %v1494
    %v4367 = vunpack.c.l.b16 %v1495
    %v4368 = vunpack.c.h.b16 %v1495
    %v4369 = vunpack.c.l.b16 %v1496
    %v4370 = vunpack.c.h.b16 %v1496
    %v4371 = vunpack.c.l.b16 %v1497
    %v4372 = vunpack.c.h.b16 %v1497
    %v4373 = vunpack.c.l.b16 %v1498
    %v4374 = vunpack.c.h.b16 %v1498
    %v4375 = vunpack.c.l.b16 %v1499
    %v4376 = vunpack.c.h.b16 %v1499
    %v4377 = vunpack.c.l.b16 %v1500
    %v4378 = vunpack.c.h.b16 %v1500
    %v4379 = vunpack.c.l.b16 %v1501
    %v4380 = vunpack.c.h.b16 %v1501
    %v4381 = vunpack.c.l.b16 %v1502
    %v4382 = vunpack.c.h.b16 %v1502
    %v4383 = vunpack.c.l.b16 %v1503
    %v4384 = vunpack.c.h.b16 %v1503
    %v4385 = vunpack.c.l.b16 %v1504
    %v4386 = vunpack.c.h.b16 %v1504
    %v4387 = vunpack.c.l.b16 %v1505
    %v4388 = vunpack.c.h.b16 %v1505
    %v4389 = vunpack.c.l.b16 %v1506
    %v4390 = vunpack.c.h.b16 %v1506
    %v4391 = vunpack.c.l.b16 %v1507
    %v4392 = vunpack.c.h.b16 %v1507
    %v4393 = vunpack.c.l.b16 %v1508
    %v4394 = vunpack.c.h.b16 %v1508
    %v4395 = vunpack.c.l.b16 %v1509
    %v4396 = vunpack.c.h.b16 %v1509
    %v4397 = vunpack.c.l.b16 %v1510
    %v4398 = vunpack.c.h.b16 %v1510
    %v4399 = vunpack.c.l.b16 %v1511
    %v4400 = vunpack.c.h.b16 %v1511
    %v4401 = vunpack.c.l.b16 %v1512
    %v4402 = vunpack.c.h.b16 %v1512
    %v4403 = vunpack.c.l.b16 %v1513
    %v4404 = vunpack.c.h.b16 %v1513
    %v4405 = vunpack.c.l.b16 %v1514
    %v4406 = vunpack.c.h.b16 %v1514
    %v4407 = vunpack.c.l.b16 %v1515
    %v4408 = vunpack.c.h.b16 %v1515
    %v4409 = vunpack.c.l.b16 %v1516
    %v4410 = vunpack.c.h.b16 %v1516
    %v4411 = vunpack.c.l.b16 %v1517
    %v4412 = vunpack.c.h.b16 %v1517
    %v4413 = vunpack.c.l.b16 %v1518
    %v4414 = vunpack.c.h.b16 %v1518
    %v4415 = vunpack.c.l.b16 %v1519
    %v4416 = vunpack.c.h.b16 %v1519
    %v4417 = vunpack.c.l.b16 %v1520
    %v4418 = vunpack.c.h.b16 %v1520
    %v4419 = vunpack.c.l.b16 %v1521
    %v4420 = vunpack.c.h.b16 %v1521
    %v4421 = vunpack.c.l.b16 %v1522
    %v4422 = vunpack.c.h.b16 %v1522
    %v4423 = vunpack.c.l.b16 %v1523
    %v4424 = vunpack.c.h.b16 %v1523
    %v4425 = vunpack.c.l.b16 %v1524
    %v4426 = vunpack.c.h.b16 %v1524
    %v4427 = vunpack.c.l.b16 %v1525
    %v4428 = vunpack.c.h.b16 %v1525
    %v4429 = vunpack.c.l.b16 %v1526
    %v4430 = vunpack.c.h.b16 %v1526
    %v4431 = vunpack.c.l.b16 %v1527
    %v4432 = vunpack.c.h.b16 %v1527
    %v4433 = vunpack.c.l.b16 %v1528
    %v4434 = vunpack.c.h.b16 %v1528
    %v4435 = vunpack.c.l.b16 %v1529
    %v4436 = vunpack.c.h.b16 %v1529
    %v4437 = vunpack.c.l.b16 %v1530
    %v4438 = vunpack.c.h.b16 %v1530
    %v4439 = vunpack.c.l.b16 %v1531
    %v4440 = vunpack.c.h.b16 %v1531
    %v4441 = vunpack.c.l.b16 %v1532
    %v4442 = vunpack.c.h.b16 %v1532
    %v4443 = vunpack.c.l.b16 %v1533
    %v4444 = vunpack.c.h.b16 %v1533
    %v4445 = vunpack.c.l.b16 %v1534
    %v4446 = vunpack.c.h.b16 %v1534
    %v4447 = vunpack.c.l.b16 %v1535
    %v4448 = vunpack.c.h.b16 %v1535
    %v4449 = vunpack.c.l.b16 %v1536
    %v4450 = vunpack.c.h.b16 %v1536
    %v4451 = vunpack.c.l.b16 %v1537
    %v4452 = vunpack.c.h.b16 %v1537
    %v4453 = vunpack.c.l.b16 %v1538
    %v4454 = vunpack.c.h.b16 %v1538
    %v4455 = vunpack.c.l.b16 %v1539
    %v4456 = vunpack.c.h.b16 %v1539
    %v4457 = vunpack.c.l.b16 %v1540
    %v4458 = vunpack.c.h.b16 %v1540
    %v4459 = vunpack.c.l.b16 %v1541
    %v4460 = vunpack.c.h.b16 %v1541
    %v4461 = vunpack.c.l.b16 %v1542
    %v4462 = vunpack.c.h.b16 %v1542
    %v4463 = vunpack.c.l.b16 %v1543
    %v4464 = vunpack.c.h.b16 %v1543
    %v4465 = vunpack.c.l.b16 %v1544
    %v4466 = vunpack.c.h.b16 %v1544
    %v4467 = vunpack.c.l.b16 %v1545
    %v4468 = vunpack.c.h.b16 %v1545
    %v4469 = vunpack.c.l.b16 %v1546
    %v4470 = vunpack.c.h.b16 %v1546
    %v4471 = vunpack.c.l.b16 %v1547
    %v4472 = vunpack.c.h.b16 %v1547
    %v4473 = vunpack.c.l.b16 %v1548
    %v4474 = vunpack.c.h.b16 %v1548
    %v4475 = vunpack.c.l.b16 %v1549
    %v4476 = vunpack.c.h.b16 %v1549
    %v4477 = vunpack.c.l.b16 %v1550
    %v4478 = vunpack.c.h.b16 %v1550
    %v4479 = vunpack.c.l.b16 %v1551
    %v4480 = vunpack.c.h.b16 %v1551
    %v4481 = vunpack.c.l.b16 %v1552
    %v4482 = vunpack.c.h.b16 %v1552
    %v4483 = vunpack.c.l.b16 %v1553
    %v4484 = vunpack.c.h.b16 %v1553
    %v4485 = vunpack.c.l.b16 %v1554
    %v4486 = vunpack.c.h.b16 %v1554
    %v4487 = vunpack.c.l.b16 %v1555
    %v4488 = vunpack.c.h.b16 %v1555
    %v4489 = vunpack.c.l.b16 %v1556
    %v4490 = vunpack.c.h.b16 %v1556
    %v4491 = vunpack.c.l.b16 %v1557
    %v4492 = vunpack.c.h.b16 %v1557
    %v4493 = vunpack.c.l.b16 %v1558
    %v4494 = vunpack.c.h.b16 %v1558
    %v4495 = vunpack.c.l.b16 %v1559
    %v4496 = vunpack.c.h.b16 %v1559
    %v4497 = vunpack.c.l.b16 %v1560
    %v4498 = vunpack.c.h.b16 %v1560
    %v4499 = vunpack.c.l.b16 %v1561
    %v4500 = vunpack.c.h.b16 %v1561
    %v4501 = vunpack.c.l.b16 %v1562
    %v4502 = vunpack.c.h.b16 %v1562
    %v4503 = vunpack.c.l.b16 %v1563
    %v4504 = vunpack.c.h.b16 %v1563
    %v4505 = vunpack.c.l.b16 %v1564
    %v4506 = vunpack.c.h.b16 %v1564
    %v4507 = vunpack.c.l.b16 %v1565
    %v4508 = vunpack.c.h.b16 %v1565
    %v4509 = vunpack.c.l.b16 %v1566
    %v4510 = vunpack.c.h.b16 %v1566
    %v4511 = vunpack.c.l.b16 %v1567
    %v4512 = vunpack.c.h.b16 %v1567
    %v4513 = vunpack.c.l.b16 %v1568
    %v4514 = vunpack.c.h.b16 %v1568
    %v4515 = vunpack.c.l.b16 %v1569
    %v4516 = vunpack.c.h.b16 %v1569
    %v4517 = vunpack.c.l.b16 %v1570
    %v4518 = vunpack.c.h.b16 %v1570
    %v4519 = vunpack.c.l.b16 %v1571
    %v4520 = vunpack.c.h.b16 %v1571
    %v4521 = vunpack.c.l.b16 %v1572
    %v4522 = vunpack.c.h.b16 %v1572
    %v4523 = vunpack.c.l.b16 %v1573
    %v4524 = vunpack.c.h.b16 %v1573
    %v4525 = vunpack.c.l.b16 %v1574
    %v4526 = vunpack.c.h.b16 %v1574
    %v4527 = vunpack.c.l.b16 %v1575
    %v4528 = vunpack.c.h.b16 %v1575
    %v4529 = vunpack.c.l.b16 %v1576
    %v4530 = vunpack.c.h.b16 %v1576
    %v4531 = vunpack.c.l.b16 %v1577
    %v4532 = vunpack.c.h.b16 %v1577
    %v4533 = vunpack.c.l.b16 %v1578
    %v4534 = vunpack.c.h.b16 %v1578
    %v4535 = vunpack.c.l.b16 %v1579
    %v4536 = vunpack.c.h.b16 %v1579
    %v4537 = vunpack.c.l.b16 %v1580
    %v4538 = vunpack.c.h.b16 %v1580
    %v4539 = vunpack.c.l.b16 %v1581
    %v4540 = vunpack.c.h.b16 %v1581
    %v4541 = vunpack.c.l.b16 %v1582
    %v4542 = vunpack.c.h.b16 %v1582
    %v4543 = vunpack.c.l.b16 %v1583
    %v4544 = vunpack.c.h.b16 %v1583
    %v4545 = vunpack.c.l.b16 %v1584
    %v4546 = vunpack.c.h.b16 %v1584
    %v4547 = vunpack.c.l.b16 %v1585
    %v4548 = vunpack.c.h.b16 %v1585
    %v4549 = vunpack.c.l.b16 %v1586
    %v4550 = vunpack.c.h.b16 %v1586
    %v4551 = vunpack.c.l.b16 %v1587
    %v4552 = vunpack.c.h.b16 %v1587
    %v4553 = vunpack.c.l.b16 %v1588
    %v4554 = vunpack.c.h.b16 %v1588
    %v4555 = vunpack.c.l.b16 %v1589
    %v4556 = vunpack.c.h.b16 %v1589
    %v4557 = vunpack.c.l.b16 %v1590
    %v4558 = vunpack.c.h.b16 %v1590
    %v4559 = vunpack.c.l.b16 %v1591
    %v4560 = vunpack.c.h.b16 %v1591
    %v4561 = vunpack.c.l.b16 %v1592
    %v4562 = vunpack.c.h.b16 %v1592
    %v4563 = vunpack.c.l.b16 %v1593
    %v4564 = vunpack.c.h.b16 %v1593
    %v4565 = vunpack.c.l.b16 %v1594
    %v4566 = vunpack.c.h.b16 %v1594
    %v4567 = vunpack.c.l.b16 %v1595
    %v4568 = vunpack.c.h.b16 %v1595
    %v4569 = vunpack.c.l.b16 %v1596
    %v4570 = vunpack.c.h.b16 %v1596
    %v4571 = vunpack.c.l.b16 %v1597
    %v4572 = vunpack.c.h.b16 %v1597
    %v4573 = vunpack.c.l.b16 %v1598
    %v4574 = vunpack.c.h.b16 %v1598
    %v4575 = vunpack.c.l.b16 %v1599
    %v4576 = vunpack.c.h.b16 %v1599
    %v4577 = vunpack.c.l.b16 %v1600
    %v4578 = vunpack.c.h.b16 %v1600
    %v4579 = vunpack.c.l.b16 %v1601
    %v4580 = vunpack.c.h.b16 %v1601
    %v4581 = vunpack.c.l.b16 %v1602
    %v4582 = vunpack.c.h.b16 %v1602
    %v4583 = vunpack.c.l.b16 %v1603
    %v4584 = vunpack.c.h.b16 %v1603
    %v4585 = vunpack.c.l.b16 %v1604
    %v4586 = vunpack.c.h.b16 %v1604
    %v4587 = vunpack.c.l.b16 %v1605
    %v4588 = vunpack.c.h.b16 %v1605
    %v4589 = vunpack.c.l.b16 %v1606
    %v4590 = vunpack.c.h.b16 %v1606
    %v4591 = vunpack.c.l.b16 %v1607
    %v4592 = vunpack.c.h.b16 %v1607
    %v4593 = vunpack.c.l.b16 %v1608
    %v4594 = vunpack.c.h.b16 %v1608
    %v4595 = vunpack.c.l.b16 %v1609
    %v4596 = vunpack.c.h.b16 %v1609
    %v4597 = vunpack.c.l.b16 %v1610
    %v4598 = vunpack.c.h.b16 %v1610
    %v4599 = vunpack.c.l.b16 %v1611
    %v4600 = vunpack.c.h.b16 %v1611
    %v4601 = vunpack.c.l.b16 %v1612
    %v4602 = vunpack.c.h.b16 %v1612
    %v4603 = vunpack.c.l.b16 %v1613
    %v4604 = vunpack.c.h.b16 %v1613
    %v4605 = vunpack.c.l.b16 %v1614
    %v4606 = vunpack.c.h.b16 %v1614
    %v4607 = vunpack.c.l.b16 %v1615
    %v4608 = vunpack.c.h.b16 %v1615
    %v4609 = vunpack.c.l.b16 %v1616
    %v4610 = vunpack.c.h.b16 %v1616
    %v4611 = vunpack.c.l.b16 %v1617
    %v4612 = vunpack.c.h.b16 %v1617
    %v4613 = vunpack.c.l.b16 %v1618
    %v4614 = vunpack.c.h.b16 %v1618
    %v4615 = vunpack.c.l.b16 %v1619
    %v4616 = vunpack.c.h.b16 %v1619
    %v4617 = vunpack.c.l.b16 %v1620
    %v4618 = vunpack.c.h.b16 %v1620
    %v4619 = vunpack.c.l.b16 %v1621
    %v4620 = vunpack.c.h.b16 %v1621
    %v4621 = vunpack.c.l.b16 %v1622
    %v4622 = vunpack.c.h.b16 %v1622
    %v4623 = vunpack.c.l.b16 %v1623
    %v4624 = vunpack.c.h.b16 %v1623
    %v4625 = vunpack.c.l.b16 %v1624
    %v4626 = vunpack.c.h.b16 %v1624
    %v4627 = vunpack.c.l.b16 %v1625
    %v4628 = vunpack.c.h.b16 %v1625
    %v4629 = vunpack.c.l.b16 %v1626
    %v4630 = vunpack.c.h.b16 %v1626
    %v4631 = vunpack.c.l.b16 %v1627
    %v4632 = vunpack.c.h.b16 %v1627
    %v4633 = vunpack.c.l.b16 %v1628
    %v4634 = vunpack.c.h.b16 %v1628
    %v4635 = vunpack.c.l.b16 %v1629
    %v4636 = vunpack.c.h.b16 %v1629
    %v4637 = vunpack.c.l.b16 %v1630
    %v4638 = vunpack.c.h.b16 %v1630
    %v4639 = vunpack.c.l.b16 %v1631
    %v4640 = vunpack.c.h.b16 %v1631
    %v4641 = vunpack.c.l.b16 %v1632
    %v4642 = vunpack.c.h.b16 %v1632
    %v4643 = vunpack.c.l.b16 %v1633
    %v4644 = vunpack.c.h.b16 %v1633
    %v4645 = vunpack.c.l.b16 %v1634
    %v4646 = vunpack.c.h.b16 %v1634
    %v4647 = vunpack.c.l.b16 %v1635
    %v4648 = vunpack.c.h.b16 %v1635
    %v4649 = vunpack.c.l.b16 %v1636
    %v4650 = vunpack.c.h.b16 %v1636
    %v4651 = vunpack.c.l.b16 %v1637
    %v4652 = vunpack.c.h.b16 %v1637
    %v4653 = vunpack.c.l.b16 %v1638
    %v4654 = vunpack.c.h.b16 %v1638
    %v4655 = vunpack.c.l.b16 %v1639
    %v4656 = vunpack.c.h.b16 %v1639
    %v4657 = vunpack.c.l.b16 %v1640
    %v4658 = vunpack.c.h.b16 %v1640
    %v4659 = vunpack.c.l.b16 %v1641
    %v4660 = vunpack.c.h.b16 %v1641
    %v4661 = vunpack.c.l.b16 %v1642
    %v4662 = vunpack.c.h.b16 %v1642
    %v4663 = vunpack.c.l.b16 %v1643
    %v4664 = vunpack.c.h.b16 %v1643
    %v4665 = vunpack.c.l.b16 %v1644
    %v4666 = vunpack.c.h.b16 %v1644
    %v4667 = vunpack.c.l.b16 %v1645
    %v4668 = vunpack.c.h.b16 %v1645
    %v4669 = vunpack.c.l.b16 %v1646
    %v4670 = vunpack.c.h.b16 %v1646
    %v4671 = vunpack.c.l.b16 %v1647
    %v4672 = vunpack.c.h.b16 %v1647
    %v4673 = vunpack.c.l.b16 %v1648
    %v4674 = vunpack.c.h.b16 %v1648
    %v4675 = vunpack.c.l.b16 %v1649
    %v4676 = vunpack.c.h.b16 %v1649
    %v4677 = vunpack.c.l.b16 %v1650
    %v4678 = vunpack.c.h.b16 %v1650
    %v4679 = vunpack.c.l.b16 %v1651
    %v4680 = vunpack.c.h.b16 %v1651
    %v4681 = vunpack.c.l.b16 %v1652
    %v4682 = vunpack.c.h.b16 %v1652
    %v4683 = vunpack.c.l.b16 %v1653
    %v4684 = vunpack.c.h.b16 %v1653
    %v4685 = vunpack.c.l.b16 %v1654
    %v4686 = vunpack.c.h.b16 %v1654
    %v4687 = vunpack.c.l.b16 %v1655
    %v4688 = vunpack.c.h.b16 %v1655
    %v4689 = vunpack.c.l.b16 %v1656
    %v4690 = vunpack.c.h.b16 %v1656
    %v4691 = vunpack.c.l.b16 %v1657
    %v4692 = vunpack.c.h.b16 %v1657
    %v4693 = vunpack.c.l.b16 %v1658
    %v4694 = vunpack.c.h.b16 %v1658
    %v4695 = vunpack.c.l.b16 %v1659
    %v4696 = vunpack.c.h.b16 %v1659
    %v4697 = vunpack.c.l.b16 %v1660
    %v4698 = vunpack.c.h.b16 %v1660
    %v4699 = vunpack.c.l.b16 %v1661
    %v4700 = vunpack.c.h.b16 %v1661
    %v4701 = vunpack.c.l.b16 %v1662
    %v4702 = vunpack.c.h.b16 %v1662
    %v4703 = vunpack.c.l.b16 %v1663
    %v4704 = vunpack.c.h.b16 %v1663
    %v4705 = vunpack.c.l.b16 %v1664
    %v4706 = vunpack.c.h.b16 %v1664
    %v4707 = vunpack.c.l.b16 %v1665
    %v4708 = vunpack.c.h.b16 %v1665
    %v4709 = vunpack.c.l.b16 %v1666
    %v4710 = vunpack.c.h.b16 %v1666
    %v4711 = vunpack.c.l.b16 %v1667
    %v4712 = vunpack.c.h.b16 %v1667
    %v4713 = vunpack.c.l.b16 %v1668
    %v4714 = vunpack.c.h.b16 %v1668
    %v4715 = vunpack.c.l.b16 %v1669
    %v4716 = vunpack.c.h.b16 %v1669
    %v4717 = vunpack.c.l.b16 %v1670
    %v4718 = vunpack.c.h.b16 %v1670
    %v4719 = vunpack.c.l.b16 %v1671
    %v4720 = vunpack.c.h.b16 %v1671
    %v4721 = vunpack.c.l.b16 %v1672
    %v4722 = vunpack.c.h.b16 %v1672
    %v4723 = vunpack.c.l.b16 %v1673
    %v4724 = vunpack.c.h.b16 %v1673
    %v4725 = vunpack.c.l.b16 %v1674
    %v4726 = vunpack.c.h.b16 %v1674
    %v4727 = vunpack.c.l.b16 %v1675
    %v4728 = vunpack.c.h.b16 %v1675
    %v4729 = vunpack.c.l.b16 %v1676
    %v4730 = vunpack.c.h.b16 %v1676
    %v4731 = vunpack.c.l.b16 %v1677
    %v4732 = vunpack.c.h.b16 %v1677
    %v4733 = vunpack.c.l.b16 %v1678
    %v4734 = vunpack.c.h.b16 %v1678
    %v4735 = vunpack.c.l.b16 %v1679
    %v4736 = vunpack.c.h.b16 %v1679
    %v4737 = vunpack.c.l.b16 %v1680
    %v4738 = vunpack.c.h.b16 %v1680
    %v4739 = vunpack.c.l.b16 %v1681
    %v4740 = vunpack.c.h.b16 %v1681
    %v4741 = vunpack.c.l.b16 %v1682
    %v4742 = vunpack.c.h.b16 %v1682
    %v4743 = vunpack.c.l.b16 %v1683
    %v4744 = vunpack.c.h.b16 %v1683
    %v4745 = vunpack.c.l.b16 %v1684
    %v4746 = vunpack.c.h.b16 %v1684
    %v4747 = vunpack.c.l.b16 %v1685
    %v4748 = vunpack.c.h.b16 %v1685
    %v4749 = vunpack.c.l.b16 %v1686
    %v4750 = vunpack.c.h.b16 %v1686
    %v4751 = vunpack.c.l.b16 %v1687
    %v4752 = vunpack.c.h.b16 %v1687
    %v4753 = vunpack.c.l.b16 %v1688
    %v4754 = vunpack.c.h.b16 %v1688
    %v4755 = vunpack.c.l.b16 %v1689
    %v4756 = vunpack.c.h.b16 %v1689
    %v4757 = vunpack.c.l.b16 %v1690
    %v4758 = vunpack.c.h.b16 %v1690
    %v4759 = vunpack.c.l.b16 %v1691
    %v4760 = vunpack.c.h.b16 %v1691
    %v4761 = vunpack.c.l.b16 %v1692
    %v4762 = vunpack.c.h.b16 %v1692
    %v4763 = vunpack.c.l.b16 %v1693
    %v4764 = vunpack.c.h.b16 %v1693
    %v4765 = vunpack.c.l.b16 %v1694
    %v4766 = vunpack.c.h.b16 %v1694
    %v4767 = vunpack.c.l.b16 %v1695
    %v4768 = vunpack.c.h.b16 %v1695
    %v4769 = vunpack.c.l.b16 %v1696
    %v4770 = vunpack.c.h.b16 %v1696
    %v4771 = vunpack.c.l.b16 %v1697
    %v4772 = vunpack.c.h.b16 %v1697
    %v4773 = vunpack.c.l.b16 %v1698
    %v4774 = vunpack.c.h.b16 %v1698
    %v4775 = vunpack.c.l.b16 %v1699
    %v4776 = vunpack.c.h.b16 %v1699
    %v4777 = vunpack.c.l.b16 %v1700
    %v4778 = vunpack.c.h.b16 %v1700
    %v4779 = vunpack.c.l.b16 %v1701
    %v4780 = vunpack.c.h.b16 %v1701
    %v4781 = vunpack.c.l.b16 %v1702
    %v4782 = vunpack.c.h.b16 %v1702
    %v4783 = vunpack.c.l.b16 %v1703
    %v4784 = vunpack.c.h.b16 %v1703
    %v4785 = vunpack.c.l.b16 %v1704
    %v4786 = vunpack.c.h.b16 %v1704
    %v4787 = vunpack.c.l.b16 %v1705
    %v4788 = vunpack.c.h.b16 %v1705
    %v4789 = vunpack.c.l.b16 %v1706
    %v4790 = vunpack.c.h.b16 %v1706
    %v4791 = vunpack.c.l.b16 %v1707
    %v4792 = vunpack.c.h.b16 %v1707
    %v4793 = vunpack.c.l.b16 %v1708
    %v4794 = vunpack.c.h.b16 %v1708
    %v4795 = vunpack.c.l.b16 %v1709
    %v4796 = vunpack.c.h.b16 %v1709
    %v4797 = vunpack.c.l.b16 %v1710
    %v4798 = vunpack.c.h.b16 %v1710
    %v4799 = vunpack.c.l.b16 %v1711
    %v4800 = vunpack.c.h.b16 %v1711
    %v4801 = vunpack.c.l.b16 %v1712
    %v4802 = vunpack.c.h.b16 %v1712
    %v4803 = vpack.c.b16 %v2763, %v2755
    %v4804 = vpack.c.b16 %v2764, %v2756
    %v4805 = vpack.c.b16 %v2765, %v2757
    %v4806 = vpack.c.b16 %v2766, %v2758
    %v4807 = vpack.c.b16 %v2767, %v2759
    %v4808 = vpack.c.b16 %v2768, %v2760
    %v4809 = vpack.c.b16 %v2769, %v2761
    %v4810 = vpack.c.b16 %v2770, %v2762
    %v4811 = vpack.c.b16 %v2779, %v2771
    %v4812 = vpack.c.b16 %v2780, %v2772
    %v4813 = vpack.c.b16 %v2781, %v2773
    %v4814 = vpack.c.b16 %v2782, %v2774
    %v4815 = vpack.c.b16 %v2783, %v2775
    %v4816 = vpack.c.b16 %v2784, %v2776
    %v4817 = vpack.c.b16 %v2785, %v2777
    %v4818 = vpack.c.b16 %v2786, %v2778
    %v4819 = vpack.c.b16 %v2795, %v2787
    %v4820 = vpack.c.b16 %v2796, %v2788
    %v4821 = vpack.c.b16 %v2797, %v2789
    %v4822 = vpack.c.b16 %v2798, %v2790
    %v4823 = vpack.c.b16 %v2799, %v2791
    %v4824 = vpack.c.b16 %v2800, %v2792
    %v4825 = vpack.c.b16 %v2801, %v2793
    %v4826 = vpack.c.b16 %v2802, %v2794
    %v4827 = vpack.c.b16 %v2811, %v2803
    %v4828 = vpack.c.b16 %v2812, %v2804
    %v4829 = vpack.c.b16 %v2813, %v2805
    %v4830 = vpack.c.b16 %v2814, %v2806
    %v4831 = vpack.c.b16 %v2815, %v2807
    %v4832 = vpack.c.b16 %v2816, %v2808
    %v4833 = vpack.c.b16 %v2817, %v2809
    %v4834 = vpack.c.b16 %v2818, %v2810
    %v4835 = vpack.c.b16 %v2827, %v2819
    %v4836 = vpack.c.b16 %v2828, %v2820
    %v4837 = vpack.c.b16 %v2829, %v2821
    %v4838 = vpack.c.b16 %v2830, %v2822
    %v4839 = vpack.c.b16 %v2831, %v2823
    %v4840 = vpack.c.b16 %v2832, %v2824
    %v4841 = vpack.c.b16 %v2833, %v2825
    %v4842 = vpack.c.b16 %v2834, %v2826
    %v4843 = vpack.c.b16 %v2843, %v2835
    %v4844 = vpack.c.b16 %v2844, %v2836
    %v4845 = vpack.c.b16 %v2845, %v2837
    %v4846 = vpack.c.b16 %v2846, %v2838
    %v4847 = vpack.c.b16 %v2847, %v2839
    %v4848 = vpack.c.b16 %v2848, %v2840
    %v4849 = vpack.c.b16 %v2849, %v2841
    %v4850 = vpack.c.b16 %v2850, %v2842
    %v4851 = vpack.c.b16 %v2859, %v2851
    %v4852 = vpack.c.b16 %v2860, %v2852
    %v4853 = vpack.c.b16 %v2861, %v2853
    %v4854 = vpack.c.b16 %v2862, %v2854
    %v4855 = vpack.c.b16 %v2863, %v2855
    %v4856 = vpack.c.b16 %v2864, %v2856
    %v4857 = vpack.c.b16 %v2865, %v2857
    %v4858 = vpack.c.b16 %v2866, %v2858
    %v4859 = vpack.c.b16 %v2875, %v2867
    %v4860 = vpack.c.b16 %v2876, %v2868
    %v4861 = vpack.c.b16 %v2877, %v2869
    %v4862 = vpack.c.b16 %v2878, %v2870
    %v4863 = vpack.c.b16 %v2879, %v2871
    %v4864 = vpack.c.b16 %v2880, %v2872
    %v4865 = vpack.c.b16 %v2881, %v2873
    %v4866 = vpack.c.b16 %v2882, %v2874
    %v4867 = vpack.c.b16 %v2891, %v2883
    %v4868 = vpack.c.b16 %v2892, %v2884
    %v4869 = vpack.c.b16 %v2893, %v2885
    %v4870 = vpack.c.b16 %v2894, %v2886
    %v4871 = vpack.c.b16 %v2895, %v2887
    %v4872 = vpack.c.b16 %v2896, %v2888
    %v4873 = vpack.c.b16 %v2897, %v2889
    %v4874 = vpack.c.b16 %v2898, %v2890
    %v4875 = vpack.c.b16 %v2907, %v2899
    %v4876 = vpack.c.b16 %v2908, %v2900
    %v4877 = vpack.c.b16 %v2909, %v2901
    %v4878 = vpack.c.b16 %v2910, %v2902
    %v4879 = vpack.c.b16 %v2911, %v2903
    %v4880 = vpack.c.b16 %v2912, %v2904
    %v4881 = vpack.c.b16 %v2913, %v2905
    %v4882 = vpack.c.b16 %v2914, %v2906
    %v4883 = vpack.c.b16 %v2923, %v2915
    %v4884 = vpack.c.b16 %v2924, %v2916
    %v4885 = vpack.c.b16 %v2925, %v2917
    %v4886 = vpack.c.b16 %v2926, %v2918
    %v4887 = vpack.c.b16 %v2927, %v2919
    %v4888 = vpack.c.b16 %v2928, %v2920
    %v4889 = vpack.c.b16 %v2929, %v2921
    %v4890 = vpack.c.b16 %v2930, %v2922
    %v4891 = vpack.c.b16 %v2939, %v2931
    %v4892 = vpack.c.b16 %v2940, %v2932
    %v4893 = vpack.c.b16 %v2941, %v2933
    %v4894 = vpack.c.b16 %v2942, %v2934
    %v4895 = vpack.c.b16 %v2943, %v2935
    %v4896 = vpack.c.b16 %v2944, %v2936
    %v4897 = vpack.c.b16 %v2945, %v2937
    %v4898 = vpack.c.b16 %v2946, %v2938
    %v4899 = vpack.c.b16 %v2955, %v2947
    %v4900 = vpack.c.b16 %v2956, %v2948
    %v4901 = vpack.c.b16 %v2957, %v2949
    %v4902 = vpack.c.b16 %v2958, %v2950
    %v4903 = vpack.c.b16 %v2959, %v2951
    %v4904 = vpack.c.b16 %v2960, %v2952
    %v4905 = vpack.c.b16 %v2961, %v2953
    %v4906 = vpack.c.b16 %v2962, %v2954
    %v4907 = vpack.c.b16 %v2971, %v2963
    %v4908 = vpack.c.b16 %v2972, %v2964
    %v4909 = vpack.c.b16 %v2973, %v2965
    %v4910 = vpack.c.b16 %v2974, %v2966
    %v4911 = vpack.c.b16 %v2975, %v2967
    %v4912 = vpack.c.b16 %v2976, %v2968
    %v4913 = vpack.c.b16 %v2977, %v2969
    %v4914 = vpack.c.b16 %v2978, %v2970
    %v4915 = vpack.c.b16 %v2987, %v2979
    %v4916 = vpack.c.b16 %v2988, %v2980
    %v4917 = vpack.c.b16 %v2989, %v2981
    %v4918 = vpack.c.b16 %v2990, %v2982
    %v4919 = vpack.c.b16 %v2991, %v2983
    %v4920 = vpack.c.b16 %v2992, %v2984
    %v4921 = vpack.c.b16 %v2993, %v2985
    %v4922 = vpack.c.b16 %v2994, %v2986
    %v4923 = vpack.c.b16 %v3003, %v2995
    %v4924 = vpack.c.b16 %v3004, %v2996
    %v4925 = vpack.c.b16 %v3005, %v2997
    %v4926 = vpack.c.b16 %v3006, %v2998
    %v4927 = vpack.c.b16 %v3007, %v2999
    %v4928 = vpack.c.b16 %v3008, %v3000
    %v4929 = vpack.c.b16 %v3009, %v3001
    %v4930 = vpack.c.b16 %v3010, %v3002
    %v4931 = vpack.c.b16 %v3019, %v3011
    %v4932 = vpack.c.b16 %v3020, %v3012
    %v4933 = vpack.c.b16 %v3021, %v3013
    %v4934 = vpack.c.b16 %v3022, %v3014
    %v4935 = vpack.c.b16 %v3023, %v3015
    %v4936 = vpack.c.b16 %v3024, %v3016
    %v4937 = vpack.c.b16 %v3025, %v3017
    %v4938 = vpack.c.b16 %v3026, %v3018
    %v4939 = vpack.c.b16 %v3035, %v3027
    %v4940 = vpack.c.b16 %v3036, %v3028
    %v4941 = vpack.c.b16 %v3037, %v3029
    %v4942 = vpack.c.b16 %v3038, %v3030
    %v4943 = vpack.c.b16 %v3039, %v3031
    %v4944 = vpack.c.b16 %v3040, %v3032
    %v4945 = vpack.c.b16 %v3041, %v3033
    %v4946 = vpack.c.b16 %v3042, %v3034
    %v4947 = vpack.c.b16 %v3051, %v3043
    %v4948 = vpack.c.b16 %v3052, %v3044
    %v4949 = vpack.c.b16 %v3053, %v3045
    %v4950 = vpack.c.b16 %v3054, %v3046
    %v4951 = vpack.c.b16 %v3055, %v3047
    %v4952 = vpack.c.b16 %v3056, %v3048
    %v4953 = vpack.c.b16 %v3057, %v3049
    %v4954 = vpack.c.b16 %v3058, %v3050
    %v4955 = vpack.c.b16 %v3067, %v3059
    %v4956 = vpack.c.b16 %v3068, %v3060
    %v4957 = vpack.c.b16 %v3069, %v3061
    %v4958 = vpack.c.b16 %v3070, %v3062
    %v4959 = vpack.c.b16 %v3071, %v3063
    %v4960 = vpack.c.b16 %v3072, %v3064
    %v4961 = vpack.c.b16 %v3073, %v3065
    %v4962 = vpack.c.b16 %v3074, %v3066
    %v4963 = vpack.c.b16 %v3083, %v3075
    %v4964 = vpack.c.b16 %v3084, %v3076
    %v4965 = vpack.c.b16 %v3085, %v3077
    %v4966 = vpack.c.b16 %v3086, %v3078
    %v4967 = vpack.c.b16 %v3087, %v3079
    %v4968 = vpack.c.b16 %v3088, %v3080
    %v4969 = vpack.c.b16 %v3089, %v3081
    %v4970 = vpack.c.b16 %v3090, %v3082
    %v4971 = vpack.c.b16 %v3099, %v3091
    %v4972 = vpack.c.b16 %v3100, %v3092
    %v4973 = vpack.c.b16 %v3101, %v3093
    %v4974 = vpack.c.b16 %v3102, %v3094
    %v4975 = vpack.c.b16 %v3103, %v3095
    %v4976 = vpack.c.b16 %v3104, %v3096
    %v4977 = vpack.c.b16 %v3105, %v3097
    %v4978 = vpack.c.b16 %v3106, %v3098
    %v4979 = vpack.c.b16 %v3115, %v3107
    %v4980 = vpack.c.b16 %v3116, %v3108
    %v4981 = vpack.c.b16 %v3117, %v3109
    %v4982 = vpack.c.b16 %v3118, %v3110
    %v4983 = vpack.c.b16 %v3119, %v3111
    %v4984 = vpack.c.b16 %v3120, %v3112
    %v4985 = vpack.c.b16 %v3121, %v3113
    %v4986 = vpack.c.b16 %v3122, %v3114
    %v4987 = vpack.c.b16 %v3131, %v3123
    %v4988 = vpack.c.b16 %v3132, %v3124
    %v4989 = vpack.c.b16 %v3133, %v3125
    %v4990 = vpack.c.b16 %v3134, %v3126
    %v4991 = vpack.c.b16 %v3135, %v3127
    %v4992 = vpack.c.b16 %v3136, %v3128
    %v4993 = vpack.c.b16 %v3137, %v3129
    %v4994 = vpack.c.b16 %v3138, %v3130
    %v4995 = vpack.c.b16 %v3147, %v3139
    %v4996 = vpack.c.b16 %v3148, %v3140
    %v4997 = vpack.c.b16 %v3149, %v3141
    %v4998 = vpack.c.b16 %v3150, %v3142
    %v4999 = vpack.c.b16 %v3151, %v3143
    %v5000 = vpack.c.b16 %v3152, %v3144
    %v5001 = vpack.c.b16 %v3153, %v3145
    %v5002 = vpack.c.b16 %v3154, %v3146
    %v5003 = vpack.c.b16 %v3163, %v3155
    %v5004 = vpack.c.b16 %v3164, %v3156
    %v5005 = vpack.c.b16 %v3165, %v3157
    %v5006 = vpack.c.b16 %v3166, %v3158
    %v5007 = vpack.c.b16 %v3167, %v3159
    %v5008 = vpack.c.b16 %v3168, %v3160
    %v5009 = vpack.c.b16 %v3169, %v3161
    %v5010 = vpack.c.b16 %v3170, %v3162
    %v5011 = vpack.c.b16 %v3179, %v3171
    %v5012 = vpack.c.b16 %v3180, %v3172
    %v5013 = vpack.c.b16 %v3181, %v3173
    %v5014 = vpack.c.b16 %v3182, %v3174
    %v5015 = vpack.c.b16 %v3183, %v3175
    %v5016 = vpack.c.b16 %v3184, %v3176
    %v5017 = vpack.c.b16 %v3185, %v3177
    %v5018 = vpack.c.b16 %v3186, %v3178
    %v5019 = vpack.c.b16 %v3195, %v3187
    %v5020 = vpack.c.b16 %v3196, %v3188
    %v5021 = vpack.c.b16 %v3197, %v3189
    %v5022 = vpack.c.b16 %v3198, %v3190
    %v5023 = vpack.c.b16 %v3199, %v3191
    %v5024 = vpack.c.b16 %v3200, %v3192
    %v5025 = vpack.c.b16 %v3201, %v3193
    %v5026 = vpack.c.b16 %v3202, %v3194
    %v5027 = vpack.c.b16 %v3211, %v3203
    %v5028 = vpack.c.b16 %v3212, %v3204
    %v5029 = vpack.c.b16 %v3213, %v3205
    %v5030 = vpack.c.b16 %v3214, %v3206
    %v5031 = vpack.c.b16 %v3215, %v3207
    %v5032 = vpack.c.b16 %v3216, %v3208
    %v5033 = vpack.c.b16 %v3217, %v3209
    %v5034 = vpack.c.b16 %v3218, %v3210
    %v5035 = vpack.c.b16 %v3227, %v3219
    %v5036 = vpack.c.b16 %v3228, %v3220
    %v5037 = vpack.c.b16 %v3229, %v3221
    %v5038 = vpack.c.b16 %v3230, %v3222
    %v5039 = vpack.c.b16 %v3231, %v3223
    %v5040 = vpack.c.b16 %v3232, %v3224
    %v5041 = vpack.c.b16 %v3233, %v3225
    %v5042 = vpack.c.b16 %v3234, %v3226
    %v5043 = vpack.c.b16 %v3243, %v3235
    %v5044 = vpack.c.b16 %v3244, %v3236
    %v5045 = vpack.c.b16 %v3245, %v3237
    %v5046 = vpack.c.b16 %v3246, %v3238
    %v5047 = vpack.c.b16 %v3247, %v3239
    %v5048 = vpack.c.b16 %v3248, %v3240
    %v5049 = vpack.c.b16 %v3249, %v3241
    %v5050 = vpack.c.b16 %v3250, %v3242
    %v5051 = vpack.c.b16 %v3259, %v3251
    %v5052 = vpack.c.b16 %v3260, %v3252
    %v5053 = vpack.c.b16 %v3261, %v3253
    %v5054 = vpack.c.b16 %v3262, %v3254
    %v5055 = vpack.c.b16 %v3263, %v3255
    %v5056 = vpack.c.b16 %v3264, %v3256
    %v5057 = vpack.c.b16 %v3265, %v3257
    %v5058 = vpack.c.b16 %v3266, %v3258
    %v5059 = vpack.c.b16 %v3275, %v3267
    %v5060 = vpack.c.b16 %v3276, %v3268
    %v5061 = vpack.c.b16 %v3277, %v3269
    %v5062 = vpack.c.b16 %v3278, %v3270
    %v5063 = vpack.c.b16 %v3279, %v3271
    %v5064 = vpack.c.b16 %v3280, %v3272
    %v5065 = vpack.c.b16 %v3281, %v3273
    %v5066 = vpack.c.b16 %v3282, %v3274
    %v5067 = vpack.c.b16 %v3291, %v3283
    %v5068 = vpack.c.b16 %v3292, %v3284
    %v5069 = vpack.c.b16 %v3293, %v3285
    %v5070 = vpack.c.b16 %v3294, %v3286
    %v5071 = vpack.c.b16 %v3295, %v3287
    %v5072 = vpack.c.b16 %v3296, %v3288
    %v5073 = vpack.c.b16 %v3297, %v3289
    %v5074 = vpack.c.b16 %v3298, %v3290
    %v5075 = vpack.c.b16 %v3307, %v3299
    %v5076 = vpack.c.b16 %v3308, %v3300
    %v5077 = vpack.c.b16 %v3309, %v3301
    %v5078 = vpack.c.b16 %v3310, %v3302
    %v5079 = vpack.c.b16 %v3311, %v3303
    %v5080 = vpack.c.b16 %v3312, %v3304
    %v5081 = vpack.c.b16 %v3313, %v3305
    %v5082 = vpack.c.b16 %v3314, %v3306
    %v5083 = vpack.c.b16 %v3323, %v3315
    %v5084 = vpack.c.b16 %v3324, %v3316
    %v5085 = vpack.c.b16 %v3325, %v3317
    %v5086 = vpack.c.b16 %v3326, %v3318
    %v5087 = vpack.c.b16 %v3327, %v3319
    %v5088 = vpack.c.b16 %v3328, %v3320
    %v5089 = vpack.c.b16 %v3329, %v3321
    %v5090 = vpack.c.b16 %v3330, %v3322
    %v5091 = vpack.c.b16 %v3339, %v3331
    %v5092 = vpack.c.b16 %v3340, %v3332
    %v5093 = vpack.c.b16 %v3341, %v3333
    %v5094 = vpack.c.b16 %v3342, %v3334
    %v5095 = vpack.c.b16 %v3343, %v3335
    %v5096 = vpack.c.b16 %v3344, %v3336
    %v5097 = vpack.c.b16 %v3345, %v3337
    %v5098 = vpack.c.b16 %v3346, %v3338
    %v5099 = vpack.c.b16 %v3355, %v3347
    %v5100 = vpack.c.b16 %v3356, %v3348
    %v5101 = vpack.c.b16 %v3357, %v3349
    %v5102 = vpack.c.b16 %v3358, %v3350
    %v5103 = vpack.c.b16 %v3359, %v3351
    %v5104 = vpack.c.b16 %v3360, %v3352
    %v5105 = vpack.c.b16 %v3361, %v3353
    %v5106 = vpack.c.b16 %v3362, %v3354
    %v5107 = vpack.c.b16 %v3371, %v3363
    %v5108 = vpack.c.b16 %v3372, %v3364
    %v5109 = vpack.c.b16 %v3373, %v3365
    %v5110 = vpack.c.b16 %v3374, %v3366
    %v5111 = vpack.c.b16 %v3375, %v3367
    %v5112 = vpack.c.b16 %v3376, %v3368
    %v5113 = vpack.c.b16 %v3377, %v3369
    %v5114 = vpack.c.b16 %v3378, %v3370
    %v5115 = vpack.c.b16 %v3387, %v3379
    %v5116 = vpack.c.b16 %v3388, %v3380
    %v5117 = vpack.c.b16 %v3389, %v3381
    %v5118 = vpack.c.b16 %v3390, %v3382
    %v5119 = vpack.c.b16 %v3391, %v3383
    %v5120 = vpack.c.b16 %v3392, %v3384
    %v5121 = vpack.c.b16 %v3393, %v3385
    %v5122 = vpack.c.b16 %v3394, %v3386
    %v5123 = vpack.c.b16 %v3403, %v3395
    %v5124 = vpack.c.b16 %v3404, %v3396
    %v5125 = vpack.c.b16 %v3405, %v3397
    %v5126 = vpack.c.b16 %v3406, %v3398
    %v5127 = vpack.c.b16 %v3407, %v3399
    %v5128 = vpack.c.b16 %v3408, %v3400
    %v5129 = vpack.c.b16 %v3409, %v3401
    %v5130 = vpack.c.b16 %v3410, %v3402
    %v5131 = vpack.c.b16 %v3419, %v3411
    %v5132 = vpack.c.b16 %v3420, %v3412
    %v5133 = vpack.c.b16 %v3421, %v3413
    %v5134 = vpack.c.b16 %v3422, %v3414
    %v5135 = vpack.c.b16 %v3423, %v3415
    %v5136 = vpack.c.b16 %v3424, %v3416
    %v5137 = vpack.c.b16 %v3425, %v3417
    %v5138 = vpack.c.b16 %v3426, %v3418
    %v5139 = vpack.c.b16 %v3435, %v3427
    %v5140 = vpack.c.b16 %v3436, %v3428
    %v5141 = vpack.c.b16 %v3437, %v3429
    %v5142 = vpack.c.b16 %v3438, %v3430
    %v5143 = vpack.c.b16 %v3439, %v3431
    %v5144 = vpack.c.b16 %v3440, %v3432
    %v5145 = vpack.c.b16 %v3441, %v3433
    %v5146 = vpack.c.b16 %v3442, %v3434
    %v5147 = vpack.c.b16 %v3451, %v3443
    %v5148 = vpack.c.b16 %v3452, %v3444
    %v5149 = vpack.c.b16 %v3453, %v3445
    %v5150 = vpack.c.b16 %v3454, %v3446
    %v5151 = vpack.c.b16 %v3455, %v3447
    %v5152 = vpack.c.b16 %v3456, %v3448
    %v5153 = vpack.c.b16 %v3457, %v3449
    %v5154 = vpack.c.b16 %v3458, %v3450
    %v5155 = vpack.c.b16 %v3467, %v3459
    %v5156 = vpack.c.b16 %v3468, %v3460
    %v5157 = vpack.c.b16 %v3469, %v3461
    %v5158 = vpack.c.b16 %v3470, %v3462
    %v5159 = vpack.c.b16 %v3471, %v3463
    %v5160 = vpack.c.b16 %v3472, %v3464
    %v5161 = vpack.c.b16 %v3473, %v3465
    %v5162 = vpack.c.b16 %v3474, %v3466
    %v5163 = vpack.c.b16 %v3483, %v3475
    %v5164 = vpack.c.b16 %v3484, %v3476
    %v5165 = vpack.c.b16 %v3485, %v3477
    %v5166 = vpack.c.b16 %v3486, %v3478
    %v5167 = vpack.c.b16 %v3487, %v3479
    %v5168 = vpack.c.b16 %v3488, %v3480
    %v5169 = vpack.c.b16 %v3489, %v3481
    %v5170 = vpack.c.b16 %v3490, %v3482
    %v5171 = vpack.c.b16 %v3499, %v3491
    %v5172 = vpack.c.b16 %v3500, %v3492
    %v5173 = vpack.c.b16 %v3501, %v3493
    %v5174 = vpack.c.b16 %v3502, %v3494
    %v5175 = vpack.c.b16 %v3503, %v3495
    %v5176 = vpack.c.b16 %v3504, %v3496
    %v5177 = vpack.c.b16 %v3505, %v3497
    %v5178 = vpack.c.b16 %v3506, %v3498
    %v5179 = vpack.c.b16 %v3515, %v3507
    %v5180 = vpack.c.b16 %v3516, %v3508
    %v5181 = vpack.c.b16 %v3517, %v3509
    %v5182 = vpack.c.b16 %v3518, %v3510
    %v5183 = vpack.c.b16 %v3519, %v3511
    %v5184 = vpack.c.b16 %v3520, %v3512
    %v5185 = vpack.c.b16 %v3521, %v3513
    %v5186 = vpack.c.b16 %v3522, %v3514
    %v5187 = vpack.c.b16 %v3531, %v3523
    %v5188 = vpack.c.b16 %v3532, %v3524
    %v5189 = vpack.c.b16 %v3533, %v3525
    %v5190 = vpack.c.b16 %v3534, %v3526
    %v5191 = vpack.c.b16 %v3535, %v3527
    %v5192 = vpack.c.b16 %v3536, %v3528
    %v5193 = vpack.c.b16 %v3537, %v3529
    %v5194 = vpack.c.b16 %v3538, %v3530
    %v5195 = vpack.c.b16 %v3547, %v3539
    %v5196 = vpack.c.b16 %v3548, %v3540
    %v5197 = vpack.c.b16 %v3549, %v3541
    %v5198 = vpack.c.b16 %v3550, %v3542
    %v5199 = vpack.c.b16 %v3551, %v3543
    %v5200 = vpack.c.b16 %v3552, %v3544
    %v5201 = vpack.c.b16 %v3553, %v3545
    %v5202 = vpack.c.b16 %v3554, %v3546
    %v5203 = vpack.c.b16 %v3563, %v3555
    %v5204 = vpack.c.b16 %v3564, %v3556
    %v5205 = vpack.c.b16 %v3565, %v3557
    %v5206 = vpack.c.b16 %v3566, %v3558
    %v5207 = vpack.c.b16 %v3567, %v3559
    %v5208 = vpack.c.b16 %v3568, %v3560
    %v5209 = vpack.c.b16 %v3569, %v3561
    %v5210 = vpack.c.b16 %v3570, %v3562
    %v5211 = vpack.c.b16 %v3579, %v3571
    %v5212 = vpack.c.b16 %v3580, %v3572
    %v5213 = vpack.c.b16 %v3581, %v3573
    %v5214 = vpack.c.b16 %v3582, %v3574
    %v5215 = vpack.c.b16 %v3583, %v3575
    %v5216 = vpack.c.b16 %v3584, %v3576
    %v5217 = vpack.c.b16 %v3585, %v3577
    %v5218 = vpack.c.b16 %v3586, %v3578
    %v5219 = vpack.c.b16 %v3595, %v3587
    %v5220 = vpack.c.b16 %v3596, %v3588
    %v5221 = vpack.c.b16 %v3597, %v3589
    %v5222 = vpack.c.b16 %v3598, %v3590
    %v5223 = vpack.c.b16 %v3599, %v3591
    %v5224 = vpack.c.b16 %v3600, %v3592
    %v5225 = vpack.c.b16 %v3601, %v3593
    %v5226 = vpack.c.b16 %v3602, %v3594
    %v5227 = vpack.c.b16 %v3611, %v3603
    %v5228 = vpack.c.b16 %v3612, %v3604
    %v5229 = vpack.c.b16 %v3613, %v3605
    %v5230 = vpack.c.b16 %v3614, %v3606
    %v5231 = vpack.c.b16 %v3615, %v3607
    %v5232 = vpack.c.b16 %v3616, %v3608
    %v5233 = vpack.c.b16 %v3617, %v3609
    %v5234 = vpack.c.b16 %v3618, %v3610
    %v5235 = vpack.c.b16 %v3627, %v3619
    %v5236 = vpack.c.b16 %v3628, %v3620
    %v5237 = vpack.c.b16 %v3629, %v3621
    %v5238 = vpack.c.b16 %v3630, %v3622
    %v5239 = vpack.c.b16 %v3631, %v3623
    %v5240 = vpack.c.b16 %v3632, %v3624
    %v5241 = vpack.c.b16 %v3633, %v3625
    %v5242 = vpack.c.b16 %v3634, %v3626
    %v5243 = vpack.c.b16 %v3643, %v3635
    %v5244 = vpack.c.b16 %v3644, %v3636
    %v5245 = vpack.c.b16 %v3645, %v3637
    %v5246 = vpack.c.b16 %v3646, %v3638
    %v5247 = vpack.c.b16 %v3647, %v3639
    %v5248 = vpack.c.b16 %v3648, %v3640
    %v5249 = vpack.c.b16 %v3649, %v3641
    %v5250 = vpack.c.b16 %v3650, %v3642
    %v5251 = vpack.c.b16 %v3659, %v3651
    %v5252 = vpack.c.b16 %v3660, %v3652
    %v5253 = vpack.c.b16 %v3661, %v3653
    %v5254 = vpack.c.b16 %v3662, %v3654
    %v5255 = vpack.c.b16 %v3663, %v3655
    %v5256 = vpack.c.b16 %v3664, %v3656
    %v5257 = vpack.c.b16 %v3665, %v3657
    %v5258 = vpack.c.b16 %v3666, %v3658
    %v5259 = vpack.c.b16 %v3675, %v3667
    %v5260 = vpack.c.b16 %v3676, %v3668
    %v5261 = vpack.c.b16 %v3677, %v3669
    %v5262 = vpack.c.b16 %v3678, %v3670
    %v5263 = vpack.c.b16 %v3679, %v3671
    %v5264 = vpack.c.b16 %v3680, %v3672
    %v5265 = vpack.c.b16 %v3681, %v3673
    %v5266 = vpack.c.b16 %v3682, %v3674
    %v5267 = vpack.c.b16 %v3691, %v3683
    %v5268 = vpack.c.b16 %v3692, %v3684
    %v5269 = vpack.c.b16 %v3693, %v3685
    %v5270 = vpack.c.b16 %v3694, %v3686
    %v5271 = vpack.c.b16 %v3695, %v3687
    %v5272 = vpack.c.b16 %v3696, %v3688
    %v5273 = vpack.c.b16 %v3697, %v3689
    %v5274 = vpack.c.b16 %v3698, %v3690
    %v5275 = vpack.c.b16 %v3707, %v3699
    %v5276 = vpack.c.b16 %v3708, %v3700
    %v5277 = vpack.c.b16 %v3709, %v3701
    %v5278 = vpack.c.b16 %v3710, %v3702
    %v5279 = vpack.c.b16 %v3711, %v3703
    %v5280 = vpack.c.b16 %v3712, %v3704
    %v5281 = vpack.c.b16 %v3713, %v3705
    %v5282 = vpack.c.b16 %v3714, %v3706
    %v5283 = vpack.c.b16 %v3723, %v3715
    %v5284 = vpack.c.b16 %v3724, %v3716
    %v5285 = vpack.c.b16 %v3725, %v3717
    %v5286 = vpack.c.b16 %v3726, %v3718
    %v5287 = vpack.c.b16 %v3727, %v3719
    %v5288 = vpack.c.b16 %v3728, %v3720
    %v5289 = vpack.c.b16 %v3729, %v3721
    %v5290 = vpack.c.b16 %v3730, %v3722
    %v5291 = vpack.c.b16 %v3739, %v3731
    %v5292 = vpack.c.b16 %v3740, %v3732
    %v5293 = vpack.c.b16 %v3741, %v3733
    %v5294 = vpack.c.b16 %v3742, %v3734
    %v5295 = vpack.c.b16 %v3743, %v3735
    %v5296 = vpack.c.b16 %v3744, %v3736
    %v5297 = vpack.c.b16 %v3745, %v3737
    %v5298 = vpack.c.b16 %v3746, %v3738
    %v5299 = vpack.c.b16 %v3755, %v3747
    %v5300 = vpack.c.b16 %v3756, %v3748
    %v5301 = vpack.c.b16 %v3757, %v3749
    %v5302 = vpack.c.b16 %v3758, %v3750
    %v5303 = vpack.c.b16 %v3759, %v3751
    %v5304 = vpack.c.b16 %v3760, %v3752
    %v5305 = vpack.c.b16 %v3761, %v3753
    %v5306 = vpack.c.b16 %v3762, %v3754
    %v5307 = vpack.c.b16 %v3771, %v3763
    %v5308 = vpack.c.b16 %v3772, %v3764
    %v5309 = vpack.c.b16 %v3773, %v3765
    %v5310 = vpack.c.b16 %v3774, %v3766
    %v5311 = vpack.c.b16 %v3775, %v3767
    %v5312 = vpack.c.b16 %v3776, %v3768
    %v5313 = vpack.c.b16 %v3777, %v3769
    %v5314 = vpack.c.b16 %v3778, %v3770
    %v5315 = vpack.c.b16 %v3787, %v3779
    %v5316 = vpack.c.b16 %v3788, %v3780
    %v5317 = vpack.c.b16 %v3789, %v3781
    %v5318 = vpack.c.b16 %v3790, %v3782
    %v5319 = vpack.c.b16 %v3791, %v3783
    %v5320 = vpack.c.b16 %v3792, %v3784
    %v5321 = vpack.c.b16 %v3793, %v3785
    %v5322 = vpack.c.b16 %v3794, %v3786
    %v5323 = vpack.c.b16 %v3803, %v3795
    %v5324 = vpack.c.b16 %v3804, %v3796
    %v5325 = vpack.c.b16 %v3805, %v3797
    %v5326 = vpack.c.b16 %v3806, %v3798
    %v5327 = vpack.c.b16 %v3807, %v3799
    %v5328 = vpack.c.b16 %v3808, %v3800
    %v5329 = vpack.c.b16 %v3809, %v3801
    %v5330 = vpack.c.b16 %v3810, %v3802
    %v5331 = vpack.c.b16 %v3819, %v3811
    %v5332 = vpack.c.b16 %v3820, %v3812
    %v5333 = vpack.c.b16 %v3821, %v3813
    %v5334 = vpack.c.b16 %v3822, %v3814
    %v5335 = vpack.c.b16 %v3823, %v3815
    %v5336 = vpack.c.b16 %v3824, %v3816
    %v5337 = vpack.c.b16 %v3825, %v3817
    %v5338 = vpack.c.b16 %v3826, %v3818
    %v5339 = vpack.c.b16 %v3835, %v3827
    %v5340 = vpack.c.b16 %v3836, %v3828
    %v5341 = vpack.c.b16 %v3837, %v3829
    %v5342 = vpack.c.b16 %v3838, %v3830
    %v5343 = vpack.c.b16 %v3839, %v3831
    %v5344 = vpack.c.b16 %v3840, %v3832
    %v5345 = vpack.c.b16 %v3841, %v3833
    %v5346 = vpack.c.b16 %v3842, %v3834
    %v5347 = vpack.c.b16 %v3851, %v3843
    %v5348 = vpack.c.b16 %v3852, %v3844
    %v5349 = vpack.c.b16 %v3853, %v3845
    %v5350 = vpack.c.b16 %v3854, %v3846
    %v5351 = vpack.c.b16 %v3855, %v3847
    %v5352 = vpack.c.b16 %v3856, %v3848
    %v5353 = vpack.c.b16 %v3857, %v3849
    %v5354 = vpack.c.b16 %v3858, %v3850
    %v5355 = vpack.c.b16 %v3867, %v3859
    %v5356 = vpack.c.b16 %v3868, %v3860
    %v5357 = vpack.c.b16 %v3869, %v3861
    %v5358 = vpack.c.b16 %v3870, %v3862
    %v5359 = vpack.c.b16 %v3871, %v3863
    %v5360 = vpack.c.b16 %v3872, %v3864
    %v5361 = vpack.c.b16 %v3873, %v3865
    %v5362 = vpack.c.b16 %v3874, %v3866
    %v5363 = vpack.c.b16 %v3883, %v3875
    %v5364 = vpack.c.b16 %v3884, %v3876
    %v5365 = vpack.c.b16 %v3885, %v3877
    %v5366 = vpack.c.b16 %v3886, %v3878
    %v5367 = vpack.c.b16 %v3887, %v3879
    %v5368 = vpack.c.b16 %v3888, %v3880
    %v5369 = vpack.c.b16 %v3889, %v3881
    %v5370 = vpack.c.b16 %v3890, %v3882
    %v5371 = vpack.c.b16 %v3899, %v3891
    %v5372 = vpack.c.b16 %v3900, %v3892
    %v5373 = vpack.c.b16 %v3901, %v3893
    %v5374 = vpack.c.b16 %v3902, %v3894
    %v5375 = vpack.c.b16 %v3903, %v3895
    %v5376 = vpack.c.b16 %v3904, %v3896
    %v5377 = vpack.c.b16 %v3905, %v3897
    %v5378 = vpack.c.b16 %v3906, %v3898
    %v5379 = vpack.c.b16 %v3915, %v3907
    %v5380 = vpack.c.b16 %v3916, %v3908
    %v5381 = vpack.c.b16 %v3917, %v3909
    %v5382 = vpack.c.b16 %v3918, %v3910
    %v5383 = vpack.c.b16 %v3919, %v3911
    %v5384 = vpack.c.b16 %v3920, %v3912
    %v5385 = vpack.c.b16 %v3921, %v3913
    %v5386 = vpack.c.b16 %v3922, %v3914
    %v5387 = vpack.c.b16 %v3931, %v3923
    %v5388 = vpack.c.b16 %v3932, %v3924
    %v5389 = vpack.c.b16 %v3933, %v3925
    %v5390 = vpack.c.b16 %v3934, %v3926
    %v5391 = vpack.c.b16 %v3935, %v3927
    %v5392 = vpack.c.b16 %v3936, %v3928
    %v5393 = vpack.c.b16 %v3937, %v3929
    %v5394 = vpack.c.b16 %v3938, %v3930
    %v5395 = vpack.c.b16 %v3947, %v3939
    %v5396 = vpack.c.b16 %v3948, %v3940
    %v5397 = vpack.c.b16 %v3949, %v3941
    %v5398 = vpack.c.b16 %v3950, %v3942
    %v5399 = vpack.c.b16 %v3951, %v3943
    %v5400 = vpack.c.b16 %v3952, %v3944
    %v5401 = vpack.c.b16 %v3953, %v3945
    %v5402 = vpack.c.b16 %v3954, %v3946
    %v5403 = vpack.c.b16 %v3963, %v3955
    %v5404 = vpack.c.b16 %v3964, %v3956
    %v5405 = vpack.c.b16 %v3965, %v3957
    %v5406 = vpack.c.b16 %v3966, %v3958
    %v5407 = vpack.c.b16 %v3967, %v3959
    %v5408 = vpack.c.b16 %v3968, %v3960
    %v5409 = vpack.c.b16 %v3969, %v3961
    %v5410 = vpack.c.b16 %v3970, %v3962
    %v5411 = vpack.c.b16 %v3979, %v3971
    %v5412 = vpack.c.b16 %v3980, %v3972
    %v5413 = vpack.c.b16 %v3981, %v3973
    %v5414 = vpack.c.b16 %v3982, %v3974
    %v5415 = vpack.c.b16 %v3983, %v3975
    %v5416 = vpack.c.b16 %v3984, %v3976
    %v5417 = vpack.c.b16 %v3985, %v3977
    %v5418 = vpack.c.b16 %v3986, %v3978
    %v5419 = vpack.c.b16 %v3995, %v3987
    %v5420 = vpack.c.b16 %v3996, %v3988
    %v5421 = vpack.c.b16 %v3997, %v3989
    %v5422 = vpack.c.b16 %v3998, %v3990
    %v5423 = vpack.c.b16 %v3999, %v3991
    %v5424 = vpack.c.b16 %v4000, %v3992
    %v5425 = vpack.c.b16 %v4001, %v3993
    %v5426 = vpack.c.b16 %v4002, %v3994
    %v5427 = vpack.c.b16 %v4011, %v4003
    %v5428 = vpack.c.b16 %v4012, %v4004
    %v5429 = vpack.c.b16 %v4013, %v4005
    %v5430 = vpack.c.b16 %v4014, %v4006
    %v5431 = vpack.c.b16 %v4015, %v4007
    %v5432 = vpack.c.b16 %v4016, %v4008
    %v5433 = vpack.c.b16 %v4017, %v4009
    %v5434 = vpack.c.b16 %v4018, %v4010
    %v5435 = vpack.c.b16 %v4027, %v4019
    %v5436 = vpack.c.b16 %v4028, %v4020
    %v5437 = vpack.c.b16 %v4029, %v4021
    %v5438 = vpack.c.b16 %v4030, %v4022
    %v5439 = vpack.c.b16 %v4031, %v4023
    %v5440 = vpack.c.b16 %v4032, %v4024
    %v5441 = vpack.c.b16 %v4033, %v4025
    %v5442 = vpack.c.b16 %v4034, %v4026
    %v5443 = vpack.c.b16 %v4043, %v4035
    %v5444 = vpack.c.b16 %v4044, %v4036
    %v5445 = vpack.c.b16 %v4045, %v4037
    %v5446 = vpack.c.b16 %v4046, %v4038
    %v5447 = vpack.c.b16 %v4047, %v4039
    %v5448 = vpack.c.b16 %v4048, %v4040
    %v5449 = vpack.c.b16 %v4049, %v4041
    %v5450 = vpack.c.b16 %v4050, %v4042
    %v5451 = vpack.c.b16 %v4059, %v4051
    %v5452 = vpack.c.b16 %v4060, %v4052
    %v5453 = vpack.c.b16 %v4061, %v4053
    %v5454 = vpack.c.b16 %v4062, %v4054
    %v5455 = vpack.c.b16 %v4063, %v4055
    %v5456 = vpack.c.b16 %v4064, %v4056
    %v5457 = vpack.c.b16 %v4065, %v4057
    %v5458 = vpack.c.b16 %v4066, %v4058
    %v5459 = vpack.c.b16 %v4075, %v4067
    %v5460 = vpack.c.b16 %v4076, %v4068
    %v5461 = vpack.c.b16 %v4077, %v4069
    %v5462 = vpack.c.b16 %v4078, %v4070
    %v5463 = vpack.c.b16 %v4079, %v4071
    %v5464 = vpack.c.b16 %v4080, %v4072
    %v5465 = vpack.c.b16 %v4081, %v4073
    %v5466 = vpack.c.b16 %v4082, %v4074
    %v5467 = vpack.c.b16 %v4091, %v4083
    %v5468 = vpack.c.b16 %v4092, %v4084
    %v5469 = vpack.c.b16 %v4093, %v4085
    %v5470 = vpack.c.b16 %v4094, %v4086
    %v5471 = vpack.c.b16 %v4095, %v4087
    %v5472 = vpack.c.b16 %v4096, %v4088
    %v5473 = vpack.c.b16 %v4097, %v4089
    %v5474 = vpack.c.b16 %v4098, %v4090
    %v5475 = vpack.c.b16 %v4107, %v4099
    %v5476 = vpack.c.b16 %v4108, %v4100
    %v5477 = vpack.c.b16 %v4109, %v4101
    %v5478 = vpack.c.b16 %v4110, %v4102
    %v5479 = vpack.c.b16 %v4111, %v4103
    %v5480 = vpack.c.b16 %v4112, %v4104
    %v5481 = vpack.c.b16 %v4113, %v4105
    %v5482 = vpack.c.b16 %v4114, %v4106
    %v5483 = vpack.c.b16 %v4123, %v4115
    %v5484 = vpack.c.b16 %v4124, %v4116
    %v5485 = vpack.c.b16 %v4125, %v4117
    %v5486 = vpack.c.b16 %v4126, %v4118
    %v5487 = vpack.c.b16 %v4127, %v4119
    %v5488 = vpack.c.b16 %v4128, %v4120
    %v5489 = vpack.c.b16 %v4129, %v4121
    %v5490 = vpack.c.b16 %v4130, %v4122
    %v5491 = vpack.c.b16 %v4139, %v4131
    %v5492 = vpack.c.b16 %v4140, %v4132
    %v5493 = vpack.c.b16 %v4141, %v4133
    %v5494 = vpack.c.b16 %v4142, %v4134
    %v5495 = vpack.c.b16 %v4143, %v4135
    %v5496 = vpack.c.b16 %v4144, %v4136
    %v5497 = vpack.c.b16 %v4145, %v4137
    %v5498 = vpack.c.b16 %v4146, %v4138
    %v5499 = vpack.c.b16 %v4155, %v4147
    %v5500 = vpack.c.b16 %v4156, %v4148
    %v5501 = vpack.c.b16 %v4157, %v4149
    %v5502 = vpack.c.b16 %v4158, %v4150
    %v5503 = vpack.c.b16 %v4159, %v4151
    %v5504 = vpack.c.b16 %v4160, %v4152
    %v5505 = vpack.c.b16 %v4161, %v4153
    %v5506 = vpack.c.b16 %v4162, %v4154
    %v5507 = vpack.c.b16 %v4171, %v4163
    %v5508 = vpack.c.b16 %v4172, %v4164
    %v5509 = vpack.c.b16 %v4173, %v4165
    %v5510 = vpack.c.b16 %v4174, %v4166
    %v5511 = vpack.c.b16 %v4175, %v4167
    %v5512 = vpack.c.b16 %v4176, %v4168
    %v5513 = vpack.c.b16 %v4177, %v4169
    %v5514 = vpack.c.b16 %v4178, %v4170
    %v5515 = vpack.c.b16 %v4187, %v4179
    %v5516 = vpack.c.b16 %v4188, %v4180
    %v5517 = vpack.c.b16 %v4189, %v4181
    %v5518 = vpack.c.b16 %v4190, %v4182
    %v5519 = vpack.c.b16 %v4191, %v4183
    %v5520 = vpack.c.b16 %v4192, %v4184
    %v5521 = vpack.c.b16 %v4193, %v4185
    %v5522 = vpack.c.b16 %v4194, %v4186
    %v5523 = vpack.c.b16 %v4203, %v4195
    %v5524 = vpack.c.b16 %v4204, %v4196
    %v5525 = vpack.c.b16 %v4205, %v4197
    %v5526 = vpack.c.b16 %v4206, %v4198
    %v5527 = vpack.c.b16 %v4207, %v4199
    %v5528 = vpack.c.b16 %v4208, %v4200
    %v5529 = vpack.c.b16 %v4209, %v4201
    %v5530 = vpack.c.b16 %v4210, %v4202
    %v5531 = vpack.c.b16 %v4219, %v4211
    %v5532 = vpack.c.b16 %v4220, %v4212
    %v5533 = vpack.c.b16 %v4221, %v4213
    %v5534 = vpack.c.b16 %v4222, %v4214
    %v5535 = vpack.c.b16 %v4223, %v4215
    %v5536 = vpack.c.b16 %v4224, %v4216
    %v5537 = vpack.c.b16 %v4225, %v4217
    %v5538 = vpack.c.b16 %v4226, %v4218
    %v5539 = vpack.c.b16 %v4235, %v4227
    %v5540 = vpack.c.b16 %v4236, %v4228
    %v5541 = vpack.c.b16 %v4237, %v4229
    %v5542 = vpack.c.b16 %v4238, %v4230
    %v5543 = vpack.c.b16 %v4239, %v4231
    %v5544 = vpack.c.b16 %v4240, %v4232
    %v5545 = vpack.c.b16 %v4241, %v4233
    %v5546 = vpack.c.b16 %v4242, %v4234
    %v5547 = vpack.c.b16 %v4251, %v4243
    %v5548 = vpack.c.b16 %v4252, %v4244
    %v5549 = vpack.c.b16 %v4253, %v4245
    %v5550 = vpack.c.b16 %v4254, %v4246
    %v5551 = vpack.c.b16 %v4255, %v4247
    %v5552 = vpack.c.b16 %v4256, %v4248
    %v5553 = vpack.c.b16 %v4257, %v4249
    %v5554 = vpack.c.b16 %v4258, %v4250
    %v5555 = vpack.c.b16 %v4267, %v4259
    %v5556 = vpack.c.b16 %v4268, %v4260
    %v5557 = vpack.c.b16 %v4269, %v4261
    %v5558 = vpack.c.b16 %v4270, %v4262
    %v5559 = vpack.c.b16 %v4271, %v4263
    %v5560 = vpack.c.b16 %v4272, %v4264
    %v5561 = vpack.c.b16 %v4273, %v4265
    %v5562 = vpack.c.b16 %v4274, %v4266
    %v5563 = vpack.c.b16 %v4283, %v4275
    %v5564 = vpack.c.b16 %v4284, %v4276
    %v5565 = vpack.c.b16 %v4285, %v4277
    %v5566 = vpack.c.b16 %v4286, %v4278
    %v5567 = vpack.c.b16 %v4287, %v4279
    %v5568 = vpack.c.b16 %v4288, %v4280
    %v5569 = vpack.c.b16 %v4289, %v4281
    %v5570 = vpack.c.b16 %v4290, %v4282
    %v5571 = vpack.c.b16 %v4299, %v4291
    %v5572 = vpack.c.b16 %v4300, %v4292
    %v5573 = vpack.c.b16 %v4301, %v4293
    %v5574 = vpack.c.b16 %v4302, %v4294
    %v5575 = vpack.c.b16 %v4303, %v4295
    %v5576 = vpack.c.b16 %v4304, %v4296
    %v5577 = vpack.c.b16 %v4305, %v4297
    %v5578 = vpack.c.b16 %v4306, %v4298
    %v5579 = vpack.c.b16 %v4315, %v4307
    %v5580 = vpack.c.b16 %v4316, %v4308
    %v5581 = vpack.c.b16 %v4317, %v4309
    %v5582 = vpack.c.b16 %v4318, %v4310
    %v5583 = vpack.c.b16 %v4319, %v4311
    %v5584 = vpack.c.b16 %v4320, %v4312
    %v5585 = vpack.c.b16 %v4321, %v4313
    %v5586 = vpack.c.b16 %v4322, %v4314
    %v5587 = vpack.c.b16 %v4331, %v4323
    %v5588 = vpack.c.b16 %v4332, %v4324
    %v5589 = vpack.c.b16 %v4333, %v4325
    %v5590 = vpack.c.b16 %v4334, %v4326
    %v5591 = vpack.c.b16 %v4335, %v4327
    %v5592 = vpack.c.b16 %v4336, %v4328
    %v5593 = vpack.c.b16 %v4337, %v4329
    %v5594 = vpack.c.b16 %v4338, %v4330
    %v5595 = vpack.c.b16 %v4347, %v4339
    %v5596 = vpack.c.b16 %v4348, %v4340
    %v5597 = vpack.c.b16 %v4349, %v4341
    %v5598 = vpack.c.b16 %v4350, %v4342
    %v5599 = vpack.c.b16 %v4351, %v4343
    %v5600 = vpack.c.b16 %v4352, %v4344
    %v5601 = vpack.c.b16 %v4353, %v4345
    %v5602 = vpack.c.b16 %v4354, %v4346
    %v5603 = vpack.c.b16 %v4363, %v4355
    %v5604 = vpack.c.b16 %v4364, %v4356
    %v5605 = vpack.c.b16 %v4365, %v4357
    %v5606 = vpack.c.b16 %v4366, %v4358
    %v5607 = vpack.c.b16 %v4367, %v4359
    %v5608 = vpack.c.b16 %v4368, %v4360
    %v5609 = vpack.c.b16 %v4369, %v4361
    %v5610 = vpack.c.b16 %v4370, %v4362
    %v5611 = vpack.c.b16 %v4379, %v4371
    %v5612 = vpack.c.b16 %v4380, %v4372
    %v5613 = vpack.c.b16 %v4381, %v4373
    %v5614 = vpack.c.b16 %v4382, %v4374
    %v5615 = vpack.c.b16 %v4383, %v4375
    %v5616 = vpack.c.b16 %v4384, %v4376
    %v5617 = vpack.c.b16 %v4385, %v4377
    %v5618 = vpack.c.b16 %v4386, %v4378
    %v5619 = vpack.c.b16 %v4395, %v4387
    %v5620 = vpack.c.b16 %v4396, %v4388
    %v5621 = vpack.c.b16 %v4397, %v4389
    %v5622 = vpack.c.b16 %v4398, %v4390
    %v5623 = vpack.c.b16 %v4399, %v4391
    %v5624 = vpack.c.b16 %v4400, %v4392
    %v5625 = vpack.c.b16 %v4401, %v4393
    %v5626 = vpack.c.b16 %v4402, %v4394
    %v5627 = vpack.c.b16 %v4411, %v4403
    %v5628 = vpack.c.b16 %v4412, %v4404
    %v5629 = vpack.c.b16 %v4413, %v4405
    %v5630 = vpack.c.b16 %v4414, %v4406
    %v5631 = vpack.c.b16 %v4415, %v4407
    %v5632 = vpack.c.b16 %v4416, %v4408
    %v5633 = vpack.c.b16 %v4417, %v4409
    %v5634 = vpack.c.b16 %v4418, %v4410
    %v5635 = vpack.c.b16 %v4427, %v4419
    %v5636 = vpack.c.b16 %v4428, %v4420
    %v5637 = vpack.c.b16 %v4429, %v4421
    %v5638 = vpack.c.b16 %v4430, %v4422
    %v5639 = vpack.c.b16 %v4431, %v4423
    %v5640 = vpack.c.b16 %v4432, %v4424
    %v5641 = vpack.c.b16 %v4433, %v4425
    %v5642 = vpack.c.b16 %v4434, %v4426
    %v5643 = vpack.c.b16 %v4443, %v4435
    %v5644 = vpack.c.b16 %v4444, %v4436
    %v5645 = vpack.c.b16 %v4445, %v4437
    %v5646 = vpack.c.b16 %v4446, %v4438
    %v5647 = vpack.c.b16 %v4447, %v4439
    %v5648 = vpack.c.b16 %v4448, %v4440
    %v5649 = vpack.c.b16 %v4449, %v4441
    %v5650 = vpack.c.b16 %v4450, %v4442
    %v5651 = vpack.c.b16 %v4459, %v4451
    %v5652 = vpack.c.b16 %v4460, %v4452
    %v5653 = vpack.c.b16 %v4461, %v4453
    %v5654 = vpack.c.b16 %v4462, %v4454
    %v5655 = vpack.c.b16 %v4463, %v4455
    %v5656 = vpack.c.b16 %v4464, %v4456
    %v5657 = vpack.c.b16 %v4465, %v4457
    %v5658 = vpack.c.b16 %v4466, %v4458
    %v5659 = vpack.c.b16 %v4475, %v4467
    %v5660 = vpack.c.b16 %v4476, %v4468
    %v5661 = vpack.c.b16 %v4477, %v4469
    %v5662 = vpack.c.b16 %v4478, %v4470
    %v5663 = vpack.c.b16 %v4479, %v4471
    %v5664 = vpack.c.b16 %v4480, %v4472
    %v5665 = vpack.c.b16 %v4481, %v4473
    %v5666 = vpack.c.b16 %v4482, %v4474
    %v5667 = vpack.c.b16 %v4491, %v4483
    %v5668 = vpack.c.b16 %v4492, %v4484
    %v5669 = vpack.c.b16 %v4493, %v4485
    %v5670 = vpack.c.b16 %v4494, %v4486
    %v5671 = vpack.c.b16 %v4495, %v4487
    %v5672 = vpack.c.b16 %v4496, %v4488
    %v5673 = vpack.c.b16 %v4497, %v4489
    %v5674 = vpack.c.b16 %v4498, %v4490
    %v5675 = vpack.c.b16 %v4507, %v4499
    %v5676 = vpack.c.b16 %v4508, %v4500
    %v5677 = vpack.c.b16 %v4509, %v4501
    %v5678 = vpack.c.b16 %v4510, %v4502
    %v5679 = vpack.c.b16 %v4511, %v4503
    %v5680 = vpack.c.b16 %v4512, %v4504
    %v5681 = vpack.c.b16 %v4513, %v4505
    %v5682 = vpack.c.b16 %v4514, %v4506
    %v5683 = vpack.c.b16 %v4523, %v4515
    %v5684 = vpack.c.b16 %v4524, %v4516
    %v5685 = vpack.c.b16 %v4525, %v4517
    %v5686 = vpack.c.b16 %v4526, %v4518
    %v5687 = vpack.c.b16 %v4527, %v4519
    %v5688 = vpack.c.b16 %v4528, %v4520
    %v5689 = vpack.c.b16 %v4529, %v4521
    %v5690 = vpack.c.b16 %v4530, %v4522
    %v5691 = vpack.c.b16 %v4539, %v4531
    %v5692 = vpack.c.b16 %v4540, %v4532
    %v5693 = vpack.c.b16 %v4541, %v4533
    %v5694 = vpack.c.b16 %v4542, %v4534
    %v5695 = vpack.c.b16 %v4543, %v4535
    %v5696 = vpack.c.b16 %v4544, %v4536
    %v5697 = vpack.c.b16 %v4545, %v4537
    %v5698 = vpack.c.b16 %v4546, %v4538
    %v5699 = vpack.c.b16 %v4555, %v4547
    %v5700 = vpack.c.b16 %v4556, %v4548
    %v5701 = vpack.c.b16 %v4557, %v4549
    %v5702 = vpack.c.b16 %v4558, %v4550
    %v5703 = vpack.c.b16 %v4559, %v4551
    %v5704 = vpack.c.b16 %v4560, %v4552
    %v5705 = vpack.c.b16 %v4561, %v4553
    %v5706 = vpack.c.b16 %v4562, %v4554
    %v5707 = vpack.c.b16 %v4571, %v4563
    %v5708 = vpack.c.b16 %v4572, %v4564
    %v5709 = vpack.c.b16 %v4573, %v4565
    %v5710 = vpack.c.b16 %v4574, %v4566
    %v5711 = vpack.c.b16 %v4575, %v4567
    %v5712 = vpack.c.b16 %v4576, %v4568
    %v5713 = vpack.c.b16 %v4577, %v4569
    %v5714 = vpack.c.b16 %v4578, %v4570
    %v5715 = vpack.c.b16 %v4587, %v4579
    %v5716 = vpack.c.b16 %v4588, %v4580
    %v5717 = vpack.c.b16 %v4589, %v4581
    %v5718 = vpack.c.b16 %v4590, %v4582
    %v5719 = vpack.c.b16 %v4591, %v4583
    %v5720 = vpack.c.b16 %v4592, %v4584
    %v5721 = vpack.c.b16 %v4593, %v4585
    %v5722 = vpack.c.b16 %v4594, %v4586
    %v5723 = vpack.c.b16 %v4603, %v4595
    %v5724 = vpack.c.b16 %v4604, %v4596
    %v5725 = vpack.c.b16 %v4605, %v4597
    %v5726 = vpack.c.b16 %v4606, %v4598
    %v5727 = vpack.c.b16 %v4607, %v4599
    %v5728 = vpack.c.b16 %v4608, %v4600
    %v5729 = vpack.c.b16 %v4609, %v4601
    %v5730 = vpack.c.b16 %v4610, %v4602
    %v5731 = vpack.c.b16 %v4619, %v4611
    %v5732 = vpack.c.b16 %v4620, %v4612
    %v5733 = vpack.c.b16 %v4621, %v4613
    %v5734 = vpack.c.b16 %v4622, %v4614
    %v5735 = vpack.c.b16 %v4623, %v4615
    %v5736 = vpack.c.b16 %v4624, %v4616
    %v5737 = vpack.c.b16 %v4625, %v4617
    %v5738 = vpack.c.b16 %v4626, %v4618
    %v5739 = vpack.c.b16 %v4635, %v4627
    %v5740 = vpack.c.b16 %v4636, %v4628
    %v5741 = vpack.c.b16 %v4637, %v4629
    %v5742 = vpack.c.b16 %v4638, %v4630
    %v5743 = vpack.c.b16 %v4639, %v4631
    %v5744 = vpack.c.b16 %v4640, %v4632
    %v5745 = vpack.c.b16 %v4641, %v4633
    %v5746 = vpack.c.b16 %v4642, %v4634
    %v5747 = vpack.c.b16 %v4651, %v4643
    %v5748 = vpack.c.b16 %v4652, %v4644
    %v5749 = vpack.c.b16 %v4653, %v4645
    %v5750 = vpack.c.b16 %v4654, %v4646
    %v5751 = vpack.c.b16 %v4655, %v4647
    %v5752 = vpack.c.b16 %v4656, %v4648
    %v5753 = vpack.c.b16 %v4657, %v4649
    %v5754 = vpack.c.b16 %v4658, %v4650
    %v5755 = vpack.c.b16 %v4667, %v4659
    %v5756 = vpack.c.b16 %v4668, %v4660
    %v5757 = vpack.c.b16 %v4669, %v4661
    %v5758 = vpack.c.b16 %v4670, %v4662
    %v5759 = vpack.c.b16 %v4671, %v4663
    %v5760 = vpack.c.b16 %v4672, %v4664
    %v5761 = vpack.c.b16 %v4673, %v4665
    %v5762 = vpack.c.b16 %v4674, %v4666
    %v5763 = vpack.c.b16 %v4683, %v4675
    %v5764 = vpack.c.b16 %v4684, %v4676
    %v5765 = vpack.c.b16 %v4685, %v4677
    %v5766 = vpack.c.b16 %v4686, %v4678
    %v5767 = vpack.c.b16 %v4687, %v4679
    %v5768 = vpack.c.b16 %v4688, %v4680
    %v5769 = vpack.c.b16 %v4689, %v4681
    %v5770 = vpack.c.b16 %v4690, %v4682
    %v5771 = vpack.c.b16 %v4699, %v4691
    %v5772 = vpack.c.b16 %v4700, %v4692
    %v5773 = vpack.c.b16 %v4701, %v4693
    %v5774 = vpack.c.b16 %v4702, %v4694
    %v5775 = vpack.c.b16 %v4703, %v4695
    %v5776 = vpack.c.b16 %v4704, %v4696
    %v5777 = vpack.c.b16 %v4705, %v4697
    %v5778 = vpack.c.b16 %v4706, %v4698
    %v5779 = vpack.c.b16 %v4715, %v4707
    %v5780 = vpack.c.b16 %v4716, %v4708
    %v5781 = vpack.c.b16 %v4717, %v4709
    %v5782 = vpack.c.b16 %v4718, %v4710
    %v5783 = vpack.c.b16 %v4719, %v4711
    %v5784 = vpack.c.b16 %v4720, %v4712
    %v5785 = vpack.c.b16 %v4721, %v4713
    %v5786 = vpack.c.b16 %v4722, %v4714
    %v5787 = vpack.c.b16 %v4731, %v4723
    %v5788 = vpack.c.b16 %v4732, %v4724
    %v5789 = vpack.c.b16 %v4733, %v4725
    %v5790 = vpack.c.b16 %v4734, %v4726
    %v5791 = vpack.c.b16 %v4735, %v4727
    %v5792 = vpack.c.b16 %v4736, %v4728
    %v5793 = vpack.c.b16 %v4737, %v4729
    %v5794 = vpack.c.b16 %v4738, %v4730
    %v5795 = vpack.c.b16 %v4747, %v4739
    %v5796 = vpack.c.b16 %v4748, %v4740
    %v5797 = vpack.c.b16 %v4749, %v4741
    %v5798 = vpack.c.b16 %v4750, %v4742
    %v5799 = vpack.c.b16 %v4751, %v4743
    %v5800 = vpack.c.b16 %v4752, %v4744
    %v5801 = vpack.c.b16 %v4753, %v4745
    %v5802 = vpack.c.b16 %v4754, %v4746
    %v5803 = vpack.c.b16 %v4763, %v4755
    %v5804 = vpack.c.b16 %v4764, %v4756
    %v5805 = vpack.c.b16 %v4765, %v4757
    %v5806 = vpack.c.b16 %v4766, %v4758
    %v5807 = vpack.c.b16 %v4767, %v4759
    %v5808 = vpack.c.b16 %v4768, %v4760
    %v5809 = vpack.c.b16 %v4769, %v4761
    %v5810 = vpack.c.b16 %v4770, %v4762
    %v5811 = vpack.c.b16 %v4779, %v4771
    %v5812 = vpack.c.b16 %v4780, %v4772
    %v5813 = vpack.c.b16 %v4781, %v4773
    %v5814 = vpack.c.b16 %v4782, %v4774
    %v5815 = vpack.c.b16 %v4783, %v4775
    %v5816 = vpack.c.b16 %v4784, %v4776
    %v5817 = vpack.c.b16 %v4785, %v4777
    %v5818 = vpack.c.b16 %v4786, %v4778
    %v5819 = vpack.c.b16 %v4795, %v4787
    %v5820 = vpack.c.b16 %v4796, %v4788
    %v5821 = vpack.c.b16 %v4797, %v4789
    %v5822 = vpack.c.b16 %v4798, %v4790
    %v5823 = vpack.c.b16 %v4799, %v4791
    %v5824 = vpack.c.b16 %v4800, %v4792
    %v5825 = vpack.c.b16 %v4801, %v4793
    %v5826 = vpack.c.b16 %v4802, %v4794
    %6851 = vmatpush.bf16.msra.mxu0 %v4859
    %6852 = vmatpush.bf16.msra.mxu0 %v4851
    %6853 = vmatpush.bf16.msra.mxu0 %v4843
    %6854 = vmatpush.bf16.msra.mxu0 %v4835
    %6855 = vmatpush.bf16.msra.mxu0 %v4827
    %6856 = vmatpush.bf16.msra.mxu0 %v4819
    %6857 = vmatpush.bf16.msra.mxu0 %v4811
    %6858 = vmatpush.bf16.msra.mxu0 %v4803
    %6859 = vmatmul.bf16.gmra.mxu0 %v673
    %v6860 = vpop.f32.mrf.mxu0
    %v6861 = vadd.f32 %v1715, %v6860
    %v6862 = vpop.f32.mrf.mxu0
    %6863 = vdwg.mxu0
    %6864 = vmatpush.bf16.msra.mxu0 %v4923
    %6865 = vmatpush.bf16.msra.mxu0 %v4915
    %6866 = vmatpush.bf16.msra.mxu0 %v4907
    %6867 = vmatpush.bf16.msra.mxu0 %v4899
    %6868 = vmatpush.bf16.msra.mxu0 %v4891
    %6869 = vmatpush.bf16.msra.mxu0 %v4883
    %6870 = vmatpush.bf16.msra.mxu0 %v4875
    %6871 = vmatpush.bf16.msra.mxu0 %v4867
    %6872 = vmatmul.bf16.gmra.mxu0 %v674
    %v6873 = vpop.f32.mrf.mxu0
    %v6874 = vadd.f32 %v6861, %v6873
    %v6875 = vpop.f32.mrf.mxu0
    %6876 = vdwg.mxu0
    %6877 = vmatpush.bf16.msra.mxu0 %v4987
    %6878 = vmatpush.bf16.msra.mxu0 %v4979
    %6879 = vmatpush.bf16.msra.mxu0 %v4971
    %6880 = vmatpush.bf16.msra.mxu0 %v4963
    %6881 = vmatpush.bf16.msra.mxu0 %v4955
    %6882 = vmatpush.bf16.msra.mxu0 %v4947
    %6883 = vmatpush.bf16.msra.mxu0 %v4939
    %6884 = vmatpush.bf16.msra.mxu0 %v4931
    %6885 = vmatmul.bf16.gmra.mxu0 %v675
    %v6886 = vpop.f32.mrf.mxu0
    %v6887 = vadd.f32 %v6874, %v6886
    %v6888 = vpop.f32.mrf.mxu0
    %6889 = vdwg.mxu0
    %6890 = vmatpush.bf16.msra.mxu0 %v5051
    %6891 = vmatpush.bf16.msra.mxu0 %v5043
    %6892 = vmatpush.bf16.msra.mxu0 %v5035
    %6893 = vmatpush.bf16.msra.mxu0 %v5027
    %6894 = vmatpush.bf16.msra.mxu0 %v5019
    %6895 = vmatpush.bf16.msra.mxu0 %v5011
    %6896 = vmatpush.bf16.msra.mxu0 %v5003
    %6897 = vmatpush.bf16.msra.mxu0 %v4995
    %6898 = vmatmul.bf16.gmra.mxu0 %v676
    %v6899 = vpop.f32.mrf.mxu0
    %v6900 = vadd.f32 %v6887, %v6899
    %v6901 = vpop.f32.mrf.mxu0
    %6902 = vdwg.mxu0
    %6903 = vmatpush.bf16.msra.mxu0 %v5115
    %6904 = vmatpush.bf16.msra.mxu0 %v5107
    %6905 = vmatpush.bf16.msra.mxu0 %v5099
    %6906 = vmatpush.bf16.msra.mxu0 %v5091
    %6907 = vmatpush.bf16.msra.mxu0 %v5083
    %6908 = vmatpush.bf16.msra.mxu0 %v5075
    %6909 = vmatpush.bf16.msra.mxu0 %v5067
    %6910 = vmatpush.bf16.msra.mxu0 %v5059
    %6911 = vmatmul.bf16.gmra.mxu0 %v677
    %v6912 = vpop.f32.mrf.mxu0
    %v6913 = vadd.f32 %v6900, %v6912
    %v6914 = vpop.f32.mrf.mxu0
    %6915 = vdwg.mxu0
    %6916 = vmatpush.bf16.msra.mxu0 %v5179
    %6917 = vmatpush.bf16.msra.mxu0 %v5171
    %6918 = vmatpush.bf16.msra.mxu0 %v5163
    %6919 = vmatpush.bf16.msra.mxu0 %v5155
    %6920 = vmatpush.bf16.msra.mxu0 %v5147
    %6921 = vmatpush.bf16.msra.mxu0 %v5139
    %6922 = vmatpush.bf16.msra.mxu0 %v5131
    %6923 = vmatpush.bf16.msra.mxu0 %v5123
    %6924 = vmatmul.bf16.gmra.mxu0 %v678
    %v6925 = vpop.f32.mrf.mxu0
    %v6926 = vadd.f32 %v6913, %v6925
    %v6927 = vpop.f32.mrf.mxu0
    %6928 = vdwg.mxu0
    %6929 = vmatpush.bf16.msra.mxu0 %v5243
    %6930 = vmatpush.bf16.msra.mxu0 %v5235
    %6931 = vmatpush.bf16.msra.mxu0 %v5227
    %6932 = vmatpush.bf16.msra.mxu0 %v5219
    %6933 = vmatpush.bf16.msra.mxu0 %v5211
    %6934 = vmatpush.bf16.msra.mxu0 %v5203
    %6935 = vmatpush.bf16.msra.mxu0 %v5195
    %6936 = vmatpush.bf16.msra.mxu0 %v5187
    %6937 = vmatmul.bf16.gmra.mxu0 %v679
    %v6938 = vpop.f32.mrf.mxu0
    %v6939 = vadd.f32 %v6926, %v6938
    %v6940 = vpop.f32.mrf.mxu0
    %6941 = vdwg.mxu0
    %6942 = vmatpush.bf16.msra.mxu0 %v5307
    %6943 = vmatpush.bf16.msra.mxu0 %v5299
    %6944 = vmatpush.bf16.msra.mxu0 %v5291
    %6945 = vmatpush.bf16.msra.mxu0 %v5283
    %6946 = vmatpush.bf16.msra.mxu0 %v5275
    %6947 = vmatpush.bf16.msra.mxu0 %v5267
    %6948 = vmatpush.bf16.msra.mxu0 %v5259
    %6949 = vmatpush.bf16.msra.mxu0 %v5251
    %6950 = vmatmul.bf16.gmra.mxu0 %v680
    %v6951 = vpop.f32.mrf.mxu0
    %v6952 = vadd.f32 %v6939, %v6951
    %v6953 = vpop.f32.mrf.mxu0
    %6954 = vdwg.mxu0
    %6955 = vmatpush.bf16.msra.mxu0 %v5371
    %6956 = vmatpush.bf16.msra.mxu0 %v5363
    %6957 = vmatpush.bf16.msra.mxu0 %v5355
    %6958 = vmatpush.bf16.msra.mxu0 %v5347
    %6959 = vmatpush.bf16.msra.mxu0 %v5339
    %6960 = vmatpush.bf16.msra.mxu0 %v5331
    %6961 = vmatpush.bf16.msra.mxu0 %v5323
    %6962 = vmatpush.bf16.msra.mxu0 %v5315
    %6963 = vmatmul.bf16.gmra.mxu0 %v681
    %v6964 = vpop.f32.mrf.mxu0
    %v6965 = vadd.f32 %v6952, %v6964
    %v6966 = vpop.f32.mrf.mxu0
    %6967 = vdwg.mxu0
    %6968 = vmatpush.bf16.msra.mxu0 %v5435
    %6969 = vmatpush.bf16.msra.mxu0 %v5427
    %6970 = vmatpush.bf16.msra.mxu0 %v5419
    %6971 = vmatpush.bf16.msra.mxu0 %v5411
    %6972 = vmatpush.bf16.msra.mxu0 %v5403
    %6973 = vmatpush.bf16.msra.mxu0 %v5395
    %6974 = vmatpush.bf16.msra.mxu0 %v5387
    %6975 = vmatpush.bf16.msra.mxu0 %v5379
    %6976 = vmatmul.bf16.gmra.mxu0 %v682
    %v6977 = vpop.f32.mrf.mxu0
    %v6978 = vadd.f32 %v6965, %v6977
    %v6979 = vpop.f32.mrf.mxu0
    %6980 = vdwg.mxu0
    %6981 = vmatpush.bf16.msra.mxu0 %v5499
    %6982 = vmatpush.bf16.msra.mxu0 %v5491
    %6983 = vmatpush.bf16.msra.mxu0 %v5483
    %6984 = vmatpush.bf16.msra.mxu0 %v5475
    %6985 = vmatpush.bf16.msra.mxu0 %v5467
    %6986 = vmatpush.bf16.msra.mxu0 %v5459
    %6987 = vmatpush.bf16.msra.mxu0 %v5451
    %6988 = vmatpush.bf16.msra.mxu0 %v5443
    %6989 = vmatmul.bf16.gmra.mxu0 %v683
    %v6990 = vpop.f32.mrf.mxu0
    %v6991 = vadd.f32 %v6978, %v6990
    %v6992 = vpop.f32.mrf.mxu0
    %6993 = vdwg.mxu0
    %6994 = vmatpush.bf16.msra.mxu0 %v5563
    %6995 = vmatpush.bf16.msra.mxu0 %v5555
    %6996 = vmatpush.bf16.msra.mxu0 %v5547
    %6997 = vmatpush.bf16.msra.mxu0 %v5539
    %6998 = vmatpush.bf16.msra.mxu0 %v5531
    %6999 = vmatpush.bf16.msra.mxu0 %v5523
    %7000 = vmatpush.bf16.msra.mxu0 %v5515
    %7001 = vmatpush.bf16.msra.mxu0 %v5507
    %7002 = vmatmul.bf16.gmra.mxu0 %v684
    %v7003 = vpop.f32.mrf.mxu0
    %v7004 = vadd.f32 %v6991, %v7003
    %v7005 = vpop.f32.mrf.mxu0
    %7006 = vdwg.mxu0
    %7007 = vmatpush.bf16.msra.mxu0 %v5627
    %7008 = vmatpush.bf16.msra.mxu0 %v5619
    %7009 = vmatpush.bf16.msra.mxu0 %v5611
    %7010 = vmatpush.bf16.msra.mxu0 %v5603
    %7011 = vmatpush.bf16.msra.mxu0 %v5595
    %7012 = vmatpush.bf16.msra.mxu0 %v5587
    %7013 = vmatpush.bf16.msra.mxu0 %v5579
    %7014 = vmatpush.bf16.msra.mxu0 %v5571
    %7015 = vmatmul.bf16.gmra.mxu0 %v685
    %v7016 = vpop.f32.mrf.mxu0
    %v7017 = vadd.f32 %v7004, %v7016
    %v7018 = vpop.f32.mrf.mxu0
    %7019 = vdwg.mxu0
    %7020 = vmatpush.bf16.msra.mxu0 %v5691
    %7021 = vmatpush.bf16.msra.mxu0 %v5683
    %7022 = vmatpush.bf16.msra.mxu0 %v5675
    %7023 = vmatpush.bf16.msra.mxu0 %v5667
    %7024 = vmatpush.bf16.msra.mxu0 %v5659
    %7025 = vmatpush.bf16.msra.mxu0 %v5651
    %7026 = vmatpush.bf16.msra.mxu0 %v5643
    %7027 = vmatpush.bf16.msra.mxu0 %v5635
    %7028 = vmatmul.bf16.gmra.mxu0 %v686
    %v7029 = vpop.f32.mrf.mxu0
    %v7030 = vadd.f32 %v7017, %v7029
    %v7031 = vpop.f32.mrf.mxu0
    %7032 = vdwg.mxu0
    %7033 = vmatpush.bf16.msra.mxu0 %v5755
    %7034 = vmatpush.bf16.msra.mxu0 %v5747
    %7035 = vmatpush.bf16.msra.mxu0 %v5739
    %7036 = vmatpush.bf16.msra.mxu0 %v5731
    %7037 = vmatpush.bf16.msra.mxu0 %v5723
    %7038 = vmatpush.bf16.msra.mxu0 %v5715
    %7039 = vmatpush.bf16.msra.mxu0 %v5707
    %7040 = vmatpush.bf16.msra.mxu0 %v5699
    %7041 = vmatmul.bf16.gmra.mxu0 %v687
    %v7042 = vpop.f32.mrf.mxu0
    %v7043 = vadd.f32 %v7030, %v7042
    %v7044 = vpop.f32.mrf.mxu0
    %7045 = vdwg.mxu0
    %7046 = vmatpush.bf16.msra.mxu0 %v5819
    %7047 = vmatpush.bf16.msra.mxu0 %v5811
    %7048 = vmatpush.bf16.msra.mxu0 %v5803
    %7049 = vmatpush.bf16.msra.mxu0 %v5795
    %7050 = vmatpush.bf16.msra.mxu0 %v5787
    %7051 = vmatpush.bf16.msra.mxu0 %v5779
    %7052 = vmatpush.bf16.msra.mxu0 %v5771
    %7053 = vmatpush.bf16.msra.mxu0 %v5763
    %7054 = vmatmul.bf16.gmra.mxu0 %v688
    %v7055 = vpop.f32.mrf.mxu0
    %v7056 = vadd.f32 %v7043, %v7055
    %v7057 = vpop.f32.mrf.mxu0
    %7058 = vdwg.mxu0
    %7059 = vmatpush.bf16.msra.mxu0 %v4860
    %7060 = vmatpush.bf16.msra.mxu0 %v4852
    %7061 = vmatpush.bf16.msra.mxu0 %v4844
    %7062 = vmatpush.bf16.msra.mxu0 %v4836
    %7063 = vmatpush.bf16.msra.mxu0 %v4828
    %7064 = vmatpush.bf16.msra.mxu0 %v4820
    %7065 = vmatpush.bf16.msra.mxu0 %v4812
    %7066 = vmatpush.bf16.msra.mxu0 %v4804
    %7067 = vmatmul.bf16.gmra.mxu0 %v673
    %v7068 = vpop.f32.mrf.mxu0
    %v7069 = vadd.f32 %v1716, %v7068
    %v7070 = vpop.f32.mrf.mxu0
    %7071 = vdwg.mxu0
    %7072 = vmatpush.bf16.msra.mxu0 %v4924
    %7073 = vmatpush.bf16.msra.mxu0 %v4916
    %7074 = vmatpush.bf16.msra.mxu0 %v4908
    %7075 = vmatpush.bf16.msra.mxu0 %v4900
    %7076 = vmatpush.bf16.msra.mxu0 %v4892
    %7077 = vmatpush.bf16.msra.mxu0 %v4884
    %7078 = vmatpush.bf16.msra.mxu0 %v4876
    %7079 = vmatpush.bf16.msra.mxu0 %v4868
    %7080 = vmatmul.bf16.gmra.mxu0 %v674
    %v7081 = vpop.f32.mrf.mxu0
    %v7082 = vadd.f32 %v7069, %v7081
    %v7083 = vpop.f32.mrf.mxu0
    %7084 = vdwg.mxu0
    %7085 = vmatpush.bf16.msra.mxu0 %v4988
    %7086 = vmatpush.bf16.msra.mxu0 %v4980
    %7087 = vmatpush.bf16.msra.mxu0 %v4972
    %7088 = vmatpush.bf16.msra.mxu0 %v4964
    %7089 = vmatpush.bf16.msra.mxu0 %v4956
    %7090 = vmatpush.bf16.msra.mxu0 %v4948
    %7091 = vmatpush.bf16.msra.mxu0 %v4940
    %7092 = vmatpush.bf16.msra.mxu0 %v4932
    %7093 = vmatmul.bf16.gmra.mxu0 %v675
    %v7094 = vpop.f32.mrf.mxu0
    %v7095 = vadd.f32 %v7082, %v7094
    %v7096 = vpop.f32.mrf.mxu0
    %7097 = vdwg.mxu0
    %7098 = vmatpush.bf16.msra.mxu0 %v5052
    %7099 = vmatpush.bf16.msra.mxu0 %v5044
    %7100 = vmatpush.bf16.msra.mxu0 %v5036
    %7101 = vmatpush.bf16.msra.mxu0 %v5028
    %7102 = vmatpush.bf16.msra.mxu0 %v5020
    %7103 = vmatpush.bf16.msra.mxu0 %v5012
    %7104 = vmatpush.bf16.msra.mxu0 %v5004
    %7105 = vmatpush.bf16.msra.mxu0 %v4996
    %7106 = vmatmul.bf16.gmra.mxu0 %v676
    %v7107 = vpop.f32.mrf.mxu0
    %v7108 = vadd.f32 %v7095, %v7107
    %v7109 = vpop.f32.mrf.mxu0
    %7110 = vdwg.mxu0
    %7111 = vmatpush.bf16.msra.mxu0 %v5116
    %7112 = vmatpush.bf16.msra.mxu0 %v5108
    %7113 = vmatpush.bf16.msra.mxu0 %v5100
    %7114 = vmatpush.bf16.msra.mxu0 %v5092
    %7115 = vmatpush.bf16.msra.mxu0 %v5084
    %7116 = vmatpush.bf16.msra.mxu0 %v5076
    %7117 = vmatpush.bf16.msra.mxu0 %v5068
    %7118 = vmatpush.bf16.msra.mxu0 %v5060
    %7119 = vmatmul.bf16.gmra.mxu0 %v677
    %v7120 = vpop.f32.mrf.mxu0
    %v7121 = vadd.f32 %v7108, %v7120
    %v7122 = vpop.f32.mrf.mxu0
    %7123 = vdwg.mxu0
    %7124 = vmatpush.bf16.msra.mxu0 %v5180
    %7125 = vmatpush.bf16.msra.mxu0 %v5172
    %7126 = vmatpush.bf16.msra.mxu0 %v5164
    %7127 = vmatpush.bf16.msra.mxu0 %v5156
    %7128 = vmatpush.bf16.msra.mxu0 %v5148
    %7129 = vmatpush.bf16.msra.mxu0 %v5140
    %7130 = vmatpush.bf16.msra.mxu0 %v5132
    %7131 = vmatpush.bf16.msra.mxu0 %v5124
    %7132 = vmatmul.bf16.gmra.mxu0 %v678
    %v7133 = vpop.f32.mrf.mxu0
    %v7134 = vadd.f32 %v7121, %v7133
    %v7135 = vpop.f32.mrf.mxu0
    %7136 = vdwg.mxu0
    %7137 = vmatpush.bf16.msra.mxu0 %v5244
    %7138 = vmatpush.bf16.msra.mxu0 %v5236
    %7139 = vmatpush.bf16.msra.mxu0 %v5228
    %7140 = vmatpush.bf16.msra.mxu0 %v5220
    %7141 = vmatpush.bf16.msra.mxu0 %v5212
    %7142 = vmatpush.bf16.msra.mxu0 %v5204
    %7143 = vmatpush.bf16.msra.mxu0 %v5196
    %7144 = vmatpush.bf16.msra.mxu0 %v5188
    %7145 = vmatmul.bf16.gmra.mxu0 %v679
    %v7146 = vpop.f32.mrf.mxu0
    %v7147 = vadd.f32 %v7134, %v7146
    %v7148 = vpop.f32.mrf.mxu0
    %7149 = vdwg.mxu0
    %7150 = vmatpush.bf16.msra.mxu0 %v5308
    %7151 = vmatpush.bf16.msra.mxu0 %v5300
    %7152 = vmatpush.bf16.msra.mxu0 %v5292
    %7153 = vmatpush.bf16.msra.mxu0 %v5284
    %7154 = vmatpush.bf16.msra.mxu0 %v5276
    %7155 = vmatpush.bf16.msra.mxu0 %v5268
    %7156 = vmatpush.bf16.msra.mxu0 %v5260
    %7157 = vmatpush.bf16.msra.mxu0 %v5252
    %7158 = vmatmul.bf16.gmra.mxu0 %v680
    %v7159 = vpop.f32.mrf.mxu0
    %v7160 = vadd.f32 %v7147, %v7159
    %v7161 = vpop.f32.mrf.mxu0
    %7162 = vdwg.mxu0
    %7163 = vmatpush.bf16.msra.mxu0 %v5372
    %7164 = vmatpush.bf16.msra.mxu0 %v5364
    %7165 = vmatpush.bf16.msra.mxu0 %v5356
    %7166 = vmatpush.bf16.msra.mxu0 %v5348
    %7167 = vmatpush.bf16.msra.mxu0 %v5340
    %7168 = vmatpush.bf16.msra.mxu0 %v5332
    %7169 = vmatpush.bf16.msra.mxu0 %v5324
    %7170 = vmatpush.bf16.msra.mxu0 %v5316
    %7171 = vmatmul.bf16.gmra.mxu0 %v681
    %v7172 = vpop.f32.mrf.mxu0
    %v7173 = vadd.f32 %v7160, %v7172
    %v7174 = vpop.f32.mrf.mxu0
    %7175 = vdwg.mxu0
    %7176 = vmatpush.bf16.msra.mxu0 %v5436
    %7177 = vmatpush.bf16.msra.mxu0 %v5428
    %7178 = vmatpush.bf16.msra.mxu0 %v5420
    %7179 = vmatpush.bf16.msra.mxu0 %v5412
    %7180 = vmatpush.bf16.msra.mxu0 %v5404
    %7181 = vmatpush.bf16.msra.mxu0 %v5396
    %7182 = vmatpush.bf16.msra.mxu0 %v5388
    %7183 = vmatpush.bf16.msra.mxu0 %v5380
    %7184 = vmatmul.bf16.gmra.mxu0 %v682
    %v7185 = vpop.f32.mrf.mxu0
    %v7186 = vadd.f32 %v7173, %v7185
    %v7187 = vpop.f32.mrf.mxu0
    %7188 = vdwg.mxu0
    %7189 = vmatpush.bf16.msra.mxu0 %v5500
    %7190 = vmatpush.bf16.msra.mxu0 %v5492
    %7191 = vmatpush.bf16.msra.mxu0 %v5484
    %7192 = vmatpush.bf16.msra.mxu0 %v5476
    %7193 = vmatpush.bf16.msra.mxu0 %v5468
    %7194 = vmatpush.bf16.msra.mxu0 %v5460
    %7195 = vmatpush.bf16.msra.mxu0 %v5452
    %7196 = vmatpush.bf16.msra.mxu0 %v5444
    %7197 = vmatmul.bf16.gmra.mxu0 %v683
    %v7198 = vpop.f32.mrf.mxu0
    %v7199 = vadd.f32 %v7186, %v7198
    %v7200 = vpop.f32.mrf.mxu0
    %7201 = vdwg.mxu0
    %7202 = vmatpush.bf16.msra.mxu0 %v5564
    %7203 = vmatpush.bf16.msra.mxu0 %v5556
    %7204 = vmatpush.bf16.msra.mxu0 %v5548
    %7205 = vmatpush.bf16.msra.mxu0 %v5540
    %7206 = vmatpush.bf16.msra.mxu0 %v5532
    %7207 = vmatpush.bf16.msra.mxu0 %v5524
    %7208 = vmatpush.bf16.msra.mxu0 %v5516
    %7209 = vmatpush.bf16.msra.mxu0 %v5508
    %7210 = vmatmul.bf16.gmra.mxu0 %v684
    %v7211 = vpop.f32.mrf.mxu0
    %v7212 = vadd.f32 %v7199, %v7211
    %v7213 = vpop.f32.mrf.mxu0
    %7214 = vdwg.mxu0
    %7215 = vmatpush.bf16.msra.mxu0 %v5628
    %7216 = vmatpush.bf16.msra.mxu0 %v5620
    %7217 = vmatpush.bf16.msra.mxu0 %v5612
    %7218 = vmatpush.bf16.msra.mxu0 %v5604
    %7219 = vmatpush.bf16.msra.mxu0 %v5596
    %7220 = vmatpush.bf16.msra.mxu0 %v5588
    %7221 = vmatpush.bf16.msra.mxu0 %v5580
    %7222 = vmatpush.bf16.msra.mxu0 %v5572
    %7223 = vmatmul.bf16.gmra.mxu0 %v685
    %v7224 = vpop.f32.mrf.mxu0
    %v7225 = vadd.f32 %v7212, %v7224
    %v7226 = vpop.f32.mrf.mxu0
    %7227 = vdwg.mxu0
    %7228 = vmatpush.bf16.msra.mxu0 %v5692
    %7229 = vmatpush.bf16.msra.mxu0 %v5684
    %7230 = vmatpush.bf16.msra.mxu0 %v5676
    %7231 = vmatpush.bf16.msra.mxu0 %v5668
    %7232 = vmatpush.bf16.msra.mxu0 %v5660
    %7233 = vmatpush.bf16.msra.mxu0 %v5652
    %7234 = vmatpush.bf16.msra.mxu0 %v5644
    %7235 = vmatpush.bf16.msra.mxu0 %v5636
    %7236 = vmatmul.bf16.gmra.mxu0 %v686
    %v7237 = vpop.f32.mrf.mxu0
    %v7238 = vadd.f32 %v7225, %v7237
    %v7239 = vpop.f32.mrf.mxu0
    %7240 = vdwg.mxu0
    %7241 = vmatpush.bf16.msra.mxu0 %v5756
    %7242 = vmatpush.bf16.msra.mxu0 %v5748
    %7243 = vmatpush.bf16.msra.mxu0 %v5740
    %7244 = vmatpush.bf16.msra.mxu0 %v5732
    %7245 = vmatpush.bf16.msra.mxu0 %v5724
    %7246 = vmatpush.bf16.msra.mxu0 %v5716
    %7247 = vmatpush.bf16.msra.mxu0 %v5708
    %7248 = vmatpush.bf16.msra.mxu0 %v5700
    %7249 = vmatmul.bf16.gmra.mxu0 %v687
    %v7250 = vpop.f32.mrf.mxu0
    %v7251 = vadd.f32 %v7238, %v7250
    %v7252 = vpop.f32.mrf.mxu0
    %7253 = vdwg.mxu0
    %7254 = vmatpush.bf16.msra.mxu0 %v5820
    %7255 = vmatpush.bf16.msra.mxu0 %v5812
    %7256 = vmatpush.bf16.msra.mxu0 %v5804
    %7257 = vmatpush.bf16.msra.mxu0 %v5796
    %7258 = vmatpush.bf16.msra.mxu0 %v5788
    %7259 = vmatpush.bf16.msra.mxu0 %v5780
    %7260 = vmatpush.bf16.msra.mxu0 %v5772
    %7261 = vmatpush.bf16.msra.mxu0 %v5764
    %7262 = vmatmul.bf16.gmra.mxu0 %v688
    %v7263 = vpop.f32.mrf.mxu0
    %v7264 = vadd.f32 %v7251, %v7263
    %v7265 = vpop.f32.mrf.mxu0
    %7266 = vdwg.mxu0
    %7267 = vmatpush.bf16.msra.mxu0 %v4861
    %7268 = vmatpush.bf16.msra.mxu0 %v4853
    %7269 = vmatpush.bf16.msra.mxu0 %v4845
    %7270 = vmatpush.bf16.msra.mxu0 %v4837
    %7271 = vmatpush.bf16.msra.mxu0 %v4829
    %7272 = vmatpush.bf16.msra.mxu0 %v4821
    %7273 = vmatpush.bf16.msra.mxu0 %v4813
    %7274 = vmatpush.bf16.msra.mxu0 %v4805
    %7275 = vmatmul.bf16.gmra.mxu0 %v673
    %v7276 = vpop.f32.mrf.mxu0
    %v7277 = vadd.f32 %v1717, %v7276
    %v7278 = vpop.f32.mrf.mxu0
    %7279 = vdwg.mxu0
    %7280 = vmatpush.bf16.msra.mxu0 %v4925
    %7281 = vmatpush.bf16.msra.mxu0 %v4917
    %7282 = vmatpush.bf16.msra.mxu0 %v4909
    %7283 = vmatpush.bf16.msra.mxu0 %v4901
    %7284 = vmatpush.bf16.msra.mxu0 %v4893
    %7285 = vmatpush.bf16.msra.mxu0 %v4885
    %7286 = vmatpush.bf16.msra.mxu0 %v4877
    %7287 = vmatpush.bf16.msra.mxu0 %v4869
    %7288 = vmatmul.bf16.gmra.mxu0 %v674
    %v7289 = vpop.f32.mrf.mxu0
    %v7290 = vadd.f32 %v7277, %v7289
    %v7291 = vpop.f32.mrf.mxu0
    %7292 = vdwg.mxu0
    %7293 = vmatpush.bf16.msra.mxu0 %v4989
    %7294 = vmatpush.bf16.msra.mxu0 %v4981
    %7295 = vmatpush.bf16.msra.mxu0 %v4973
    %7296 = vmatpush.bf16.msra.mxu0 %v4965
    %7297 = vmatpush.bf16.msra.mxu0 %v4957
    %7298 = vmatpush.bf16.msra.mxu0 %v4949
    %7299 = vmatpush.bf16.msra.mxu0 %v4941
    %7300 = vmatpush.bf16.msra.mxu0 %v4933
    %7301 = vmatmul.bf16.gmra.mxu0 %v675
    %v7302 = vpop.f32.mrf.mxu0
    %v7303 = vadd.f32 %v7290, %v7302
    %v7304 = vpop.f32.mrf.mxu0
    %7305 = vdwg.mxu0
    %7306 = vmatpush.bf16.msra.mxu0 %v5053
    %7307 = vmatpush.bf16.msra.mxu0 %v5045
    %7308 = vmatpush.bf16.msra.mxu0 %v5037
    %7309 = vmatpush.bf16.msra.mxu0 %v5029
    %7310 = vmatpush.bf16.msra.mxu0 %v5021
    %7311 = vmatpush.bf16.msra.mxu0 %v5013
    %7312 = vmatpush.bf16.msra.mxu0 %v5005
    %7313 = vmatpush.bf16.msra.mxu0 %v4997
    %7314 = vmatmul.bf16.gmra.mxu0 %v676
    %v7315 = vpop.f32.mrf.mxu0
    %v7316 = vadd.f32 %v7303, %v7315
    %v7317 = vpop.f32.mrf.mxu0
    %7318 = vdwg.mxu0
    %7319 = vmatpush.bf16.msra.mxu0 %v5117
    %7320 = vmatpush.bf16.msra.mxu0 %v5109
    %7321 = vmatpush.bf16.msra.mxu0 %v5101
    %7322 = vmatpush.bf16.msra.mxu0 %v5093
    %7323 = vmatpush.bf16.msra.mxu0 %v5085
    %7324 = vmatpush.bf16.msra.mxu0 %v5077
    %7325 = vmatpush.bf16.msra.mxu0 %v5069
    %7326 = vmatpush.bf16.msra.mxu0 %v5061
    %7327 = vmatmul.bf16.gmra.mxu0 %v677
    %v7328 = vpop.f32.mrf.mxu0
    %v7329 = vadd.f32 %v7316, %v7328
    %v7330 = vpop.f32.mrf.mxu0
    %7331 = vdwg.mxu0
    %7332 = vmatpush.bf16.msra.mxu0 %v5181
    %7333 = vmatpush.bf16.msra.mxu0 %v5173
    %7334 = vmatpush.bf16.msra.mxu0 %v5165
    %7335 = vmatpush.bf16.msra.mxu0 %v5157
    %7336 = vmatpush.bf16.msra.mxu0 %v5149
    %7337 = vmatpush.bf16.msra.mxu0 %v5141
    %7338 = vmatpush.bf16.msra.mxu0 %v5133
    %7339 = vmatpush.bf16.msra.mxu0 %v5125
    %7340 = vmatmul.bf16.gmra.mxu0 %v678
    %v7341 = vpop.f32.mrf.mxu0
    %v7342 = vadd.f32 %v7329, %v7341
    %v7343 = vpop.f32.mrf.mxu0
    %7344 = vdwg.mxu0
    %7345 = vmatpush.bf16.msra.mxu0 %v5245
    %7346 = vmatpush.bf16.msra.mxu0 %v5237
    %7347 = vmatpush.bf16.msra.mxu0 %v5229
    %7348 = vmatpush.bf16.msra.mxu0 %v5221
    %7349 = vmatpush.bf16.msra.mxu0 %v5213
    %7350 = vmatpush.bf16.msra.mxu0 %v5205
    %7351 = vmatpush.bf16.msra.mxu0 %v5197
    %7352 = vmatpush.bf16.msra.mxu0 %v5189
    %7353 = vmatmul.bf16.gmra.mxu0 %v679
    %v7354 = vpop.f32.mrf.mxu0
    %v7355 = vadd.f32 %v7342, %v7354
    %v7356 = vpop.f32.mrf.mxu0
    %7357 = vdwg.mxu0
    %7358 = vmatpush.bf16.msra.mxu0 %v5309
    %7359 = vmatpush.bf16.msra.mxu0 %v5301
    %7360 = vmatpush.bf16.msra.mxu0 %v5293
    %7361 = vmatpush.bf16.msra.mxu0 %v5285
    %7362 = vmatpush.bf16.msra.mxu0 %v5277
    %7363 = vmatpush.bf16.msra.mxu0 %v5269
    %7364 = vmatpush.bf16.msra.mxu0 %v5261
    %7365 = vmatpush.bf16.msra.mxu0 %v5253
    %7366 = vmatmul.bf16.gmra.mxu0 %v680
    %v7367 = vpop.f32.mrf.mxu0
    %v7368 = vadd.f32 %v7355, %v7367
    %v7369 = vpop.f32.mrf.mxu0
    %7370 = vdwg.mxu0
    %7371 = vmatpush.bf16.msra.mxu0 %v5373
    %7372 = vmatpush.bf16.msra.mxu0 %v5365
    %7373 = vmatpush.bf16.msra.mxu0 %v5357
    %7374 = vmatpush.bf16.msra.mxu0 %v5349
    %7375 = vmatpush.bf16.msra.mxu0 %v5341
    %7376 = vmatpush.bf16.msra.mxu0 %v5333
    %7377 = vmatpush.bf16.msra.mxu0 %v5325
    %7378 = vmatpush.bf16.msra.mxu0 %v5317
    %7379 = vmatmul.bf16.gmra.mxu0 %v681
    %v7380 = vpop.f32.mrf.mxu0
    %v7381 = vadd.f32 %v7368, %v7380
    %v7382 = vpop.f32.mrf.mxu0
    %7383 = vdwg.mxu0
    %7384 = vmatpush.bf16.msra.mxu0 %v5437
    %7385 = vmatpush.bf16.msra.mxu0 %v5429
    %7386 = vmatpush.bf16.msra.mxu0 %v5421
    %7387 = vmatpush.bf16.msra.mxu0 %v5413
    %7388 = vmatpush.bf16.msra.mxu0 %v5405
    %7389 = vmatpush.bf16.msra.mxu0 %v5397
    %7390 = vmatpush.bf16.msra.mxu0 %v5389
    %7391 = vmatpush.bf16.msra.mxu0 %v5381
    %7392 = vmatmul.bf16.gmra.mxu0 %v682
    %v7393 = vpop.f32.mrf.mxu0
    %v7394 = vadd.f32 %v7381, %v7393
    %v7395 = vpop.f32.mrf.mxu0
    %7396 = vdwg.mxu0
    %7397 = vmatpush.bf16.msra.mxu0 %v5501
    %7398 = vmatpush.bf16.msra.mxu0 %v5493
    %7399 = vmatpush.bf16.msra.mxu0 %v5485
    %7400 = vmatpush.bf16.msra.mxu0 %v5477
    %7401 = vmatpush.bf16.msra.mxu0 %v5469
    %7402 = vmatpush.bf16.msra.mxu0 %v5461
    %7403 = vmatpush.bf16.msra.mxu0 %v5453
    %7404 = vmatpush.bf16.msra.mxu0 %v5445
    %7405 = vmatmul.bf16.gmra.mxu0 %v683
    %v7406 = vpop.f32.mrf.mxu0
    %v7407 = vadd.f32 %v7394, %v7406
    %v7408 = vpop.f32.mrf.mxu0
    %7409 = vdwg.mxu0
    %7410 = vmatpush.bf16.msra.mxu0 %v5565
    %7411 = vmatpush.bf16.msra.mxu0 %v5557
    %7412 = vmatpush.bf16.msra.mxu0 %v5549
    %7413 = vmatpush.bf16.msra.mxu0 %v5541
    %7414 = vmatpush.bf16.msra.mxu0 %v5533
    %7415 = vmatpush.bf16.msra.mxu0 %v5525
    %7416 = vmatpush.bf16.msra.mxu0 %v5517
    %7417 = vmatpush.bf16.msra.mxu0 %v5509
    %7418 = vmatmul.bf16.gmra.mxu0 %v684
    %v7419 = vpop.f32.mrf.mxu0
    %v7420 = vadd.f32 %v7407, %v7419
    %v7421 = vpop.f32.mrf.mxu0
    %7422 = vdwg.mxu0
    %7423 = vmatpush.bf16.msra.mxu0 %v5629
    %7424 = vmatpush.bf16.msra.mxu0 %v5621
    %7425 = vmatpush.bf16.msra.mxu0 %v5613
    %7426 = vmatpush.bf16.msra.mxu0 %v5605
    %7427 = vmatpush.bf16.msra.mxu0 %v5597
    %7428 = vmatpush.bf16.msra.mxu0 %v5589
    %7429 = vmatpush.bf16.msra.mxu0 %v5581
    %7430 = vmatpush.bf16.msra.mxu0 %v5573
    %7431 = vmatmul.bf16.gmra.mxu0 %v685
    %v7432 = vpop.f32.mrf.mxu0
    %v7433 = vadd.f32 %v7420, %v7432
    %v7434 = vpop.f32.mrf.mxu0
    %7435 = vdwg.mxu0
    %7436 = vmatpush.bf16.msra.mxu0 %v5693
    %7437 = vmatpush.bf16.msra.mxu0 %v5685
    %7438 = vmatpush.bf16.msra.mxu0 %v5677
    %7439 = vmatpush.bf16.msra.mxu0 %v5669
    %7440 = vmatpush.bf16.msra.mxu0 %v5661
    %7441 = vmatpush.bf16.msra.mxu0 %v5653
    %7442 = vmatpush.bf16.msra.mxu0 %v5645
    %7443 = vmatpush.bf16.msra.mxu0 %v5637
    %7444 = vmatmul.bf16.gmra.mxu0 %v686
    %v7445 = vpop.f32.mrf.mxu0
    %v7446 = vadd.f32 %v7433, %v7445
    %v7447 = vpop.f32.mrf.mxu0
    %7448 = vdwg.mxu0
    %7449 = vmatpush.bf16.msra.mxu0 %v5757
    %7450 = vmatpush.bf16.msra.mxu0 %v5749
    %7451 = vmatpush.bf16.msra.mxu0 %v5741
    %7452 = vmatpush.bf16.msra.mxu0 %v5733
    %7453 = vmatpush.bf16.msra.mxu0 %v5725
    %7454 = vmatpush.bf16.msra.mxu0 %v5717
    %7455 = vmatpush.bf16.msra.mxu0 %v5709
    %7456 = vmatpush.bf16.msra.mxu0 %v5701
    %7457 = vmatmul.bf16.gmra.mxu0 %v687
    %v7458 = vpop.f32.mrf.mxu0
    %v7459 = vadd.f32 %v7446, %v7458
    %v7460 = vpop.f32.mrf.mxu0
    %7461 = vdwg.mxu0
    %7462 = vmatpush.bf16.msra.mxu0 %v5821
    %7463 = vmatpush.bf16.msra.mxu0 %v5813
    %7464 = vmatpush.bf16.msra.mxu0 %v5805
    %7465 = vmatpush.bf16.msra.mxu0 %v5797
    %7466 = vmatpush.bf16.msra.mxu0 %v5789
    %7467 = vmatpush.bf16.msra.mxu0 %v5781
    %7468 = vmatpush.bf16.msra.mxu0 %v5773
    %7469 = vmatpush.bf16.msra.mxu0 %v5765
    %7470 = vmatmul.bf16.gmra.mxu0 %v688
    %v7471 = vpop.f32.mrf.mxu0
    %v7472 = vadd.f32 %v7459, %v7471
    %v7473 = vpop.f32.mrf.mxu0
    %7474 = vdwg.mxu0
    %7475 = vmatpush.bf16.msra.mxu0 %v4862
    %7476 = vmatpush.bf16.msra.mxu0 %v4854
    %7477 = vmatpush.bf16.msra.mxu0 %v4846
    %7478 = vmatpush.bf16.msra.mxu0 %v4838
    %7479 = vmatpush.bf16.msra.mxu0 %v4830
    %7480 = vmatpush.bf16.msra.mxu0 %v4822
    %7481 = vmatpush.bf16.msra.mxu0 %v4814
    %7482 = vmatpush.bf16.msra.mxu0 %v4806
    %7483 = vmatmul.bf16.gmra.mxu0 %v673
    %v7484 = vpop.f32.mrf.mxu0
    %v7485 = vadd.f32 %v1718, %v7484
    %v7486 = vpop.f32.mrf.mxu0
    %7487 = vdwg.mxu0
    %7488 = vmatpush.bf16.msra.mxu0 %v4926
    %7489 = vmatpush.bf16.msra.mxu0 %v4918
    %7490 = vmatpush.bf16.msra.mxu0 %v4910
    %7491 = vmatpush.bf16.msra.mxu0 %v4902
    %7492 = vmatpush.bf16.msra.mxu0 %v4894
    %7493 = vmatpush.bf16.msra.mxu0 %v4886
    %7494 = vmatpush.bf16.msra.mxu0 %v4878
    %7495 = vmatpush.bf16.msra.mxu0 %v4870
    %7496 = vmatmul.bf16.gmra.mxu0 %v674
    %v7497 = vpop.f32.mrf.mxu0
    %v7498 = vadd.f32 %v7485, %v7497
    %v7499 = vpop.f32.mrf.mxu0
    %7500 = vdwg.mxu0
    %7501 = vmatpush.bf16.msra.mxu0 %v4990
    %7502 = vmatpush.bf16.msra.mxu0 %v4982
    %7503 = vmatpush.bf16.msra.mxu0 %v4974
    %7504 = vmatpush.bf16.msra.mxu0 %v4966
    %7505 = vmatpush.bf16.msra.mxu0 %v4958
    %7506 = vmatpush.bf16.msra.mxu0 %v4950
    %7507 = vmatpush.bf16.msra.mxu0 %v4942
    %7508 = vmatpush.bf16.msra.mxu0 %v4934
    %7509 = vmatmul.bf16.gmra.mxu0 %v675
    %v7510 = vpop.f32.mrf.mxu0
    %v7511 = vadd.f32 %v7498, %v7510
    %v7512 = vpop.f32.mrf.mxu0
    %7513 = vdwg.mxu0
    %7514 = vmatpush.bf16.msra.mxu0 %v5054
    %7515 = vmatpush.bf16.msra.mxu0 %v5046
    %7516 = vmatpush.bf16.msra.mxu0 %v5038
    %7517 = vmatpush.bf16.msra.mxu0 %v5030
    %7518 = vmatpush.bf16.msra.mxu0 %v5022
    %7519 = vmatpush.bf16.msra.mxu0 %v5014
    %7520 = vmatpush.bf16.msra.mxu0 %v5006
    %7521 = vmatpush.bf16.msra.mxu0 %v4998
    %7522 = vmatmul.bf16.gmra.mxu0 %v676
    %v7523 = vpop.f32.mrf.mxu0
    %v7524 = vadd.f32 %v7511, %v7523
    %v7525 = vpop.f32.mrf.mxu0
    %7526 = vdwg.mxu0
    %7527 = vmatpush.bf16.msra.mxu0 %v5118
    %7528 = vmatpush.bf16.msra.mxu0 %v5110
    %7529 = vmatpush.bf16.msra.mxu0 %v5102
    %7530 = vmatpush.bf16.msra.mxu0 %v5094
    %7531 = vmatpush.bf16.msra.mxu0 %v5086
    %7532 = vmatpush.bf16.msra.mxu0 %v5078
    %7533 = vmatpush.bf16.msra.mxu0 %v5070
    %7534 = vmatpush.bf16.msra.mxu0 %v5062
    %7535 = vmatmul.bf16.gmra.mxu0 %v677
    %v7536 = vpop.f32.mrf.mxu0
    %v7537 = vadd.f32 %v7524, %v7536
    %v7538 = vpop.f32.mrf.mxu0
    %7539 = vdwg.mxu0
    %7540 = vmatpush.bf16.msra.mxu0 %v5182
    %7541 = vmatpush.bf16.msra.mxu0 %v5174
    %7542 = vmatpush.bf16.msra.mxu0 %v5166
    %7543 = vmatpush.bf16.msra.mxu0 %v5158
    %7544 = vmatpush.bf16.msra.mxu0 %v5150
    %7545 = vmatpush.bf16.msra.mxu0 %v5142
    %7546 = vmatpush.bf16.msra.mxu0 %v5134
    %7547 = vmatpush.bf16.msra.mxu0 %v5126
    %7548 = vmatmul.bf16.gmra.mxu0 %v678
    %v7549 = vpop.f32.mrf.mxu0
    %v7550 = vadd.f32 %v7537, %v7549
    %v7551 = vpop.f32.mrf.mxu0
    %7552 = vdwg.mxu0
    %7553 = vmatpush.bf16.msra.mxu0 %v5246
    %7554 = vmatpush.bf16.msra.mxu0 %v5238
    %7555 = vmatpush.bf16.msra.mxu0 %v5230
    %7556 = vmatpush.bf16.msra.mxu0 %v5222
    %7557 = vmatpush.bf16.msra.mxu0 %v5214
    %7558 = vmatpush.bf16.msra.mxu0 %v5206
    %7559 = vmatpush.bf16.msra.mxu0 %v5198
    %7560 = vmatpush.bf16.msra.mxu0 %v5190
    %7561 = vmatmul.bf16.gmra.mxu0 %v679
    %v7562 = vpop.f32.mrf.mxu0
    %v7563 = vadd.f32 %v7550, %v7562
    %v7564 = vpop.f32.mrf.mxu0
    %7565 = vdwg.mxu0
    %7566 = vmatpush.bf16.msra.mxu0 %v5310
    %7567 = vmatpush.bf16.msra.mxu0 %v5302
    %7568 = vmatpush.bf16.msra.mxu0 %v5294
    %7569 = vmatpush.bf16.msra.mxu0 %v5286
    %7570 = vmatpush.bf16.msra.mxu0 %v5278
    %7571 = vmatpush.bf16.msra.mxu0 %v5270
    %7572 = vmatpush.bf16.msra.mxu0 %v5262
    %7573 = vmatpush.bf16.msra.mxu0 %v5254
    %7574 = vmatmul.bf16.gmra.mxu0 %v680
    %v7575 = vpop.f32.mrf.mxu0
    %v7576 = vadd.f32 %v7563, %v7575
    %v7577 = vpop.f32.mrf.mxu0
    %7578 = vdwg.mxu0
    %7579 = vmatpush.bf16.msra.mxu0 %v5374
    %7580 = vmatpush.bf16.msra.mxu0 %v5366
    %7581 = vmatpush.bf16.msra.mxu0 %v5358
    %7582 = vmatpush.bf16.msra.mxu0 %v5350
    %7583 = vmatpush.bf16.msra.mxu0 %v5342
    %7584 = vmatpush.bf16.msra.mxu0 %v5334
    %7585 = vmatpush.bf16.msra.mxu0 %v5326
    %7586 = vmatpush.bf16.msra.mxu0 %v5318
    %7587 = vmatmul.bf16.gmra.mxu0 %v681
    %v7588 = vpop.f32.mrf.mxu0
    %v7589 = vadd.f32 %v7576, %v7588
    %v7590 = vpop.f32.mrf.mxu0
    %7591 = vdwg.mxu0
    %7592 = vmatpush.bf16.msra.mxu0 %v5438
    %7593 = vmatpush.bf16.msra.mxu0 %v5430
    %7594 = vmatpush.bf16.msra.mxu0 %v5422
    %7595 = vmatpush.bf16.msra.mxu0 %v5414
    %7596 = vmatpush.bf16.msra.mxu0 %v5406
    %7597 = vmatpush.bf16.msra.mxu0 %v5398
    %7598 = vmatpush.bf16.msra.mxu0 %v5390
    %7599 = vmatpush.bf16.msra.mxu0 %v5382
    %7600 = vmatmul.bf16.gmra.mxu0 %v682
    %v7601 = vpop.f32.mrf.mxu0
    %v7602 = vadd.f32 %v7589, %v7601
    %v7603 = vpop.f32.mrf.mxu0
    %7604 = vdwg.mxu0
    %7605 = vmatpush.bf16.msra.mxu0 %v5502
    %7606 = vmatpush.bf16.msra.mxu0 %v5494
    %7607 = vmatpush.bf16.msra.mxu0 %v5486
    %7608 = vmatpush.bf16.msra.mxu0 %v5478
    %7609 = vmatpush.bf16.msra.mxu0 %v5470
    %7610 = vmatpush.bf16.msra.mxu0 %v5462
    %7611 = vmatpush.bf16.msra.mxu0 %v5454
    %7612 = vmatpush.bf16.msra.mxu0 %v5446
    %7613 = vmatmul.bf16.gmra.mxu0 %v683
    %v7614 = vpop.f32.mrf.mxu0
    %v7615 = vadd.f32 %v7602, %v7614
    %v7616 = vpop.f32.mrf.mxu0
    %7617 = vdwg.mxu0
    %7618 = vmatpush.bf16.msra.mxu0 %v5566
    %7619 = vmatpush.bf16.msra.mxu0 %v5558
    %7620 = vmatpush.bf16.msra.mxu0 %v5550
    %7621 = vmatpush.bf16.msra.mxu0 %v5542
    %7622 = vmatpush.bf16.msra.mxu0 %v5534
    %7623 = vmatpush.bf16.msra.mxu0 %v5526
    %7624 = vmatpush.bf16.msra.mxu0 %v5518
    %7625 = vmatpush.bf16.msra.mxu0 %v5510
    %7626 = vmatmul.bf16.gmra.mxu0 %v684
    %v7627 = vpop.f32.mrf.mxu0
    %v7628 = vadd.f32 %v7615, %v7627
    %v7629 = vpop.f32.mrf.mxu0
    %7630 = vdwg.mxu0
    %7631 = vmatpush.bf16.msra.mxu0 %v5630
    %7632 = vmatpush.bf16.msra.mxu0 %v5622
    %7633 = vmatpush.bf16.msra.mxu0 %v5614
    %7634 = vmatpush.bf16.msra.mxu0 %v5606
    %7635 = vmatpush.bf16.msra.mxu0 %v5598
    %7636 = vmatpush.bf16.msra.mxu0 %v5590
    %7637 = vmatpush.bf16.msra.mxu0 %v5582
    %7638 = vmatpush.bf16.msra.mxu0 %v5574
    %7639 = vmatmul.bf16.gmra.mxu0 %v685
    %v7640 = vpop.f32.mrf.mxu0
    %v7641 = vadd.f32 %v7628, %v7640
    %v7642 = vpop.f32.mrf.mxu0
    %7643 = vdwg.mxu0
    %7644 = vmatpush.bf16.msra.mxu0 %v5694
    %7645 = vmatpush.bf16.msra.mxu0 %v5686
    %7646 = vmatpush.bf16.msra.mxu0 %v5678
    %7647 = vmatpush.bf16.msra.mxu0 %v5670
    %7648 = vmatpush.bf16.msra.mxu0 %v5662
    %7649 = vmatpush.bf16.msra.mxu0 %v5654
    %7650 = vmatpush.bf16.msra.mxu0 %v5646
    %7651 = vmatpush.bf16.msra.mxu0 %v5638
    %7652 = vmatmul.bf16.gmra.mxu0 %v686
    %v7653 = vpop.f32.mrf.mxu0
    %v7654 = vadd.f32 %v7641, %v7653
    %v7655 = vpop.f32.mrf.mxu0
    %7656 = vdwg.mxu0
    %7657 = vmatpush.bf16.msra.mxu0 %v5758
    %7658 = vmatpush.bf16.msra.mxu0 %v5750
    %7659 = vmatpush.bf16.msra.mxu0 %v5742
    %7660 = vmatpush.bf16.msra.mxu0 %v5734
    %7661 = vmatpush.bf16.msra.mxu0 %v5726
    %7662 = vmatpush.bf16.msra.mxu0 %v5718
    %7663 = vmatpush.bf16.msra.mxu0 %v5710
    %7664 = vmatpush.bf16.msra.mxu0 %v5702
    %7665 = vmatmul.bf16.gmra.mxu0 %v687
    %v7666 = vpop.f32.mrf.mxu0
    %v7667 = vadd.f32 %v7654, %v7666
    %v7668 = vpop.f32.mrf.mxu0
    %7669 = vdwg.mxu0
    %7670 = vmatpush.bf16.msra.mxu0 %v5822
    %7671 = vmatpush.bf16.msra.mxu0 %v5814
    %7672 = vmatpush.bf16.msra.mxu0 %v5806
    %7673 = vmatpush.bf16.msra.mxu0 %v5798
    %7674 = vmatpush.bf16.msra.mxu0 %v5790
    %7675 = vmatpush.bf16.msra.mxu0 %v5782
    %7676 = vmatpush.bf16.msra.mxu0 %v5774
    %7677 = vmatpush.bf16.msra.mxu0 %v5766
    %7678 = vmatmul.bf16.gmra.mxu0 %v688
    %v7679 = vpop.f32.mrf.mxu0
    %v7680 = vadd.f32 %v7667, %v7679
    %v7681 = vpop.f32.mrf.mxu0
    %7682 = vdwg.mxu0
    %7683 = vmatpush.bf16.msra.mxu0 %v4863
    %7684 = vmatpush.bf16.msra.mxu0 %v4855
    %7685 = vmatpush.bf16.msra.mxu0 %v4847
    %7686 = vmatpush.bf16.msra.mxu0 %v4839
    %7687 = vmatpush.bf16.msra.mxu0 %v4831
    %7688 = vmatpush.bf16.msra.mxu0 %v4823
    %7689 = vmatpush.bf16.msra.mxu0 %v4815
    %7690 = vmatpush.bf16.msra.mxu0 %v4807
    %7691 = vmatmul.bf16.gmra.mxu0 %v673
    %v7692 = vpop.f32.mrf.mxu0
    %v7693 = vadd.f32 %v1719, %v7692
    %v7694 = vpop.f32.mrf.mxu0
    %7695 = vdwg.mxu0
    %7696 = vmatpush.bf16.msra.mxu0 %v4927
    %7697 = vmatpush.bf16.msra.mxu0 %v4919
    %7698 = vmatpush.bf16.msra.mxu0 %v4911
    %7699 = vmatpush.bf16.msra.mxu0 %v4903
    %7700 = vmatpush.bf16.msra.mxu0 %v4895
    %7701 = vmatpush.bf16.msra.mxu0 %v4887
    %7702 = vmatpush.bf16.msra.mxu0 %v4879
    %7703 = vmatpush.bf16.msra.mxu0 %v4871
    %7704 = vmatmul.bf16.gmra.mxu0 %v674
    %v7705 = vpop.f32.mrf.mxu0
    %v7706 = vadd.f32 %v7693, %v7705
    %v7707 = vpop.f32.mrf.mxu0
    %7708 = vdwg.mxu0
    %7709 = vmatpush.bf16.msra.mxu0 %v4991
    %7710 = vmatpush.bf16.msra.mxu0 %v4983
    %7711 = vmatpush.bf16.msra.mxu0 %v4975
    %7712 = vmatpush.bf16.msra.mxu0 %v4967
    %7713 = vmatpush.bf16.msra.mxu0 %v4959
    %7714 = vmatpush.bf16.msra.mxu0 %v4951
    %7715 = vmatpush.bf16.msra.mxu0 %v4943
    %7716 = vmatpush.bf16.msra.mxu0 %v4935
    %7717 = vmatmul.bf16.gmra.mxu0 %v675
    %v7718 = vpop.f32.mrf.mxu0
    %v7719 = vadd.f32 %v7706, %v7718
    %v7720 = vpop.f32.mrf.mxu0
    %7721 = vdwg.mxu0
    %7722 = vmatpush.bf16.msra.mxu0 %v5055
    %7723 = vmatpush.bf16.msra.mxu0 %v5047
    %7724 = vmatpush.bf16.msra.mxu0 %v5039
    %7725 = vmatpush.bf16.msra.mxu0 %v5031
    %7726 = vmatpush.bf16.msra.mxu0 %v5023
    %7727 = vmatpush.bf16.msra.mxu0 %v5015
    %7728 = vmatpush.bf16.msra.mxu0 %v5007
    %7729 = vmatpush.bf16.msra.mxu0 %v4999
    %7730 = vmatmul.bf16.gmra.mxu0 %v676
    %v7731 = vpop.f32.mrf.mxu0
    %v7732 = vadd.f32 %v7719, %v7731
    %v7733 = vpop.f32.mrf.mxu0
    %7734 = vdwg.mxu0
    %7735 = vmatpush.bf16.msra.mxu0 %v5119
    %7736 = vmatpush.bf16.msra.mxu0 %v5111
    %7737 = vmatpush.bf16.msra.mxu0 %v5103
    %7738 = vmatpush.bf16.msra.mxu0 %v5095
    %7739 = vmatpush.bf16.msra.mxu0 %v5087
    %7740 = vmatpush.bf16.msra.mxu0 %v5079
    %7741 = vmatpush.bf16.msra.mxu0 %v5071
    %7742 = vmatpush.bf16.msra.mxu0 %v5063
    %7743 = vmatmul.bf16.gmra.mxu0 %v677
    %v7744 = vpop.f32.mrf.mxu0
    %v7745 = vadd.f32 %v7732, %v7744
    %v7746 = vpop.f32.mrf.mxu0
    %7747 = vdwg.mxu0
    %7748 = vmatpush.bf16.msra.mxu0 %v5183
    %7749 = vmatpush.bf16.msra.mxu0 %v5175
    %7750 = vmatpush.bf16.msra.mxu0 %v5167
    %7751 = vmatpush.bf16.msra.mxu0 %v5159
    %7752 = vmatpush.bf16.msra.mxu0 %v5151
    %7753 = vmatpush.bf16.msra.mxu0 %v5143
    %7754 = vmatpush.bf16.msra.mxu0 %v5135
    %7755 = vmatpush.bf16.msra.mxu0 %v5127
    %7756 = vmatmul.bf16.gmra.mxu0 %v678
    %v7757 = vpop.f32.mrf.mxu0
    %v7758 = vadd.f32 %v7745, %v7757
    %v7759 = vpop.f32.mrf.mxu0
    %7760 = vdwg.mxu0
    %7761 = vmatpush.bf16.msra.mxu0 %v5247
    %7762 = vmatpush.bf16.msra.mxu0 %v5239
    %7763 = vmatpush.bf16.msra.mxu0 %v5231
    %7764 = vmatpush.bf16.msra.mxu0 %v5223
    %7765 = vmatpush.bf16.msra.mxu0 %v5215
    %7766 = vmatpush.bf16.msra.mxu0 %v5207
    %7767 = vmatpush.bf16.msra.mxu0 %v5199
    %7768 = vmatpush.bf16.msra.mxu0 %v5191
    %7769 = vmatmul.bf16.gmra.mxu0 %v679
    %v7770 = vpop.f32.mrf.mxu0
    %v7771 = vadd.f32 %v7758, %v7770
    %v7772 = vpop.f32.mrf.mxu0
    %7773 = vdwg.mxu0
    %7774 = vmatpush.bf16.msra.mxu0 %v5311
    %7775 = vmatpush.bf16.msra.mxu0 %v5303
    %7776 = vmatpush.bf16.msra.mxu0 %v5295
    %7777 = vmatpush.bf16.msra.mxu0 %v5287
    %7778 = vmatpush.bf16.msra.mxu0 %v5279
    %7779 = vmatpush.bf16.msra.mxu0 %v5271
    %7780 = vmatpush.bf16.msra.mxu0 %v5263
    %7781 = vmatpush.bf16.msra.mxu0 %v5255
    %7782 = vmatmul.bf16.gmra.mxu0 %v680
    %v7783 = vpop.f32.mrf.mxu0
    %v7784 = vadd.f32 %v7771, %v7783
    %v7785 = vpop.f32.mrf.mxu0
    %7786 = vdwg.mxu0
    %7787 = vmatpush.bf16.msra.mxu0 %v5375
    %7788 = vmatpush.bf16.msra.mxu0 %v5367
    %7789 = vmatpush.bf16.msra.mxu0 %v5359
    %7790 = vmatpush.bf16.msra.mxu0 %v5351
    %7791 = vmatpush.bf16.msra.mxu0 %v5343
    %7792 = vmatpush.bf16.msra.mxu0 %v5335
    %7793 = vmatpush.bf16.msra.mxu0 %v5327
    %7794 = vmatpush.bf16.msra.mxu0 %v5319
    %7795 = vmatmul.bf16.gmra.mxu0 %v681
    %v7796 = vpop.f32.mrf.mxu0
    %v7797 = vadd.f32 %v7784, %v7796
    %v7798 = vpop.f32.mrf.mxu0
    %7799 = vdwg.mxu0
    %7800 = vmatpush.bf16.msra.mxu0 %v5439
    %7801 = vmatpush.bf16.msra.mxu0 %v5431
    %7802 = vmatpush.bf16.msra.mxu0 %v5423
    %7803 = vmatpush.bf16.msra.mxu0 %v5415
    %7804 = vmatpush.bf16.msra.mxu0 %v5407
    %7805 = vmatpush.bf16.msra.mxu0 %v5399
    %7806 = vmatpush.bf16.msra.mxu0 %v5391
    %7807 = vmatpush.bf16.msra.mxu0 %v5383
    %7808 = vmatmul.bf16.gmra.mxu0 %v682
    %v7809 = vpop.f32.mrf.mxu0
    %v7810 = vadd.f32 %v7797, %v7809
    %v7811 = vpop.f32.mrf.mxu0
    %7812 = vdwg.mxu0
    %7813 = vmatpush.bf16.msra.mxu0 %v5503
    %7814 = vmatpush.bf16.msra.mxu0 %v5495
    %7815 = vmatpush.bf16.msra.mxu0 %v5487
    %7816 = vmatpush.bf16.msra.mxu0 %v5479
    %7817 = vmatpush.bf16.msra.mxu0 %v5471
    %7818 = vmatpush.bf16.msra.mxu0 %v5463
    %7819 = vmatpush.bf16.msra.mxu0 %v5455
    %7820 = vmatpush.bf16.msra.mxu0 %v5447
    %7821 = vmatmul.bf16.gmra.mxu0 %v683
    %v7822 = vpop.f32.mrf.mxu0
    %v7823 = vadd.f32 %v7810, %v7822
    %v7824 = vpop.f32.mrf.mxu0
    %7825 = vdwg.mxu0
    %7826 = vmatpush.bf16.msra.mxu0 %v5567
    %7827 = vmatpush.bf16.msra.mxu0 %v5559
    %7828 = vmatpush.bf16.msra.mxu0 %v5551
    %7829 = vmatpush.bf16.msra.mxu0 %v5543
    %7830 = vmatpush.bf16.msra.mxu0 %v5535
    %7831 = vmatpush.bf16.msra.mxu0 %v5527
    %7832 = vmatpush.bf16.msra.mxu0 %v5519
    %7833 = vmatpush.bf16.msra.mxu0 %v5511
    %7834 = vmatmul.bf16.gmra.mxu0 %v684
    %v7835 = vpop.f32.mrf.mxu0
    %v7836 = vadd.f32 %v7823, %v7835
    %v7837 = vpop.f32.mrf.mxu0
    %7838 = vdwg.mxu0
    %7839 = vmatpush.bf16.msra.mxu0 %v5631
    %7840 = vmatpush.bf16.msra.mxu0 %v5623
    %7841 = vmatpush.bf16.msra.mxu0 %v5615
    %7842 = vmatpush.bf16.msra.mxu0 %v5607
    %7843 = vmatpush.bf16.msra.mxu0 %v5599
    %7844 = vmatpush.bf16.msra.mxu0 %v5591
    %7845 = vmatpush.bf16.msra.mxu0 %v5583
    %7846 = vmatpush.bf16.msra.mxu0 %v5575
    %7847 = vmatmul.bf16.gmra.mxu0 %v685
    %v7848 = vpop.f32.mrf.mxu0
    %v7849 = vadd.f32 %v7836, %v7848
    %v7850 = vpop.f32.mrf.mxu0
    %7851 = vdwg.mxu0
    %7852 = vmatpush.bf16.msra.mxu0 %v5695
    %7853 = vmatpush.bf16.msra.mxu0 %v5687
    %7854 = vmatpush.bf16.msra.mxu0 %v5679
    %7855 = vmatpush.bf16.msra.mxu0 %v5671
    %7856 = vmatpush.bf16.msra.mxu0 %v5663
    %7857 = vmatpush.bf16.msra.mxu0 %v5655
    %7858 = vmatpush.bf16.msra.mxu0 %v5647
    %7859 = vmatpush.bf16.msra.mxu0 %v5639
    %7860 = vmatmul.bf16.gmra.mxu0 %v686
    %v7861 = vpop.f32.mrf.mxu0
    %v7862 = vadd.f32 %v7849, %v7861
    %v7863 = vpop.f32.mrf.mxu0
    %7864 = vdwg.mxu0
    %7865 = vmatpush.bf16.msra.mxu0 %v5759
    %7866 = vmatpush.bf16.msra.mxu0 %v5751
    %7867 = vmatpush.bf16.msra.mxu0 %v5743
    %7868 = vmatpush.bf16.msra.mxu0 %v5735
    %7869 = vmatpush.bf16.msra.mxu0 %v5727
    %7870 = vmatpush.bf16.msra.mxu0 %v5719
    %7871 = vmatpush.bf16.msra.mxu0 %v5711
    %7872 = vmatpush.bf16.msra.mxu0 %v5703
    %7873 = vmatmul.bf16.gmra.mxu0 %v687
    %v7874 = vpop.f32.mrf.mxu0
    %v7875 = vadd.f32 %v7862, %v7874
    %v7876 = vpop.f32.mrf.mxu0
    %7877 = vdwg.mxu0
    %7878 = vmatpush.bf16.msra.mxu0 %v5823
    %7879 = vmatpush.bf16.msra.mxu0 %v5815
    %7880 = vmatpush.bf16.msra.mxu0 %v5807
    %7881 = vmatpush.bf16.msra.mxu0 %v5799
    %7882 = vmatpush.bf16.msra.mxu0 %v5791
    %7883 = vmatpush.bf16.msra.mxu0 %v5783
    %7884 = vmatpush.bf16.msra.mxu0 %v5775
    %7885 = vmatpush.bf16.msra.mxu0 %v5767
    %7886 = vmatmul.bf16.gmra.mxu0 %v688
    %v7887 = vpop.f32.mrf.mxu0
    %v7888 = vadd.f32 %v7875, %v7887
    %v7889 = vpop.f32.mrf.mxu0
    %7890 = vdwg.mxu0
    %7891 = vmatpush.bf16.msra.mxu0 %v4864
    %7892 = vmatpush.bf16.msra.mxu0 %v4856
    %7893 = vmatpush.bf16.msra.mxu0 %v4848
    %7894 = vmatpush.bf16.msra.mxu0 %v4840
    %7895 = vmatpush.bf16.msra.mxu0 %v4832
    %7896 = vmatpush.bf16.msra.mxu0 %v4824
    %7897 = vmatpush.bf16.msra.mxu0 %v4816
    %7898 = vmatpush.bf16.msra.mxu0 %v4808
    %7899 = vmatmul.bf16.gmra.mxu0 %v673
    %v7900 = vpop.f32.mrf.mxu0
    %v7901 = vadd.f32 %v1720, %v7900
    %v7902 = vpop.f32.mrf.mxu0
    %7903 = vdwg.mxu0
    %7904 = vmatpush.bf16.msra.mxu0 %v4928
    %7905 = vmatpush.bf16.msra.mxu0 %v4920
    %7906 = vmatpush.bf16.msra.mxu0 %v4912
    %7907 = vmatpush.bf16.msra.mxu0 %v4904
    %7908 = vmatpush.bf16.msra.mxu0 %v4896
    %7909 = vmatpush.bf16.msra.mxu0 %v4888
    %7910 = vmatpush.bf16.msra.mxu0 %v4880
    %7911 = vmatpush.bf16.msra.mxu0 %v4872
    %7912 = vmatmul.bf16.gmra.mxu0 %v674
    %v7913 = vpop.f32.mrf.mxu0
    %v7914 = vadd.f32 %v7901, %v7913
    %v7915 = vpop.f32.mrf.mxu0
    %7916 = vdwg.mxu0
    %7917 = vmatpush.bf16.msra.mxu0 %v4992
    %7918 = vmatpush.bf16.msra.mxu0 %v4984
    %7919 = vmatpush.bf16.msra.mxu0 %v4976
    %7920 = vmatpush.bf16.msra.mxu0 %v4968
    %7921 = vmatpush.bf16.msra.mxu0 %v4960
    %7922 = vmatpush.bf16.msra.mxu0 %v4952
    %7923 = vmatpush.bf16.msra.mxu0 %v4944
    %7924 = vmatpush.bf16.msra.mxu0 %v4936
    %7925 = vmatmul.bf16.gmra.mxu0 %v675
    %v7926 = vpop.f32.mrf.mxu0
    %v7927 = vadd.f32 %v7914, %v7926
    %v7928 = vpop.f32.mrf.mxu0
    %7929 = vdwg.mxu0
    %7930 = vmatpush.bf16.msra.mxu0 %v5056
    %7931 = vmatpush.bf16.msra.mxu0 %v5048
    %7932 = vmatpush.bf16.msra.mxu0 %v5040
    %7933 = vmatpush.bf16.msra.mxu0 %v5032
    %7934 = vmatpush.bf16.msra.mxu0 %v5024
    %7935 = vmatpush.bf16.msra.mxu0 %v5016
    %7936 = vmatpush.bf16.msra.mxu0 %v5008
    %7937 = vmatpush.bf16.msra.mxu0 %v5000
    %7938 = vmatmul.bf16.gmra.mxu0 %v676
    %v7939 = vpop.f32.mrf.mxu0
    %v7940 = vadd.f32 %v7927, %v7939
    %v7941 = vpop.f32.mrf.mxu0
    %7942 = vdwg.mxu0
    %7943 = vmatpush.bf16.msra.mxu0 %v5120
    %7944 = vmatpush.bf16.msra.mxu0 %v5112
    %7945 = vmatpush.bf16.msra.mxu0 %v5104
    %7946 = vmatpush.bf16.msra.mxu0 %v5096
    %7947 = vmatpush.bf16.msra.mxu0 %v5088
    %7948 = vmatpush.bf16.msra.mxu0 %v5080
    %7949 = vmatpush.bf16.msra.mxu0 %v5072
    %7950 = vmatpush.bf16.msra.mxu0 %v5064
    %7951 = vmatmul.bf16.gmra.mxu0 %v677
    %v7952 = vpop.f32.mrf.mxu0
    %v7953 = vadd.f32 %v7940, %v7952
    %v7954 = vpop.f32.mrf.mxu0
    %7955 = vdwg.mxu0
    %7956 = vmatpush.bf16.msra.mxu0 %v5184
    %7957 = vmatpush.bf16.msra.mxu0 %v5176
    %7958 = vmatpush.bf16.msra.mxu0 %v5168
    %7959 = vmatpush.bf16.msra.mxu0 %v5160
    %7960 = vmatpush.bf16.msra.mxu0 %v5152
    %7961 = vmatpush.bf16.msra.mxu0 %v5144
    %7962 = vmatpush.bf16.msra.mxu0 %v5136
    %7963 = vmatpush.bf16.msra.mxu0 %v5128
    %7964 = vmatmul.bf16.gmra.mxu0 %v678
    %v7965 = vpop.f32.mrf.mxu0
    %v7966 = vadd.f32 %v7953, %v7965
    %v7967 = vpop.f32.mrf.mxu0
    %7968 = vdwg.mxu0
    %7969 = vmatpush.bf16.msra.mxu0 %v5248
    %7970 = vmatpush.bf16.msra.mxu0 %v5240
    %7971 = vmatpush.bf16.msra.mxu0 %v5232
    %7972 = vmatpush.bf16.msra.mxu0 %v5224
    %7973 = vmatpush.bf16.msra.mxu0 %v5216
    %7974 = vmatpush.bf16.msra.mxu0 %v5208
    %7975 = vmatpush.bf16.msra.mxu0 %v5200
    %7976 = vmatpush.bf16.msra.mxu0 %v5192
    %7977 = vmatmul.bf16.gmra.mxu0 %v679
    %v7978 = vpop.f32.mrf.mxu0
    %v7979 = vadd.f32 %v7966, %v7978
    %v7980 = vpop.f32.mrf.mxu0
    %7981 = vdwg.mxu0
    %7982 = vmatpush.bf16.msra.mxu0 %v5312
    %7983 = vmatpush.bf16.msra.mxu0 %v5304
    %7984 = vmatpush.bf16.msra.mxu0 %v5296
    %7985 = vmatpush.bf16.msra.mxu0 %v5288
    %7986 = vmatpush.bf16.msra.mxu0 %v5280
    %7987 = vmatpush.bf16.msra.mxu0 %v5272
    %7988 = vmatpush.bf16.msra.mxu0 %v5264
    %7989 = vmatpush.bf16.msra.mxu0 %v5256
    %7990 = vmatmul.bf16.gmra.mxu0 %v680
    %v7991 = vpop.f32.mrf.mxu0
    %v7992 = vadd.f32 %v7979, %v7991
    %v7993 = vpop.f32.mrf.mxu0
    %7994 = vdwg.mxu0
    %7995 = vmatpush.bf16.msra.mxu0 %v5376
    %7996 = vmatpush.bf16.msra.mxu0 %v5368
    %7997 = vmatpush.bf16.msra.mxu0 %v5360
    %7998 = vmatpush.bf16.msra.mxu0 %v5352
    %7999 = vmatpush.bf16.msra.mxu0 %v5344
    %8000 = vmatpush.bf16.msra.mxu0 %v5336
    %8001 = vmatpush.bf16.msra.mxu0 %v5328
    %8002 = vmatpush.bf16.msra.mxu0 %v5320
    %8003 = vmatmul.bf16.gmra.mxu0 %v681
    %v8004 = vpop.f32.mrf.mxu0
    %v8005 = vadd.f32 %v7992, %v8004
    %v8006 = vpop.f32.mrf.mxu0
    %8007 = vdwg.mxu0
    %8008 = vmatpush.bf16.msra.mxu0 %v5440
    %8009 = vmatpush.bf16.msra.mxu0 %v5432
    %8010 = vmatpush.bf16.msra.mxu0 %v5424
    %8011 = vmatpush.bf16.msra.mxu0 %v5416
    %8012 = vmatpush.bf16.msra.mxu0 %v5408
    %8013 = vmatpush.bf16.msra.mxu0 %v5400
    %8014 = vmatpush.bf16.msra.mxu0 %v5392
    %8015 = vmatpush.bf16.msra.mxu0 %v5384
    %8016 = vmatmul.bf16.gmra.mxu0 %v682
    %v8017 = vpop.f32.mrf.mxu0
    %v8018 = vadd.f32 %v8005, %v8017
    %v8019 = vpop.f32.mrf.mxu0
    %8020 = vdwg.mxu0
    %8021 = vmatpush.bf16.msra.mxu0 %v5504
    %8022 = vmatpush.bf16.msra.mxu0 %v5496
    %8023 = vmatpush.bf16.msra.mxu0 %v5488
    %8024 = vmatpush.bf16.msra.mxu0 %v5480
    %8025 = vmatpush.bf16.msra.mxu0 %v5472
    %8026 = vmatpush.bf16.msra.mxu0 %v5464
    %8027 = vmatpush.bf16.msra.mxu0 %v5456
    %8028 = vmatpush.bf16.msra.mxu0 %v5448
    %8029 = vmatmul.bf16.gmra.mxu0 %v683
    %v8030 = vpop.f32.mrf.mxu0
    %v8031 = vadd.f32 %v8018, %v8030
    %v8032 = vpop.f32.mrf.mxu0
    %8033 = vdwg.mxu0
    %8034 = vmatpush.bf16.msra.mxu0 %v5568
    %8035 = vmatpush.bf16.msra.mxu0 %v5560
    %8036 = vmatpush.bf16.msra.mxu0 %v5552
    %8037 = vmatpush.bf16.msra.mxu0 %v5544
    %8038 = vmatpush.bf16.msra.mxu0 %v5536
    %8039 = vmatpush.bf16.msra.mxu0 %v5528
    %8040 = vmatpush.bf16.msra.mxu0 %v5520
    %8041 = vmatpush.bf16.msra.mxu0 %v5512
    %8042 = vmatmul.bf16.gmra.mxu0 %v684
    %v8043 = vpop.f32.mrf.mxu0
    %v8044 = vadd.f32 %v8031, %v8043
    %v8045 = vpop.f32.mrf.mxu0
    %8046 = vdwg.mxu0
    %8047 = vmatpush.bf16.msra.mxu0 %v5632
    %8048 = vmatpush.bf16.msra.mxu0 %v5624
    %8049 = vmatpush.bf16.msra.mxu0 %v5616
    %8050 = vmatpush.bf16.msra.mxu0 %v5608
    %8051 = vmatpush.bf16.msra.mxu0 %v5600
    %8052 = vmatpush.bf16.msra.mxu0 %v5592
    %8053 = vmatpush.bf16.msra.mxu0 %v5584
    %8054 = vmatpush.bf16.msra.mxu0 %v5576
    %8055 = vmatmul.bf16.gmra.mxu0 %v685
    %v8056 = vpop.f32.mrf.mxu0
    %v8057 = vadd.f32 %v8044, %v8056
    %v8058 = vpop.f32.mrf.mxu0
    %8059 = vdwg.mxu0
    %8060 = vmatpush.bf16.msra.mxu0 %v5696
    %8061 = vmatpush.bf16.msra.mxu0 %v5688
    %8062 = vmatpush.bf16.msra.mxu0 %v5680
    %8063 = vmatpush.bf16.msra.mxu0 %v5672
    %8064 = vmatpush.bf16.msra.mxu0 %v5664
    %8065 = vmatpush.bf16.msra.mxu0 %v5656
    %8066 = vmatpush.bf16.msra.mxu0 %v5648
    %8067 = vmatpush.bf16.msra.mxu0 %v5640
    %8068 = vmatmul.bf16.gmra.mxu0 %v686
    %v8069 = vpop.f32.mrf.mxu0
    %v8070 = vadd.f32 %v8057, %v8069
    %v8071 = vpop.f32.mrf.mxu0
    %8072 = vdwg.mxu0
    %8073 = vmatpush.bf16.msra.mxu0 %v5760
    %8074 = vmatpush.bf16.msra.mxu0 %v5752
    %8075 = vmatpush.bf16.msra.mxu0 %v5744
    %8076 = vmatpush.bf16.msra.mxu0 %v5736
    %8077 = vmatpush.bf16.msra.mxu0 %v5728
    %8078 = vmatpush.bf16.msra.mxu0 %v5720
    %8079 = vmatpush.bf16.msra.mxu0 %v5712
    %8080 = vmatpush.bf16.msra.mxu0 %v5704
    %8081 = vmatmul.bf16.gmra.mxu0 %v687
    %v8082 = vpop.f32.mrf.mxu0
    %v8083 = vadd.f32 %v8070, %v8082
    %v8084 = vpop.f32.mrf.mxu0
    %8085 = vdwg.mxu0
    %8086 = vmatpush.bf16.msra.mxu0 %v5824
    %8087 = vmatpush.bf16.msra.mxu0 %v5816
    %8088 = vmatpush.bf16.msra.mxu0 %v5808
    %8089 = vmatpush.bf16.msra.mxu0 %v5800
    %8090 = vmatpush.bf16.msra.mxu0 %v5792
    %8091 = vmatpush.bf16.msra.mxu0 %v5784
    %8092 = vmatpush.bf16.msra.mxu0 %v5776
    %8093 = vmatpush.bf16.msra.mxu0 %v5768
    %8094 = vmatmul.bf16.gmra.mxu0 %v688
    %v8095 = vpop.f32.mrf.mxu0
    %v8096 = vadd.f32 %v8083, %v8095
    %v8097 = vpop.f32.mrf.mxu0
    %8098 = vdwg.mxu0
    %8099 = vmatpush.bf16.msra.mxu0 %v4865
    %8100 = vmatpush.bf16.msra.mxu0 %v4857
    %8101 = vmatpush.bf16.msra.mxu0 %v4849
    %8102 = vmatpush.bf16.msra.mxu0 %v4841
    %8103 = vmatpush.bf16.msra.mxu0 %v4833
    %8104 = vmatpush.bf16.msra.mxu0 %v4825
    %8105 = vmatpush.bf16.msra.mxu0 %v4817
    %8106 = vmatpush.bf16.msra.mxu0 %v4809
    %8107 = vmatmul.bf16.gmra.mxu0 %v673
    %v8108 = vpop.f32.mrf.mxu0
    %v8109 = vadd.f32 %v1721, %v8108
    %v8110 = vpop.f32.mrf.mxu0
    %8111 = vdwg.mxu0
    %8112 = vmatpush.bf16.msra.mxu0 %v4929
    %8113 = vmatpush.bf16.msra.mxu0 %v4921
    %8114 = vmatpush.bf16.msra.mxu0 %v4913
    %8115 = vmatpush.bf16.msra.mxu0 %v4905
    %8116 = vmatpush.bf16.msra.mxu0 %v4897
    %8117 = vmatpush.bf16.msra.mxu0 %v4889
    %8118 = vmatpush.bf16.msra.mxu0 %v4881
    %8119 = vmatpush.bf16.msra.mxu0 %v4873
    %8120 = vmatmul.bf16.gmra.mxu0 %v674
    %v8121 = vpop.f32.mrf.mxu0
    %v8122 = vadd.f32 %v8109, %v8121
    %v8123 = vpop.f32.mrf.mxu0
    %8124 = vdwg.mxu0
    %8125 = vmatpush.bf16.msra.mxu0 %v4993
    %8126 = vmatpush.bf16.msra.mxu0 %v4985
    %8127 = vmatpush.bf16.msra.mxu0 %v4977
    %8128 = vmatpush.bf16.msra.mxu0 %v4969
    %8129 = vmatpush.bf16.msra.mxu0 %v4961
    %8130 = vmatpush.bf16.msra.mxu0 %v4953
    %8131 = vmatpush.bf16.msra.mxu0 %v4945
    %8132 = vmatpush.bf16.msra.mxu0 %v4937
    %8133 = vmatmul.bf16.gmra.mxu0 %v675
    %v8134 = vpop.f32.mrf.mxu0
    %v8135 = vadd.f32 %v8122, %v8134
    %v8136 = vpop.f32.mrf.mxu0
    %8137 = vdwg.mxu0
    %8138 = vmatpush.bf16.msra.mxu0 %v5057
    %8139 = vmatpush.bf16.msra.mxu0 %v5049
    %8140 = vmatpush.bf16.msra.mxu0 %v5041
    %8141 = vmatpush.bf16.msra.mxu0 %v5033
    %8142 = vmatpush.bf16.msra.mxu0 %v5025
    %8143 = vmatpush.bf16.msra.mxu0 %v5017
    %8144 = vmatpush.bf16.msra.mxu0 %v5009
    %8145 = vmatpush.bf16.msra.mxu0 %v5001
    %8146 = vmatmul.bf16.gmra.mxu0 %v676
    %v8147 = vpop.f32.mrf.mxu0
    %v8148 = vadd.f32 %v8135, %v8147
    %v8149 = vpop.f32.mrf.mxu0
    %8150 = vdwg.mxu0
    %8151 = vmatpush.bf16.msra.mxu0 %v5121
    %8152 = vmatpush.bf16.msra.mxu0 %v5113
    %8153 = vmatpush.bf16.msra.mxu0 %v5105
    %8154 = vmatpush.bf16.msra.mxu0 %v5097
    %8155 = vmatpush.bf16.msra.mxu0 %v5089
    %8156 = vmatpush.bf16.msra.mxu0 %v5081
    %8157 = vmatpush.bf16.msra.mxu0 %v5073
    %8158 = vmatpush.bf16.msra.mxu0 %v5065
    %8159 = vmatmul.bf16.gmra.mxu0 %v677
    %v8160 = vpop.f32.mrf.mxu0
    %v8161 = vadd.f32 %v8148, %v8160
    %v8162 = vpop.f32.mrf.mxu0
    %8163 = vdwg.mxu0
    %8164 = vmatpush.bf16.msra.mxu0 %v5185
    %8165 = vmatpush.bf16.msra.mxu0 %v5177
    %8166 = vmatpush.bf16.msra.mxu0 %v5169
    %8167 = vmatpush.bf16.msra.mxu0 %v5161
    %8168 = vmatpush.bf16.msra.mxu0 %v5153
    %8169 = vmatpush.bf16.msra.mxu0 %v5145
    %8170 = vmatpush.bf16.msra.mxu0 %v5137
    %8171 = vmatpush.bf16.msra.mxu0 %v5129
    %8172 = vmatmul.bf16.gmra.mxu0 %v678
    %v8173 = vpop.f32.mrf.mxu0
    %v8174 = vadd.f32 %v8161, %v8173
    %v8175 = vpop.f32.mrf.mxu0
    %8176 = vdwg.mxu0
    %8177 = vmatpush.bf16.msra.mxu0 %v5249
    %8178 = vmatpush.bf16.msra.mxu0 %v5241
    %8179 = vmatpush.bf16.msra.mxu0 %v5233
    %8180 = vmatpush.bf16.msra.mxu0 %v5225
    %8181 = vmatpush.bf16.msra.mxu0 %v5217
    %8182 = vmatpush.bf16.msra.mxu0 %v5209
    %8183 = vmatpush.bf16.msra.mxu0 %v5201
    %8184 = vmatpush.bf16.msra.mxu0 %v5193
    %8185 = vmatmul.bf16.gmra.mxu0 %v679
    %v8186 = vpop.f32.mrf.mxu0
    %v8187 = vadd.f32 %v8174, %v8186
    %v8188 = vpop.f32.mrf.mxu0
    %8189 = vdwg.mxu0
    %8190 = vmatpush.bf16.msra.mxu0 %v5313
    %8191 = vmatpush.bf16.msra.mxu0 %v5305
    %8192 = vmatpush.bf16.msra.mxu0 %v5297
    %8193 = vmatpush.bf16.msra.mxu0 %v5289
    %8194 = vmatpush.bf16.msra.mxu0 %v5281
    %8195 = vmatpush.bf16.msra.mxu0 %v5273
    %8196 = vmatpush.bf16.msra.mxu0 %v5265
    %8197 = vmatpush.bf16.msra.mxu0 %v5257
    %8198 = vmatmul.bf16.gmra.mxu0 %v680
    %v8199 = vpop.f32.mrf.mxu0
    %v8200 = vadd.f32 %v8187, %v8199
    %v8201 = vpop.f32.mrf.mxu0
    %8202 = vdwg.mxu0
    %8203 = vmatpush.bf16.msra.mxu0 %v5377
    %8204 = vmatpush.bf16.msra.mxu0 %v5369
    %8205 = vmatpush.bf16.msra.mxu0 %v5361
    %8206 = vmatpush.bf16.msra.mxu0 %v5353
    %8207 = vmatpush.bf16.msra.mxu0 %v5345
    %8208 = vmatpush.bf16.msra.mxu0 %v5337
    %8209 = vmatpush.bf16.msra.mxu0 %v5329
    %8210 = vmatpush.bf16.msra.mxu0 %v5321
    %8211 = vmatmul.bf16.gmra.mxu0 %v681
    %v8212 = vpop.f32.mrf.mxu0
    %v8213 = vadd.f32 %v8200, %v8212
    %v8214 = vpop.f32.mrf.mxu0
    %8215 = vdwg.mxu0
    %8216 = vmatpush.bf16.msra.mxu0 %v5441
    %8217 = vmatpush.bf16.msra.mxu0 %v5433
    %8218 = vmatpush.bf16.msra.mxu0 %v5425
    %8219 = vmatpush.bf16.msra.mxu0 %v5417
    %8220 = vmatpush.bf16.msra.mxu0 %v5409
    %8221 = vmatpush.bf16.msra.mxu0 %v5401
    %8222 = vmatpush.bf16.msra.mxu0 %v5393
    %8223 = vmatpush.bf16.msra.mxu0 %v5385
    %8224 = vmatmul.bf16.gmra.mxu0 %v682
    %v8225 = vpop.f32.mrf.mxu0
    %v8226 = vadd.f32 %v8213, %v8225
    %v8227 = vpop.f32.mrf.mxu0
    %8228 = vdwg.mxu0
    %8229 = vmatpush.bf16.msra.mxu0 %v5505
    %8230 = vmatpush.bf16.msra.mxu0 %v5497
    %8231 = vmatpush.bf16.msra.mxu0 %v5489
    %8232 = vmatpush.bf16.msra.mxu0 %v5481
    %8233 = vmatpush.bf16.msra.mxu0 %v5473
    %8234 = vmatpush.bf16.msra.mxu0 %v5465
    %8235 = vmatpush.bf16.msra.mxu0 %v5457
    %8236 = vmatpush.bf16.msra.mxu0 %v5449
    %8237 = vmatmul.bf16.gmra.mxu0 %v683
    %v8238 = vpop.f32.mrf.mxu0
    %v8239 = vadd.f32 %v8226, %v8238
    %v8240 = vpop.f32.mrf.mxu0
    %8241 = vdwg.mxu0
    %8242 = vmatpush.bf16.msra.mxu0 %v5569
    %8243 = vmatpush.bf16.msra.mxu0 %v5561
    %8244 = vmatpush.bf16.msra.mxu0 %v5553
    %8245 = vmatpush.bf16.msra.mxu0 %v5545
    %8246 = vmatpush.bf16.msra.mxu0 %v5537
    %8247 = vmatpush.bf16.msra.mxu0 %v5529
    %8248 = vmatpush.bf16.msra.mxu0 %v5521
    %8249 = vmatpush.bf16.msra.mxu0 %v5513
    %8250 = vmatmul.bf16.gmra.mxu0 %v684
    %v8251 = vpop.f32.mrf.mxu0
    %v8252 = vadd.f32 %v8239, %v8251
    %v8253 = vpop.f32.mrf.mxu0
    %8254 = vdwg.mxu0
    %8255 = vmatpush.bf16.msra.mxu0 %v5633
    %8256 = vmatpush.bf16.msra.mxu0 %v5625
    %8257 = vmatpush.bf16.msra.mxu0 %v5617
    %8258 = vmatpush.bf16.msra.mxu0 %v5609
    %8259 = vmatpush.bf16.msra.mxu0 %v5601
    %8260 = vmatpush.bf16.msra.mxu0 %v5593
    %8261 = vmatpush.bf16.msra.mxu0 %v5585
    %8262 = vmatpush.bf16.msra.mxu0 %v5577
    %8263 = vmatmul.bf16.gmra.mxu0 %v685
    %v8264 = vpop.f32.mrf.mxu0
    %v8265 = vadd.f32 %v8252, %v8264
    %v8266 = vpop.f32.mrf.mxu0
    %8267 = vdwg.mxu0
    %8268 = vmatpush.bf16.msra.mxu0 %v5697
    %8269 = vmatpush.bf16.msra.mxu0 %v5689
    %8270 = vmatpush.bf16.msra.mxu0 %v5681
    %8271 = vmatpush.bf16.msra.mxu0 %v5673
    %8272 = vmatpush.bf16.msra.mxu0 %v5665
    %8273 = vmatpush.bf16.msra.mxu0 %v5657
    %8274 = vmatpush.bf16.msra.mxu0 %v5649
    %8275 = vmatpush.bf16.msra.mxu0 %v5641
    %8276 = vmatmul.bf16.gmra.mxu0 %v686
    %v8277 = vpop.f32.mrf.mxu0
    %v8278 = vadd.f32 %v8265, %v8277
    %v8279 = vpop.f32.mrf.mxu0
    %8280 = vdwg.mxu0
    %8281 = vmatpush.bf16.msra.mxu0 %v5761
    %8282 = vmatpush.bf16.msra.mxu0 %v5753
    %8283 = vmatpush.bf16.msra.mxu0 %v5745
    %8284 = vmatpush.bf16.msra.mxu0 %v5737
    %8285 = vmatpush.bf16.msra.mxu0 %v5729
    %8286 = vmatpush.bf16.msra.mxu0 %v5721
    %8287 = vmatpush.bf16.msra.mxu0 %v5713
    %8288 = vmatpush.bf16.msra.mxu0 %v5705
    %8289 = vmatmul.bf16.gmra.mxu0 %v687
    %v8290 = vpop.f32.mrf.mxu0
    %v8291 = vadd.f32 %v8278, %v8290
    %v8292 = vpop.f32.mrf.mxu0
    %8293 = vdwg.mxu0
    %8294 = vmatpush.bf16.msra.mxu0 %v5825
    %8295 = vmatpush.bf16.msra.mxu0 %v5817
    %8296 = vmatpush.bf16.msra.mxu0 %v5809
    %8297 = vmatpush.bf16.msra.mxu0 %v5801
    %8298 = vmatpush.bf16.msra.mxu0 %v5793
    %8299 = vmatpush.bf16.msra.mxu0 %v5785
    %8300 = vmatpush.bf16.msra.mxu0 %v5777
    %8301 = vmatpush.bf16.msra.mxu0 %v5769
    %8302 = vmatmul.bf16.gmra.mxu0 %v688
    %v8303 = vpop.f32.mrf.mxu0
    %v8304 = vadd.f32 %v8291, %v8303
    %v8305 = vpop.f32.mrf.mxu0
    %8306 = vdwg.mxu0
    %8307 = vmatpush.bf16.msra.mxu0 %v4866
    %8308 = vmatpush.bf16.msra.mxu0 %v4858
    %8309 = vmatpush.bf16.msra.mxu0 %v4850
    %8310 = vmatpush.bf16.msra.mxu0 %v4842
    %8311 = vmatpush.bf16.msra.mxu0 %v4834
    %8312 = vmatpush.bf16.msra.mxu0 %v4826
    %8313 = vmatpush.bf16.msra.mxu0 %v4818
    %8314 = vmatpush.bf16.msra.mxu0 %v4810
    %8315 = vmatmul.bf16.gmra.mxu0 %v673
    %v8316 = vpop.f32.mrf.mxu0
    %v8317 = vadd.f32 %v1722, %v8316
    %v8318 = vpop.f32.mrf.mxu0
    %8319 = vdwg.mxu0
    %8320 = vmatpush.bf16.msra.mxu0 %v4930
    %8321 = vmatpush.bf16.msra.mxu0 %v4922
    %8322 = vmatpush.bf16.msra.mxu0 %v4914
    %8323 = vmatpush.bf16.msra.mxu0 %v4906
    %8324 = vmatpush.bf16.msra.mxu0 %v4898
    %8325 = vmatpush.bf16.msra.mxu0 %v4890
    %8326 = vmatpush.bf16.msra.mxu0 %v4882
    %8327 = vmatpush.bf16.msra.mxu0 %v4874
    %8328 = vmatmul.bf16.gmra.mxu0 %v674
    %v8329 = vpop.f32.mrf.mxu0
    %v8330 = vadd.f32 %v8317, %v8329
    %v8331 = vpop.f32.mrf.mxu0
    %8332 = vdwg.mxu0
    %8333 = vmatpush.bf16.msra.mxu0 %v4994
    %8334 = vmatpush.bf16.msra.mxu0 %v4986
    %8335 = vmatpush.bf16.msra.mxu0 %v4978
    %8336 = vmatpush.bf16.msra.mxu0 %v4970
    %8337 = vmatpush.bf16.msra.mxu0 %v4962
    %8338 = vmatpush.bf16.msra.mxu0 %v4954
    %8339 = vmatpush.bf16.msra.mxu0 %v4946
    %8340 = vmatpush.bf16.msra.mxu0 %v4938
    %8341 = vmatmul.bf16.gmra.mxu0 %v675
    %v8342 = vpop.f32.mrf.mxu0
    %v8343 = vadd.f32 %v8330, %v8342
    %v8344 = vpop.f32.mrf.mxu0
    %8345 = vdwg.mxu0
    %8346 = vmatpush.bf16.msra.mxu0 %v5058
    %8347 = vmatpush.bf16.msra.mxu0 %v5050
    %8348 = vmatpush.bf16.msra.mxu0 %v5042
    %8349 = vmatpush.bf16.msra.mxu0 %v5034
    %8350 = vmatpush.bf16.msra.mxu0 %v5026
    %8351 = vmatpush.bf16.msra.mxu0 %v5018
    %8352 = vmatpush.bf16.msra.mxu0 %v5010
    %8353 = vmatpush.bf16.msra.mxu0 %v5002
    %8354 = vmatmul.bf16.gmra.mxu0 %v676
    %v8355 = vpop.f32.mrf.mxu0
    %v8356 = vadd.f32 %v8343, %v8355
    %v8357 = vpop.f32.mrf.mxu0
    %8358 = vdwg.mxu0
    %8359 = vmatpush.bf16.msra.mxu0 %v5122
    %8360 = vmatpush.bf16.msra.mxu0 %v5114
    %8361 = vmatpush.bf16.msra.mxu0 %v5106
    %8362 = vmatpush.bf16.msra.mxu0 %v5098
    %8363 = vmatpush.bf16.msra.mxu0 %v5090
    %8364 = vmatpush.bf16.msra.mxu0 %v5082
    %8365 = vmatpush.bf16.msra.mxu0 %v5074
    %8366 = vmatpush.bf16.msra.mxu0 %v5066
    %8367 = vmatmul.bf16.gmra.mxu0 %v677
    %v8368 = vpop.f32.mrf.mxu0
    %v8369 = vadd.f32 %v8356, %v8368
    %v8370 = vpop.f32.mrf.mxu0
    %8371 = vdwg.mxu0
    %8372 = vmatpush.bf16.msra.mxu0 %v5186
    %8373 = vmatpush.bf16.msra.mxu0 %v5178
    %8374 = vmatpush.bf16.msra.mxu0 %v5170
    %8375 = vmatpush.bf16.msra.mxu0 %v5162
    %8376 = vmatpush.bf16.msra.mxu0 %v5154
    %8377 = vmatpush.bf16.msra.mxu0 %v5146
    %8378 = vmatpush.bf16.msra.mxu0 %v5138
    %8379 = vmatpush.bf16.msra.mxu0 %v5130
    %8380 = vmatmul.bf16.gmra.mxu0 %v678
    %v8381 = vpop.f32.mrf.mxu0
    %v8382 = vadd.f32 %v8369, %v8381
    %v8383 = vpop.f32.mrf.mxu0
    %8384 = vdwg.mxu0
    %8385 = vmatpush.bf16.msra.mxu0 %v5250
    %8386 = vmatpush.bf16.msra.mxu0 %v5242
    %8387 = vmatpush.bf16.msra.mxu0 %v5234
    %8388 = vmatpush.bf16.msra.mxu0 %v5226
    %8389 = vmatpush.bf16.msra.mxu0 %v5218
    %8390 = vmatpush.bf16.msra.mxu0 %v5210
    %8391 = vmatpush.bf16.msra.mxu0 %v5202
    %8392 = vmatpush.bf16.msra.mxu0 %v5194
    %8393 = vmatmul.bf16.gmra.mxu0 %v679
    %v8394 = vpop.f32.mrf.mxu0
    %v8395 = vadd.f32 %v8382, %v8394
    %v8396 = vpop.f32.mrf.mxu0
    %8397 = vdwg.mxu0
    %8398 = vmatpush.bf16.msra.mxu0 %v5314
    %8399 = vmatpush.bf16.msra.mxu0 %v5306
    %8400 = vmatpush.bf16.msra.mxu0 %v5298
    %8401 = vmatpush.bf16.msra.mxu0 %v5290
    %8402 = vmatpush.bf16.msra.mxu0 %v5282
    %8403 = vmatpush.bf16.msra.mxu0 %v5274
    %8404 = vmatpush.bf16.msra.mxu0 %v5266
    %8405 = vmatpush.bf16.msra.mxu0 %v5258
    %8406 = vmatmul.bf16.gmra.mxu0 %v680
    %v8407 = vpop.f32.mrf.mxu0
    %v8408 = vadd.f32 %v8395, %v8407
    %v8409 = vpop.f32.mrf.mxu0
    %8410 = vdwg.mxu0
    %8411 = vmatpush.bf16.msra.mxu0 %v5378
    %8412 = vmatpush.bf16.msra.mxu0 %v5370
    %8413 = vmatpush.bf16.msra.mxu0 %v5362
    %8414 = vmatpush.bf16.msra.mxu0 %v5354
    %8415 = vmatpush.bf16.msra.mxu0 %v5346
    %8416 = vmatpush.bf16.msra.mxu0 %v5338
    %8417 = vmatpush.bf16.msra.mxu0 %v5330
    %8418 = vmatpush.bf16.msra.mxu0 %v5322
    %8419 = vmatmul.bf16.gmra.mxu0 %v681
    %v8420 = vpop.f32.mrf.mxu0
    %v8421 = vadd.f32 %v8408, %v8420
    %v8422 = vpop.f32.mrf.mxu0
    %8423 = vdwg.mxu0
    %8424 = vmatpush.bf16.msra.mxu0 %v5442
    %8425 = vmatpush.bf16.msra.mxu0 %v5434
    %8426 = vmatpush.bf16.msra.mxu0 %v5426
    %8427 = vmatpush.bf16.msra.mxu0 %v5418
    %8428 = vmatpush.bf16.msra.mxu0 %v5410
    %8429 = vmatpush.bf16.msra.mxu0 %v5402
    %8430 = vmatpush.bf16.msra.mxu0 %v5394
    %8431 = vmatpush.bf16.msra.mxu0 %v5386
    %8432 = vmatmul.bf16.gmra.mxu0 %v682
    %v8433 = vpop.f32.mrf.mxu0
    %v8434 = vadd.f32 %v8421, %v8433
    %v8435 = vpop.f32.mrf.mxu0
    %8436 = vdwg.mxu0
    %8437 = vmatpush.bf16.msra.mxu0 %v5506
    %8438 = vmatpush.bf16.msra.mxu0 %v5498
    %8439 = vmatpush.bf16.msra.mxu0 %v5490
    %8440 = vmatpush.bf16.msra.mxu0 %v5482
    %8441 = vmatpush.bf16.msra.mxu0 %v5474
    %8442 = vmatpush.bf16.msra.mxu0 %v5466
    %8443 = vmatpush.bf16.msra.mxu0 %v5458
    %8444 = vmatpush.bf16.msra.mxu0 %v5450
    %8445 = vmatmul.bf16.gmra.mxu0 %v683
    %v8446 = vpop.f32.mrf.mxu0
    %v8447 = vadd.f32 %v8434, %v8446
    %v8448 = vpop.f32.mrf.mxu0
    %8449 = vdwg.mxu0
    %8450 = vmatpush.bf16.msra.mxu0 %v5570
    %8451 = vmatpush.bf16.msra.mxu0 %v5562
    %8452 = vmatpush.bf16.msra.mxu0 %v5554
    %8453 = vmatpush.bf16.msra.mxu0 %v5546
    %8454 = vmatpush.bf16.msra.mxu0 %v5538
    %8455 = vmatpush.bf16.msra.mxu0 %v5530
    %8456 = vmatpush.bf16.msra.mxu0 %v5522
    %8457 = vmatpush.bf16.msra.mxu0 %v5514
    %8458 = vmatmul.bf16.gmra.mxu0 %v684
    %v8459 = vpop.f32.mrf.mxu0
    %v8460 = vadd.f32 %v8447, %v8459
    %v8461 = vpop.f32.mrf.mxu0
    %8462 = vdwg.mxu0
    %8463 = vmatpush.bf16.msra.mxu0 %v5634
    %8464 = vmatpush.bf16.msra.mxu0 %v5626
    %8465 = vmatpush.bf16.msra.mxu0 %v5618
    %8466 = vmatpush.bf16.msra.mxu0 %v5610
    %8467 = vmatpush.bf16.msra.mxu0 %v5602
    %8468 = vmatpush.bf16.msra.mxu0 %v5594
    %8469 = vmatpush.bf16.msra.mxu0 %v5586
    %8470 = vmatpush.bf16.msra.mxu0 %v5578
    %8471 = vmatmul.bf16.gmra.mxu0 %v685
    %v8472 = vpop.f32.mrf.mxu0
    %v8473 = vadd.f32 %v8460, %v8472
    %v8474 = vpop.f32.mrf.mxu0
    %8475 = vdwg.mxu0
    %8476 = vmatpush.bf16.msra.mxu0 %v5698
    %8477 = vmatpush.bf16.msra.mxu0 %v5690
    %8478 = vmatpush.bf16.msra.mxu0 %v5682
    %8479 = vmatpush.bf16.msra.mxu0 %v5674
    %8480 = vmatpush.bf16.msra.mxu0 %v5666
    %8481 = vmatpush.bf16.msra.mxu0 %v5658
    %8482 = vmatpush.bf16.msra.mxu0 %v5650
    %8483 = vmatpush.bf16.msra.mxu0 %v5642
    %8484 = vmatmul.bf16.gmra.mxu0 %v686
    %v8485 = vpop.f32.mrf.mxu0
    %v8486 = vadd.f32 %v8473, %v8485
    %v8487 = vpop.f32.mrf.mxu0
    %8488 = vdwg.mxu0
    %8489 = vmatpush.bf16.msra.mxu0 %v5762
    %8490 = vmatpush.bf16.msra.mxu0 %v5754
    %8491 = vmatpush.bf16.msra.mxu0 %v5746
    %8492 = vmatpush.bf16.msra.mxu0 %v5738
    %8493 = vmatpush.bf16.msra.mxu0 %v5730
    %8494 = vmatpush.bf16.msra.mxu0 %v5722
    %8495 = vmatpush.bf16.msra.mxu0 %v5714
    %8496 = vmatpush.bf16.msra.mxu0 %v5706
    %8497 = vmatmul.bf16.gmra.mxu0 %v687
    %v8498 = vpop.f32.mrf.mxu0
    %v8499 = vadd.f32 %v8486, %v8498
    %v8500 = vpop.f32.mrf.mxu0
    %8501 = vdwg.mxu0
    %8502 = vmatpush.bf16.msra.mxu0 %v5826
    %8503 = vmatpush.bf16.msra.mxu0 %v5818
    %8504 = vmatpush.bf16.msra.mxu0 %v5810
    %8505 = vmatpush.bf16.msra.mxu0 %v5802
    %8506 = vmatpush.bf16.msra.mxu0 %v5794
    %8507 = vmatpush.bf16.msra.mxu0 %v5786
    %8508 = vmatpush.bf16.msra.mxu0 %v5778
    %8509 = vmatpush.bf16.msra.mxu0 %v5770
    %8510 = vmatmul.bf16.gmra.mxu0 %v688
    %v8511 = vpop.f32.mrf.mxu0
    %v8512 = vadd.f32 %v8499, %v8511
    %v8513 = vpop.f32.mrf.mxu0
    %8514 = vdwg.mxu0
    %v8515 = vmax.f32 %v7056, 0.0
    %v8516 = vmax.f32 %v7264, 0.0
    %v8517 = vmax.f32 %v7472, 0.0
    %v8518 = vmax.f32 %v7680, 0.0
    %v8519 = vmax.f32 %v7888, 0.0
    %v8520 = vmax.f32 %v8096, 0.0
    %v8521 = vmax.f32 %v8304, 0.0
    %v8522 = vmax.f32 %v8512, 0.0
    %v8523 = vpack.c.bf16 %v8515, %v8515
    %v8524 = vpack.c.bf16 %v8516, %v8516
    %v8525 = vpack.c.bf16 %v8517, %v8517
    %v8526 = vpack.c.bf16 %v8518, %v8518
    %v8527 = vpack.c.bf16 %v8519, %v8519
    %v8528 = vpack.c.bf16 %v8520, %v8520
    %v8529 = vpack.c.bf16 %v8521, %v8521
    %v8530 = vpack.c.bf16 %v8522, %v8522
    %v8531 = vld [vmem:[#allocation10] sm:$0xff]
    %v8532 = vld [vmem:[#allocation10 + $0x8] sm:$0xff]
    %v8533 = vld [vmem:[#allocation10 + $0x10] sm:$0xff]
    %v8534 = vld [vmem:[#allocation10 + $0x18] sm:$0xff]
    %v8535 = vld [vmem:[#allocation10 + $0x20] sm:$0xff]
    %v8536 = vld [vmem:[#allocation10 + $0x28] sm:$0xff]
    %v8537 = vld [vmem:[#allocation10 + $0x30] sm:$0xff]
    %v8538 = vld [vmem:[#allocation10 + $0x38] sm:$0xff]
    %v8539 = vld [vmem:[#allocation10 + $0x40] sm:$0xff]
    %v8540 = vld [vmem:[#allocation10 + $0x48] sm:$0xff]
    %v8541 = vld [vmem:[#allocation10 + $0x50] sm:$0xff]
    %v8542 = vld [vmem:[#allocation10 + $0x58] sm:$0xff]
    %v8543 = vld [vmem:[#allocation10 + $0x60] sm:$0xff]
    %v8544 = vld [vmem:[#allocation10 + $0x68] sm:$0xff]
    %v8545 = vld [vmem:[#allocation10 + $0x70] sm:$0xff]
    %v8546 = vld [vmem:[#allocation10 + $0x78] sm:$0xff]
    %v8547 = vld [vmem:[#allocation10 + $0x80] sm:$0xff]
    %v8548 = vld [vmem:[#allocation10 + $0x88] sm:$0xff]
    %v8549 = vld [vmem:[#allocation10 + $0x90] sm:$0xff]
    %v8550 = vld [vmem:[#allocation10 + $0x98] sm:$0xff]
    %v8551 = vld [vmem:[#allocation10 + $0xa0] sm:$0xff]
    %v8552 = vld [vmem:[#allocation10 + $0xa8] sm:$0xff]
    %v8553 = vld [vmem:[#allocation10 + $0xb0] sm:$0xff]
    %v8554 = vld [vmem:[#allocation10 + $0xb8] sm:$0xff]
    %v8555 = vld [vmem:[#allocation10 + $0xc0] sm:$0xff]
    %v8556 = vld [vmem:[#allocation10 + $0xc8] sm:$0xff]
    %v8557 = vld [vmem:[#allocation10 + $0xd0] sm:$0xff]
    %v8558 = vld [vmem:[#allocation10 + $0xd8] sm:$0xff]
    %v8559 = vld [vmem:[#allocation10 + $0xe0] sm:$0xff]
    %v8560 = vld [vmem:[#allocation10 + $0xe8] sm:$0xff]
    %v8561 = vld [vmem:[#allocation10 + $0xf0] sm:$0xff]
    %v8562 = vld [vmem:[#allocation10 + $0xf8] sm:$0xff]
    %v8563 = vld [vmem:[#allocation10 + $0x100] sm:$0xff]
    %v8564 = vld [vmem:[#allocation10 + $0x108] sm:$0xff]
    %v8565 = vld [vmem:[#allocation10 + $0x110] sm:$0xff]
    %v8566 = vld [vmem:[#allocation10 + $0x118] sm:$0xff]
    %v8567 = vld [vmem:[#allocation10 + $0x120] sm:$0xff]
    %v8568 = vld [vmem:[#allocation10 + $0x128] sm:$0xff]
    %v8569 = vld [vmem:[#allocation10 + $0x130] sm:$0xff]
    %v8570 = vld [vmem:[#allocation10 + $0x138] sm:$0xff]
    %v8571 = vld [vmem:[#allocation10 + $0x140] sm:$0xff]
    %v8572 = vld [vmem:[#allocation10 + $0x148] sm:$0xff]
    %v8573 = vld [vmem:[#allocation10 + $0x150] sm:$0xff]
    %v8574 = vld [vmem:[#allocation10 + $0x158] sm:$0xff]
    %v8575 = vld [vmem:[#allocation10 + $0x160] sm:$0xff]
    %v8576 = vld [vmem:[#allocation10 + $0x168] sm:$0xff]
    %v8577 = vld [vmem:[#allocation10 + $0x170] sm:$0xff]
    %v8578 = vld [vmem:[#allocation10 + $0x178] sm:$0xff]
    %v8579 = vld [vmem:[#allocation10 + $0x180] sm:$0xff]
    %v8580 = vld [vmem:[#allocation10 + $0x188] sm:$0xff]
    %v8581 = vld [vmem:[#allocation10 + $0x190] sm:$0xff]
    %v8582 = vld [vmem:[#allocation10 + $0x198] sm:$0xff]
    %v8583 = vld [vmem:[#allocation10 + $0x1a0] sm:$0xff]
    %v8584 = vld [vmem:[#allocation10 + $0x1a8] sm:$0xff]
    %v8585 = vld [vmem:[#allocation10 + $0x1b0] sm:$0xff]
    %v8586 = vld [vmem:[#allocation10 + $0x1b8] sm:$0xff]
    %v8587 = vld [vmem:[#allocation10 + $0x1c0] sm:$0xff]
    %v8588 = vld [vmem:[#allocation10 + $0x1c8] sm:$0xff]
    %v8589 = vld [vmem:[#allocation10 + $0x1d0] sm:$0xff]
    %v8590 = vld [vmem:[#allocation10 + $0x1d8] sm:$0xff]
    %v8591 = vld [vmem:[#allocation10 + $0x1e0] sm:$0xff]
    %v8592 = vld [vmem:[#allocation10 + $0x1e8] sm:$0xff]
    %v8593 = vld [vmem:[#allocation10 + $0x1f0] sm:$0xff]
    %v8594 = vld [vmem:[#allocation10 + $0x1f8] sm:$0xff]
    %v8595 = vld [vmem:[#allocation10 + $0x200] sm:$0xff]
    %v8596 = vld [vmem:[#allocation10 + $0x208] sm:$0xff]
    %v8597 = vld [vmem:[#allocation10 + $0x210] sm:$0xff]
    %v8598 = vld [vmem:[#allocation10 + $0x218] sm:$0xff]
    %v8599 = vld [vmem:[#allocation10 + $0x220] sm:$0xff]
    %v8600 = vld [vmem:[#allocation10 + $0x228] sm:$0xff]
    %v8601 = vld [vmem:[#allocation10 + $0x230] sm:$0xff]
    %v8602 = vld [vmem:[#allocation10 + $0x238] sm:$0xff]
    %v8603 = vld [vmem:[#allocation10 + $0x240] sm:$0xff]
    %v8604 = vld [vmem:[#allocation10 + $0x248] sm:$0xff]
    %v8605 = vld [vmem:[#allocation10 + $0x250] sm:$0xff]
    %v8606 = vld [vmem:[#allocation10 + $0x258] sm:$0xff]
    %v8607 = vld [vmem:[#allocation10 + $0x260] sm:$0xff]
    %v8608 = vld [vmem:[#allocation10 + $0x268] sm:$0xff]
    %v8609 = vld [vmem:[#allocation10 + $0x270] sm:$0xff]
    %v8610 = vld [vmem:[#allocation10 + $0x278] sm:$0xff]
    %v8611 = vld [vmem:[#allocation10 + $0x280] sm:$0xff]
    %v8612 = vld [vmem:[#allocation10 + $0x288] sm:$0xff]
    %v8613 = vld [vmem:[#allocation10 + $0x290] sm:$0xff]
    %v8614 = vld [vmem:[#allocation10 + $0x298] sm:$0xff]
    %v8615 = vld [vmem:[#allocation10 + $0x2a0] sm:$0xff]
    %v8616 = vld [vmem:[#allocation10 + $0x2a8] sm:$0xff]
    %v8617 = vld [vmem:[#allocation10 + $0x2b0] sm:$0xff]
    %v8618 = vld [vmem:[#allocation10 + $0x2b8] sm:$0xff]
    %v8619 = vld [vmem:[#allocation10 + $0x2c0] sm:$0xff]
    %v8620 = vld [vmem:[#allocation10 + $0x2c8] sm:$0xff]
    %v8621 = vld [vmem:[#allocation10 + $0x2d0] sm:$0xff]
    %v8622 = vld [vmem:[#allocation10 + $0x2d8] sm:$0xff]
    %v8623 = vld [vmem:[#allocation10 + $0x2e0] sm:$0xff]
    %v8624 = vld [vmem:[#allocation10 + $0x2e8] sm:$0xff]
    %v8625 = vld [vmem:[#allocation10 + $0x2f0] sm:$0xff]
    %v8626 = vld [vmem:[#allocation10 + $0x2f8] sm:$0xff]
    %v8627 = vld [vmem:[#allocation10 + $0x300] sm:$0xff]
    %v8628 = vld [vmem:[#allocation10 + $0x308] sm:$0xff]
    %v8629 = vld [vmem:[#allocation10 + $0x310] sm:$0xff]
    %v8630 = vld [vmem:[#allocation10 + $0x318] sm:$0xff]
    %v8631 = vld [vmem:[#allocation10 + $0x320] sm:$0xff]
    %v8632 = vld [vmem:[#allocation10 + $0x328] sm:$0xff]
    %v8633 = vld [vmem:[#allocation10 + $0x330] sm:$0xff]
    %v8634 = vld [vmem:[#allocation10 + $0x338] sm:$0xff]
    %v8635 = vld [vmem:[#allocation10 + $0x340] sm:$0xff]
    %v8636 = vld [vmem:[#allocation10 + $0x348] sm:$0xff]
    %v8637 = vld [vmem:[#allocation10 + $0x350] sm:$0xff]
    %v8638 = vld [vmem:[#allocation10 + $0x358] sm:$0xff]
    %v8639 = vld [vmem:[#allocation10 + $0x360] sm:$0xff]
    %v8640 = vld [vmem:[#allocation10 + $0x368] sm:$0xff]
    %v8641 = vld [vmem:[#allocation10 + $0x370] sm:$0xff]
    %v8642 = vld [vmem:[#allocation10 + $0x378] sm:$0xff]
    %v8643 = vld [vmem:[#allocation10 + $0x380] sm:$0xff]
    %v8644 = vld [vmem:[#allocation10 + $0x388] sm:$0xff]
    %v8645 = vld [vmem:[#allocation10 + $0x390] sm:$0xff]
    %v8646 = vld [vmem:[#allocation10 + $0x398] sm:$0xff]
    %v8647 = vld [vmem:[#allocation10 + $0x3a0] sm:$0xff]
    %v8648 = vld [vmem:[#allocation10 + $0x3a8] sm:$0xff]
    %v8649 = vld [vmem:[#allocation10 + $0x3b0] sm:$0xff]
    %v8650 = vld [vmem:[#allocation10 + $0x3b8] sm:$0xff]
    %v8651 = vld [vmem:[#allocation10 + $0x3c0] sm:$0xff]
    %v8652 = vld [vmem:[#allocation10 + $0x3c8] sm:$0xff]
    %v8653 = vld [vmem:[#allocation10 + $0x3d0] sm:$0xff]
    %v8654 = vld [vmem:[#allocation10 + $0x3d8] sm:$0xff]
    %v8655 = vld [vmem:[#allocation10 + $0x3e0] sm:$0xff]
    %v8656 = vld [vmem:[#allocation10 + $0x3e8] sm:$0xff]
    %v8657 = vld [vmem:[#allocation10 + $0x3f0] sm:$0xff]
    %v8658 = vld [vmem:[#allocation10 + $0x3f8] sm:$0xff]
    %v8659 = vld [vmem:[#allocation10 + $0x400] sm:$0xff]
    %v8660 = vld [vmem:[#allocation10 + $0x408] sm:$0xff]
    %v8661 = vld [vmem:[#allocation10 + $0x410] sm:$0xff]
    %v8662 = vld [vmem:[#allocation10 + $0x418] sm:$0xff]
    %v8663 = vld [vmem:[#allocation10 + $0x420] sm:$0xff]
    %v8664 = vld [vmem:[#allocation10 + $0x428] sm:$0xff]
    %v8665 = vld [vmem:[#allocation10 + $0x430] sm:$0xff]
    %v8666 = vld [vmem:[#allocation10 + $0x438] sm:$0xff]
    %v8667 = vld [vmem:[#allocation10 + $0x440] sm:$0xff]
    %v8668 = vld [vmem:[#allocation10 + $0x448] sm:$0xff]
    %v8669 = vld [vmem:[#allocation10 + $0x450] sm:$0xff]
    %v8670 = vld [vmem:[#allocation10 + $0x458] sm:$0xff]
    %v8671 = vld [vmem:[#allocation10 + $0x460] sm:$0xff]
    %v8672 = vld [vmem:[#allocation10 + $0x468] sm:$0xff]
    %v8673 = vld [vmem:[#allocation10 + $0x470] sm:$0xff]
    %v8674 = vld [vmem:[#allocation10 + $0x478] sm:$0xff]
    %v8675 = vld [vmem:[#allocation10 + $0x480] sm:$0xff]
    %v8676 = vld [vmem:[#allocation10 + $0x488] sm:$0xff]
    %v8677 = vld [vmem:[#allocation10 + $0x490] sm:$0xff]
    %v8678 = vld [vmem:[#allocation10 + $0x498] sm:$0xff]
    %v8679 = vld [vmem:[#allocation10 + $0x4a0] sm:$0xff]
    %v8680 = vld [vmem:[#allocation10 + $0x4a8] sm:$0xff]
    %v8681 = vld [vmem:[#allocation10 + $0x4b0] sm:$0xff]
    %v8682 = vld [vmem:[#allocation10 + $0x4b8] sm:$0xff]
    %v8683 = vld [vmem:[#allocation10 + $0x4c0] sm:$0xff]
    %v8684 = vld [vmem:[#allocation10 + $0x4c8] sm:$0xff]
    %v8685 = vld [vmem:[#allocation10 + $0x4d0] sm:$0xff]
    %v8686 = vld [vmem:[#allocation10 + $0x4d8] sm:$0xff]
    %v8687 = vld [vmem:[#allocation10 + $0x4e0] sm:$0xff]
    %v8688 = vld [vmem:[#allocation10 + $0x4e8] sm:$0xff]
    %v8689 = vld [vmem:[#allocation10 + $0x4f0] sm:$0xff]
    %v8690 = vld [vmem:[#allocation10 + $0x4f8] sm:$0xff]
    %v8691 = vld [vmem:[#allocation10 + $0x500] sm:$0xff]
    %v8692 = vld [vmem:[#allocation10 + $0x508] sm:$0xff]
    %v8693 = vld [vmem:[#allocation10 + $0x510] sm:$0xff]
    %v8694 = vld [vmem:[#allocation10 + $0x518] sm:$0xff]
    %v8695 = vld [vmem:[#allocation10 + $0x520] sm:$0xff]
    %v8696 = vld [vmem:[#allocation10 + $0x528] sm:$0xff]
    %v8697 = vld [vmem:[#allocation10 + $0x530] sm:$0xff]
    %v8698 = vld [vmem:[#allocation10 + $0x538] sm:$0xff]
    %v8699 = vld [vmem:[#allocation10 + $0x540] sm:$0xff]
    %v8700 = vld [vmem:[#allocation10 + $0x548] sm:$0xff]
    %v8701 = vld [vmem:[#allocation10 + $0x550] sm:$0xff]
    %v8702 = vld [vmem:[#allocation10 + $0x558] sm:$0xff]
    %v8703 = vld [vmem:[#allocation10 + $0x560] sm:$0xff]
    %v8704 = vld [vmem:[#allocation10 + $0x568] sm:$0xff]
    %v8705 = vld [vmem:[#allocation10 + $0x570] sm:$0xff]
    %v8706 = vld [vmem:[#allocation10 + $0x578] sm:$0xff]
    %v8707 = vld [vmem:[#allocation10 + $0x580] sm:$0xff]
    %v8708 = vld [vmem:[#allocation10 + $0x588] sm:$0xff]
    %v8709 = vld [vmem:[#allocation10 + $0x590] sm:$0xff]
    %v8710 = vld [vmem:[#allocation10 + $0x598] sm:$0xff]
    %v8711 = vld [vmem:[#allocation10 + $0x5a0] sm:$0xff]
    %v8712 = vld [vmem:[#allocation10 + $0x5a8] sm:$0xff]
    %v8713 = vld [vmem:[#allocation10 + $0x5b0] sm:$0xff]
    %v8714 = vld [vmem:[#allocation10 + $0x5b8] sm:$0xff]
    %v8715 = vld [vmem:[#allocation10 + $0x5c0] sm:$0xff]
    %v8716 = vld [vmem:[#allocation10 + $0x5c8] sm:$0xff]
    %v8717 = vld [vmem:[#allocation10 + $0x5d0] sm:$0xff]
    %v8718 = vld [vmem:[#allocation10 + $0x5d8] sm:$0xff]
    %v8719 = vld [vmem:[#allocation10 + $0x5e0] sm:$0xff]
    %v8720 = vld [vmem:[#allocation10 + $0x5e8] sm:$0xff]
    %v8721 = vld [vmem:[#allocation10 + $0x5f0] sm:$0xff]
    %v8722 = vld [vmem:[#allocation10 + $0x5f8] sm:$0xff]
    %v8723 = vld [vmem:[#allocation10 + $0x600] sm:$0xff]
    %v8724 = vld [vmem:[#allocation10 + $0x608] sm:$0xff]
    %v8725 = vld [vmem:[#allocation10 + $0x610] sm:$0xff]
    %v8726 = vld [vmem:[#allocation10 + $0x618] sm:$0xff]
    %v8727 = vld [vmem:[#allocation10 + $0x620] sm:$0xff]
    %v8728 = vld [vmem:[#allocation10 + $0x628] sm:$0xff]
    %v8729 = vld [vmem:[#allocation10 + $0x630] sm:$0xff]
    %v8730 = vld [vmem:[#allocation10 + $0x638] sm:$0xff]
    %v8731 = vld [vmem:[#allocation10 + $0x640] sm:$0xff]
    %v8732 = vld [vmem:[#allocation10 + $0x648] sm:$0xff]
    %v8733 = vld [vmem:[#allocation10 + $0x650] sm:$0xff]
    %v8734 = vld [vmem:[#allocation10 + $0x658] sm:$0xff]
    %v8735 = vld [vmem:[#allocation10 + $0x660] sm:$0xff]
    %v8736 = vld [vmem:[#allocation10 + $0x668] sm:$0xff]
    %v8737 = vld [vmem:[#allocation10 + $0x670] sm:$0xff]
    %v8738 = vld [vmem:[#allocation10 + $0x678] sm:$0xff]
    %v8739 = vld [vmem:[#allocation10 + $0x680] sm:$0xff]
    %v8740 = vld [vmem:[#allocation10 + $0x688] sm:$0xff]
    %v8741 = vld [vmem:[#allocation10 + $0x690] sm:$0xff]
    %v8742 = vld [vmem:[#allocation10 + $0x698] sm:$0xff]
    %v8743 = vld [vmem:[#allocation10 + $0x6a0] sm:$0xff]
    %v8744 = vld [vmem:[#allocation10 + $0x6a8] sm:$0xff]
    %v8745 = vld [vmem:[#allocation10 + $0x6b0] sm:$0xff]
    %v8746 = vld [vmem:[#allocation10 + $0x6b8] sm:$0xff]
    %v8747 = vld [vmem:[#allocation10 + $0x6c0] sm:$0xff]
    %v8748 = vld [vmem:[#allocation10 + $0x6c8] sm:$0xff]
    %v8749 = vld [vmem:[#allocation10 + $0x6d0] sm:$0xff]
    %v8750 = vld [vmem:[#allocation10 + $0x6d8] sm:$0xff]
    %v8751 = vld [vmem:[#allocation10 + $0x6e0] sm:$0xff]
    %v8752 = vld [vmem:[#allocation10 + $0x6e8] sm:$0xff]
    %v8753 = vld [vmem:[#allocation10 + $0x6f0] sm:$0xff]
    %v8754 = vld [vmem:[#allocation10 + $0x6f8] sm:$0xff]
    %v8755 = vld [vmem:[#allocation10 + $0x700] sm:$0xff]
    %v8756 = vld [vmem:[#allocation10 + $0x708] sm:$0xff]
    %v8757 = vld [vmem:[#allocation10 + $0x710] sm:$0xff]
    %v8758 = vld [vmem:[#allocation10 + $0x718] sm:$0xff]
    %v8759 = vld [vmem:[#allocation10 + $0x720] sm:$0xff]
    %v8760 = vld [vmem:[#allocation10 + $0x728] sm:$0xff]
    %v8761 = vld [vmem:[#allocation10 + $0x730] sm:$0xff]
    %v8762 = vld [vmem:[#allocation10 + $0x738] sm:$0xff]
    %v8763 = vld [vmem:[#allocation10 + $0x740] sm:$0xff]
    %v8764 = vld [vmem:[#allocation10 + $0x748] sm:$0xff]
    %v8765 = vld [vmem:[#allocation10 + $0x750] sm:$0xff]
    %v8766 = vld [vmem:[#allocation10 + $0x758] sm:$0xff]
    %v8767 = vld [vmem:[#allocation10 + $0x760] sm:$0xff]
    %v8768 = vld [vmem:[#allocation10 + $0x768] sm:$0xff]
    %v8769 = vld [vmem:[#allocation10 + $0x770] sm:$0xff]
    %v8770 = vld [vmem:[#allocation10 + $0x778] sm:$0xff]
    %v8771 = vld [vmem:[#allocation10 + $0x780] sm:$0xff]
    %v8772 = vld [vmem:[#allocation10 + $0x788] sm:$0xff]
    %v8773 = vld [vmem:[#allocation10 + $0x790] sm:$0xff]
    %v8774 = vld [vmem:[#allocation10 + $0x798] sm:$0xff]
    %v8775 = vld [vmem:[#allocation10 + $0x7a0] sm:$0xff]
    %v8776 = vld [vmem:[#allocation10 + $0x7a8] sm:$0xff]
    %v8777 = vld [vmem:[#allocation10 + $0x7b0] sm:$0xff]
    %v8778 = vld [vmem:[#allocation10 + $0x7b8] sm:$0xff]
    %v8779 = vld [vmem:[#allocation10 + $0x7c0] sm:$0xff]
    %v8780 = vld [vmem:[#allocation10 + $0x7c8] sm:$0xff]
    %v8781 = vld [vmem:[#allocation10 + $0x7d0] sm:$0xff]
    %v8782 = vld [vmem:[#allocation10 + $0x7d8] sm:$0xff]
    %v8783 = vld [vmem:[#allocation10 + $0x7e0] sm:$0xff]
    %v8784 = vld [vmem:[#allocation10 + $0x7e8] sm:$0xff]
    %v8785 = vld [vmem:[#allocation10 + $0x7f0] sm:$0xff]
    %v8786 = vld [vmem:[#allocation10 + $0x7f8] sm:$0xff]
    %v8787 = vld [vmem:[#allocation11] sm:$0xf]
    %v8789 = vperm.slane %v8787, 0
    %v8790 = vperm.slane %v8787, 1
    %v8791 = vperm.slane %v8787, 2
    %v8792 = vperm.slane %v8787, 3
    %v9053 = vunpack.c.l.b16 %v8531
    %v9054 = vunpack.c.h.b16 %v8531
    %v9055 = vunpack.c.l.b16 %v8532
    %v9056 = vunpack.c.h.b16 %v8532
    %v9057 = vunpack.c.l.b16 %v8533
    %v9058 = vunpack.c.h.b16 %v8533
    %v9059 = vunpack.c.l.b16 %v8534
    %v9060 = vunpack.c.h.b16 %v8534
    %v9061 = vunpack.c.l.b16 %v8535
    %v9062 = vunpack.c.h.b16 %v8535
    %v9063 = vunpack.c.l.b16 %v8536
    %v9064 = vunpack.c.h.b16 %v8536
    %v9065 = vunpack.c.l.b16 %v8537
    %v9066 = vunpack.c.h.b16 %v8537
    %v9067 = vunpack.c.l.b16 %v8538
    %v9068 = vunpack.c.h.b16 %v8538
    %v9069 = vunpack.c.l.b16 %v8539
    %v9070 = vunpack.c.h.b16 %v8539
    %v9071 = vunpack.c.l.b16 %v8540
    %v9072 = vunpack.c.h.b16 %v8540
    %v9073 = vunpack.c.l.b16 %v8541
    %v9074 = vunpack.c.h.b16 %v8541
    %v9075 = vunpack.c.l.b16 %v8542
    %v9076 = vunpack.c.h.b16 %v8542
    %v9077 = vunpack.c.l.b16 %v8543
    %v9078 = vunpack.c.h.b16 %v8543
    %v9079 = vunpack.c.l.b16 %v8544
    %v9080 = vunpack.c.h.b16 %v8544
    %v9081 = vunpack.c.l.b16 %v8545
    %v9082 = vunpack.c.h.b16 %v8545
    %v9083 = vunpack.c.l.b16 %v8546
    %v9084 = vunpack.c.h.b16 %v8546
    %v9085 = vunpack.c.l.b16 %v8547
    %v9086 = vunpack.c.h.b16 %v8547
    %v9087 = vunpack.c.l.b16 %v8548
    %v9088 = vunpack.c.h.b16 %v8548
    %v9089 = vunpack.c.l.b16 %v8549
    %v9090 = vunpack.c.h.b16 %v8549
    %v9091 = vunpack.c.l.b16 %v8550
    %v9092 = vunpack.c.h.b16 %v8550
    %v9093 = vunpack.c.l.b16 %v8551
    %v9094 = vunpack.c.h.b16 %v8551
    %v9095 = vunpack.c.l.b16 %v8552
    %v9096 = vunpack.c.h.b16 %v8552
    %v9097 = vunpack.c.l.b16 %v8553
    %v9098 = vunpack.c.h.b16 %v8553
    %v9099 = vunpack.c.l.b16 %v8554
    %v9100 = vunpack.c.h.b16 %v8554
    %v9101 = vunpack.c.l.b16 %v8555
    %v9102 = vunpack.c.h.b16 %v8555
    %v9103 = vunpack.c.l.b16 %v8556
    %v9104 = vunpack.c.h.b16 %v8556
    %v9105 = vunpack.c.l.b16 %v8557
    %v9106 = vunpack.c.h.b16 %v8557
    %v9107 = vunpack.c.l.b16 %v8558
    %v9108 = vunpack.c.h.b16 %v8558
    %v9109 = vunpack.c.l.b16 %v8559
    %v9110 = vunpack.c.h.b16 %v8559
    %v9111 = vunpack.c.l.b16 %v8560
    %v9112 = vunpack.c.h.b16 %v8560
    %v9113 = vunpack.c.l.b16 %v8561
    %v9114 = vunpack.c.h.b16 %v8561
    %v9115 = vunpack.c.l.b16 %v8562
    %v9116 = vunpack.c.h.b16 %v8562
    %v9117 = vunpack.c.l.b16 %v8563
    %v9118 = vunpack.c.h.b16 %v8563
    %v9119 = vunpack.c.l.b16 %v8564
    %v9120 = vunpack.c.h.b16 %v8564
    %v9121 = vunpack.c.l.b16 %v8565
    %v9122 = vunpack.c.h.b16 %v8565
    %v9123 = vunpack.c.l.b16 %v8566
    %v9124 = vunpack.c.h.b16 %v8566
    %v9125 = vunpack.c.l.b16 %v8567
    %v9126 = vunpack.c.h.b16 %v8567
    %v9127 = vunpack.c.l.b16 %v8568
    %v9128 = vunpack.c.h.b16 %v8568
    %v9129 = vunpack.c.l.b16 %v8569
    %v9130 = vunpack.c.h.b16 %v8569
    %v9131 = vunpack.c.l.b16 %v8570
    %v9132 = vunpack.c.h.b16 %v8570
    %v9133 = vunpack.c.l.b16 %v8571
    %v9134 = vunpack.c.h.b16 %v8571
    %v9135 = vunpack.c.l.b16 %v8572
    %v9136 = vunpack.c.h.b16 %v8572
    %v9137 = vunpack.c.l.b16 %v8573
    %v9138 = vunpack.c.h.b16 %v8573
    %v9139 = vunpack.c.l.b16 %v8574
    %v9140 = vunpack.c.h.b16 %v8574
    %v9141 = vunpack.c.l.b16 %v8575
    %v9142 = vunpack.c.h.b16 %v8575
    %v9143 = vunpack.c.l.b16 %v8576
    %v9144 = vunpack.c.h.b16 %v8576
    %v9145 = vunpack.c.l.b16 %v8577
    %v9146 = vunpack.c.h.b16 %v8577
    %v9147 = vunpack.c.l.b16 %v8578
    %v9148 = vunpack.c.h.b16 %v8578
    %v9149 = vunpack.c.l.b16 %v8579
    %v9150 = vunpack.c.h.b16 %v8579
    %v9151 = vunpack.c.l.b16 %v8580
    %v9152 = vunpack.c.h.b16 %v8580
    %v9153 = vunpack.c.l.b16 %v8581
    %v9154 = vunpack.c.h.b16 %v8581
    %v9155 = vunpack.c.l.b16 %v8582
    %v9156 = vunpack.c.h.b16 %v8582
    %v9157 = vunpack.c.l.b16 %v8583
    %v9158 = vunpack.c.h.b16 %v8583
    %v9159 = vunpack.c.l.b16 %v8584
    %v9160 = vunpack.c.h.b16 %v8584
    %v9161 = vunpack.c.l.b16 %v8585
    %v9162 = vunpack.c.h.b16 %v8585
    %v9163 = vunpack.c.l.b16 %v8586
    %v9164 = vunpack.c.h.b16 %v8586
    %v9165 = vunpack.c.l.b16 %v8587
    %v9166 = vunpack.c.h.b16 %v8587
    %v9167 = vunpack.c.l.b16 %v8588
    %v9168 = vunpack.c.h.b16 %v8588
    %v9169 = vunpack.c.l.b16 %v8589
    %v9170 = vunpack.c.h.b16 %v8589
    %v9171 = vunpack.c.l.b16 %v8590
    %v9172 = vunpack.c.h.b16 %v8590
    %v9173 = vunpack.c.l.b16 %v8591
    %v9174 = vunpack.c.h.b16 %v8591
    %v9175 = vunpack.c.l.b16 %v8592
    %v9176 = vunpack.c.h.b16 %v8592
    %v9177 = vunpack.c.l.b16 %v8593
    %v9178 = vunpack.c.h.b16 %v8593
    %v9179 = vunpack.c.l.b16 %v8594
    %v9180 = vunpack.c.h.b16 %v8594
    %v9181 = vunpack.c.l.b16 %v8595
    %v9182 = vunpack.c.h.b16 %v8595
    %v9183 = vunpack.c.l.b16 %v8596
    %v9184 = vunpack.c.h.b16 %v8596
    %v9185 = vunpack.c.l.b16 %v8597
    %v9186 = vunpack.c.h.b16 %v8597
    %v9187 = vunpack.c.l.b16 %v8598
    %v9188 = vunpack.c.h.b16 %v8598
    %v9189 = vunpack.c.l.b16 %v8599
    %v9190 = vunpack.c.h.b16 %v8599
    %v9191 = vunpack.c.l.b16 %v8600
    %v9192 = vunpack.c.h.b16 %v8600
    %v9193 = vunpack.c.l.b16 %v8601
    %v9194 = vunpack.c.h.b16 %v8601
    %v9195 = vunpack.c.l.b16 %v8602
    %v9196 = vunpack.c.h.b16 %v8602
    %v9197 = vunpack.c.l.b16 %v8603
    %v9198 = vunpack.c.h.b16 %v8603
    %v9199 = vunpack.c.l.b16 %v8604
    %v9200 = vunpack.c.h.b16 %v8604
    %v9201 = vunpack.c.l.b16 %v8605
    %v9202 = vunpack.c.h.b16 %v8605
    %v9203 = vunpack.c.l.b16 %v8606
    %v9204 = vunpack.c.h.b16 %v8606
    %v9205 = vunpack.c.l.b16 %v8607
    %v9206 = vunpack.c.h.b16 %v8607
    %v9207 = vunpack.c.l.b16 %v8608
    %v9208 = vunpack.c.h.b16 %v8608
    %v9209 = vunpack.c.l.b16 %v8609
    %v9210 = vunpack.c.h.b16 %v8609
    %v9211 = vunpack.c.l.b16 %v8610
    %v9212 = vunpack.c.h.b16 %v8610
    %v9213 = vunpack.c.l.b16 %v8611
    %v9214 = vunpack.c.h.b16 %v8611
    %v9215 = vunpack.c.l.b16 %v8612
    %v9216 = vunpack.c.h.b16 %v8612
    %v9217 = vunpack.c.l.b16 %v8613
    %v9218 = vunpack.c.h.b16 %v8613
    %v9219 = vunpack.c.l.b16 %v8614
    %v9220 = vunpack.c.h.b16 %v8614
    %v9221 = vunpack.c.l.b16 %v8615
    %v9222 = vunpack.c.h.b16 %v8615
    %v9223 = vunpack.c.l.b16 %v8616
    %v9224 = vunpack.c.h.b16 %v8616
    %v9225 = vunpack.c.l.b16 %v8617
    %v9226 = vunpack.c.h.b16 %v8617
    %v9227 = vunpack.c.l.b16 %v8618
    %v9228 = vunpack.c.h.b16 %v8618
    %v9229 = vunpack.c.l.b16 %v8619
    %v9230 = vunpack.c.h.b16 %v8619
    %v9231 = vunpack.c.l.b16 %v8620
    %v9232 = vunpack.c.h.b16 %v8620
    %v9233 = vunpack.c.l.b16 %v8621
    %v9234 = vunpack.c.h.b16 %v8621
    %v9235 = vunpack.c.l.b16 %v8622
    %v9236 = vunpack.c.h.b16 %v8622
    %v9237 = vunpack.c.l.b16 %v8623
    %v9238 = vunpack.c.h.b16 %v8623
    %v9239 = vunpack.c.l.b16 %v8624
    %v9240 = vunpack.c.h.b16 %v8624
    %v9241 = vunpack.c.l.b16 %v8625
    %v9242 = vunpack.c.h.b16 %v8625
    %v9243 = vunpack.c.l.b16 %v8626
    %v9244 = vunpack.c.h.b16 %v8626
    %v9245 = vunpack.c.l.b16 %v8627
    %v9246 = vunpack.c.h.b16 %v8627
    %v9247 = vunpack.c.l.b16 %v8628
    %v9248 = vunpack.c.h.b16 %v8628
    %v9249 = vunpack.c.l.b16 %v8629
    %v9250 = vunpack.c.h.b16 %v8629
    %v9251 = vunpack.c.l.b16 %v8630
    %v9252 = vunpack.c.h.b16 %v8630
    %v9253 = vunpack.c.l.b16 %v8631
    %v9254 = vunpack.c.h.b16 %v8631
    %v9255 = vunpack.c.l.b16 %v8632
    %v9256 = vunpack.c.h.b16 %v8632
    %v9257 = vunpack.c.l.b16 %v8633
    %v9258 = vunpack.c.h.b16 %v8633
    %v9259 = vunpack.c.l.b16 %v8634
    %v9260 = vunpack.c.h.b16 %v8634
    %v9261 = vunpack.c.l.b16 %v8635
    %v9262 = vunpack.c.h.b16 %v8635
    %v9263 = vunpack.c.l.b16 %v8636
    %v9264 = vunpack.c.h.b16 %v8636
    %v9265 = vunpack.c.l.b16 %v8637
    %v9266 = vunpack.c.h.b16 %v8637
    %v9267 = vunpack.c.l.b16 %v8638
    %v9268 = vunpack.c.h.b16 %v8638
    %v9269 = vunpack.c.l.b16 %v8639
    %v9270 = vunpack.c.h.b16 %v8639
    %v9271 = vunpack.c.l.b16 %v8640
    %v9272 = vunpack.c.h.b16 %v8640
    %v9273 = vunpack.c.l.b16 %v8641
    %v9274 = vunpack.c.h.b16 %v8641
    %v9275 = vunpack.c.l.b16 %v8642
    %v9276 = vunpack.c.h.b16 %v8642
    %v9277 = vunpack.c.l.b16 %v8643
    %v9278 = vunpack.c.h.b16 %v8643
    %v9279 = vunpack.c.l.b16 %v8644
    %v9280 = vunpack.c.h.b16 %v8644
    %v9281 = vunpack.c.l.b16 %v8645
    %v9282 = vunpack.c.h.b16 %v8645
    %v9283 = vunpack.c.l.b16 %v8646
    %v9284 = vunpack.c.h.b16 %v8646
    %v9285 = vunpack.c.l.b16 %v8647
    %v9286 = vunpack.c.h.b16 %v8647
    %v9287 = vunpack.c.l.b16 %v8648
    %v9288 = vunpack.c.h.b16 %v8648
    %v9289 = vunpack.c.l.b16 %v8649
    %v9290 = vunpack.c.h.b16 %v8649
    %v9291 = vunpack.c.l.b16 %v8650
    %v9292 = vunpack.c.h.b16 %v8650
    %v9293 = vunpack.c.l.b16 %v8651
    %v9294 = vunpack.c.h.b16 %v8651
    %v9295 = vunpack.c.l.b16 %v8652
    %v9296 = vunpack.c.h.b16 %v8652
    %v9297 = vunpack.c.l.b16 %v8653
    %v9298 = vunpack.c.h.b16 %v8653
    %v9299 = vunpack.c.l.b16 %v8654
    %v9300 = vunpack.c.h.b16 %v8654
    %v9301 = vunpack.c.l.b16 %v8655
    %v9302 = vunpack.c.h.b16 %v8655
    %v9303 = vunpack.c.l.b16 %v8656
    %v9304 = vunpack.c.h.b16 %v8656
    %v9305 = vunpack.c.l.b16 %v8657
    %v9306 = vunpack.c.h.b16 %v8657
    %v9307 = vunpack.c.l.b16 %v8658
    %v9308 = vunpack.c.h.b16 %v8658
    %v9309 = vunpack.c.l.b16 %v8659
    %v9310 = vunpack.c.h.b16 %v8659
    %v9311 = vunpack.c.l.b16 %v8660
    %v9312 = vunpack.c.h.b16 %v8660
    %v9313 = vunpack.c.l.b16 %v8661
    %v9314 = vunpack.c.h.b16 %v8661
    %v9315 = vunpack.c.l.b16 %v8662
    %v9316 = vunpack.c.h.b16 %v8662
    %v9317 = vunpack.c.l.b16 %v8663
    %v9318 = vunpack.c.h.b16 %v8663
    %v9319 = vunpack.c.l.b16 %v8664
    %v9320 = vunpack.c.h.b16 %v8664
    %v9321 = vunpack.c.l.b16 %v8665
    %v9322 = vunpack.c.h.b16 %v8665
    %v9323 = vunpack.c.l.b16 %v8666
    %v9324 = vunpack.c.h.b16 %v8666
    %v9325 = vunpack.c.l.b16 %v8667
    %v9326 = vunpack.c.h.b16 %v8667
    %v9327 = vunpack.c.l.b16 %v8668
    %v9328 = vunpack.c.h.b16 %v8668
    %v9329 = vunpack.c.l.b16 %v8669
    %v9330 = vunpack.c.h.b16 %v8669
    %v9331 = vunpack.c.l.b16 %v8670
    %v9332 = vunpack.c.h.b16 %v8670
    %v9333 = vunpack.c.l.b16 %v8671
    %v9334 = vunpack.c.h.b16 %v8671
    %v9335 = vunpack.c.l.b16 %v8672
    %v9336 = vunpack.c.h.b16 %v8672
    %v9337 = vunpack.c.l.b16 %v8673
    %v9338 = vunpack.c.h.b16 %v8673
    %v9339 = vunpack.c.l.b16 %v8674
    %v9340 = vunpack.c.h.b16 %v8674
    %v9341 = vunpack.c.l.b16 %v8675
    %v9342 = vunpack.c.h.b16 %v8675
    %v9343 = vunpack.c.l.b16 %v8676
    %v9344 = vunpack.c.h.b16 %v8676
    %v9345 = vunpack.c.l.b16 %v8677
    %v9346 = vunpack.c.h.b16 %v8677
    %v9347 = vunpack.c.l.b16 %v8678
    %v9348 = vunpack.c.h.b16 %v8678
    %v9349 = vunpack.c.l.b16 %v8679
    %v9350 = vunpack.c.h.b16 %v8679
    %v9351 = vunpack.c.l.b16 %v8680
    %v9352 = vunpack.c.h.b16 %v8680
    %v9353 = vunpack.c.l.b16 %v8681
    %v9354 = vunpack.c.h.b16 %v8681
    %v9355 = vunpack.c.l.b16 %v8682
    %v9356 = vunpack.c.h.b16 %v8682
    %v9357 = vunpack.c.l.b16 %v8683
    %v9358 = vunpack.c.h.b16 %v8683
    %v9359 = vunpack.c.l.b16 %v8684
    %v9360 = vunpack.c.h.b16 %v8684
    %v9361 = vunpack.c.l.b16 %v8685
    %v9362 = vunpack.c.h.b16 %v8685
    %v9363 = vunpack.c.l.b16 %v8686
    %v9364 = vunpack.c.h.b16 %v8686
    %v9365 = vunpack.c.l.b16 %v8687
    %v9366 = vunpack.c.h.b16 %v8687
    %v9367 = vunpack.c.l.b16 %v8688
    %v9368 = vunpack.c.h.b16 %v8688
    %v9369 = vunpack.c.l.b16 %v8689
    %v9370 = vunpack.c.h.b16 %v8689
    %v9371 = vunpack.c.l.b16 %v8690
    %v9372 = vunpack.c.h.b16 %v8690
    %v9373 = vunpack.c.l.b16 %v8691
    %v9374 = vunpack.c.h.b16 %v8691
    %v9375 = vunpack.c.l.b16 %v8692
    %v9376 = vunpack.c.h.b16 %v8692
    %v9377 = vunpack.c.l.b16 %v8693
    %v9378 = vunpack.c.h.b16 %v8693
    %v9379 = vunpack.c.l.b16 %v8694
    %v9380 = vunpack.c.h.b16 %v8694
    %v9381 = vunpack.c.l.b16 %v8695
    %v9382 = vunpack.c.h.b16 %v8695
    %v9383 = vunpack.c.l.b16 %v8696
    %v9384 = vunpack.c.h.b16 %v8696
    %v9385 = vunpack.c.l.b16 %v8697
    %v9386 = vunpack.c.h.b16 %v8697
    %v9387 = vunpack.c.l.b16 %v8698
    %v9388 = vunpack.c.h.b16 %v8698
    %v9389 = vunpack.c.l.b16 %v8699
    %v9390 = vunpack.c.h.b16 %v8699
    %v9391 = vunpack.c.l.b16 %v8700
    %v9392 = vunpack.c.h.b16 %v8700
    %v9393 = vunpack.c.l.b16 %v8701
    %v9394 = vunpack.c.h.b16 %v8701
    %v9395 = vunpack.c.l.b16 %v8702
    %v9396 = vunpack.c.h.b16 %v8702
    %v9397 = vunpack.c.l.b16 %v8703
    %v9398 = vunpack.c.h.b16 %v8703
    %v9399 = vunpack.c.l.b16 %v8704
    %v9400 = vunpack.c.h.b16 %v8704
    %v9401 = vunpack.c.l.b16 %v8705
    %v9402 = vunpack.c.h.b16 %v8705
    %v9403 = vunpack.c.l.b16 %v8706
    %v9404 = vunpack.c.h.b16 %v8706
    %v9405 = vunpack.c.l.b16 %v8707
    %v9406 = vunpack.c.h.b16 %v8707
    %v9407 = vunpack.c.l.b16 %v8708
    %v9408 = vunpack.c.h.b16 %v8708
    %v9409 = vunpack.c.l.b16 %v8709
    %v9410 = vunpack.c.h.b16 %v8709
    %v9411 = vunpack.c.l.b16 %v8710
    %v9412 = vunpack.c.h.b16 %v8710
    %v9413 = vunpack.c.l.b16 %v8711
    %v9414 = vunpack.c.h.b16 %v8711
    %v9415 = vunpack.c.l.b16 %v8712
    %v9416 = vunpack.c.h.b16 %v8712
    %v9417 = vunpack.c.l.b16 %v8713
    %v9418 = vunpack.c.h.b16 %v8713
    %v9419 = vunpack.c.l.b16 %v8714
    %v9420 = vunpack.c.h.b16 %v8714
    %v9421 = vunpack.c.l.b16 %v8715
    %v9422 = vunpack.c.h.b16 %v8715
    %v9423 = vunpack.c.l.b16 %v8716
    %v9424 = vunpack.c.h.b16 %v8716
    %v9425 = vunpack.c.l.b16 %v8717
    %v9426 = vunpack.c.h.b16 %v8717
    %v9427 = vunpack.c.l.b16 %v8718
    %v9428 = vunpack.c.h.b16 %v8718
    %v9429 = vunpack.c.l.b16 %v8719
    %v9430 = vunpack.c.h.b16 %v8719
    %v9431 = vunpack.c.l.b16 %v8720
    %v9432 = vunpack.c.h.b16 %v8720
    %v9433 = vunpack.c.l.b16 %v8721
    %v9434 = vunpack.c.h.b16 %v8721
    %v9435 = vunpack.c.l.b16 %v8722
    %v9436 = vunpack.c.h.b16 %v8722
    %v9437 = vunpack.c.l.b16 %v8723
    %v9438 = vunpack.c.h.b16 %v8723
    %v9439 = vunpack.c.l.b16 %v8724
    %v9440 = vunpack.c.h.b16 %v8724
    %v9441 = vunpack.c.l.b16 %v8725
    %v9442 = vunpack.c.h.b16 %v8725
    %v9443 = vunpack.c.l.b16 %v8726
    %v9444 = vunpack.c.h.b16 %v8726
    %v9445 = vunpack.c.l.b16 %v8727
    %v9446 = vunpack.c.h.b16 %v8727
    %v9447 = vunpack.c.l.b16 %v8728
    %v9448 = vunpack.c.h.b16 %v8728
    %v9449 = vunpack.c.l.b16 %v8729
    %v9450 = vunpack.c.h.b16 %v8729
    %v9451 = vunpack.c.l.b16 %v8730
    %v9452 = vunpack.c.h.b16 %v8730
    %v9453 = vunpack.c.l.b16 %v8731
    %v9454 = vunpack.c.h.b16 %v8731
    %v9455 = vunpack.c.l.b16 %v8732
    %v9456 = vunpack.c.h.b16 %v8732
    %v9457 = vunpack.c.l.b16 %v8733
    %v9458 = vunpack.c.h.b16 %v8733
    %v9459 = vunpack.c.l.b16 %v8734
    %v9460 = vunpack.c.h.b16 %v8734
    %v9461 = vunpack.c.l.b16 %v8735
    %v9462 = vunpack.c.h.b16 %v8735
    %v9463 = vunpack.c.l.b16 %v8736
    %v9464 = vunpack.c.h.b16 %v8736
    %v9465 = vunpack.c.l.b16 %v8737
    %v9466 = vunpack.c.h.b16 %v8737
    %v9467 = vunpack.c.l.b16 %v8738
    %v9468 = vunpack.c.h.b16 %v8738
    %v9469 = vunpack.c.l.b16 %v8739
    %v9470 = vunpack.c.h.b16 %v8739
    %v9471 = vunpack.c.l.b16 %v8740
    %v9472 = vunpack.c.h.b16 %v8740
    %v9473 = vunpack.c.l.b16 %v8741
    %v9474 = vunpack.c.h.b16 %v8741
    %v9475 = vunpack.c.l.b16 %v8742
    %v9476 = vunpack.c.h.b16 %v8742
    %v9477 = vunpack.c.l.b16 %v8743
    %v9478 = vunpack.c.h.b16 %v8743
    %v9479 = vunpack.c.l.b16 %v8744
    %v9480 = vunpack.c.h.b16 %v8744
    %v9481 = vunpack.c.l.b16 %v8745
    %v9482 = vunpack.c.h.b16 %v8745
    %v9483 = vunpack.c.l.b16 %v8746
    %v9484 = vunpack.c.h.b16 %v8746
    %v9485 = vunpack.c.l.b16 %v8747
    %v9486 = vunpack.c.h.b16 %v8747
    %v9487 = vunpack.c.l.b16 %v8748
    %v9488 = vunpack.c.h.b16 %v8748
    %v9489 = vunpack.c.l.b16 %v8749
    %v9490 = vunpack.c.h.b16 %v8749
    %v9491 = vunpack.c.l.b16 %v8750
    %v9492 = vunpack.c.h.b16 %v8750
    %v9493 = vunpack.c.l.b16 %v8751
    %v9494 = vunpack.c.h.b16 %v8751
    %v9495 = vunpack.c.l.b16 %v8752
    %v9496 = vunpack.c.h.b16 %v8752
    %v9497 = vunpack.c.l.b16 %v8753
    %v9498 = vunpack.c.h.b16 %v8753
    %v9499 = vunpack.c.l.b16 %v8754
    %v9500 = vunpack.c.h.b16 %v8754
    %v9501 = vunpack.c.l.b16 %v8755
    %v9502 = vunpack.c.h.b16 %v8755
    %v9503 = vunpack.c.l.b16 %v8756
    %v9504 = vunpack.c.h.b16 %v8756
    %v9505 = vunpack.c.l.b16 %v8757
    %v9506 = vunpack.c.h.b16 %v8757
    %v9507 = vunpack.c.l.b16 %v8758
    %v9508 = vunpack.c.h.b16 %v8758
    %v9509 = vunpack.c.l.b16 %v8759
    %v9510 = vunpack.c.h.b16 %v8759
    %v9511 = vunpack.c.l.b16 %v8760
    %v9512 = vunpack.c.h.b16 %v8760
    %v9513 = vunpack.c.l.b16 %v8761
    %v9514 = vunpack.c.h.b16 %v8761
    %v9515 = vunpack.c.l.b16 %v8762
    %v9516 = vunpack.c.h.b16 %v8762
    %v9517 = vunpack.c.l.b16 %v8763
    %v9518 = vunpack.c.h.b16 %v8763
    %v9519 = vunpack.c.l.b16 %v8764
    %v9520 = vunpack.c.h.b16 %v8764
    %v9521 = vunpack.c.l.b16 %v8765
    %v9522 = vunpack.c.h.b16 %v8765
    %v9523 = vunpack.c.l.b16 %v8766
    %v9524 = vunpack.c.h.b16 %v8766
    %v9525 = vunpack.c.l.b16 %v8767
    %v9526 = vunpack.c.h.b16 %v8767
    %v9527 = vunpack.c.l.b16 %v8768
    %v9528 = vunpack.c.h.b16 %v8768
    %v9529 = vunpack.c.l.b16 %v8769
    %v9530 = vunpack.c.h.b16 %v8769
    %v9531 = vunpack.c.l.b16 %v8770
    %v9532 = vunpack.c.h.b16 %v8770
    %v9533 = vunpack.c.l.b16 %v8771
    %v9534 = vunpack.c.h.b16 %v8771
    %v9535 = vunpack.c.l.b16 %v8772
    %v9536 = vunpack.c.h.b16 %v8772
    %v9537 = vunpack.c.l.b16 %v8773
    %v9538 = vunpack.c.h.b16 %v8773
    %v9539 = vunpack.c.l.b16 %v8774
    %v9540 = vunpack.c.h.b16 %v8774
    %v9541 = vunpack.c.l.b16 %v8775
    %v9542 = vunpack.c.h.b16 %v8775
    %v9543 = vunpack.c.l.b16 %v8776
    %v9544 = vunpack.c.h.b16 %v8776
    %v9545 = vunpack.c.l.b16 %v8777
    %v9546 = vunpack.c.h.b16 %v8777
    %v9547 = vunpack.c.l.b16 %v8778
    %v9548 = vunpack.c.h.b16 %v8778
    %v9549 = vunpack.c.l.b16 %v8779
    %v9550 = vunpack.c.h.b16 %v8779
    %v9551 = vunpack.c.l.b16 %v8780
    %v9552 = vunpack.c.h.b16 %v8780
    %v9553 = vunpack.c.l.b16 %v8781
    %v9554 = vunpack.c.h.b16 %v8781
    %v9555 = vunpack.c.l.b16 %v8782
    %v9556 = vunpack.c.h.b16 %v8782
    %v9557 = vunpack.c.l.b16 %v8783
    %v9558 = vunpack.c.h.b16 %v8783
    %v9559 = vunpack.c.l.b16 %v8784
    %v9560 = vunpack.c.h.b16 %v8784
    %v9561 = vunpack.c.l.b16 %v8785
    %v9562 = vunpack.c.h.b16 %v8785
    %v9563 = vunpack.c.l.b16 %v8786
    %v9564 = vunpack.c.h.b16 %v8786
    %v9565 = vpack.c.b16 %v9057, %v9053
    %v9566 = vpack.c.b16 %v9058, %v9054
    %v9567 = vpack.c.b16 %v9059, %v9055
    %v9568 = vpack.c.b16 %v9060, %v9056
    %v9569 = vpack.c.b16 %v9065, %v9061
    %v9570 = vpack.c.b16 %v9066, %v9062
    %v9571 = vpack.c.b16 %v9067, %v9063
    %v9572 = vpack.c.b16 %v9068, %v9064
    %v9573 = vpack.c.b16 %v9073, %v9069
    %v9574 = vpack.c.b16 %v9074, %v9070
    %v9575 = vpack.c.b16 %v9075, %v9071
    %v9576 = vpack.c.b16 %v9076, %v9072
    %v9577 = vpack.c.b16 %v9081, %v9077
    %v9578 = vpack.c.b16 %v9082, %v9078
    %v9579 = vpack.c.b16 %v9083, %v9079
    %v9580 = vpack.c.b16 %v9084, %v9080
    %v9581 = vpack.c.b16 %v9089, %v9085
    %v9582 = vpack.c.b16 %v9090, %v9086
    %v9583 = vpack.c.b16 %v9091, %v9087
    %v9584 = vpack.c.b16 %v9092, %v9088
    %v9585 = vpack.c.b16 %v9097, %v9093
    %v9586 = vpack.c.b16 %v9098, %v9094
    %v9587 = vpack.c.b16 %v9099, %v9095
    %v9588 = vpack.c.b16 %v9100, %v9096
    %v9589 = vpack.c.b16 %v9105, %v9101
    %v9590 = vpack.c.b16 %v9106, %v9102
    %v9591 = vpack.c.b16 %v9107, %v9103
    %v9592 = vpack.c.b16 %v9108, %v9104
    %v9593 = vpack.c.b16 %v9113, %v9109
    %v9594 = vpack.c.b16 %v9114, %v9110
    %v9595 = vpack.c.b16 %v9115, %v9111
    %v9596 = vpack.c.b16 %v9116, %v9112
    %v9597 = vpack.c.b16 %v9121, %v9117
    %v9598 = vpack.c.b16 %v9122, %v9118
    %v9599 = vpack.c.b16 %v9123, %v9119
    %v9600 = vpack.c.b16 %v9124, %v9120
    %v9601 = vpack.c.b16 %v9129, %v9125
    %v9602 = vpack.c.b16 %v9130, %v9126
    %v9603 = vpack.c.b16 %v9131, %v9127
    %v9604 = vpack.c.b16 %v9132, %v9128
    %v9605 = vpack.c.b16 %v9137, %v9133
    %v9606 = vpack.c.b16 %v9138, %v9134
    %v9607 = vpack.c.b16 %v9139, %v9135
    %v9608 = vpack.c.b16 %v9140, %v9136
    %v9609 = vpack.c.b16 %v9145, %v9141
    %v9610 = vpack.c.b16 %v9146, %v9142
    %v9611 = vpack.c.b16 %v9147, %v9143
    %v9612 = vpack.c.b16 %v9148, %v9144
    %v9613 = vpack.c.b16 %v9153, %v9149
    %v9614 = vpack.c.b16 %v9154, %v9150
    %v9615 = vpack.c.b16 %v9155, %v9151
    %v9616 = vpack.c.b16 %v9156, %v9152
    %v9617 = vpack.c.b16 %v9161, %v9157
    %v9618 = vpack.c.b16 %v9162, %v9158
    %v9619 = vpack.c.b16 %v9163, %v9159
    %v9620 = vpack.c.b16 %v9164, %v9160
    %v9621 = vpack.c.b16 %v9169, %v9165
    %v9622 = vpack.c.b16 %v9170, %v9166
    %v9623 = vpack.c.b16 %v9171, %v9167
    %v9624 = vpack.c.b16 %v9172, %v9168
    %v9625 = vpack.c.b16 %v9177, %v9173
    %v9626 = vpack.c.b16 %v9178, %v9174
    %v9627 = vpack.c.b16 %v9179, %v9175
    %v9628 = vpack.c.b16 %v9180, %v9176
    %v9629 = vpack.c.b16 %v9185, %v9181
    %v9630 = vpack.c.b16 %v9186, %v9182
    %v9631 = vpack.c.b16 %v9187, %v9183
    %v9632 = vpack.c.b16 %v9188, %v9184
    %v9633 = vpack.c.b16 %v9193, %v9189
    %v9634 = vpack.c.b16 %v9194, %v9190
    %v9635 = vpack.c.b16 %v9195, %v9191
    %v9636 = vpack.c.b16 %v9196, %v9192
    %v9637 = vpack.c.b16 %v9201, %v9197
    %v9638 = vpack.c.b16 %v9202, %v9198
    %v9639 = vpack.c.b16 %v9203, %v9199
    %v9640 = vpack.c.b16 %v9204, %v9200
    %v9641 = vpack.c.b16 %v9209, %v9205
    %v9642 = vpack.c.b16 %v9210, %v9206
    %v9643 = vpack.c.b16 %v9211, %v9207
    %v9644 = vpack.c.b16 %v9212, %v9208
    %v9645 = vpack.c.b16 %v9217, %v9213
    %v9646 = vpack.c.b16 %v9218, %v9214
    %v9647 = vpack.c.b16 %v9219, %v9215
    %v9648 = vpack.c.b16 %v9220, %v9216
    %v9649 = vpack.c.b16 %v9225, %v9221
    %v9650 = vpack.c.b16 %v9226, %v9222
    %v9651 = vpack.c.b16 %v9227, %v9223
    %v9652 = vpack.c.b16 %v9228, %v9224
    %v9653 = vpack.c.b16 %v9233, %v9229
    %v9654 = vpack.c.b16 %v9234, %v9230
    %v9655 = vpack.c.b16 %v9235, %v9231
    %v9656 = vpack.c.b16 %v9236, %v9232
    %v9657 = vpack.c.b16 %v9241, %v9237
    %v9658 = vpack.c.b16 %v9242, %v9238
    %v9659 = vpack.c.b16 %v9243, %v9239
    %v9660 = vpack.c.b16 %v9244, %v9240
    %v9661 = vpack.c.b16 %v9249, %v9245
    %v9662 = vpack.c.b16 %v9250, %v9246
    %v9663 = vpack.c.b16 %v9251, %v9247
    %v9664 = vpack.c.b16 %v9252, %v9248
    %v9665 = vpack.c.b16 %v9257, %v9253
    %v9666 = vpack.c.b16 %v9258, %v9254
    %v9667 = vpack.c.b16 %v9259, %v9255
    %v9668 = vpack.c.b16 %v9260, %v9256
    %v9669 = vpack.c.b16 %v9265, %v9261
    %v9670 = vpack.c.b16 %v9266, %v9262
    %v9671 = vpack.c.b16 %v9267, %v9263
    %v9672 = vpack.c.b16 %v9268, %v9264
    %v9673 = vpack.c.b16 %v9273, %v9269
    %v9674 = vpack.c.b16 %v9274, %v9270
    %v9675 = vpack.c.b16 %v9275, %v9271
    %v9676 = vpack.c.b16 %v9276, %v9272
    %v9677 = vpack.c.b16 %v9281, %v9277
    %v9678 = vpack.c.b16 %v9282, %v9278
    %v9679 = vpack.c.b16 %v9283, %v9279
    %v9680 = vpack.c.b16 %v9284, %v9280
    %v9681 = vpack.c.b16 %v9289, %v9285
    %v9682 = vpack.c.b16 %v9290, %v9286
    %v9683 = vpack.c.b16 %v9291, %v9287
    %v9684 = vpack.c.b16 %v9292, %v9288
    %v9685 = vpack.c.b16 %v9297, %v9293
    %v9686 = vpack.c.b16 %v9298, %v9294
    %v9687 = vpack.c.b16 %v9299, %v9295
    %v9688 = vpack.c.b16 %v9300, %v9296
    %v9689 = vpack.c.b16 %v9305, %v9301
    %v9690 = vpack.c.b16 %v9306, %v9302
    %v9691 = vpack.c.b16 %v9307, %v9303
    %v9692 = vpack.c.b16 %v9308, %v9304
    %v9693 = vpack.c.b16 %v9313, %v9309
    %v9694 = vpack.c.b16 %v9314, %v9310
    %v9695 = vpack.c.b16 %v9315, %v9311
    %v9696 = vpack.c.b16 %v9316, %v9312
    %v9697 = vpack.c.b16 %v9321, %v9317
    %v9698 = vpack.c.b16 %v9322, %v9318
    %v9699 = vpack.c.b16 %v9323, %v9319
    %v9700 = vpack.c.b16 %v9324, %v9320
    %v9701 = vpack.c.b16 %v9329, %v9325
    %v9702 = vpack.c.b16 %v9330, %v9326
    %v9703 = vpack.c.b16 %v9331, %v9327
    %v9704 = vpack.c.b16 %v9332, %v9328
    %v9705 = vpack.c.b16 %v9337, %v9333
    %v9706 = vpack.c.b16 %v9338, %v9334
    %v9707 = vpack.c.b16 %v9339, %v9335
    %v9708 = vpack.c.b16 %v9340, %v9336
    %v9709 = vpack.c.b16 %v9345, %v9341
    %v9710 = vpack.c.b16 %v9346, %v9342
    %v9711 = vpack.c.b16 %v9347, %v9343
    %v9712 = vpack.c.b16 %v9348, %v9344
    %v9713 = vpack.c.b16 %v9353, %v9349
    %v9714 = vpack.c.b16 %v9354, %v9350
    %v9715 = vpack.c.b16 %v9355, %v9351
    %v9716 = vpack.c.b16 %v9356, %v9352
    %v9717 = vpack.c.b16 %v9361, %v9357
    %v9718 = vpack.c.b16 %v9362, %v9358
    %v9719 = vpack.c.b16 %v9363, %v9359
    %v9720 = vpack.c.b16 %v9364, %v9360
    %v9721 = vpack.c.b16 %v9369, %v9365
    %v9722 = vpack.c.b16 %v9370, %v9366
    %v9723 = vpack.c.b16 %v9371, %v9367
    %v9724 = vpack.c.b16 %v9372, %v9368
    %v9725 = vpack.c.b16 %v9377, %v9373
    %v9726 = vpack.c.b16 %v9378, %v9374
    %v9727 = vpack.c.b16 %v9379, %v9375
    %v9728 = vpack.c.b16 %v9380, %v9376
    %v9729 = vpack.c.b16 %v9385, %v9381
    %v9730 = vpack.c.b16 %v9386, %v9382
    %v9731 = vpack.c.b16 %v9387, %v9383
    %v9732 = vpack.c.b16 %v9388, %v9384
    %v9733 = vpack.c.b16 %v9393, %v9389
    %v9734 = vpack.c.b16 %v9394, %v9390
    %v9735 = vpack.c.b16 %v9395, %v9391
    %v9736 = vpack.c.b16 %v9396, %v9392
    %v9737 = vpack.c.b16 %v9401, %v9397
    %v9738 = vpack.c.b16 %v9402, %v9398
    %v9739 = vpack.c.b16 %v9403, %v9399
    %v9740 = vpack.c.b16 %v9404, %v9400
    %v9741 = vpack.c.b16 %v9409, %v9405
    %v9742 = vpack.c.b16 %v9410, %v9406
    %v9743 = vpack.c.b16 %v9411, %v9407
    %v9744 = vpack.c.b16 %v9412, %v9408
    %v9745 = vpack.c.b16 %v9417, %v9413
    %v9746 = vpack.c.b16 %v9418, %v9414
    %v9747 = vpack.c.b16 %v9419, %v9415
    %v9748 = vpack.c.b16 %v9420, %v9416
    %v9749 = vpack.c.b16 %v9425, %v9421
    %v9750 = vpack.c.b16 %v9426, %v9422
    %v9751 = vpack.c.b16 %v9427, %v9423
    %v9752 = vpack.c.b16 %v9428, %v9424
    %v9753 = vpack.c.b16 %v9433, %v9429
    %v9754 = vpack.c.b16 %v9434, %v9430
    %v9755 = vpack.c.b16 %v9435, %v9431
    %v9756 = vpack.c.b16 %v9436, %v9432
    %v9757 = vpack.c.b16 %v9441, %v9437
    %v9758 = vpack.c.b16 %v9442, %v9438
    %v9759 = vpack.c.b16 %v9443, %v9439
    %v9760 = vpack.c.b16 %v9444, %v9440
    %v9761 = vpack.c.b16 %v9449, %v9445
    %v9762 = vpack.c.b16 %v9450, %v9446
    %v9763 = vpack.c.b16 %v9451, %v9447
    %v9764 = vpack.c.b16 %v9452, %v9448
    %v9765 = vpack.c.b16 %v9457, %v9453
    %v9766 = vpack.c.b16 %v9458, %v9454
    %v9767 = vpack.c.b16 %v9459, %v9455
    %v9768 = vpack.c.b16 %v9460, %v9456
    %v9769 = vpack.c.b16 %v9465, %v9461
    %v9770 = vpack.c.b16 %v9466, %v9462
    %v9771 = vpack.c.b16 %v9467, %v9463
    %v9772 = vpack.c.b16 %v9468, %v9464
    %v9773 = vpack.c.b16 %v9473, %v9469
    %v9774 = vpack.c.b16 %v9474, %v9470
    %v9775 = vpack.c.b16 %v9475, %v9471
    %v9776 = vpack.c.b16 %v9476, %v9472
    %v9777 = vpack.c.b16 %v9481, %v9477
    %v9778 = vpack.c.b16 %v9482, %v9478
    %v9779 = vpack.c.b16 %v9483, %v9479
    %v9780 = vpack.c.b16 %v9484, %v9480
    %v9781 = vpack.c.b16 %v9489, %v9485
    %v9782 = vpack.c.b16 %v9490, %v9486
    %v9783 = vpack.c.b16 %v9491, %v9487
    %v9784 = vpack.c.b16 %v9492, %v9488
    %v9785 = vpack.c.b16 %v9497, %v9493
    %v9786 = vpack.c.b16 %v9498, %v9494
    %v9787 = vpack.c.b16 %v9499, %v9495
    %v9788 = vpack.c.b16 %v9500, %v9496
    %v9789 = vpack.c.b16 %v9505, %v9501
    %v9790 = vpack.c.b16 %v9506, %v9502
    %v9791 = vpack.c.b16 %v9507, %v9503
    %v9792 = vpack.c.b16 %v9508, %v9504
    %v9793 = vpack.c.b16 %v9513, %v9509
    %v9794 = vpack.c.b16 %v9514, %v9510
    %v9795 = vpack.c.b16 %v9515, %v9511
    %v9796 = vpack.c.b16 %v9516, %v9512
    %v9797 = vpack.c.b16 %v9521, %v9517
    %v9798 = vpack.c.b16 %v9522, %v9518
    %v9799 = vpack.c.b16 %v9523, %v9519
    %v9800 = vpack.c.b16 %v9524, %v9520
    %v9801 = vpack.c.b16 %v9529, %v9525
    %v9802 = vpack.c.b16 %v9530, %v9526
    %v9803 = vpack.c.b16 %v9531, %v9527
    %v9804 = vpack.c.b16 %v9532, %v9528
    %v9805 = vpack.c.b16 %v9537, %v9533
    %v9806 = vpack.c.b16 %v9538, %v9534
    %v9807 = vpack.c.b16 %v9539, %v9535
    %v9808 = vpack.c.b16 %v9540, %v9536
    %v9809 = vpack.c.b16 %v9545, %v9541
    %v9810 = vpack.c.b16 %v9546, %v9542
    %v9811 = vpack.c.b16 %v9547, %v9543
    %v9812 = vpack.c.b16 %v9548, %v9544
    %v9813 = vpack.c.b16 %v9553, %v9549
    %v9814 = vpack.c.b16 %v9554, %v9550
    %v9815 = vpack.c.b16 %v9555, %v9551
    %v9816 = vpack.c.b16 %v9556, %v9552
    %v9817 = vpack.c.b16 %v9561, %v9557
    %v9818 = vpack.c.b16 %v9562, %v9558
    %v9819 = vpack.c.b16 %v9563, %v9559
    %v9820 = vpack.c.b16 %v9564, %v9560
    %10077 = vmatpush.bf16.msra.mxu0 %v9593
    %10078 = vmatpush.bf16.msra.mxu0 %v9589
    %10079 = vmatpush.bf16.msra.mxu0 %v9585
    %10080 = vmatpush.bf16.msra.mxu0 %v9581
    %10081 = vmatpush.bf16.msra.mxu0 %v9577
    %10082 = vmatpush.bf16.msra.mxu0 %v9573
    %10083 = vmatpush.bf16.msra.mxu0 %v9569
    %10084 = vmatpush.bf16.msra.mxu0 %v9565
    %10085 = vmatmul.bf16.gmra.mxu0 %v8523
    %v10086 = vpop.f32.mrf.mxu0
    %v10087 = vadd.f32 %v8789, %v10086
    %v10088 = vpop.f32.mrf.mxu0
    %10089 = vdwg.mxu0
    %10090 = vmatpush.bf16.msra.mxu0 %v9625
    %10091 = vmatpush.bf16.msra.mxu0 %v9621
    %10092 = vmatpush.bf16.msra.mxu0 %v9617
    %10093 = vmatpush.bf16.msra.mxu0 %v9613
    %10094 = vmatpush.bf16.msra.mxu0 %v9609
    %10095 = vmatpush.bf16.msra.mxu0 %v9605
    %10096 = vmatpush.bf16.msra.mxu0 %v9601
    %10097 = vmatpush.bf16.msra.mxu0 %v9597
    %10098 = vmatmul.bf16.gmra.mxu0 %v8524
    %v10099 = vpop.f32.mrf.mxu0
    %v10100 = vadd.f32 %v10087, %v10099
    %v10101 = vpop.f32.mrf.mxu0
    %10102 = vdwg.mxu0
    %10103 = vmatpush.bf16.msra.mxu0 %v9657
    %10104 = vmatpush.bf16.msra.mxu0 %v9653
    %10105 = vmatpush.bf16.msra.mxu0 %v9649
    %10106 = vmatpush.bf16.msra.mxu0 %v9645
    %10107 = vmatpush.bf16.msra.mxu0 %v9641
    %10108 = vmatpush.bf16.msra.mxu0 %v9637
    %10109 = vmatpush.bf16.msra.mxu0 %v9633
    %10110 = vmatpush.bf16.msra.mxu0 %v9629
    %10111 = vmatmul.bf16.gmra.mxu0 %v8525
    %v10112 = vpop.f32.mrf.mxu0
    %v10113 = vadd.f32 %v10100, %v10112
    %v10114 = vpop.f32.mrf.mxu0
    %10115 = vdwg.mxu0
    %10116 = vmatpush.bf16.msra.mxu0 %v9689
    %10117 = vmatpush.bf16.msra.mxu0 %v9685
    %10118 = vmatpush.bf16.msra.mxu0 %v9681
    %10119 = vmatpush.bf16.msra.mxu0 %v9677
    %10120 = vmatpush.bf16.msra.mxu0 %v9673
    %10121 = vmatpush.bf16.msra.mxu0 %v9669
    %10122 = vmatpush.bf16.msra.mxu0 %v9665
    %10123 = vmatpush.bf16.msra.mxu0 %v9661
    %10124 = vmatmul.bf16.gmra.mxu0 %v8526
    %v10125 = vpop.f32.mrf.mxu0
    %v10126 = vadd.f32 %v10113, %v10125
    %v10127 = vpop.f32.mrf.mxu0
    %10128 = vdwg.mxu0
    %10129 = vmatpush.bf16.msra.mxu0 %v9721
    %10130 = vmatpush.bf16.msra.mxu0 %v9717
    %10131 = vmatpush.bf16.msra.mxu0 %v9713
    %10132 = vmatpush.bf16.msra.mxu0 %v9709
    %10133 = vmatpush.bf16.msra.mxu0 %v9705
    %10134 = vmatpush.bf16.msra.mxu0 %v9701
    %10135 = vmatpush.bf16.msra.mxu0 %v9697
    %10136 = vmatpush.bf16.msra.mxu0 %v9693
    %10137 = vmatmul.bf16.gmra.mxu0 %v8527
    %v10138 = vpop.f32.mrf.mxu0
    %v10139 = vadd.f32 %v10126, %v10138
    %v10140 = vpop.f32.mrf.mxu0
    %10141 = vdwg.mxu0
    %10142 = vmatpush.bf16.msra.mxu0 %v9753
    %10143 = vmatpush.bf16.msra.mxu0 %v9749
    %10144 = vmatpush.bf16.msra.mxu0 %v9745
    %10145 = vmatpush.bf16.msra.mxu0 %v9741
    %10146 = vmatpush.bf16.msra.mxu0 %v9737
    %10147 = vmatpush.bf16.msra.mxu0 %v9733
    %10148 = vmatpush.bf16.msra.mxu0 %v9729
    %10149 = vmatpush.bf16.msra.mxu0 %v9725
    %10150 = vmatmul.bf16.gmra.mxu0 %v8528
    %v10151 = vpop.f32.mrf.mxu0
    %v10152 = vadd.f32 %v10139, %v10151
    %v10153 = vpop.f32.mrf.mxu0
    %10154 = vdwg.mxu0
    %10155 = vmatpush.bf16.msra.mxu0 %v9785
    %10156 = vmatpush.bf16.msra.mxu0 %v9781
    %10157 = vmatpush.bf16.msra.mxu0 %v9777
    %10158 = vmatpush.bf16.msra.mxu0 %v9773
    %10159 = vmatpush.bf16.msra.mxu0 %v9769
    %10160 = vmatpush.bf16.msra.mxu0 %v9765
    %10161 = vmatpush.bf16.msra.mxu0 %v9761
    %10162 = vmatpush.bf16.msra.mxu0 %v9757
    %10163 = vmatmul.bf16.gmra.mxu0 %v8529
    %v10164 = vpop.f32.mrf.mxu0
    %v10165 = vadd.f32 %v10152, %v10164
    %v10166 = vpop.f32.mrf.mxu0
    %10167 = vdwg.mxu0
    %10168 = vmatpush.bf16.msra.mxu0 %v9817
    %10169 = vmatpush.bf16.msra.mxu0 %v9813
    %10170 = vmatpush.bf16.msra.mxu0 %v9809
    %10171 = vmatpush.bf16.msra.mxu0 %v9805
    %10172 = vmatpush.bf16.msra.mxu0 %v9801
    %10173 = vmatpush.bf16.msra.mxu0 %v9797
    %10174 = vmatpush.bf16.msra.mxu0 %v9793
    %10175 = vmatpush.bf16.msra.mxu0 %v9789
    %10176 = vmatmul.bf16.gmra.mxu0 %v8530
    %v10177 = vpop.f32.mrf.mxu0
    %v10178 = vadd.f32 %v10165, %v10177
    %v10179 = vpop.f32.mrf.mxu0
    %10180 = vdwg.mxu0
    %10181 = vmatpush.bf16.msra.mxu0 %v9594
    %10182 = vmatpush.bf16.msra.mxu0 %v9590
    %10183 = vmatpush.bf16.msra.mxu0 %v9586
    %10184 = vmatpush.bf16.msra.mxu0 %v9582
    %10185 = vmatpush.bf16.msra.mxu0 %v9578
    %10186 = vmatpush.bf16.msra.mxu0 %v9574
    %10187 = vmatpush.bf16.msra.mxu0 %v9570
    %10188 = vmatpush.bf16.msra.mxu0 %v9566
    %10189 = vmatmul.bf16.gmra.mxu0 %v8523
    %v10190 = vpop.f32.mrf.mxu0
    %v10191 = vadd.f32 %v8790, %v10190
    %v10192 = vpop.f32.mrf.mxu0
    %10193 = vdwg.mxu0
    %10194 = vmatpush.bf16.msra.mxu0 %v9626
    %10195 = vmatpush.bf16.msra.mxu0 %v9622
    %10196 = vmatpush.bf16.msra.mxu0 %v9618
    %10197 = vmatpush.bf16.msra.mxu0 %v9614
    %10198 = vmatpush.bf16.msra.mxu0 %v9610
    %10199 = vmatpush.bf16.msra.mxu0 %v9606
    %10200 = vmatpush.bf16.msra.mxu0 %v9602
    %10201 = vmatpush.bf16.msra.mxu0 %v9598
    %10202 = vmatmul.bf16.gmra.mxu0 %v8524
    %v10203 = vpop.f32.mrf.mxu0
    %v10204 = vadd.f32 %v10191, %v10203
    %v10205 = vpop.f32.mrf.mxu0
    %10206 = vdwg.mxu0
    %10207 = vmatpush.bf16.msra.mxu0 %v9658
    %10208 = vmatpush.bf16.msra.mxu0 %v9654
    %10209 = vmatpush.bf16.msra.mxu0 %v9650
    %10210 = vmatpush.bf16.msra.mxu0 %v9646
    %10211 = vmatpush.bf16.msra.mxu0 %v9642
    %10212 = vmatpush.bf16.msra.mxu0 %v9638
    %10213 = vmatpush.bf16.msra.mxu0 %v9634
    %10214 = vmatpush.bf16.msra.mxu0 %v9630
    %10215 = vmatmul.bf16.gmra.mxu0 %v8525
    %v10216 = vpop.f32.mrf.mxu0
    %v10217 = vadd.f32 %v10204, %v10216
    %v10218 = vpop.f32.mrf.mxu0
    %10219 = vdwg.mxu0
    %10220 = vmatpush.bf16.msra.mxu0 %v9690
    %10221 = vmatpush.bf16.msra.mxu0 %v9686
    %10222 = vmatpush.bf16.msra.mxu0 %v9682
    %10223 = vmatpush.bf16.msra.mxu0 %v9678
    %10224 = vmatpush.bf16.msra.mxu0 %v9674
    %10225 = vmatpush.bf16.msra.mxu0 %v9670
    %10226 = vmatpush.bf16.msra.mxu0 %v9666
    %10227 = vmatpush.bf16.msra.mxu0 %v9662
    %10228 = vmatmul.bf16.gmra.mxu0 %v8526
    %v10229 = vpop.f32.mrf.mxu0
    %v10230 = vadd.f32 %v10217, %v10229
    %v10231 = vpop.f32.mrf.mxu0
    %10232 = vdwg.mxu0
    %10233 = vmatpush.bf16.msra.mxu0 %v9722
    %10234 = vmatpush.bf16.msra.mxu0 %v9718
    %10235 = vmatpush.bf16.msra.mxu0 %v9714
    %10236 = vmatpush.bf16.msra.mxu0 %v9710
    %10237 = vmatpush.bf16.msra.mxu0 %v9706
    %10238 = vmatpush.bf16.msra.mxu0 %v9702
    %10239 = vmatpush.bf16.msra.mxu0 %v9698
    %10240 = vmatpush.bf16.msra.mxu0 %v9694
    %10241 = vmatmul.bf16.gmra.mxu0 %v8527
    %v10242 = vpop.f32.mrf.mxu0
    %v10243 = vadd.f32 %v10230, %v10242
    %v10244 = vpop.f32.mrf.mxu0
    %10245 = vdwg.mxu0
    %10246 = vmatpush.bf16.msra.mxu0 %v9754
    %10247 = vmatpush.bf16.msra.mxu0 %v9750
    %10248 = vmatpush.bf16.msra.mxu0 %v9746
    %10249 = vmatpush.bf16.msra.mxu0 %v9742
    %10250 = vmatpush.bf16.msra.mxu0 %v9738
    %10251 = vmatpush.bf16.msra.mxu0 %v9734
    %10252 = vmatpush.bf16.msra.mxu0 %v9730
    %10253 = vmatpush.bf16.msra.mxu0 %v9726
    %10254 = vmatmul.bf16.gmra.mxu0 %v8528
    %v10255 = vpop.f32.mrf.mxu0
    %v10256 = vadd.f32 %v10243, %v10255
    %v10257 = vpop.f32.mrf.mxu0
    %10258 = vdwg.mxu0
    %10259 = vmatpush.bf16.msra.mxu0 %v9786
    %10260 = vmatpush.bf16.msra.mxu0 %v9782
    %10261 = vmatpush.bf16.msra.mxu0 %v9778
    %10262 = vmatpush.bf16.msra.mxu0 %v9774
    %10263 = vmatpush.bf16.msra.mxu0 %v9770
    %10264 = vmatpush.bf16.msra.mxu0 %v9766
    %10265 = vmatpush.bf16.msra.mxu0 %v9762
    %10266 = vmatpush.bf16.msra.mxu0 %v9758
    %10267 = vmatmul.bf16.gmra.mxu0 %v8529
    %v10268 = vpop.f32.mrf.mxu0
    %v10269 = vadd.f32 %v10256, %v10268
    %v10270 = vpop.f32.mrf.mxu0
    %10271 = vdwg.mxu0
    %10272 = vmatpush.bf16.msra.mxu0 %v9818
    %10273 = vmatpush.bf16.msra.mxu0 %v9814
    %10274 = vmatpush.bf16.msra.mxu0 %v9810
    %10275 = vmatpush.bf16.msra.mxu0 %v9806
    %10276 = vmatpush.bf16.msra.mxu0 %v9802
    %10277 = vmatpush.bf16.msra.mxu0 %v9798
    %10278 = vmatpush.bf16.msra.mxu0 %v9794
    %10279 = vmatpush.bf16.msra.mxu0 %v9790
    %10280 = vmatmul.bf16.gmra.mxu0 %v8530
    %v10281 = vpop.f32.mrf.mxu0
    %v10282 = vadd.f32 %v10269, %v10281
    %v10283 = vpop.f32.mrf.mxu0
    %10284 = vdwg.mxu0
    %10285 = vmatpush.bf16.msra.mxu0 %v9595
    %10286 = vmatpush.bf16.msra.mxu0 %v9591
    %10287 = vmatpush.bf16.msra.mxu0 %v9587
    %10288 = vmatpush.bf16.msra.mxu0 %v9583
    %10289 = vmatpush.bf16.msra.mxu0 %v9579
    %10290 = vmatpush.bf16.msra.mxu0 %v9575
    %10291 = vmatpush.bf16.msra.mxu0 %v9571
    %10292 = vmatpush.bf16.msra.mxu0 %v9567
    %10293 = vmatmul.bf16.gmra.mxu0 %v8523
    %v10294 = vpop.f32.mrf.mxu0
    %v10295 = vadd.f32 %v8791, %v10294
    %v10296 = vpop.f32.mrf.mxu0
    %10297 = vdwg.mxu0
    %10298 = vmatpush.bf16.msra.mxu0 %v9627
    %10299 = vmatpush.bf16.msra.mxu0 %v9623
    %10300 = vmatpush.bf16.msra.mxu0 %v9619
    %10301 = vmatpush.bf16.msra.mxu0 %v9615
    %10302 = vmatpush.bf16.msra.mxu0 %v9611
    %10303 = vmatpush.bf16.msra.mxu0 %v9607
    %10304 = vmatpush.bf16.msra.mxu0 %v9603
    %10305 = vmatpush.bf16.msra.mxu0 %v9599
    %10306 = vmatmul.bf16.gmra.mxu0 %v8524
    %v10307 = vpop.f32.mrf.mxu0
    %v10308 = vadd.f32 %v10295, %v10307
    %v10309 = vpop.f32.mrf.mxu0
    %10310 = vdwg.mxu0
    %10311 = vmatpush.bf16.msra.mxu0 %v9659
    %10312 = vmatpush.bf16.msra.mxu0 %v9655
    %10313 = vmatpush.bf16.msra.mxu0 %v9651
    %10314 = vmatpush.bf16.msra.mxu0 %v9647
    %10315 = vmatpush.bf16.msra.mxu0 %v9643
    %10316 = vmatpush.bf16.msra.mxu0 %v9639
    %10317 = vmatpush.bf16.msra.mxu0 %v9635
    %10318 = vmatpush.bf16.msra.mxu0 %v9631
    %10319 = vmatmul.bf16.gmra.mxu0 %v8525
    %v10320 = vpop.f32.mrf.mxu0
    %v10321 = vadd.f32 %v10308, %v10320
    %v10322 = vpop.f32.mrf.mxu0
    %10323 = vdwg.mxu0
    %10324 = vmatpush.bf16.msra.mxu0 %v9691
    %10325 = vmatpush.bf16.msra.mxu0 %v9687
    %10326 = vmatpush.bf16.msra.mxu0 %v9683
    %10327 = vmatpush.bf16.msra.mxu0 %v9679
    %10328 = vmatpush.bf16.msra.mxu0 %v9675
    %10329 = vmatpush.bf16.msra.mxu0 %v9671
    %10330 = vmatpush.bf16.msra.mxu0 %v9667
    %10331 = vmatpush.bf16.msra.mxu0 %v9663
    %10332 = vmatmul.bf16.gmra.mxu0 %v8526
    %v10333 = vpop.f32.mrf.mxu0
    %v10334 = vadd.f32 %v10321, %v10333
    %v10335 = vpop.f32.mrf.mxu0
    %10336 = vdwg.mxu0
    %10337 = vmatpush.bf16.msra.mxu0 %v9723
    %10338 = vmatpush.bf16.msra.mxu0 %v9719
    %10339 = vmatpush.bf16.msra.mxu0 %v9715
    %10340 = vmatpush.bf16.msra.mxu0 %v9711
    %10341 = vmatpush.bf16.msra.mxu0 %v9707
    %10342 = vmatpush.bf16.msra.mxu0 %v9703
    %10343 = vmatpush.bf16.msra.mxu0 %v9699
    %10344 = vmatpush.bf16.msra.mxu0 %v9695
    %10345 = vmatmul.bf16.gmra.mxu0 %v8527
    %v10346 = vpop.f32.mrf.mxu0
    %v10347 = vadd.f32 %v10334, %v10346
    %v10348 = vpop.f32.mrf.mxu0
    %10349 = vdwg.mxu0
    %10350 = vmatpush.bf16.msra.mxu0 %v9755
    %10351 = vmatpush.bf16.msra.mxu0 %v9751
    %10352 = vmatpush.bf16.msra.mxu0 %v9747
    %10353 = vmatpush.bf16.msra.mxu0 %v9743
    %10354 = vmatpush.bf16.msra.mxu0 %v9739
    %10355 = vmatpush.bf16.msra.mxu0 %v9735
    %10356 = vmatpush.bf16.msra.mxu0 %v9731
    %10357 = vmatpush.bf16.msra.mxu0 %v9727
    %10358 = vmatmul.bf16.gmra.mxu0 %v8528
    %v10359 = vpop.f32.mrf.mxu0
    %v10360 = vadd.f32 %v10347, %v10359
    %v10361 = vpop.f32.mrf.mxu0
    %10362 = vdwg.mxu0
    %10363 = vmatpush.bf16.msra.mxu0 %v9787
    %10364 = vmatpush.bf16.msra.mxu0 %v9783
    %10365 = vmatpush.bf16.msra.mxu0 %v9779
    %10366 = vmatpush.bf16.msra.mxu0 %v9775
    %10367 = vmatpush.bf16.msra.mxu0 %v9771
    %10368 = vmatpush.bf16.msra.mxu0 %v9767
    %10369 = vmatpush.bf16.msra.mxu0 %v9763
    %10370 = vmatpush.bf16.msra.mxu0 %v9759
    %10371 = vmatmul.bf16.gmra.mxu0 %v8529
    %v10372 = vpop.f32.mrf.mxu0
    %v10373 = vadd.f32 %v10360, %v10372
    %v10374 = vpop.f32.mrf.mxu0
    %10375 = vdwg.mxu0
    %10376 = vmatpush.bf16.msra.mxu0 %v9819
    %10377 = vmatpush.bf16.msra.mxu0 %v9815
    %10378 = vmatpush.bf16.msra.mxu0 %v9811
    %10379 = vmatpush.bf16.msra.mxu0 %v9807
    %10380 = vmatpush.bf16.msra.mxu0 %v9803
    %10381 = vmatpush.bf16.msra.mxu0 %v9799
    %10382 = vmatpush.bf16.msra.mxu0 %v9795
    %10383 = vmatpush.bf16.msra.mxu0 %v9791
    %10384 = vmatmul.bf16.gmra.mxu0 %v8530
    %v10385 = vpop.f32.mrf.mxu0
    %v10386 = vadd.f32 %v10373, %v10385
    %v10387 = vpop.f32.mrf.mxu0
    %10388 = vdwg.mxu0
    %10389 = vmatpush.bf16.msra.mxu0 %v9596
    %10390 = vmatpush.bf16.msra.mxu0 %v9592
    %10391 = vmatpush.bf16.msra.mxu0 %v9588
    %10392 = vmatpush.bf16.msra.mxu0 %v9584
    %10393 = vmatpush.bf16.msra.mxu0 %v9580
    %10394 = vmatpush.bf16.msra.mxu0 %v9576
    %10395 = vmatpush.bf16.msra.mxu0 %v9572
    %10396 = vmatpush.bf16.msra.mxu0 %v9568
    %10397 = vmatmul.bf16.gmra.mxu0 %v8523
    %v10398 = vpop.f32.mrf.mxu0
    %v10399 = vadd.f32 %v8792, %v10398
    %v10400 = vpop.f32.mrf.mxu0
    %10401 = vdwg.mxu0
    %10402 = vmatpush.bf16.msra.mxu0 %v9628
    %10403 = vmatpush.bf16.msra.mxu0 %v9624
    %10404 = vmatpush.bf16.msra.mxu0 %v9620
    %10405 = vmatpush.bf16.msra.mxu0 %v9616
    %10406 = vmatpush.bf16.msra.mxu0 %v9612
    %10407 = vmatpush.bf16.msra.mxu0 %v9608
    %10408 = vmatpush.bf16.msra.mxu0 %v9604
    %10409 = vmatpush.bf16.msra.mxu0 %v9600
    %10410 = vmatmul.bf16.gmra.mxu0 %v8524
    %v10411 = vpop.f32.mrf.mxu0
    %v10412 = vadd.f32 %v10399, %v10411
    %v10413 = vpop.f32.mrf.mxu0
    %10414 = vdwg.mxu0
    %10415 = vmatpush.bf16.msra.mxu0 %v9660
    %10416 = vmatpush.bf16.msra.mxu0 %v9656
    %10417 = vmatpush.bf16.msra.mxu0 %v9652
    %10418 = vmatpush.bf16.msra.mxu0 %v9648
    %10419 = vmatpush.bf16.msra.mxu0 %v9644
    %10420 = vmatpush.bf16.msra.mxu0 %v9640
    %10421 = vmatpush.bf16.msra.mxu0 %v9636
    %10422 = vmatpush.bf16.msra.mxu0 %v9632
    %10423 = vmatmul.bf16.gmra.mxu0 %v8525
    %v10424 = vpop.f32.mrf.mxu0
    %v10425 = vadd.f32 %v10412, %v10424
    %v10426 = vpop.f32.mrf.mxu0
    %10427 = vdwg.mxu0
    %10428 = vmatpush.bf16.msra.mxu0 %v9692
    %10429 = vmatpush.bf16.msra.mxu0 %v9688
    %10430 = vmatpush.bf16.msra.mxu0 %v9684
    %10431 = vmatpush.bf16.msra.mxu0 %v9680
    %10432 = vmatpush.bf16.msra.mxu0 %v9676
    %10433 = vmatpush.bf16.msra.mxu0 %v9672
    %10434 = vmatpush.bf16.msra.mxu0 %v9668
    %10435 = vmatpush.bf16.msra.mxu0 %v9664
    %10436 = vmatmul.bf16.gmra.mxu0 %v8526
    %v10437 = vpop.f32.mrf.mxu0
    %v10438 = vadd.f32 %v10425, %v10437
    %v10439 = vpop.f32.mrf.mxu0
    %10440 = vdwg.mxu0
    %10441 = vmatpush.bf16.msra.mxu0 %v9724
    %10442 = vmatpush.bf16.msra.mxu0 %v9720
    %10443 = vmatpush.bf16.msra.mxu0 %v9716
    %10444 = vmatpush.bf16.msra.mxu0 %v9712
    %10445 = vmatpush.bf16.msra.mxu0 %v9708
    %10446 = vmatpush.bf16.msra.mxu0 %v9704
    %10447 = vmatpush.bf16.msra.mxu0 %v9700
    %10448 = vmatpush.bf16.msra.mxu0 %v9696
    %10449 = vmatmul.bf16.gmra.mxu0 %v8527
    %v10450 = vpop.f32.mrf.mxu0
    %v10451 = vadd.f32 %v10438, %v10450
    %v10452 = vpop.f32.mrf.mxu0
    %10453 = vdwg.mxu0
    %10454 = vmatpush.bf16.msra.mxu0 %v9756
    %10455 = vmatpush.bf16.msra.mxu0 %v9752
    %10456 = vmatpush.bf16.msra.mxu0 %v9748
    %10457 = vmatpush.bf16.msra.mxu0 %v9744
    %10458 = vmatpush.bf16.msra.mxu0 %v9740
    %10459 = vmatpush.bf16.msra.mxu0 %v9736
    %10460 = vmatpush.bf16.msra.mxu0 %v9732
    %10461 = vmatpush.bf16.msra.mxu0 %v9728
    %10462 = vmatmul.bf16.gmra.mxu0 %v8528
    %v10463 = vpop.f32.mrf.mxu0
    %v10464 = vadd.f32 %v10451, %v10463
    %v10465 = vpop.f32.mrf.mxu0
    %10466 = vdwg.mxu0
    %10467 = vmatpush.bf16.msra.mxu0 %v9788
    %10468 = vmatpush.bf16.msra.mxu0 %v9784
    %10469 = vmatpush.bf16.msra.mxu0 %v9780
    %10470 = vmatpush.bf16.msra.mxu0 %v9776
    %10471 = vmatpush.bf16.msra.mxu0 %v9772
    %10472 = vmatpush.bf16.msra.mxu0 %v9768
    %10473 = vmatpush.bf16.msra.mxu0 %v9764
    %10474 = vmatpush.bf16.msra.mxu0 %v9760
    %10475 = vmatmul.bf16.gmra.mxu0 %v8529
    %v10476 = vpop.f32.mrf.mxu0
    %v10477 = vadd.f32 %v10464, %v10476
    %v10478 = vpop.f32.mrf.mxu0
    %10479 = vdwg.mxu0
    %10480 = vmatpush.bf16.msra.mxu0 %v9820
    %10481 = vmatpush.bf16.msra.mxu0 %v9816
    %10482 = vmatpush.bf16.msra.mxu0 %v9812
    %10483 = vmatpush.bf16.msra.mxu0 %v9808
    %10484 = vmatpush.bf16.msra.mxu0 %v9804
    %10485 = vmatpush.bf16.msra.mxu0 %v9800
    %10486 = vmatpush.bf16.msra.mxu0 %v9796
    %10487 = vmatpush.bf16.msra.mxu0 %v9792
    %10488 = vmatmul.bf16.gmra.mxu0 %v8530
    %v10489 = vpop.f32.mrf.mxu0
    %v10490 = vadd.f32 %v10477, %v10489
    %v10491 = vpop.f32.mrf.mxu0
    %10492 = vdwg.mxu0
    %v10493 = vmax.f32 %v10178, 0.0
    %v10494 = vmax.f32 %v10282, 0.0
    %v10495 = vmax.f32 %v10386, 0.0
    %v10496 = vmax.f32 %v10490, 0.0
    %v10497 = vpack.c.bf16 %v10493, %v10493
    %v10498 = vpack.c.bf16 %v10494, %v10494
    %v10499 = vpack.c.bf16 %v10495, %v10495
    %v10500 = vpack.c.bf16 %v10496, %v10496
    %v10501 = vld [vmem:[%s7] sm:$0xf]
    %v10502 = vld [vmem:[%s7 + $0x4] sm:$0xf]
    %v10503 = vld [vmem:[%s7 + $0x8] sm:$0xf]
    %v10504 = vld [vmem:[%s7 + $0xc] sm:$0xf]
    %v10505 = vld [vmem:[%s7 + $0x10] sm:$0xf]
    %v10506 = vld [vmem:[%s7 + $0x14] sm:$0xf]
    %v10507 = vld [vmem:[%s7 + $0x18] sm:$0xf]
    %v10508 = vld [vmem:[%s7 + $0x1c] sm:$0xf]
    %v10509 = vld [vmem:[%s7 + $0x20] sm:$0xf]
    %v10510 = vld [vmem:[%s7 + $0x24] sm:$0xf]
    %v10511 = vld [vmem:[%s7 + $0x28] sm:$0xf]
    %v10512 = vld [vmem:[%s7 + $0x2c] sm:$0xf]
    %v10513 = vld [vmem:[%s7 + $0x30] sm:$0xf]
    %v10514 = vld [vmem:[%s7 + $0x34] sm:$0xf]
    %v10515 = vld [vmem:[%s7 + $0x38] sm:$0xf]
    %v10516 = vld [vmem:[%s7 + $0x3c] sm:$0xf]
    %v10517 = vld [vmem:[%s7 + $0x40] sm:$0xf]
    %v10518 = vld [vmem:[%s7 + $0x44] sm:$0xf]
    %v10519 = vld [vmem:[%s7 + $0x48] sm:$0xf]
    %v10520 = vld [vmem:[%s7 + $0x4c] sm:$0xf]
    %v10521 = vld [vmem:[%s7 + $0x50] sm:$0xf]
    %v10522 = vld [vmem:[%s7 + $0x54] sm:$0xf]
    %v10523 = vld [vmem:[%s7 + $0x58] sm:$0xf]
    %v10524 = vld [vmem:[%s7 + $0x5c] sm:$0xf]
    %v10525 = vld [vmem:[%s7 + $0x60] sm:$0xf]
    %v10526 = vld [vmem:[%s7 + $0x64] sm:$0xf]
    %v10527 = vld [vmem:[%s7 + $0x68] sm:$0xf]
    %v10528 = vld [vmem:[%s7 + $0x6c] sm:$0xf]
    %v10529 = vld [vmem:[%s7 + $0x70] sm:$0xf]
    %v10530 = vld [vmem:[%s7 + $0x74] sm:$0xf]
    %v10531 = vld [vmem:[%s7 + $0x78] sm:$0xf]
    %v10532 = vld [vmem:[%s7 + $0x7c] sm:$0xf]
    %v10533 = vld [vmem:[%s7 + $0x80] sm:$0xf]
    %v10534 = vld [vmem:[%s7 + $0x84] sm:$0xf]
    %v10535 = vld [vmem:[%s7 + $0x88] sm:$0xf]
    %v10536 = vld [vmem:[%s7 + $0x8c] sm:$0xf]
    %v10537 = vld [vmem:[%s7 + $0x90] sm:$0xf]
    %v10538 = vld [vmem:[%s7 + $0x94] sm:$0xf]
    %v10539 = vld [vmem:[%s7 + $0x98] sm:$0xf]
    %v10540 = vld [vmem:[%s7 + $0x9c] sm:$0xf]
    %v10541 = vld [vmem:[%s7 + $0xa0] sm:$0xf]
    %v10542 = vld [vmem:[%s7 + $0xa4] sm:$0xf]
    %v10543 = vld [vmem:[%s7 + $0xa8] sm:$0xf]
    %v10544 = vld [vmem:[%s7 + $0xac] sm:$0xf]
    %v10545 = vld [vmem:[%s7 + $0xb0] sm:$0xf]
    %v10546 = vld [vmem:[%s7 + $0xb4] sm:$0xf]
    %v10547 = vld [vmem:[%s7 + $0xb8] sm:$0xf]
    %v10548 = vld [vmem:[%s7 + $0xbc] sm:$0xf]
    %v10549 = vld [vmem:[%s7 + $0xc0] sm:$0xf]
    %v10550 = vld [vmem:[%s7 + $0xc4] sm:$0xf]
    %v10551 = vld [vmem:[%s7 + $0xc8] sm:$0xf]
    %v10552 = vld [vmem:[%s7 + $0xcc] sm:$0xf]
    %v10553 = vld [vmem:[%s7 + $0xd0] sm:$0xf]
    %v10554 = vld [vmem:[%s7 + $0xd4] sm:$0xf]
    %v10555 = vld [vmem:[%s7 + $0xd8] sm:$0xf]
    %v10556 = vld [vmem:[%s7 + $0xdc] sm:$0xf]
    %v10557 = vld [vmem:[%s7 + $0xe0] sm:$0xf]
    %v10558 = vld [vmem:[%s7 + $0xe4] sm:$0xf]
    %v10559 = vld [vmem:[%s7 + $0xe8] sm:$0xf]
    %v10560 = vld [vmem:[%s7 + $0xec] sm:$0xf]
    %v10561 = vld [vmem:[%s7 + $0xf0] sm:$0xf]
    %v10562 = vld [vmem:[%s7 + $0xf4] sm:$0xf]
    %v10563 = vld [vmem:[%s7 + $0xf8] sm:$0xf]
    %v10564 = vld [vmem:[%s7 + $0xfc] sm:$0xf]
    %v10565 = vld [vmem:[#allocation13] sm:$0x1]
    %v10567 = vperm.slane %v10565, 0
    %v10633 = vunpack.c.l.b16 %v10501
    %v10634 = vunpack.c.l.b16 %v10502
    %v10635 = vunpack.c.l.b16 %v10503
    %v10636 = vunpack.c.l.b16 %v10504
    %v10637 = vunpack.c.l.b16 %v10505
    %v10638 = vunpack.c.l.b16 %v10506
    %v10639 = vunpack.c.l.b16 %v10507
    %v10640 = vunpack.c.l.b16 %v10508
    %v10641 = vunpack.c.l.b16 %v10509
    %v10642 = vunpack.c.l.b16 %v10510
    %v10643 = vunpack.c.l.b16 %v10511
    %v10644 = vunpack.c.l.b16 %v10512
    %v10645 = vunpack.c.l.b16 %v10513
    %v10646 = vunpack.c.l.b16 %v10514
    %v10647 = vunpack.c.l.b16 %v10515
    %v10648 = vunpack.c.l.b16 %v10516
    %v10649 = vunpack.c.l.b16 %v10517
    %v10650 = vunpack.c.l.b16 %v10518
    %v10651 = vunpack.c.l.b16 %v10519
    %v10652 = vunpack.c.l.b16 %v10520
    %v10653 = vunpack.c.l.b16 %v10521
    %v10654 = vunpack.c.l.b16 %v10522
    %v10655 = vunpack.c.l.b16 %v10523
    %v10656 = vunpack.c.l.b16 %v10524
    %v10657 = vunpack.c.l.b16 %v10525
    %v10658 = vunpack.c.l.b16 %v10526
    %v10659 = vunpack.c.l.b16 %v10527
    %v10660 = vunpack.c.l.b16 %v10528
    %v10661 = vunpack.c.l.b16 %v10529
    %v10662 = vunpack.c.l.b16 %v10530
    %v10663 = vunpack.c.l.b16 %v10531
    %v10664 = vunpack.c.l.b16 %v10532
    %v10665 = vunpack.c.l.b16 %v10533
    %v10666 = vunpack.c.l.b16 %v10534
    %v10667 = vunpack.c.l.b16 %v10535
    %v10668 = vunpack.c.l.b16 %v10536
    %v10669 = vunpack.c.l.b16 %v10537
    %v10670 = vunpack.c.l.b16 %v10538
    %v10671 = vunpack.c.l.b16 %v10539
    %v10672 = vunpack.c.l.b16 %v10540
    %v10673 = vunpack.c.l.b16 %v10541
    %v10674 = vunpack.c.l.b16 %v10542
    %v10675 = vunpack.c.l.b16 %v10543
    %v10676 = vunpack.c.l.b16 %v10544
    %v10677 = vunpack.c.l.b16 %v10545
    %v10678 = vunpack.c.l.b16 %v10546
    %v10679 = vunpack.c.l.b16 %v10547
    %v10680 = vunpack.c.l.b16 %v10548
    %v10681 = vunpack.c.l.b16 %v10549
    %v10682 = vunpack.c.l.b16 %v10550
    %v10683 = vunpack.c.l.b16 %v10551
    %v10684 = vunpack.c.l.b16 %v10552
    %v10685 = vunpack.c.l.b16 %v10553
    %v10686 = vunpack.c.l.b16 %v10554
    %v10687 = vunpack.c.l.b16 %v10555
    %v10688 = vunpack.c.l.b16 %v10556
    %v10689 = vunpack.c.l.b16 %v10557
    %v10690 = vunpack.c.l.b16 %v10558
    %v10691 = vunpack.c.l.b16 %v10559
    %v10692 = vunpack.c.l.b16 %v10560
    %v10693 = vunpack.c.l.b16 %v10561
    %v10694 = vunpack.c.l.b16 %v10562
    %v10695 = vunpack.c.l.b16 %v10563
    %v10696 = vunpack.c.l.b16 %v10564
    %v10697 = vpack.c.b16 %v10634, %v10633
    %v10698 = vpack.c.b16 %v10636, %v10635
    %v10699 = vpack.c.b16 %v10638, %v10637
    %v10700 = vpack.c.b16 %v10640, %v10639
    %v10701 = vpack.c.b16 %v10642, %v10641
    %v10702 = vpack.c.b16 %v10644, %v10643
    %v10703 = vpack.c.b16 %v10646, %v10645
    %v10704 = vpack.c.b16 %v10648, %v10647
    %v10705 = vpack.c.b16 %v10650, %v10649
    %v10706 = vpack.c.b16 %v10652, %v10651
    %v10707 = vpack.c.b16 %v10654, %v10653
    %v10708 = vpack.c.b16 %v10656, %v10655
    %v10709 = vpack.c.b16 %v10658, %v10657
    %v10710 = vpack.c.b16 %v10660, %v10659
    %v10711 = vpack.c.b16 %v10662, %v10661
    %v10712 = vpack.c.b16 %v10664, %v10663
    %v10713 = vpack.c.b16 %v10666, %v10665
    %v10714 = vpack.c.b16 %v10668, %v10667
    %v10715 = vpack.c.b16 %v10670, %v10669
    %v10716 = vpack.c.b16 %v10672, %v10671
    %v10717 = vpack.c.b16 %v10674, %v10673
    %v10718 = vpack.c.b16 %v10676, %v10675
    %v10719 = vpack.c.b16 %v10678, %v10677
    %v10720 = vpack.c.b16 %v10680, %v10679
    %v10721 = vpack.c.b16 %v10682, %v10681
    %v10722 = vpack.c.b16 %v10684, %v10683
    %v10723 = vpack.c.b16 %v10686, %v10685
    %v10724 = vpack.c.b16 %v10688, %v10687
    %v10725 = vpack.c.b16 %v10690, %v10689
    %v10726 = vpack.c.b16 %v10692, %v10691
    %v10727 = vpack.c.b16 %v10694, %v10693
    %v10728 = vpack.c.b16 %v10696, %v10695
    %10761 = vmatpush.bf16.msra.mxu0 %v10704
    %10762 = vmatpush.bf16.msra.mxu0 %v10703
    %10763 = vmatpush.bf16.msra.mxu0 %v10702
    %10764 = vmatpush.bf16.msra.mxu0 %v10701
    %10765 = vmatpush.bf16.msra.mxu0 %v10700
    %10766 = vmatpush.bf16.msra.mxu0 %v10699
    %10767 = vmatpush.bf16.msra.mxu0 %v10698
    %10768 = vmatpush.bf16.msra.mxu0 %v10697
    %10769 = vmatmul.bf16.gmra.mxu0 %v10497
    %v10770 = vpop.f32.mrf.mxu0
    %v10771 = vadd.f32 %v10567, %v10770
    %v10772 = vpop.f32.mrf.mxu0
    %10773 = vdwg.mxu0
    %10774 = vmatpush.bf16.msra.mxu0 %v10712
    %10775 = vmatpush.bf16.msra.mxu0 %v10711
    %10776 = vmatpush.bf16.msra.mxu0 %v10710
    %10777 = vmatpush.bf16.msra.mxu0 %v10709
    %10778 = vmatpush.bf16.msra.mxu0 %v10708
    %10779 = vmatpush.bf16.msra.mxu0 %v10707
    %10780 = vmatpush.bf16.msra.mxu0 %v10706
    %10781 = vmatpush.bf16.msra.mxu0 %v10705
    %10782 = vmatmul.bf16.gmra.mxu0 %v10498
    %v10783 = vpop.f32.mrf.mxu0
    %v10784 = vadd.f32 %v10771, %v10783
    %v10785 = vpop.f32.mrf.mxu0
    %10786 = vdwg.mxu0
    %10787 = vmatpush.bf16.msra.mxu0 %v10720
    %10788 = vmatpush.bf16.msra.mxu0 %v10719
    %10789 = vmatpush.bf16.msra.mxu0 %v10718
    %10790 = vmatpush.bf16.msra.mxu0 %v10717
    %10791 = vmatpush.bf16.msra.mxu0 %v10716
    %10792 = vmatpush.bf16.msra.mxu0 %v10715
    %10793 = vmatpush.bf16.msra.mxu0 %v10714
    %10794 = vmatpush.bf16.msra.mxu0 %v10713
    %10795 = vmatmul.bf16.gmra.mxu0 %v10499
    %v10796 = vpop.f32.mrf.mxu0
    %v10797 = vadd.f32 %v10784, %v10796
    %v10798 = vpop.f32.mrf.mxu0
    %10799 = vdwg.mxu0
    %10800 = vmatpush.bf16.msra.mxu0 %v10728
    %10801 = vmatpush.bf16.msra.mxu0 %v10727
    %10802 = vmatpush.bf16.msra.mxu0 %v10726
    %10803 = vmatpush.bf16.msra.mxu0 %v10725
    %10804 = vmatpush.bf16.msra.mxu0 %v10724
    %10805 = vmatpush.bf16.msra.mxu0 %v10723
    %10806 = vmatpush.bf16.msra.mxu0 %v10722
    %10807 = vmatpush.bf16.msra.mxu0 %v10721
    %10808 = vmatmul.bf16.gmra.mxu0 %v10500
    %v10809 = vpop.f32.mrf.mxu0
    %v10810 = vadd.f32 %v10797, %v10809
    %v10811 = vpop.f32.mrf.mxu0
    %10812 = vdwg.mxu0
    %v10813 = vxor.u32 %v10810, 2147483648
    %v10814 = vmul.f32 %v10813, 1.442695
    %v10815 = vpow.pop %v10814
    %v10816 = vadd.f32 %v10815, 1.0
    %v10817 = vrcp.pop %v10816
    %v10818 = vmul.f32 %v10816, %v10817
    %v10819 = vsub.f32 1.0, %v10818
    %v10820 = vmul.f32 %v10817, %v10819
    %v10821 = vadd.f32 %v10817, %v10820
    %vm10822 = vweird.f32 %v10816
    %vm10823 = vweird.f32 %v10817
    %vm10824 = vmor %vm10822, %vm10823
    %v10825 = vsel %vm10824, %v10817, %v10821
    %v10826 = vand.u32 2147483647, %v10816
    %vm10827 = vcmp.eq.f32.partialorder %v10826, 8.507059e+37
    %v10828 = vand.u32 %v10816, 2147483648
    %v10829 = vor.u32 1.1754944e-38, %v10828
    %v10830 = vsel %vm10827, %v10829, %v10825
    %v10831 = vmul.f32 1.0, %v10830
    %vm10832 = vcmask 9216
    %10833 = vst.msk [vmem:[#allocation14] sm:$0x3] %vm10832, %v10831
    // Predicated region
    $region66: #{image_only_forward.3} parent=1 // pred_check
      _
    $region67: #{image_only_forward.3} parent=1 // pred_check_branch
      %10835 = sbr.rel (0) target = $region69
    $region68: #{image_only_forward.3} parent=1 // pred_region
      %10837 = vsyncadd [#allocation4], 0
      %s10839 = sshll.u32 [#allocation14], 4
      %s10840 = int_to_ptr.vmem [resolvable:$true] %s10839
      %s10841 = sshll.u32 %s9, 4
      %s10842 = int_to_ptr.hbm [resolvable:$true] %s10841
      %10844 = dma.vmem_to_hbm [thread:$0]  %s10840, 32, %s10842, [#allocation4]
    $region69: #{image_only_forward.3} parent=1 // pred_fallthru
      _
    // Predicated region
    $region70: #{image_only_forward.3} parent=1 // pred_check
      _
    $region71: #{image_only_forward.3} parent=1 // pred_check_branch
      %10846 = sbr.rel (0) target = $region73
    $region72: #{image_only_forward.3} parent=1 // pred_region
      %10848 = dma.done [#allocation4], 32
    $region73: #{image_only_forward.3} parent=1 // pred_fallthru
      _
    %10849 = vsyncpa [#allocation3], 1
    %10850 = vsyncpa [#allocation6], 1
    %10851 = vsyncpa [#allocation9], 1
    %10852 = vsyncpa [#allocation12], 1
    %10853 = vsyncpa [#allocation4], 1

</llo_original>
